<compile_context>
chip_gen: v7x
topology: tpu7x:2x2x1
jax: 0.10.0
libtpu: 0.0.40
codegen_flags: <defaults>
</compile_context>

<pallas_src>
import functools
import math

import jax
import jax.numpy as jnp
from jax.experimental import pallas as pl
from jax.experimental.pallas import tpu as pltpu

# ----------------------------- model hyper-params (small, consistent with module) --
D_MODEL = 64        # (module default 512)
HEADS = 4           # (module default 8)
D_FF = 128          # (module default 2048)
N_ENC_LAYERS = 2    # (module default 6)
N_DEC_LAYERS = 2
VOCAB_SRC = 32
VOCAB_TGT = 32
PAD_ID = 1          # tgt_pad_id == src_pad_id == 1 (asserted in the PyTorch module)
LANG_NUM = 2
LN_EPS = 1e-6


# ----------------------------------------------------------------- in-kernel helpers --
def _ln(v, g, b, eps=LN_EPS):
    """LayerNorm over the last dim.  v: (S, D), g/b broadcastable to (S, D)."""
    mu = jnp.mean(v, axis=-1, keepdims=True)
    c = v - mu
    var = jnp.mean(c * c, axis=-1, keepdims=True)
    return c * jax.lax.rsqrt(var + eps) * g + b


def _self_attention(xn, qkv_w, qkv_b, wo_w, wo_b, mask2d, heads, want_head0):
    """Fused multi-head self-attention on one batch element.
    xn: (S, D) normalized input; qkv_w: (D, 3D) (query scale pre-folded); mask2d broadcasts
    to (S, S) with True = masked.  Returns (out (S, D), head-0 probs or None)."""
    S, D = xn.shape
    dh = D // heads
    qkv = jnp.dot(xn, qkv_w, preferred_element_type=jnp.float32) + qkv_b   # (S, 3D)
    neg = jnp.float32(-1e18)
    ctx_heads = []
    head0_p = None
    for h in range(heads):
        q_h = qkv[:, h * dh:(h + 1) * dh]                 # (S, dh)
        k_h = qkv[:, D + h * dh:D + (h + 1) * dh]
        v_h = qkv[:, 2 * D + h * dh:2 * D + (h + 1) * dh]
        s = jax.lax.dot_general(q_h, k_h, (((1,), (1,)), ((), ())),
                                preferred_element_type=jnp.float32)        # (S, S)
        s = jnp.where(mask2d, neg, s)                     # onmt masked_fill(mask, -1e18)
        m = jnp.max(s, axis=-1, keepdims=True)
        e = jnp.exp(s - m)
        p = e / jnp.sum(e, axis=-1, keepdims=True)
        if want_head0 and h == 0:
            head0_p = p
        ctx_heads.append(jnp.dot(p, v_h, preferred_element_type=jnp.float32))
    ctx = jnp.concatenate(ctx_heads, axis=-1)             # (S, D) head merge in-kernel
    out = jnp.dot(ctx, wo_w, preferred_element_type=jnp.float32) + wo_b
    return out, head0_p


# ----------------------------------------------------------------- Pallas kernels --
def _encoder_kernel(x_ref, pad_ref, qkvw_ref, qkvb_ref, wow_ref, wob_ref,
                    w1_ref, b1_ref, w2_ref, b2_ref, ln_ref, fln_ref,
                    out_ref, *, heads, n_layers):
    """Whole MyTransformerEncoder stack for one batch element (grid over batch)."""
    x = x_ref[0].astype(jnp.float32)                      # (S, D)
    key_pad = pad_ref[0] > 0.5                            # (1, S) True = pad (key mask)

    for l in range(n_layers):
        ln_p = ln_ref[l]                                  # (6, D): att_g/b, ffn_g/b, pw_g/b
        # self-attention sublayer
        xn = _ln(x, ln_p[0], ln_p[1])
        attn_out, _ = _self_attention(xn, qkvw_ref[l], qkvb_ref[l],
                                      wow_ref[l], wob_ref[l], key_pad,
                                      heads, want_head0=False)
        x = attn_out + x
        # feed-forward sublayer: outer ffn_layer_norm, then onmt PositionwiseFeedForward
        # (which has its OWN internal LayerNorm and residual), then the layer residual.
        xn = _ln(x, ln_p[2], ln_p[3])
        z = _ln(xn, ln_p[4], ln_p[5])
        hdd = jnp.maximum(
            jnp.dot(z, w1_ref[l], preferred_element_type=jnp.float32) + b1_ref[l], 0.0)
        ff = jnp.dot(hdd, w2_ref[l], preferred_element_type=jnp.float32) + b2_ref[l]
        x = (ff + xn) + x
    x = _ln(x, fln_ref[0], fln_ref[1])                    # final encoder LayerNorm
    out_ref[0] = x.astype(out_ref.dtype)


def _decoder_kernel(x_ref, pad_ref, qkvw_ref, qkvb_ref, wow_ref, wob_ref,
                    w1_ref, b1_ref, w2_ref, b2_ref, ln_ref, fln_ref, genw_ref,
                    logits_ref, attn_ref, *, heads, n_layers):
    """Causal self-attention decoder stand-in + generator, one batch element per grid step.
    TODO(synk): onmt build_decoder/build_embeddings source is not provided; implemented as a
    causal self-attention transformer decoder (no cross-attention to memory_bank)."""
    T = x_ref.shape[1]
    x = x_ref[0].astype(jnp.float32)                      # (T, D)
    key_pad = pad_ref[0] > 0.5                            # (1, T)
    row = jax.lax.broadcasted_iota(jnp.int32, (T, T), 0)
    col = jax.lax.broadcasted_iota(jnp.int32, (T, T), 1)
    masked = jnp.logical_or(col > row, key_pad)           # (T, T) causal | key pad

    top_p = None
    for l in range(n_layers):
        ln_p = ln_ref[l]                                  # (4, D): att_g/b, pw_g/b
        xn = _ln(x, ln_p[0], ln_p[1])
        attn_out, head0_p = _self_attention(xn, qkvw_ref[l], qkvb_ref[l],
                                            wow_ref[l], wob_ref[l], masked,
                                            heads, want_head0=(l == n_layers - 1))
        if l == n_layers - 1:
            top_p = head0_p
        x = attn_out + x
        # PositionwiseFeedForward (internal LN + residual)
        z = _ln(x, ln_p[2], ln_p[3])
        hdd = jnp.maximum(
            jnp.dot(z, w1_ref[l], preferred_element_type=jnp.float32) + b1_ref[l], 0.0)
        ff = jnp.dot(hdd, w2_ref[l], preferred_element_type=jnp.float32) + b2_ref[l]
        x = ff + x
    x = _ln(x, fln_ref[0], fln_ref[1])                    # final decoder LayerNorm
    # generator: Linear(d_model, vocab, bias=False), fused (no zero-bias operand)
    logits_ref[0] = jnp.dot(x, genw_ref[...],
                            preferred_element_type=jnp.float32).astype(logits_ref.dtype)
    attn_ref[0] = top_p.astype(attn_ref.dtype)


# ----------------------------------------------------------------- kernel wrappers --
def _rep_spec(arr):
    """Full-array BlockSpec replicated across the batch grid (weights stay resident)."""
    zeros = (0,) * arr.ndim
    return pl.BlockSpec(arr.shape, lambda b, _z=zeros: _z)


def encoder_forward(params, src):
    """MyTransformerEncoder.forward (contextual_embeddings is None branch).
    src: (S, B) int32.  Returns (memory_bank (S,B,D), emb (S,B,D))."""
    p = params["enc"]
    emb = params["src_emb"][src]                          # (S, B, D)
    x = jnp.transpose(emb, (1, 0, 2))                     # (B, S, D)
    words = src.T                                         # (B, S)
    B, S = words.shape
    pad = (words == PAD_ID).astype(jnp.float32)[:, None, :]   # (B, 1, S)

    weights = (p["qkv_w"], p["qkv_b"], p["wo_w"], p["wo_b"],
               p["w1"], p["b1"], p["w2"], p["b2"], p["ln"], p["final_ln"])
    out = pl.pallas_call(
        functools.partial(_encoder_kernel, heads=HEADS, n_layers=N_ENC_LAYERS),
        grid=(B,),
        out_shape=jax.ShapeDtypeStruct((B, S, D_MODEL), jnp.float32),
        in_specs=[pl.BlockSpec((1, S, D_MODEL), lambda b: (b, 0, 0)),
                  pl.BlockSpec((1, 1, S), lambda b: (b, 0, 0))]
                 + [_rep_spec(w) for w in weights],
        out_specs=pl.BlockSpec((1, S, D_MODEL), lambda b: (b, 0, 0)),
        compiler_params=pltpu.CompilerParams(dimension_semantics=("parallel",)),
    )(x, pad, *weights)
    memory_bank = jnp.transpose(out, (1, 0, 2))           # (S, B, D)
    return memory_bank, emb


def decoder_forward(params, tgt):
    """tgt: (T, Bx) int32 -> (dec_final (T, Bx, V), attns (Bx, T, T))."""
    p = params["dec"]
    T, Bx = tgt.shape
    emb = params["tgt_emb"][tgt]                          # (T, Bx, D)
    x = jnp.transpose(emb, (1, 0, 2))                     # (Bx, T, D)
    pad = (tgt.T == PAD_ID).astype(jnp.float32)[:, None, :]   # (Bx, 1, T)

    weights = (p["qkv_w"], p["qkv_b"], p["wo_w"], p["wo_b"],
               p["w1"], p["b1"], p["w2"], p["b2"], p["ln"], p["final_ln"],
               params["gen_w"])
    logits, attn = pl.pallas_call(
        functools.partial(_decoder_kernel, heads=HEADS, n_layers=N_DEC_LAYERS),
        grid=(Bx,),
        out_shape=(jax.ShapeDtypeStruct((Bx, T, VOCAB_TGT), jnp.float32),
                   jax.ShapeDtypeStruct((Bx, T, T), jnp.float32)),
        in_specs=[pl.BlockSpec((1, T, D_MODEL), lambda b: (b, 0, 0)),
                  pl.BlockSpec((1, 1, T), lambda b: (b, 0, 0))]
                 + [_rep_spec(w) for w in weights],
        out_specs=(pl.BlockSpec((1, T, VOCAB_TGT), lambda b: (b, 0, 0)),
                   pl.BlockSpec((1, T, T), lambda b: (b, 0, 0))),
        compiler_params=pltpu.CompilerParams(dimension_semantics=("parallel",)),
    )(x, pad, *weights)
    dec_final = jnp.transpose(logits, (1, 0, 2))          # (T, Bx, V)
    return dec_final, attn


def parser_model_forward(params, x, x_attn, tgt, *, lang_num):
    """ParserModel.forward with translate=False, cal_loss=False.
    x: (batch, S_src) ids, tgt: (batch, T+1) ids, x_attn unused (contextual_embeddings=None)."""
    del x_attn
    x = x.T                                               # (S_src, B)  == x.permute(1, 0)
    tgt = tgt.T                                           # (T+1, B)
    memory_bank, _emb = encoder_forward(params, x)
    # decoder.init_state(x, memory_bank) is stateless here.
    ground_truth_tgt = tgt[1:]                            # kept for parity; unused (cal_loss=False)
    del ground_truth_tgt
    tgt_in = tgt[:-1]
    seq_len, batch = tgt_in.shape
    tgt_rep = jnp.repeat(tgt_in[:, :, None], lang_num, axis=2).reshape(
        seq_len, batch * lang_num)
    dec_final, attns = decoder_forward(params, tgt_rep)   # generator fused in-kernel
    translate_dec_out = None
    return dec_final, attns, memory_bank, translate_dec_out


# ----------------------------------------------------------------- parameter init --
def _xavier(key, shape):
    fan_in, fan_out = shape[0], shape[1]
    limit = math.sqrt(6.0 / (fan_in + fan_out))
    return jax.random.uniform(key, shape, jnp.float32, -limit, limit)


def _mha_params(key, d):
    ks = jax.random.split(key, 4)
    return {
        "wq": _xavier(ks[0], (d, d)), "bq": jnp.zeros((1, d), jnp.float32),
        "wk": _xavier(ks[1], (d, d)), "bk": jnp.zeros((1, d), jnp.float32),
        "wv": _xavier(ks[2], (d, d)), "bv": jnp.zeros((1, d), jnp.float32),
        "wo": _xavier(ks[3], (d, d)), "bo": jnp.zeros((1, d), jnp.float32),
    }


def _ffn_params(key, d, d_ff):
    k1, k2 = jax.random.split(key)
    return {
        "w1": _xavier(k1, (d, d_ff)), "b1": jnp.zeros((1, d_ff), jnp.float32),
        "w2": _xavier(k2, (d_ff, d)), "b2": jnp.zeros((1, d), jnp.float32),
        "ln_g": jnp.ones((1, d), jnp.float32), "ln_b": jnp.zeros((1, d), jnp.float32),
    }


def _layer_params(key, d, d_ff):
    k1, k2 = jax.random.split(key)
    return {
        "attn": _mha_params(k1, d),
        "ffn": _ffn_params(k2, d, d_ff),
        "att_ln_g": jnp.ones((1, d), jnp.float32), "att_ln_b": jnp.zeros((1, d), jnp.float32),
        "ffn_ln_g": jnp.ones((1, d), jnp.float32), "ffn_ln_b": jnp.zeros((1, d), jnp.float32),
    }


def _pack_layers(layers, final_g, final_b, *, with_ffn_ln):
    """Stack per-layer weights on a leading layer axis.  Query scale 1/sqrt(dh) is folded
    into the packed q weights/bias (mathematically identical to onmt's q / sqrt(dh))."""
    scale = 1.0 / math.sqrt(D_MODEL // HEADS)
    qkv_w = jnp.stack([jnp.concatenate(
        [lp["attn"]["wq"] * scale, lp["attn"]["wk"], lp["attn"]["wv"]], axis=1)
        for lp in layers])                                            # (L, D, 3D)
    qkv_b = jnp.stack([jnp.concatenate(
        [lp["attn"]["bq"] * scale, lp["attn"]["bk"], lp["attn"]["bv"]], axis=1)
        for lp in layers])                                            # (L, 1, 3D)
    wo_w = jnp.stack([lp["attn"]["wo"] for lp in layers])
    wo_b = jnp.stack([lp["attn"]["bo"] for lp in layers])
    w1 = jnp.stack([lp["ffn"]["w1"] for lp in layers])
    b1 = jnp.stack([lp["ffn"]["b1"] for lp in layers])
    w2 = jnp.stack([lp["ffn"]["w2"] for lp in layers])
    b2 = jnp.stack([lp["ffn"]["b2"] for lp in layers])
    if with_ffn_ln:
        ln = jnp.stack([jnp.stack([lp["att_ln_g"][0], lp["att_ln_b"][0],
                                   lp["ffn_ln_g"][0], lp["ffn_ln_b"][0],
                                   lp["ffn"]["ln_g"][0], lp["ffn"]["ln_b"][0]])
                        for lp in layers])                            # (L, 6, D)
    else:
        ln = jnp.stack([jnp.stack([lp["att_ln_g"][0], lp["att_ln_b"][0],
                                   lp["ffn"]["ln_g"][0], lp["ffn"]["ln_b"][0]])
                        for lp in layers])                            # (L, 4, D)
    final_ln = jnp.stack([final_g[0], final_b[0]])                    # (2, D)
    return {"qkv_w": qkv_w, "qkv_b": qkv_b, "wo_w": wo_w, "wo_b": wo_b,
            "w1": w1, "b1": b1, "w2": w2, "b2": b2, "ln": ln, "final_ln": final_ln}


def init_params(key):
    keys = jax.random.split(key, 4 + N_ENC_LAYERS + N_DEC_LAYERS)
    i = 0
    src_emb = 0.02 * jax.random.normal(keys[i], (VOCAB_SRC, D_MODEL), jnp.float32); i += 1
    tgt_emb = 0.02 * jax.random.normal(keys[i], (VOCAB_TGT, D_MODEL), jnp.float32); i += 1
    gen_w = _xavier(keys[i], (D_MODEL, VOCAB_TGT)); i += 1
    enc_layers = [_layer_params(keys[i + j], D_MODEL, D_FF) for j in range(N_ENC_LAYERS)]
    i += N_ENC_LAYERS
    dec_layers = [_layer_params(keys[i + j], D_MODEL, D_FF) for j in range(N_DEC_LAYERS)]

    enc_ln_g = jnp.ones((1, D_MODEL), jnp.float32); enc_ln_b = jnp.zeros((1, D_MODEL), jnp.float32)
    dec_ln_g = jnp.ones((1, D_MODEL), jnp.float32); dec_ln_b = jnp.zeros((1, D_MODEL), jnp.float32)

    return {
        "src_emb": src_emb,
        "tgt_emb": tgt_emb,
        "gen_w": gen_w,
        "enc": _pack_layers(enc_layers, enc_ln_g, enc_ln_b, with_ffn_ln=True),
        "dec": _pack_layers(dec_layers, dec_ln_g, dec_ln_b, with_ffn_ln=False),
    }


# --------------------------------------------------------------------------- main --
if __name__ == "__main__":
    key = jax.random.PRNGKey(0)
    kp, kx, kt = jax.random.split(key, 3)
    params = init_params(kp)

    B, S_SRC, T_TGT = 2, 8, 8
    x = jax.random.randint(kx, (B, S_SRC), 2, VOCAB_SRC, dtype=jnp.int32)
    x = x.at[:, -2:].set(PAD_ID)                          # some padding positions
    x_attn = jnp.ones((B, S_SRC), jnp.int32)              # unused (contextual_embeddings=None)
    tgt = jax.random.randint(kt, (B, T_TGT + 1), 2, VOCAB_TGT, dtype=jnp.int32)
    tgt = tgt.at[:, -1].set(PAD_ID)

    fwd = jax.jit(functools.partial(parser_model_forward, lang_num=LANG_NUM))
    dec_final, attns, memory_bank, translate_dec_out = fwd(params, x, x_attn, tgt)
    jax.block_until_ready((dec_final, attns, memory_bank))

    assert dec_final.shape == (T_TGT, B * LANG_NUM, VOCAB_TGT)
    assert memory_bank.shape == (S_SRC, B, D_MODEL)
    assert attns.shape == (B * LANG_NUM, T_TGT, T_TGT)
    assert translate_dec_out is None
    assert bool(jnp.all(jnp.isfinite(dec_final)))
    assert bool(jnp.all(jnp.isfinite(memory_bank)))
    assert bool(jnp.all(jnp.isfinite(attns)))
    print("KERNEL_OK")
</pallas_src>

<mosaic_0001>
module attributes {stable_mosaic.version = 11 : i64} {
  func.func @_decoder_kernel(%arg0: i32, %arg1: memref<1x8x64xf32, #tpu.memory_space<vmem>>, %arg2: memref<1x1x8xf32, #tpu.memory_space<vmem>>, %arg3: memref<2x64x192xf32, #tpu.memory_space<vmem>>, %arg4: memref<2x1x192xf32, #tpu.memory_space<vmem>>, %arg5: memref<2x64x64xf32, #tpu.memory_space<vmem>>, %arg6: memref<2x1x64xf32, #tpu.memory_space<vmem>>, %arg7: memref<2x64x128xf32, #tpu.memory_space<vmem>>, %arg8: memref<2x1x128xf32, #tpu.memory_space<vmem>>, %arg9: memref<2x128x64xf32, #tpu.memory_space<vmem>>, %arg10: memref<2x1x64xf32, #tpu.memory_space<vmem>>, %arg11: memref<2x4x64xf32, #tpu.memory_space<vmem>>, %arg12: memref<2x64xf32, #tpu.memory_space<vmem>>, %arg13: memref<64x32xf32, #tpu.memory_space<vmem>>, %arg14: memref<1x8x32xf32, #tpu.memory_space<vmem>>, %arg15: memref<1x8x8xf32, #tpu.memory_space<vmem>>) attributes {dimension_semantics = [#tpu.dimension_semantics<parallel>], iteration_bounds = array<i64: 4>, scalar_prefetch = 0 : i64, scratch_operands = 0 : i64, tpu.core_type = #tpu.core_type<tc>, window_params = [{transform_indices = @transform_0, window_bounds = array<i64: 1, 8, 64>}, {transform_indices = @transform_1, window_bounds = array<i64: 1, 1, 8>}, {pipeline_mode = #tpu.pipeline_mode<synchronous>, transform_indices = @transform_2, window_bounds = array<i64: 2, 64, 192>}, {pipeline_mode = #tpu.pipeline_mode<synchronous>, transform_indices = @transform_3, window_bounds = array<i64: 2, 1, 192>}, {pipeline_mode = #tpu.pipeline_mode<synchronous>, transform_indices = @transform_4, window_bounds = array<i64: 2, 64, 64>}, {pipeline_mode = #tpu.pipeline_mode<synchronous>, transform_indices = @transform_5, window_bounds = array<i64: 2, 1, 64>}, {pipeline_mode = #tpu.pipeline_mode<synchronous>, transform_indices = @transform_6, window_bounds = array<i64: 2, 64, 128>}, {pipeline_mode = #tpu.pipeline_mode<synchronous>, transform_indices = @transform_7, window_bounds = array<i64: 2, 1, 128>}, {pipeline_mode = #tpu.pipeline_mode<synchronous>, transform_indices = @transform_8, window_bounds = array<i64: 2, 128, 64>}, {pipeline_mode = #tpu.pipeline_mode<synchronous>, transform_indices = @transform_9, window_bounds = array<i64: 2, 1, 64>}, {pipeline_mode = #tpu.pipeline_mode<synchronous>, transform_indices = @transform_10, window_bounds = array<i64: 2, 4, 64>}, {pipeline_mode = #tpu.pipeline_mode<synchronous>, transform_indices = @transform_11, window_bounds = array<i64: 2, 64>}, {pipeline_mode = #tpu.pipeline_mode<synchronous>, transform_indices = @transform_12, window_bounds = array<i64: 64, 32>}, {transform_indices = @transform_13, window_bounds = array<i64: 1, 8, 32>}, {transform_indices = @transform_14, window_bounds = array<i64: 1, 8, 8>}]} {
    %c0 = arith.constant 0 : index
    %c0_0 = arith.constant 0 : index
    %c0_1 = arith.constant 0 : index
    %0 = vector.load %arg1[%c0, %c0_0, %c0_1] : memref<1x8x64xf32, #tpu.memory_space<vmem>>, vector<1x8x64xf32>
    %1 = vector.shape_cast %0 : vector<1x8x64xf32> to vector<8x64xf32>
    %c0_2 = arith.constant 0 : index
    %c0_3 = arith.constant 0 : index
    %c0_4 = arith.constant 0 : index
    %2 = vector.load %arg2[%c0_2, %c0_3, %c0_4] : memref<1x1x8xf32, #tpu.memory_space<vmem>>, vector<1x1x8xf32>
    %3 = vector.shape_cast %2 : vector<1x1x8xf32> to vector<1x8xf32>
    %cst = arith.constant 5.000000e-01 : f32
    %4 = vector.broadcast %cst : f32 to vector<1x8xf32>
    %5 = arith.cmpf ogt, %3, %4 : vector<1x8xf32>
    %6 = tpu.iota {dimensions = array<i32: 0>} : vector<8x8xi32>
    %7 = tpu.iota {dimensions = array<i32: 1>} : vector<8x8xi32>
    %8 = arith.cmpi sgt, %7, %6 : vector<8x8xi32>
    %9 = vector.broadcast %5 : vector<1x8xi1> to vector<8x8xi1>
    %10 = arith.ori %8, %9 : vector<8x8xi1>
    %c0_5 = arith.constant 0 : index
    %c0_6 = arith.constant 0 : index
    %c0_7 = arith.constant 0 : index
    %11 = vector.load %arg11[%c0_5, %c0_6, %c0_7] : memref<2x4x64xf32, #tpu.memory_space<vmem>>, vector<1x4x64xf32>
    %12 = vector.shape_cast %11 : vector<1x4x64xf32> to vector<4x64xf32>
    %13 = vector.extract_strided_slice %12 {offsets = [0, 0], sizes = [1, 64], strides = [1, 1]} : vector<4x64xf32> to vector<1x64xf32>
    %14 = vector.shape_cast %13 : vector<1x64xf32> to vector<64xf32>
    %15 = vector.extract_strided_slice %12 {offsets = [1, 0], sizes = [1, 64], strides = [1, 1]} : vector<4x64xf32> to vector<1x64xf32>
    %16 = vector.shape_cast %15 : vector<1x64xf32> to vector<64xf32>
    %cst_8 = arith.constant dense<0.000000e+00> : vector<8xf32>
    %17 = vector.multi_reduction <add>, %1, %cst_8 [1] : vector<8x64xf32> to vector<8xf32>
    %18 = vector.shape_cast %17 : vector<8xf32> to vector<8x1xf32>
    %cst_9 = arith.constant 6.400000e+01 : f32
    %19 = vector.broadcast %cst_9 : f32 to vector<8x1xf32>
    %20 = arith.divf %18, %19 : vector<8x1xf32>
    %21 = vector.broadcast %20 : vector<8x1xf32> to vector<8x64xf32>
    %22 = arith.subf %1, %21 : vector<8x64xf32>
    %23 = arith.mulf %22, %22 : vector<8x64xf32>
    %cst_10 = arith.constant dense<0.000000e+00> : vector<8xf32>
    %24 = vector.multi_reduction <add>, %23, %cst_10 [1] : vector<8x64xf32> to vector<8xf32>
    %25 = vector.shape_cast %24 : vector<8xf32> to vector<8x1xf32>
    %cst_11 = arith.constant 6.400000e+01 : f32
    %26 = vector.broadcast %cst_11 : f32 to vector<8x1xf32>
    %27 = arith.divf %25, %26 : vector<8x1xf32>
    %cst_12 = arith.constant 9.99999997E-7 : f32
    %28 = vector.broadcast %cst_12 : f32 to vector<8x1xf32>
    %29 = arith.addf %27, %28 : vector<8x1xf32>
    %30 = math.rsqrt %29 : vector<8x1xf32>
    %31 = vector.broadcast %30 : vector<8x1xf32> to vector<8x64xf32>
    %32 = arith.mulf %22, %31 : vector<8x64xf32>
    %33 = vector.shape_cast %14 : vector<64xf32> to vector<1x64xf32>
    %34 = vector.broadcast %33 : vector<1x64xf32> to vector<8x64xf32>
    %35 = arith.mulf %32, %34 : vector<8x64xf32>
    %36 = vector.shape_cast %16 : vector<64xf32> to vector<1x64xf32>
    %37 = vector.broadcast %36 : vector<1x64xf32> to vector<8x64xf32>
    %38 = arith.addf %35, %37 : vector<8x64xf32>
    %c0_13 = arith.constant 0 : index
    %c0_14 = arith.constant 0 : index
    %c0_15 = arith.constant 0 : index
    %39 = vector.load %arg3[%c0_13, %c0_14, %c0_15] : memref<2x64x192xf32, #tpu.memory_space<vmem>>, vector<1x64x192xf32>
    %40 = vector.shape_cast %39 : vector<1x64x192xf32> to vector<64x192xf32>
    %c0_16 = arith.constant 0 : index
    %c0_17 = arith.constant 0 : index
    %c0_18 = arith.constant 0 : index
    %41 = vector.load %arg4[%c0_16, %c0_17, %c0_18] : memref<2x1x192xf32, #tpu.memory_space<vmem>>, vector<1x1x192xf32>
    %42 = vector.shape_cast %41 : vector<1x1x192xf32> to vector<1x192xf32>
    %c0_19 = arith.constant 0 : index
    %c0_20 = arith.constant 0 : index
    %c0_21 = arith.constant 0 : index
    %43 = vector.load %arg5[%c0_19, %c0_20, %c0_21] : memref<2x64x64xf32, #tpu.memory_space<vmem>>, vector<1x64x64xf32>
    %44 = vector.shape_cast %43 : vector<1x64x64xf32> to vector<64x64xf32>
    %c0_22 = arith.constant 0 : index
    %c0_23 = arith.constant 0 : index
    %c0_24 = arith.constant 0 : index
    %45 = vector.load %arg6[%c0_22, %c0_23, %c0_24] : memref<2x1x64xf32, #tpu.memory_space<vmem>>, vector<1x1x64xf32>
    %46 = vector.shape_cast %45 : vector<1x1x64xf32> to vector<1x64xf32>
    %cst_25 = arith.constant dense<0.000000e+00> : vector<8x192xf32>
    %47 = tpu.matmul %38, %40, %cst_25 {dimension_numbers = #tpu.dot_dimension_numbers<[1], [0], [0], [1], [0, 0, 1, 1], [], []>} : vector<8x64xf32>, vector<64x192xf32>, vector<8x192xf32> -> vector<8x192xf32>
    %48 = vector.broadcast %42 : vector<1x192xf32> to vector<8x192xf32>
    %49 = arith.addf %47, %48 : vector<8x192xf32>
    %50 = vector.extract_strided_slice %49 {offsets = [0, 0], sizes = [8, 16], strides = [1, 1]} : vector<8x192xf32> to vector<8x16xf32>
    %51 = vector.extract_strided_slice %49 {offsets = [0, 64], sizes = [8, 16], strides = [1, 1]} : vector<8x192xf32> to vector<8x16xf32>
    %52 = vector.extract_strided_slice %49 {offsets = [0, 128], sizes = [8, 16], strides = [1, 1]} : vector<8x192xf32> to vector<8x16xf32>
    %cst_26 = arith.constant dense<0.000000e+00> : vector<8x8xf32>
    %53 = tpu.matmul %50, %51, %cst_26 {dimension_numbers = #tpu.dot_dimension_numbers<[1], [1], [0], [0], [0, 0, 1, 0], [], []>} : vector<8x16xf32>, vector<8x16xf32>, vector<8x8xf32> -> vector<8x8xf32>
    %cst_27 = arith.constant -9.99999984E+17 : f32
    %54 = vector.broadcast %cst_27 : f32 to vector<8x8xf32>
    %55 = arith.select %10, %54, %53 : vector<8x8xi1>, vector<8x8xf32>
    %cst_28 = arith.constant dense<0xFF800000> : vector<8xf32>
    %56 = vector.multi_reduction <maximumf>, %55, %cst_28 [1] : vector<8x8xf32> to vector<8xf32>
    %57 = vector.shape_cast %56 : vector<8xf32> to vector<8x1xf32>
    %58 = vector.broadcast %57 : vector<8x1xf32> to vector<8x8xf32>
    %59 = arith.subf %55, %58 : vector<8x8xf32>
    %60 = math.exp %59 : vector<8x8xf32>
    %cst_29 = arith.constant dense<0.000000e+00> : vector<8xf32>
    %61 = vector.multi_reduction <add>, %60, %cst_29 [1] : vector<8x8xf32> to vector<8xf32>
    %62 = vector.shape_cast %61 : vector<8xf32> to vector<8x1xf32>
    %63 = vector.broadcast %62 : vector<8x1xf32> to vector<8x8xf32>
    %64 = arith.divf %60, %63 : vector<8x8xf32>
    %cst_30 = arith.constant dense<0.000000e+00> : vector<8x16xf32>
    %65 = tpu.matmul %64, %52, %cst_30 {dimension_numbers = #tpu.dot_dimension_numbers<[1], [0], [0], [1], [0, 0, 1, 1], [], []>} : vector<8x8xf32>, vector<8x16xf32>, vector<8x16xf32> -> vector<8x16xf32>
    %66 = vector.extract_strided_slice %49 {offsets = [0, 16], sizes = [8, 16], strides = [1, 1]} : vector<8x192xf32> to vector<8x16xf32>
    %67 = vector.extract_strided_slice %49 {offsets = [0, 80], sizes = [8, 16], strides = [1, 1]} : vector<8x192xf32> to vector<8x16xf32>
    %68 = vector.extract_strided_slice %49 {offsets = [0, 144], sizes = [8, 16], strides = [1, 1]} : vector<8x192xf32> to vector<8x16xf32>
    %cst_31 = arith.constant dense<0.000000e+00> : vector<8x8xf32>
    %69 = tpu.matmul %66, %67, %cst_31 {dimension_numbers = #tpu.dot_dimension_numbers<[1], [1], [0], [0], [0, 0, 1, 0], [], []>} : vector<8x16xf32>, vector<8x16xf32>, vector<8x8xf32> -> vector<8x8xf32>
    %cst_32 = arith.constant -9.99999984E+17 : f32
    %70 = vector.broadcast %cst_32 : f32 to vector<8x8xf32>
    %71 = arith.select %10, %70, %69 : vector<8x8xi1>, vector<8x8xf32>
    %cst_33 = arith.constant dense<0xFF800000> : vector<8xf32>
    %72 = vector.multi_reduction <maximumf>, %71, %cst_33 [1] : vector<8x8xf32> to vector<8xf32>
    %73 = vector.shape_cast %72 : vector<8xf32> to vector<8x1xf32>
    %74 = vector.broadcast %73 : vector<8x1xf32> to vector<8x8xf32>
    %75 = arith.subf %71, %74 : vector<8x8xf32>
    %76 = math.exp %75 : vector<8x8xf32>
    %cst_34 = arith.constant dense<0.000000e+00> : vector<8xf32>
    %77 = vector.multi_reduction <add>, %76, %cst_34 [1] : vector<8x8xf32> to vector<8xf32>
    %78 = vector.shape_cast %77 : vector<8xf32> to vector<8x1xf32>
    %79 = vector.broadcast %78 : vector<8x1xf32> to vector<8x8xf32>
    %80 = arith.divf %76, %79 : vector<8x8xf32>
    %cst_35 = arith.constant dense<0.000000e+00> : vector<8x16xf32>
    %81 = tpu.matmul %80, %68, %cst_35 {dimension_numbers = #tpu.dot_dimension_numbers<[1], [0], [0], [1], [0, 0, 1, 1], [], []>} : vector<8x8xf32>, vector<8x16xf32>, vector<8x16xf32> -> vector<8x16xf32>
    %82 = vector.extract_strided_slice %49 {offsets = [0, 32], sizes = [8, 16], strides = [1, 1]} : vector<8x192xf32> to vector<8x16xf32>
    %83 = vector.extract_strided_slice %49 {offsets = [0, 96], sizes = [8, 16], strides = [1, 1]} : vector<8x192xf32> to vector<8x16xf32>
    %84 = vector.extract_strided_slice %49 {offsets = [0, 160], sizes = [8, 16], strides = [1, 1]} : vector<8x192xf32> to vector<8x16xf32>
    %cst_36 = arith.constant dense<0.000000e+00> : vector<8x8xf32>
    %85 = tpu.matmul %82, %83, %cst_36 {dimension_numbers = #tpu.dot_dimension_numbers<[1], [1], [0], [0], [0, 0, 1, 0], [], []>} : vector<8x16xf32>, vector<8x16xf32>, vector<8x8xf32> -> vector<8x8xf32>
    %cst_37 = arith.constant -9.99999984E+17 : f32
    %86 = vector.broadcast %cst_37 : f32 to vector<8x8xf32>
    %87 = arith.select %10, %86, %85 : vector<8x8xi1>, vector<8x8xf32>
    %cst_38 = arith.constant dense<0xFF800000> : vector<8xf32>
    %88 = vector.multi_reduction <maximumf>, %87, %cst_38 [1] : vector<8x8xf32> to vector<8xf32>
    %89 = vector.shape_cast %88 : vector<8xf32> to vector<8x1xf32>
    %90 = vector.broadcast %89 : vector<8x1xf32> to vector<8x8xf32>
    %91 = arith.subf %87, %90 : vector<8x8xf32>
    %92 = math.exp %91 : vector<8x8xf32>
    %cst_39 = arith.constant dense<0.000000e+00> : vector<8xf32>
    %93 = vector.multi_reduction <add>, %92, %cst_39 [1] : vector<8x8xf32> to vector<8xf32>
    %94 = vector.shape_cast %93 : vector<8xf32> to vector<8x1xf32>
    %95 = vector.broadcast %94 : vector<8x1xf32> to vector<8x8xf32>
    %96 = arith.divf %92, %95 : vector<8x8xf32>
    %cst_40 = arith.constant dense<0.000000e+00> : vector<8x16xf32>
    %97 = tpu.matmul %96, %84, %cst_40 {dimension_numbers = #tpu.dot_dimension_numbers<[1], [0], [0], [1], [0, 0, 1, 1], [], []>} : vector<8x8xf32>, vector<8x16xf32>, vector<8x16xf32> -> vector<8x16xf32>
    %98 = vector.extract_strided_slice %49 {offsets = [0, 48], sizes = [8, 16], strides = [1, 1]} : vector<8x192xf32> to vector<8x16xf32>
    %99 = vector.extract_strided_slice %49 {offsets = [0, 112], sizes = [8, 16], strides = [1, 1]} : vector<8x192xf32> to vector<8x16xf32>
    %100 = vector.extract_strided_slice %49 {offsets = [0, 176], sizes = [8, 16], strides = [1, 1]} : vector<8x192xf32> to vector<8x16xf32>
    %cst_41 = arith.constant dense<0.000000e+00> : vector<8x8xf32>
    %101 = tpu.matmul %98, %99, %cst_41 {dimension_numbers = #tpu.dot_dimension_numbers<[1], [1], [0], [0], [0, 0, 1, 0], [], []>} : vector<8x16xf32>, vector<8x16xf32>, vector<8x8xf32> -> vector<8x8xf32>
    %cst_42 = arith.constant -9.99999984E+17 : f32
    %102 = vector.broadcast %cst_42 : f32 to vector<8x8xf32>
    %103 = arith.select %10, %102, %101 : vector<8x8xi1>, vector<8x8xf32>
    %cst_43 = arith.constant dense<0xFF800000> : vector<8xf32>
    %104 = vector.multi_reduction <maximumf>, %103, %cst_43 [1] : vector<8x8xf32> to vector<8xf32>
    %105 = vector.shape_cast %104 : vector<8xf32> to vector<8x1xf32>
    %106 = vector.broadcast %105 : vector<8x1xf32> to vector<8x8xf32>
    %107 = arith.subf %103, %106 : vector<8x8xf32>
    %108 = math.exp %107 : vector<8x8xf32>
    %cst_44 = arith.constant dense<0.000000e+00> : vector<8xf32>
    %109 = vector.multi_reduction <add>, %108, %cst_44 [1] : vector<8x8xf32> to vector<8xf32>
    %110 = vector.shape_cast %109 : vector<8xf32> to vector<8x1xf32>
    %111 = vector.broadcast %110 : vector<8x1xf32> to vector<8x8xf32>
    %112 = arith.divf %108, %111 : vector<8x8xf32>
    %cst_45 = arith.constant dense<0.000000e+00> : vector<8x16xf32>
    %113 = tpu.matmul %112, %100, %cst_45 {dimension_numbers = #tpu.dot_dimension_numbers<[1], [0], [0], [1], [0, 0, 1, 1], [], []>} : vector<8x8xf32>, vector<8x16xf32>, vector<8x16xf32> -> vector<8x16xf32>
    %114 = tpu.concatenate %65, %81, %97, %113 in 1 : vector<8x16xf32>, vector<8x16xf32>, vector<8x16xf32>, vector<8x16xf32> -> vector<8x64xf32>
    %cst_46 = arith.constant dense<0.000000e+00> : vector<8x64xf32>
    %115 = tpu.matmul %114, %44, %cst_46 {dimension_numbers = #tpu.dot_dimension_numbers<[1], [0], [0], [1], [0, 0, 1, 1], [], []>} : vector<8x64xf32>, vector<64x64xf32>, vector<8x64xf32> -> vector<8x64xf32>
    %116 = vector.broadcast %46 : vector<1x64xf32> to vector<8x64xf32>
    %117 = arith.addf %115, %116 : vector<8x64xf32>
    %118 = arith.addf %117, %1 : vector<8x64xf32>
    %119 = vector.extract_strided_slice %12 {offsets = [2, 0], sizes = [1, 64], strides = [1, 1]} : vector<4x64xf32> to vector<1x64xf32>
    %120 = vector.shape_cast %119 : vector<1x64xf32> to vector<64xf32>
    %121 = vector.extract_strided_slice %12 {offsets = [3, 0], sizes = [1, 64], strides = [1, 1]} : vector<4x64xf32> to vector<1x64xf32>
    %122 = vector.shape_cast %121 : vector<1x64xf32> to vector<64xf32>
    %cst_47 = arith.constant dense<0.000000e+00> : vector<8xf32>
    %123 = vector.multi_reduction <add>, %118, %cst_47 [1] : vector<8x64xf32> to vector<8xf32>
    %124 = vector.shape_cast %123 : vector<8xf32> to vector<8x1xf32>
    %cst_48 = arith.constant 6.400000e+01 : f32
    %125 = vector.broadcast %cst_48 : f32 to vector<8x1xf32>
    %126 = arith.divf %124, %125 : vector<8x1xf32>
    %127 = vector.broadcast %126 : vector<8x1xf32> to vector<8x64xf32>
    %128 = arith.subf %118, %127 : vector<8x64xf32>
    %129 = arith.mulf %128, %128 : vector<8x64xf32>
    %cst_49 = arith.constant dense<0.000000e+00> : vector<8xf32>
    %130 = vector.multi_reduction <add>, %129, %cst_49 [1] : vector<8x64xf32> to vector<8xf32>
    %131 = vector.shape_cast %130 : vector<8xf32> to vector<8x1xf32>
    %cst_50 = arith.constant 6.400000e+01 : f32
    %132 = vector.broadcast %cst_50 : f32 to vector<8x1xf32>
    %133 = arith.divf %131, %132 : vector<8x1xf32>
    %cst_51 = arith.constant 9.99999997E-7 : f32
    %134 = vector.broadcast %cst_51 : f32 to vector<8x1xf32>
    %135 = arith.addf %133, %134 : vector<8x1xf32>
    %136 = math.rsqrt %135 : vector<8x1xf32>
    %137 = vector.broadcast %136 : vector<8x1xf32> to vector<8x64xf32>
    %138 = arith.mulf %128, %137 : vector<8x64xf32>
    %139 = vector.shape_cast %120 : vector<64xf32> to vector<1x64xf32>
    %140 = vector.broadcast %139 : vector<1x64xf32> to vector<8x64xf32>
    %141 = arith.mulf %138, %140 : vector<8x64xf32>
    %142 = vector.shape_cast %122 : vector<64xf32> to vector<1x64xf32>
    %143 = vector.broadcast %142 : vector<1x64xf32> to vector<8x64xf32>
    %144 = arith.addf %141, %143 : vector<8x64xf32>
    %c0_52 = arith.constant 0 : index
    %c0_53 = arith.constant 0 : index
    %c0_54 = arith.constant 0 : index
    %145 = vector.load %arg7[%c0_52, %c0_53, %c0_54] : memref<2x64x128xf32, #tpu.memory_space<vmem>>, vector<1x64x128xf32>
    %146 = vector.shape_cast %145 : vector<1x64x128xf32> to vector<64x128xf32>
    %cst_55 = arith.constant dense<0.000000e+00> : vector<8x128xf32>
    %147 = tpu.matmul %144, %146, %cst_55 {dimension_numbers = #tpu.dot_dimension_numbers<[1], [0], [0], [1], [0, 0, 1, 1], [], []>} : vector<8x64xf32>, vector<64x128xf32>, vector<8x128xf32> -> vector<8x128xf32>
    %c0_56 = arith.constant 0 : index
    %c0_57 = arith.constant 0 : index
    %c0_58 = arith.constant 0 : index
    %148 = vector.load %arg8[%c0_56, %c0_57, %c0_58] : memref<2x1x128xf32, #tpu.memory_space<vmem>>, vector<1x1x128xf32>
    %149 = vector.shape_cast %148 : vector<1x1x128xf32> to vector<1x128xf32>
    %150 = vector.broadcast %149 : vector<1x128xf32> to vector<8x128xf32>
    %151 = arith.addf %147, %150 : vector<8x128xf32>
    %cst_59 = arith.constant 0.000000e+00 : f32
    %152 = vector.broadcast %cst_59 : f32 to vector<8x128xf32>
    %153 = arith.maximumf %151, %152 : vector<8x128xf32>
    %c0_60 = arith.constant 0 : index
    %c0_61 = arith.constant 0 : index
    %c0_62 = arith.constant 0 : index
    %154 = vector.load %arg9[%c0_60, %c0_61, %c0_62] : memref<2x128x64xf32, #tpu.memory_space<vmem>>, vector<1x128x64xf32>
    %155 = vector.shape_cast %154 : vector<1x128x64xf32> to vector<128x64xf32>
    %cst_63 = arith.constant dense<0.000000e+00> : vector<8x64xf32>
    %156 = tpu.matmul %153, %155, %cst_63 {dimension_numbers = #tpu.dot_dimension_numbers<[1], [0], [0], [1], [0, 0, 1, 1], [], []>} : vector<8x128xf32>, vector<128x64xf32>, vector<8x64xf32> -> vector<8x64xf32>
    %c0_64 = arith.constant 0 : index
    %c0_65 = arith.constant 0 : index
    %c0_66 = arith.constant 0 : index
    %157 = vector.load %arg10[%c0_64, %c0_65, %c0_66] : memref<2x1x64xf32, #tpu.memory_space<vmem>>, vector<1x1x64xf32>
    %158 = vector.shape_cast %157 : vector<1x1x64xf32> to vector<1x64xf32>
    %159 = vector.broadcast %158 : vector<1x64xf32> to vector<8x64xf32>
    %160 = arith.addf %156, %159 : vector<8x64xf32>
    %161 = arith.addf %160, %118 : vector<8x64xf32>
    %c1 = arith.constant 1 : index
    %c0_67 = arith.constant 0 : index
    %c0_68 = arith.constant 0 : index
    %162 = vector.load %arg11[%c1, %c0_67, %c0_68] : memref<2x4x64xf32, #tpu.memory_space<vmem>>, vector<1x4x64xf32>
    %163 = vector.shape_cast %162 : vector<1x4x64xf32> to vector<4x64xf32>
    %164 = vector.extract_strided_slice %163 {offsets = [0, 0], sizes = [1, 64], strides = [1, 1]} : vector<4x64xf32> to vector<1x64xf32>
    %165 = vector.shape_cast %164 : vector<1x64xf32> to vector<64xf32>
    %166 = vector.extract_strided_slice %163 {offsets = [1, 0], sizes = [1, 64], strides = [1, 1]} : vector<4x64xf32> to vector<1x64xf32>
    %167 = vector.shape_cast %166 : vector<1x64xf32> to vector<64xf32>
    %cst_69 = arith.constant dense<0.000000e+00> : vector<8xf32>
    %168 = vector.multi_reduction <add>, %161, %cst_69 [1] : vector<8x64xf32> to vector<8xf32>
    %169 = vector.shape_cast %168 : vector<8xf32> to vector<8x1xf32>
    %cst_70 = arith.constant 6.400000e+01 : f32
    %170 = vector.broadcast %cst_70 : f32 to vector<8x1xf32>
    %171 = arith.divf %169, %170 : vector<8x1xf32>
    %172 = vector.broadcast %171 : vector<8x1xf32> to vector<8x64xf32>
    %173 = arith.subf %161, %172 : vector<8x64xf32>
    %174 = arith.mulf %173, %173 : vector<8x64xf32>
    %cst_71 = arith.constant dense<0.000000e+00> : vector<8xf32>
    %175 = vector.multi_reduction <add>, %174, %cst_71 [1] : vector<8x64xf32> to vector<8xf32>
    %176 = vector.shape_cast %175 : vector<8xf32> to vector<8x1xf32>
    %cst_72 = arith.constant 6.400000e+01 : f32
    %177 = vector.broadcast %cst_72 : f32 to vector<8x1xf32>
    %178 = arith.divf %176, %177 : vector<8x1xf32>
    %cst_73 = arith.constant 9.99999997E-7 : f32
    %179 = vector.broadcast %cst_73 : f32 to vector<8x1xf32>
    %180 = arith.addf %178, %179 : vector<8x1xf32>
    %181 = math.rsqrt %180 : vector<8x1xf32>
    %182 = vector.broadcast %181 : vector<8x1xf32> to vector<8x64xf32>
    %183 = arith.mulf %173, %182 : vector<8x64xf32>
    %184 = vector.shape_cast %165 : vector<64xf32> to vector<1x64xf32>
    %185 = vector.broadcast %184 : vector<1x64xf32> to vector<8x64xf32>
    %186 = arith.mulf %183, %185 : vector<8x64xf32>
    %187 = vector.shape_cast %167 : vector<64xf32> to vector<1x64xf32>
    %188 = vector.broadcast %187 : vector<1x64xf32> to vector<8x64xf32>
    %189 = arith.addf %186, %188 : vector<8x64xf32>
    %c1_74 = arith.constant 1 : index
    %c0_75 = arith.constant 0 : index
    %c0_76 = arith.constant 0 : index
    %190 = vector.load %arg3[%c1_74, %c0_75, %c0_76] : memref<2x64x192xf32, #tpu.memory_space<vmem>>, vector<1x64x192xf32>
    %191 = vector.shape_cast %190 : vector<1x64x192xf32> to vector<64x192xf32>
    %c1_77 = arith.constant 1 : index
    %c0_78 = arith.constant 0 : index
    %c0_79 = arith.constant 0 : index
    %192 = vector.load %arg4[%c1_77, %c0_78, %c0_79] : memref<2x1x192xf32, #tpu.memory_space<vmem>>, vector<1x1x192xf32>
    %193 = vector.shape_cast %192 : vector<1x1x192xf32> to vector<1x192xf32>
    %c1_80 = arith.constant 1 : index
    %c0_81 = arith.constant 0 : index
    %c0_82 = arith.constant 0 : index
    %194 = vector.load %arg5[%c1_80, %c0_81, %c0_82] : memref<2x64x64xf32, #tpu.memory_space<vmem>>, vector<1x64x64xf32>
    %195 = vector.shape_cast %194 : vector<1x64x64xf32> to vector<64x64xf32>
    %c1_83 = arith.constant 1 : index
    %c0_84 = arith.constant 0 : index
    %c0_85 = arith.constant 0 : index
    %196 = vector.load %arg6[%c1_83, %c0_84, %c0_85] : memref<2x1x64xf32, #tpu.memory_space<vmem>>, vector<1x1x64xf32>
    %197 = vector.shape_cast %196 : vector<1x1x64xf32> to vector<1x64xf32>
    %cst_86 = arith.constant dense<0.000000e+00> : vector<8x192xf32>
    %198 = tpu.matmul %189, %191, %cst_86 {dimension_numbers = #tpu.dot_dimension_numbers<[1], [0], [0], [1], [0, 0, 1, 1], [], []>} : vector<8x64xf32>, vector<64x192xf32>, vector<8x192xf32> -> vector<8x192xf32>
    %199 = vector.broadcast %193 : vector<1x192xf32> to vector<8x192xf32>
    %200 = arith.addf %198, %199 : vector<8x192xf32>
    %201 = vector.extract_strided_slice %200 {offsets = [0, 0], sizes = [8, 16], strides = [1, 1]} : vector<8x192xf32> to vector<8x16xf32>
    %202 = vector.extract_strided_slice %200 {offsets = [0, 64], sizes = [8, 16], strides = [1, 1]} : vector<8x192xf32> to vector<8x16xf32>
    %203 = vector.extract_strided_slice %200 {offsets = [0, 128], sizes = [8, 16], strides = [1, 1]} : vector<8x192xf32> to vector<8x16xf32>
    %cst_87 = arith.constant dense<0.000000e+00> : vector<8x8xf32>
    %204 = tpu.matmul %201, %202, %cst_87 {dimension_numbers = #tpu.dot_dimension_numbers<[1], [1], [0], [0], [0, 0, 1, 0], [], []>} : vector<8x16xf32>, vector<8x16xf32>, vector<8x8xf32> -> vector<8x8xf32>
    %cst_88 = arith.constant -9.99999984E+17 : f32
    %205 = vector.broadcast %cst_88 : f32 to vector<8x8xf32>
    %206 = arith.select %10, %205, %204 : vector<8x8xi1>, vector<8x8xf32>
    %cst_89 = arith.constant dense<0xFF800000> : vector<8xf32>
    %207 = vector.multi_reduction <maximumf>, %206, %cst_89 [1] : vector<8x8xf32> to vector<8xf32>
    %208 = vector.shape_cast %207 : vector<8xf32> to vector<8x1xf32>
    %209 = vector.broadcast %208 : vector<8x1xf32> to vector<8x8xf32>
    %210 = arith.subf %206, %209 : vector<8x8xf32>
    %211 = math.exp %210 : vector<8x8xf32>
    %cst_90 = arith.constant dense<0.000000e+00> : vector<8xf32>
    %212 = vector.multi_reduction <add>, %211, %cst_90 [1] : vector<8x8xf32> to vector<8xf32>
    %213 = vector.shape_cast %212 : vector<8xf32> to vector<8x1xf32>
    %214 = vector.broadcast %213 : vector<8x1xf32> to vector<8x8xf32>
    %215 = arith.divf %211, %214 : vector<8x8xf32>
    %cst_91 = arith.constant dense<0.000000e+00> : vector<8x16xf32>
    %216 = tpu.matmul %215, %203, %cst_91 {dimension_numbers = #tpu.dot_dimension_numbers<[1], [0], [0], [1], [0, 0, 1, 1], [], []>} : vector<8x8xf32>, vector<8x16xf32>, vector<8x16xf32> -> vector<8x16xf32>
    %217 = vector.extract_strided_slice %200 {offsets = [0, 16], sizes = [8, 16], strides = [1, 1]} : vector<8x192xf32> to vector<8x16xf32>
    %218 = vector.extract_strided_slice %200 {offsets = [0, 80], sizes = [8, 16], strides = [1, 1]} : vector<8x192xf32> to vector<8x16xf32>
    %219 = vector.extract_strided_slice %200 {offsets = [0, 144], sizes = [8, 16], strides = [1, 1]} : vector<8x192xf32> to vector<8x16xf32>
    %cst_92 = arith.constant dense<0.000000e+00> : vector<8x8xf32>
    %220 = tpu.matmul %217, %218, %cst_92 {dimension_numbers = #tpu.dot_dimension_numbers<[1], [1], [0], [0], [0, 0, 1, 0], [], []>} : vector<8x16xf32>, vector<8x16xf32>, vector<8x8xf32> -> vector<8x8xf32>
    %cst_93 = arith.constant -9.99999984E+17 : f32
    %221 = vector.broadcast %cst_93 : f32 to vector<8x8xf32>
    %222 = arith.select %10, %221, %220 : vector<8x8xi1>, vector<8x8xf32>
    %cst_94 = arith.constant dense<0xFF800000> : vector<8xf32>
    %223 = vector.multi_reduction <maximumf>, %222, %cst_94 [1] : vector<8x8xf32> to vector<8xf32>
    %224 = vector.shape_cast %223 : vector<8xf32> to vector<8x1xf32>
    %225 = vector.broadcast %224 : vector<8x1xf32> to vector<8x8xf32>
    %226 = arith.subf %222, %225 : vector<8x8xf32>
    %227 = math.exp %226 : vector<8x8xf32>
    %cst_95 = arith.constant dense<0.000000e+00> : vector<8xf32>
    %228 = vector.multi_reduction <add>, %227, %cst_95 [1] : vector<8x8xf32> to vector<8xf32>
    %229 = vector.shape_cast %228 : vector<8xf32> to vector<8x1xf32>
    %230 = vector.broadcast %229 : vector<8x1xf32> to vector<8x8xf32>
    %231 = arith.divf %227, %230 : vector<8x8xf32>
    %cst_96 = arith.constant dense<0.000000e+00> : vector<8x16xf32>
    %232 = tpu.matmul %231, %219, %cst_96 {dimension_numbers = #tpu.dot_dimension_numbers<[1], [0], [0], [1], [0, 0, 1, 1], [], []>} : vector<8x8xf32>, vector<8x16xf32>, vector<8x16xf32> -> vector<8x16xf32>
    %233 = vector.extract_strided_slice %200 {offsets = [0, 32], sizes = [8, 16], strides = [1, 1]} : vector<8x192xf32> to vector<8x16xf32>
    %234 = vector.extract_strided_slice %200 {offsets = [0, 96], sizes = [8, 16], strides = [1, 1]} : vector<8x192xf32> to vector<8x16xf32>
    %235 = vector.extract_strided_slice %200 {offsets = [0, 160], sizes = [8, 16], strides = [1, 1]} : vector<8x192xf32> to vector<8x16xf32>
    %cst_97 = arith.constant dense<0.000000e+00> : vector<8x8xf32>
    %236 = tpu.matmul %233, %234, %cst_97 {dimension_numbers = #tpu.dot_dimension_numbers<[1], [1], [0], [0], [0, 0, 1, 0], [], []>} : vector<8x16xf32>, vector<8x16xf32>, vector<8x8xf32> -> vector<8x8xf32>
    %cst_98 = arith.constant -9.99999984E+17 : f32
    %237 = vector.broadcast %cst_98 : f32 to vector<8x8xf32>
    %238 = arith.select %10, %237, %236 : vector<8x8xi1>, vector<8x8xf32>
    %cst_99 = arith.constant dense<0xFF800000> : vector<8xf32>
    %239 = vector.multi_reduction <maximumf>, %238, %cst_99 [1] : vector<8x8xf32> to vector<8xf32>
    %240 = vector.shape_cast %239 : vector<8xf32> to vector<8x1xf32>
    %241 = vector.broadcast %240 : vector<8x1xf32> to vector<8x8xf32>
    %242 = arith.subf %238, %241 : vector<8x8xf32>
    %243 = math.exp %242 : vector<8x8xf32>
    %cst_100 = arith.constant dense<0.000000e+00> : vector<8xf32>
    %244 = vector.multi_reduction <add>, %243, %cst_100 [1] : vector<8x8xf32> to vector<8xf32>
    %245 = vector.shape_cast %244 : vector<8xf32> to vector<8x1xf32>
    %246 = vector.broadcast %245 : vector<8x1xf32> to vector<8x8xf32>
    %247 = arith.divf %243, %246 : vector<8x8xf32>
    %cst_101 = arith.constant dense<0.000000e+00> : vector<8x16xf32>
    %248 = tpu.matmul %247, %235, %cst_101 {dimension_numbers = #tpu.dot_dimension_numbers<[1], [0], [0], [1], [0, 0, 1, 1], [], []>} : vector<8x8xf32>, vector<8x16xf32>, vector<8x16xf32> -> vector<8x16xf32>
    %249 = vector.extract_strided_slice %200 {offsets = [0, 48], sizes = [8, 16], strides = [1, 1]} : vector<8x192xf32> to vector<8x16xf32>
    %250 = vector.extract_strided_slice %200 {offsets = [0, 112], sizes = [8, 16], strides = [1, 1]} : vector<8x192xf32> to vector<8x16xf32>
    %251 = vector.extract_strided_slice %200 {offsets = [0, 176], sizes = [8, 16], strides = [1, 1]} : vector<8x192xf32> to vector<8x16xf32>
    %cst_102 = arith.constant dense<0.000000e+00> : vector<8x8xf32>
    %252 = tpu.matmul %249, %250, %cst_102 {dimension_numbers = #tpu.dot_dimension_numbers<[1], [1], [0], [0], [0, 0, 1, 0], [], []>} : vector<8x16xf32>, vector<8x16xf32>, vector<8x8xf32> -> vector<8x8xf32>
    %cst_103 = arith.constant -9.99999984E+17 : f32
    %253 = vector.broadcast %cst_103 : f32 to vector<8x8xf32>
    %254 = arith.select %10, %253, %252 : vector<8x8xi1>, vector<8x8xf32>
    %cst_104 = arith.constant dense<0xFF800000> : vector<8xf32>
    %255 = vector.multi_reduction <maximumf>, %254, %cst_104 [1] : vector<8x8xf32> to vector<8xf32>
    %256 = vector.shape_cast %255 : vector<8xf32> to vector<8x1xf32>
    %257 = vector.broadcast %256 : vector<8x1xf32> to vector<8x8xf32>
    %258 = arith.subf %254, %257 : vector<8x8xf32>
    %259 = math.exp %258 : vector<8x8xf32>
    %cst_105 = arith.constant dense<0.000000e+00> : vector<8xf32>
    %260 = vector.multi_reduction <add>, %259, %cst_105 [1] : vector<8x8xf32> to vector<8xf32>
    %261 = vector.shape_cast %260 : vector<8xf32> to vector<8x1xf32>
    %262 = vector.broadcast %261 : vector<8x1xf32> to vector<8x8xf32>
    %263 = arith.divf %259, %262 : vector<8x8xf32>
    %cst_106 = arith.constant dense<0.000000e+00> : vector<8x16xf32>
    %264 = tpu.matmul %263, %251, %cst_106 {dimension_numbers = #tpu.dot_dimension_numbers<[1], [0], [0], [1], [0, 0, 1, 1], [], []>} : vector<8x8xf32>, vector<8x16xf32>, vector<8x16xf32> -> vector<8x16xf32>
    %265 = tpu.concatenate %216, %232, %248, %264 in 1 : vector<8x16xf32>, vector<8x16xf32>, vector<8x16xf32>, vector<8x16xf32> -> vector<8x64xf32>
    %cst_107 = arith.constant dense<0.000000e+00> : vector<8x64xf32>
    %266 = tpu.matmul %265, %195, %cst_107 {dimension_numbers = #tpu.dot_dimension_numbers<[1], [0], [0], [1], [0, 0, 1, 1], [], []>} : vector<8x64xf32>, vector<64x64xf32>, vector<8x64xf32> -> vector<8x64xf32>
    %267 = vector.broadcast %197 : vector<1x64xf32> to vector<8x64xf32>
    %268 = arith.addf %266, %267 : vector<8x64xf32>
    %269 = arith.addf %268, %161 : vector<8x64xf32>
    %270 = vector.extract_strided_slice %163 {offsets = [2, 0], sizes = [1, 64], strides = [1, 1]} : vector<4x64xf32> to vector<1x64xf32>
    %271 = vector.shape_cast %270 : vector<1x64xf32> to vector<64xf32>
    %272 = vector.extract_strided_slice %163 {offsets = [3, 0], sizes = [1, 64], strides = [1, 1]} : vector<4x64xf32> to vector<1x64xf32>
    %273 = vector.shape_cast %272 : vector<1x64xf32> to vector<64xf32>
    %cst_108 = arith.constant dense<0.000000e+00> : vector<8xf32>
    %274 = vector.multi_reduction <add>, %269, %cst_108 [1] : vector<8x64xf32> to vector<8xf32>
    %275 = vector.shape_cast %274 : vector<8xf32> to vector<8x1xf32>
    %cst_109 = arith.constant 6.400000e+01 : f32
    %276 = vector.broadcast %cst_109 : f32 to vector<8x1xf32>
    %277 = arith.divf %275, %276 : vector<8x1xf32>
    %278 = vector.broadcast %277 : vector<8x1xf32> to vector<8x64xf32>
    %279 = arith.subf %269, %278 : vector<8x64xf32>
    %280 = arith.mulf %279, %279 : vector<8x64xf32>
    %cst_110 = arith.constant dense<0.000000e+00> : vector<8xf32>
    %281 = vector.multi_reduction <add>, %280, %cst_110 [1] : vector<8x64xf32> to vector<8xf32>
    %282 = vector.shape_cast %281 : vector<8xf32> to vector<8x1xf32>
    %cst_111 = arith.constant 6.400000e+01 : f32
    %283 = vector.broadcast %cst_111 : f32 to vector<8x1xf32>
    %284 = arith.divf %282, %283 : vector<8x1xf32>
    %cst_112 = arith.constant 9.99999997E-7 : f32
    %285 = vector.broadcast %cst_112 : f32 to vector<8x1xf32>
    %286 = arith.addf %284, %285 : vector<8x1xf32>
    %287 = math.rsqrt %286 : vector<8x1xf32>
    %288 = vector.broadcast %287 : vector<8x1xf32> to vector<8x64xf32>
    %289 = arith.mulf %279, %288 : vector<8x64xf32>
    %290 = vector.shape_cast %271 : vector<64xf32> to vector<1x64xf32>
    %291 = vector.broadcast %290 : vector<1x64xf32> to vector<8x64xf32>
    %292 = arith.mulf %289, %291 : vector<8x64xf32>
    %293 = vector.shape_cast %273 : vector<64xf32> to vector<1x64xf32>
    %294 = vector.broadcast %293 : vector<1x64xf32> to vector<8x64xf32>
    %295 = arith.addf %292, %294 : vector<8x64xf32>
    %c1_113 = arith.constant 1 : index
    %c0_114 = arith.constant 0 : index
    %c0_115 = arith.constant 0 : index
    %296 = vector.load %arg7[%c1_113, %c0_114, %c0_115] : memref<2x64x128xf32, #tpu.memory_space<vmem>>, vector<1x64x128xf32>
    %297 = vector.shape_cast %296 : vector<1x64x128xf32> to vector<64x128xf32>
    %cst_116 = arith.constant dense<0.000000e+00> : vector<8x128xf32>
    %298 = tpu.matmul %295, %297, %cst_116 {dimension_numbers = #tpu.dot_dimension_numbers<[1], [0], [0], [1], [0, 0, 1, 1], [], []>} : vector<8x64xf32>, vector<64x128xf32>, vector<8x128xf32> -> vector<8x128xf32>
    %c1_117 = arith.constant 1 : index
    %c0_118 = arith.constant 0 : index
    %c0_119 = arith.constant 0 : index
    %299 = vector.load %arg8[%c1_117, %c0_118, %c0_119] : memref<2x1x128xf32, #tpu.memory_space<vmem>>, vector<1x1x128xf32>
    %300 = vector.shape_cast %299 : vector<1x1x128xf32> to vector<1x128xf32>
    %301 = vector.broadcast %300 : vector<1x128xf32> to vector<8x128xf32>
    %302 = arith.addf %298, %301 : vector<8x128xf32>
    %cst_120 = arith.constant 0.000000e+00 : f32
    %303 = vector.broadcast %cst_120 : f32 to vector<8x128xf32>
    %304 = arith.maximumf %302, %303 : vector<8x128xf32>
    %c1_121 = arith.constant 1 : index
    %c0_122 = arith.constant 0 : index
    %c0_123 = arith.constant 0 : index
    %305 = vector.load %arg9[%c1_121, %c0_122, %c0_123] : memref<2x128x64xf32, #tpu.memory_space<vmem>>, vector<1x128x64xf32>
    %306 = vector.shape_cast %305 : vector<1x128x64xf32> to vector<128x64xf32>
    %cst_124 = arith.constant dense<0.000000e+00> : vector<8x64xf32>
    %307 = tpu.matmul %304, %306, %cst_124 {dimension_numbers = #tpu.dot_dimension_numbers<[1], [0], [0], [1], [0, 0, 1, 1], [], []>} : vector<8x128xf32>, vector<128x64xf32>, vector<8x64xf32> -> vector<8x64xf32>
    %c1_125 = arith.constant 1 : index
    %c0_126 = arith.constant 0 : index
    %c0_127 = arith.constant 0 : index
    %308 = vector.load %arg10[%c1_125, %c0_126, %c0_127] : memref<2x1x64xf32, #tpu.memory_space<vmem>>, vector<1x1x64xf32>
    %309 = vector.shape_cast %308 : vector<1x1x64xf32> to vector<1x64xf32>
    %310 = vector.broadcast %309 : vector<1x64xf32> to vector<8x64xf32>
    %311 = arith.addf %307, %310 : vector<8x64xf32>
    %312 = arith.addf %311, %269 : vector<8x64xf32>
    %c0_128 = arith.constant 0 : index
    %c0_129 = arith.constant 0 : index
    %313 = vector.load %arg12[%c0_128, %c0_129] : memref<2x64xf32, #tpu.memory_space<vmem>>, vector<1x64xf32>
    %314 = vector.shape_cast %313 : vector<1x64xf32> to vector<64xf32>
    %c1_130 = arith.constant 1 : index
    %c0_131 = arith.constant 0 : index
    %315 = vector.load %arg12[%c1_130, %c0_131] : memref<2x64xf32, #tpu.memory_space<vmem>>, vector<1x64xf32>
    %316 = vector.shape_cast %315 : vector<1x64xf32> to vector<64xf32>
    %cst_132 = arith.constant dense<0.000000e+00> : vector<8xf32>
    %317 = vector.multi_reduction <add>, %312, %cst_132 [1] : vector<8x64xf32> to vector<8xf32>
    %318 = vector.shape_cast %317 : vector<8xf32> to vector<8x1xf32>
    %cst_133 = arith.constant 6.400000e+01 : f32
    %319 = vector.broadcast %cst_133 : f32 to vector<8x1xf32>
    %320 = arith.divf %318, %319 : vector<8x1xf32>
    %321 = vector.broadcast %320 : vector<8x1xf32> to vector<8x64xf32>
    %322 = arith.subf %312, %321 : vector<8x64xf32>
    %323 = arith.mulf %322, %322 : vector<8x64xf32>
    %cst_134 = arith.constant dense<0.000000e+00> : vector<8xf32>
    %324 = vector.multi_reduction <add>, %323, %cst_134 [1] : vector<8x64xf32> to vector<8xf32>
    %325 = vector.shape_cast %324 : vector<8xf32> to vector<8x1xf32>
    %cst_135 = arith.constant 6.400000e+01 : f32
    %326 = vector.broadcast %cst_135 : f32 to vector<8x1xf32>
    %327 = arith.divf %325, %326 : vector<8x1xf32>
    %cst_136 = arith.constant 9.99999997E-7 : f32
    %328 = vector.broadcast %cst_136 : f32 to vector<8x1xf32>
    %329 = arith.addf %327, %328 : vector<8x1xf32>
    %330 = math.rsqrt %329 : vector<8x1xf32>
    %331 = vector.broadcast %330 : vector<8x1xf32> to vector<8x64xf32>
    %332 = arith.mulf %322, %331 : vector<8x64xf32>
    %333 = vector.shape_cast %314 : vector<64xf32> to vector<1x64xf32>
    %334 = vector.broadcast %333 : vector<1x64xf32> to vector<8x64xf32>
    %335 = arith.mulf %332, %334 : vector<8x64xf32>
    %336 = vector.shape_cast %316 : vector<64xf32> to vector<1x64xf32>
    %337 = vector.broadcast %336 : vector<1x64xf32> to vector<8x64xf32>
    %338 = arith.addf %335, %337 : vector<8x64xf32>
    %c0_137 = arith.constant 0 : index
    %c0_138 = arith.constant 0 : index
    %339 = vector.load %arg13[%c0_137, %c0_138] : memref<64x32xf32, #tpu.memory_space<vmem>>, vector<64x32xf32>
    %cst_139 = arith.constant dense<0.000000e+00> : vector<8x32xf32>
    %340 = tpu.matmul %338, %339, %cst_139 {dimension_numbers = #tpu.dot_dimension_numbers<[1], [0], [0], [1], [0, 0, 1, 1], [], []>} : vector<8x64xf32>, vector<64x32xf32>, vector<8x32xf32> -> vector<8x32xf32>
    %c0_140 = arith.constant 0 : index
    %c0_141 = arith.constant 0 : index
    %c0_142 = arith.constant 0 : index
    %341 = vector.load %arg14[%c0_140, %c0_141, %c0_142] : memref<1x8x32xf32, #tpu.memory_space<vmem>>, vector<1x8x32xf32>
    %342 = vector.shape_cast %341 : vector<1x8x32xf32> to vector<8x32xf32>
    %343 = vector.shape_cast %340 : vector<8x32xf32> to vector<1x8x32xf32>
    tpu.vector_store %arg14[%c0_140, %c0_141, %c0_142], %343 {strides = array<i32>} : memref<1x8x32xf32, #tpu.memory_space<vmem>>, vector<1x8x32xf32>,
    %c0_143 = arith.constant 0 : index
    %c0_144 = arith.constant 0 : index
    %c0_145 = arith.constant 0 : index
    %344 = vector.load %arg15[%c0_143, %c0_144, %c0_145] : memref<1x8x8xf32, #tpu.memory_space<vmem>>, vector<1x8x8xf32>
    %345 = vector.shape_cast %344 : vector<1x8x8xf32> to vector<8x8xf32>
    %346 = vector.shape_cast %215 : vector<8x8xf32> to vector<1x8x8xf32>
    tpu.vector_store %arg15[%c0_143, %c0_144, %c0_145], %346 {strides = array<i32>} : memref<1x8x8xf32, #tpu.memory_space<vmem>>, vector<1x8x8xf32>,
    return
  }
  func.func @transform_0(%arg0: i32) -> (i32, i32, i32) {
    %c0_i32 = arith.constant 0 : i32
    %c0_i32_0 = arith.constant 0 : i32
    %c0_i32_1 = arith.constant 0 : i32
    return %arg0, %c0_i32, %c0_i32_0 : i32, i32, i32
  }
  func.func @transform_1(%arg0: i32) -> (i32, i32, i32) {
    %c0_i32 = arith.constant 0 : i32
    %c0_i32_0 = arith.constant 0 : i32
    %c0_i32_1 = arith.constant 0 : i32
    return %arg0, %c0_i32, %c0_i32_0 : i32, i32, i32
  }
  func.func @transform_2(%arg0: i32) -> (i32, i32, i32) {
    %c0_i32 = arith.constant 0 : i32
    %c0_i32_0 = arith.constant 0 : i32
    %c0_i32_1 = arith.constant 0 : i32
    %c0_i32_2 = arith.constant 0 : i32
    return %c0_i32, %c0_i32_0, %c0_i32_1 : i32, i32, i32
  }
  func.func @transform_3(%arg0: i32) -> (i32, i32, i32) {
    %c0_i32 = arith.constant 0 : i32
    %c0_i32_0 = arith.constant 0 : i32
    %c0_i32_1 = arith.constant 0 : i32
    %c0_i32_2 = arith.constant 0 : i32
    return %c0_i32, %c0_i32_0, %c0_i32_1 : i32, i32, i32
  }
  func.func @transform_4(%arg0: i32) -> (i32, i32, i32) {
    %c0_i32 = arith.constant 0 : i32
    %c0_i32_0 = arith.constant 0 : i32
    %c0_i32_1 = arith.constant 0 : i32
    %c0_i32_2 = arith.constant 0 : i32
    return %c0_i32, %c0_i32_0, %c0_i32_1 : i32, i32, i32
  }
  func.func @transform_5(%arg0: i32) -> (i32, i32, i32) {
    %c0_i32 = arith.constant 0 : i32
    %c0_i32_0 = arith.constant 0 : i32
    %c0_i32_1 = arith.constant 0 : i32
    %c0_i32_2 = arith.constant 0 : i32
    return %c0_i32, %c0_i32_0, %c0_i32_1 : i32, i32, i32
  }
  func.func @transform_6(%arg0: i32) -> (i32, i32, i32) {
    %c0_i32 = arith.constant 0 : i32
    %c0_i32_0 = arith.constant 0 : i32
    %c0_i32_1 = arith.constant 0 : i32
    %c0_i32_2 = arith.constant 0 : i32
    return %c0_i32, %c0_i32_0, %c0_i32_1 : i32, i32, i32
  }
  func.func @transform_7(%arg0: i32) -> (i32, i32, i32) {
    %c0_i32 = arith.constant 0 : i32
    %c0_i32_0 = arith.constant 0 : i32
    %c0_i32_1 = arith.constant 0 : i32
    %c0_i32_2 = arith.constant 0 : i32
    return %c0_i32, %c0_i32_0, %c0_i32_1 : i32, i32, i32
  }
  func.func @transform_8(%arg0: i32) -> (i32, i32, i32) {
    %c0_i32 = arith.constant 0 : i32
    %c0_i32_0 = arith.constant 0 : i32
    %c0_i32_1 = arith.constant 0 : i32
    %c0_i32_2 = arith.constant 0 : i32
    return %c0_i32, %c0_i32_0, %c0_i32_1 : i32, i32, i32
  }
  func.func @transform_9(%arg0: i32) -> (i32, i32, i32) {
    %c0_i32 = arith.constant 0 : i32
    %c0_i32_0 = arith.constant 0 : i32
    %c0_i32_1 = arith.constant 0 : i32
    %c0_i32_2 = arith.constant 0 : i32
    return %c0_i32, %c0_i32_0, %c0_i32_1 : i32, i32, i32
  }
  func.func @transform_10(%arg0: i32) -> (i32, i32, i32) {
    %c0_i32 = arith.constant 0 : i32
    %c0_i32_0 = arith.constant 0 : i32
    %c0_i32_1 = arith.constant 0 : i32
    %c0_i32_2 = arith.constant 0 : i32
    return %c0_i32, %c0_i32_0, %c0_i32_1 : i32, i32, i32
  }
  func.func @transform_11(%arg0: i32) -> (i32, i32) {
    %c0_i32 = arith.constant 0 : i32
    %c0_i32_0 = arith.constant 0 : i32
    %c0_i32_1 = arith.constant 0 : i32
    return %c0_i32, %c0_i32_0 : i32, i32
  }
  func.func @transform_12(%arg0: i32) -> (i32, i32) {
    %c0_i32 = arith.constant 0 : i32
    %c0_i32_0 = arith.constant 0 : i32
    %c0_i32_1 = arith.constant 0 : i32
    return %c0_i32, %c0_i32_0 : i32, i32
  }
  func.func @transform_13(%arg0: i32) -> (i32, i32, i32) {
    %c0_i32 = arith.constant 0 : i32
    %c0_i32_0 = arith.constant 0 : i32
    %c0_i32_1 = arith.constant 0 : i32
    return %arg0, %c0_i32, %c0_i32_0 : i32, i32, i32
  }
  func.func @transform_14(%arg0: i32) -> (i32, i32, i32) {
    %c0_i32 = arith.constant 0 : i32
    %c0_i32_0 = arith.constant 0 : i32
    %c0_i32_1 = arith.constant 0 : i32
    return %arg0, %c0_i32, %c0_i32_0 : i32, i32, i32
  }
}

module attributes {stable_mosaic.version = 11 : i64} {
  func.func @_encoder_kernel(%arg0: i32, %arg1: memref<1x8x64xf32, #tpu.memory_space<vmem>>, %arg2: memref<1x1x8xf32, #tpu.memory_space<vmem>>, %arg3: memref<2x64x192xf32, #tpu.memory_space<vmem>>, %arg4: memref<2x1x192xf32, #tpu.memory_space<vmem>>, %arg5: memref<2x64x64xf32, #tpu.memory_space<vmem>>, %arg6: memref<2x1x64xf32, #tpu.memory_space<vmem>>, %arg7: memref<2x64x128xf32, #tpu.memory_space<vmem>>, %arg8: memref<2x1x128xf32, #tpu.memory_space<vmem>>, %arg9: memref<2x128x64xf32, #tpu.memory_space<vmem>>, %arg10: memref<2x1x64xf32, #tpu.memory_space<vmem>>, %arg11: memref<2x6x64xf32, #tpu.memory_space<vmem>>, %arg12: memref<2x64xf32, #tpu.memory_space<vmem>>, %arg13: memref<1x8x64xf32, #tpu.memory_space<vmem>>) attributes {dimension_semantics = [#tpu.dimension_semantics<parallel>], iteration_bounds = array<i64: 2>, scalar_prefetch = 0 : i64, scratch_operands = 0 : i64, tpu.core_type = #tpu.core_type<tc>, window_params = [{transform_indices = @transform_0, window_bounds = array<i64: 1, 8, 64>}, {transform_indices = @transform_1, window_bounds = array<i64: 1, 1, 8>}, {pipeline_mode = #tpu.pipeline_mode<synchronous>, transform_indices = @transform_2, window_bounds = array<i64: 2, 64, 192>}, {pipeline_mode = #tpu.pipeline_mode<synchronous>, transform_indices = @transform_3, window_bounds = array<i64: 2, 1, 192>}, {pipeline_mode = #tpu.pipeline_mode<synchronous>, transform_indices = @transform_4, window_bounds = array<i64: 2, 64, 64>}, {pipeline_mode = #tpu.pipeline_mode<synchronous>, transform_indices = @transform_5, window_bounds = array<i64: 2, 1, 64>}, {pipeline_mode = #tpu.pipeline_mode<synchronous>, transform_indices = @transform_6, window_bounds = array<i64: 2, 64, 128>}, {pipeline_mode = #tpu.pipeline_mode<synchronous>, transform_indices = @transform_7, window_bounds = array<i64: 2, 1, 128>}, {pipeline_mode = #tpu.pipeline_mode<synchronous>, transform_indices = @transform_8, window_bounds = array<i64: 2, 128, 64>}, {pipeline_mode = #tpu.pipeline_mode<synchronous>, transform_indices = @transform_9, window_bounds = array<i64: 2, 1, 64>}, {pipeline_mode = #tpu.pipeline_mode<synchronous>, transform_indices = @transform_10, window_bounds = array<i64: 2, 6, 64>}, {pipeline_mode = #tpu.pipeline_mode<synchronous>, transform_indices = @transform_11, window_bounds = array<i64: 2, 64>}, {transform_indices = @transform_12, window_bounds = array<i64: 1, 8, 64>}]} {
    %c0 = arith.constant 0 : index
    %c0_0 = arith.constant 0 : index
    %c0_1 = arith.constant 0 : index
    %0 = vector.load %arg1[%c0, %c0_0, %c0_1] : memref<1x8x64xf32, #tpu.memory_space<vmem>>, vector<1x8x64xf32>
    %1 = vector.shape_cast %0 : vector<1x8x64xf32> to vector<8x64xf32>
    %c0_2 = arith.constant 0 : index
    %c0_3 = arith.constant 0 : index
    %c0_4 = arith.constant 0 : index
    %2 = vector.load %arg2[%c0_2, %c0_3, %c0_4] : memref<1x1x8xf32, #tpu.memory_space<vmem>>, vector<1x1x8xf32>
    %3 = vector.shape_cast %2 : vector<1x1x8xf32> to vector<1x8xf32>
    %cst = arith.constant 5.000000e-01 : f32
    %4 = vector.broadcast %cst : f32 to vector<1x8xf32>
    %5 = arith.cmpf ogt, %3, %4 : vector<1x8xf32>
    %c0_5 = arith.constant 0 : index
    %c0_6 = arith.constant 0 : index
    %c0_7 = arith.constant 0 : index
    %6 = vector.load %arg11[%c0_5, %c0_6, %c0_7] : memref<2x6x64xf32, #tpu.memory_space<vmem>>, vector<1x6x64xf32>
    %7 = vector.shape_cast %6 : vector<1x6x64xf32> to vector<6x64xf32>
    %8 = vector.extract_strided_slice %7 {offsets = [0, 0], sizes = [1, 64], strides = [1, 1]} : vector<6x64xf32> to vector<1x64xf32>
    %9 = vector.shape_cast %8 : vector<1x64xf32> to vector<64xf32>
    %10 = vector.extract_strided_slice %7 {offsets = [1, 0], sizes = [1, 64], strides = [1, 1]} : vector<6x64xf32> to vector<1x64xf32>
    %11 = vector.shape_cast %10 : vector<1x64xf32> to vector<64xf32>
    %cst_8 = arith.constant dense<0.000000e+00> : vector<8xf32>
    %12 = vector.multi_reduction <add>, %1, %cst_8 [1] : vector<8x64xf32> to vector<8xf32>
    %13 = vector.shape_cast %12 : vector<8xf32> to vector<8x1xf32>
    %cst_9 = arith.constant 6.400000e+01 : f32
    %14 = vector.broadcast %cst_9 : f32 to vector<8x1xf32>
    %15 = arith.divf %13, %14 : vector<8x1xf32>
    %16 = vector.broadcast %15 : vector<8x1xf32> to vector<8x64xf32>
    %17 = arith.subf %1, %16 : vector<8x64xf32>
    %18 = arith.mulf %17, %17 : vector<8x64xf32>
    %cst_10 = arith.constant dense<0.000000e+00> : vector<8xf32>
    %19 = vector.multi_reduction <add>, %18, %cst_10 [1] : vector<8x64xf32> to vector<8xf32>
    %20 = vector.shape_cast %19 : vector<8xf32> to vector<8x1xf32>
    %cst_11 = arith.constant 6.400000e+01 : f32
    %21 = vector.broadcast %cst_11 : f32 to vector<8x1xf32>
    %22 = arith.divf %20, %21 : vector<8x1xf32>
    %cst_12 = arith.constant 9.99999997E-7 : f32
    %23 = vector.broadcast %cst_12 : f32 to vector<8x1xf32>
    %24 = arith.addf %22, %23 : vector<8x1xf32>
    %25 = math.rsqrt %24 : vector<8x1xf32>
    %26 = vector.broadcast %25 : vector<8x1xf32> to vector<8x64xf32>
    %27 = arith.mulf %17, %26 : vector<8x64xf32>
    %28 = vector.shape_cast %9 : vector<64xf32> to vector<1x64xf32>
    %29 = vector.broadcast %28 : vector<1x64xf32> to vector<8x64xf32>
    %30 = arith.mulf %27, %29 : vector<8x64xf32>
    %31 = vector.shape_cast %11 : vector<64xf32> to vector<1x64xf32>
    %32 = vector.broadcast %31 : vector<1x64xf32> to vector<8x64xf32>
    %33 = arith.addf %30, %32 : vector<8x64xf32>
    %c0_13 = arith.constant 0 : index
    %c0_14 = arith.constant 0 : index
    %c0_15 = arith.constant 0 : index
    %34 = vector.load %arg3[%c0_13, %c0_14, %c0_15] : memref<2x64x192xf32, #tpu.memory_space<vmem>>, vector<1x64x192xf32>
    %35 = vector.shape_cast %34 : vector<1x64x192xf32> to vector<64x192xf32>
    %c0_16 = arith.constant 0 : index
    %c0_17 = arith.constant 0 : index
    %c0_18 = arith.constant 0 : index
    %36 = vector.load %arg4[%c0_16, %c0_17, %c0_18] : memref<2x1x192xf32, #tpu.memory_space<vmem>>, vector<1x1x192xf32>
    %37 = vector.shape_cast %36 : vector<1x1x192xf32> to vector<1x192xf32>
    %c0_19 = arith.constant 0 : index
    %c0_20 = arith.constant 0 : index
    %c0_21 = arith.constant 0 : index
    %38 = vector.load %arg5[%c0_19, %c0_20, %c0_21] : memref<2x64x64xf32, #tpu.memory_space<vmem>>, vector<1x64x64xf32>
    %39 = vector.shape_cast %38 : vector<1x64x64xf32> to vector<64x64xf32>
    %c0_22 = arith.constant 0 : index
    %c0_23 = arith.constant 0 : index
    %c0_24 = arith.constant 0 : index
    %40 = vector.load %arg6[%c0_22, %c0_23, %c0_24] : memref<2x1x64xf32, #tpu.memory_space<vmem>>, vector<1x1x64xf32>
    %41 = vector.shape_cast %40 : vector<1x1x64xf32> to vector<1x64xf32>
    %cst_25 = arith.constant dense<0.000000e+00> : vector<8x192xf32>
    %42 = tpu.matmul %33, %35, %cst_25 {dimension_numbers = #tpu.dot_dimension_numbers<[1], [0], [0], [1], [0, 0, 1, 1], [], []>} : vector<8x64xf32>, vector<64x192xf32>, vector<8x192xf32> -> vector<8x192xf32>
    %43 = vector.broadcast %37 : vector<1x192xf32> to vector<8x192xf32>
    %44 = arith.addf %42, %43 : vector<8x192xf32>
    %45 = vector.extract_strided_slice %44 {offsets = [0, 0], sizes = [8, 16], strides = [1, 1]} : vector<8x192xf32> to vector<8x16xf32>
    %46 = vector.extract_strided_slice %44 {offsets = [0, 64], sizes = [8, 16], strides = [1, 1]} : vector<8x192xf32> to vector<8x16xf32>
    %47 = vector.extract_strided_slice %44 {offsets = [0, 128], sizes = [8, 16], strides = [1, 1]} : vector<8x192xf32> to vector<8x16xf32>
    %cst_26 = arith.constant dense<0.000000e+00> : vector<8x8xf32>
    %48 = tpu.matmul %45, %46, %cst_26 {dimension_numbers = #tpu.dot_dimension_numbers<[1], [1], [0], [0], [0, 0, 1, 0], [], []>} : vector<8x16xf32>, vector<8x16xf32>, vector<8x8xf32> -> vector<8x8xf32>
    %cst_27 = arith.constant -9.99999984E+17 : f32
    %49 = vector.shape_cast %5 : vector<1x8xi1> to vector<1x8xi1>
    %50 = vector.broadcast %49 : vector<1x8xi1> to vector<8x8xi1>
    %51 = vector.broadcast %cst_27 : f32 to vector<8x8xf32>
    %52 = arith.select %50, %51, %48 : vector<8x8xi1>, vector<8x8xf32>
    %cst_28 = arith.constant dense<0xFF800000> : vector<8xf32>
    %53 = vector.multi_reduction <maximumf>, %52, %cst_28 [1] : vector<8x8xf32> to vector<8xf32>
    %54 = vector.shape_cast %53 : vector<8xf32> to vector<8x1xf32>
    %55 = vector.broadcast %54 : vector<8x1xf32> to vector<8x8xf32>
    %56 = arith.subf %52, %55 : vector<8x8xf32>
    %57 = math.exp %56 : vector<8x8xf32>
    %cst_29 = arith.constant dense<0.000000e+00> : vector<8xf32>
    %58 = vector.multi_reduction <add>, %57, %cst_29 [1] : vector<8x8xf32> to vector<8xf32>
    %59 = vector.shape_cast %58 : vector<8xf32> to vector<8x1xf32>
    %60 = vector.broadcast %59 : vector<8x1xf32> to vector<8x8xf32>
    %61 = arith.divf %57, %60 : vector<8x8xf32>
    %cst_30 = arith.constant dense<0.000000e+00> : vector<8x16xf32>
    %62 = tpu.matmul %61, %47, %cst_30 {dimension_numbers = #tpu.dot_dimension_numbers<[1], [0], [0], [1], [0, 0, 1, 1], [], []>} : vector<8x8xf32>, vector<8x16xf32>, vector<8x16xf32> -> vector<8x16xf32>
    %63 = vector.extract_strided_slice %44 {offsets = [0, 16], sizes = [8, 16], strides = [1, 1]} : vector<8x192xf32> to vector<8x16xf32>
    %64 = vector.extract_strided_slice %44 {offsets = [0, 80], sizes = [8, 16], strides = [1, 1]} : vector<8x192xf32> to vector<8x16xf32>
    %65 = vector.extract_strided_slice %44 {offsets = [0, 144], sizes = [8, 16], strides = [1, 1]} : vector<8x192xf32> to vector<8x16xf32>
    %cst_31 = arith.constant dense<0.000000e+00> : vector<8x8xf32>
    %66 = tpu.matmul %63, %64, %cst_31 {dimension_numbers = #tpu.dot_dimension_numbers<[1], [1], [0], [0], [0, 0, 1, 0], [], []>} : vector<8x16xf32>, vector<8x16xf32>, vector<8x8xf32> -> vector<8x8xf32>
    %cst_32 = arith.constant -9.99999984E+17 : f32
    %67 = vector.shape_cast %5 : vector<1x8xi1> to vector<1x8xi1>
    %68 = vector.broadcast %67 : vector<1x8xi1> to vector<8x8xi1>
    %69 = vector.broadcast %cst_32 : f32 to vector<8x8xf32>
    %70 = arith.select %68, %69, %66 : vector<8x8xi1>, vector<8x8xf32>
    %cst_33 = arith.constant dense<0xFF800000> : vector<8xf32>
    %71 = vector.multi_reduction <maximumf>, %70, %cst_33 [1] : vector<8x8xf32> to vector<8xf32>
    %72 = vector.shape_cast %71 : vector<8xf32> to vector<8x1xf32>
    %73 = vector.broadcast %72 : vector<8x1xf32> to vector<8x8xf32>
    %74 = arith.subf %70, %73 : vector<8x8xf32>
    %75 = math.exp %74 : vector<8x8xf32>
    %cst_34 = arith.constant dense<0.000000e+00> : vector<8xf32>
    %76 = vector.multi_reduction <add>, %75, %cst_34 [1] : vector<8x8xf32> to vector<8xf32>
    %77 = vector.shape_cast %76 : vector<8xf32> to vector<8x1xf32>
    %78 = vector.broadcast %77 : vector<8x1xf32> to vector<8x8xf32>
    %79 = arith.divf %75, %78 : vector<8x8xf32>
    %cst_35 = arith.constant dense<0.000000e+00> : vector<8x16xf32>
    %80 = tpu.matmul %79, %65, %cst_35 {dimension_numbers = #tpu.dot_dimension_numbers<[1], [0], [0], [1], [0, 0, 1, 1], [], []>} : vector<8x8xf32>, vector<8x16xf32>, vector<8x16xf32> -> vector<8x16xf32>
    %81 = vector.extract_strided_slice %44 {offsets = [0, 32], sizes = [8, 16], strides = [1, 1]} : vector<8x192xf32> to vector<8x16xf32>
    %82 = vector.extract_strided_slice %44 {offsets = [0, 96], sizes = [8, 16], strides = [1, 1]} : vector<8x192xf32> to vector<8x16xf32>
    %83 = vector.extract_strided_slice %44 {offsets = [0, 160], sizes = [8, 16], strides = [1, 1]} : vector<8x192xf32> to vector<8x16xf32>
    %cst_36 = arith.constant dense<0.000000e+00> : vector<8x8xf32>
    %84 = tpu.matmul %81, %82, %cst_36 {dimension_numbers = #tpu.dot_dimension_numbers<[1], [1], [0], [0], [0, 0, 1, 0], [], []>} : vector<8x16xf32>, vector<8x16xf32>, vector<8x8xf32> -> vector<8x8xf32>
    %cst_37 = arith.constant -9.99999984E+17 : f32
    %85 = vector.shape_cast %5 : vector<1x8xi1> to vector<1x8xi1>
    %86 = vector.broadcast %85 : vector<1x8xi1> to vector<8x8xi1>
    %87 = vector.broadcast %cst_37 : f32 to vector<8x8xf32>
    %88 = arith.select %86, %87, %84 : vector<8x8xi1>, vector<8x8xf32>
    %cst_38 = arith.constant dense<0xFF800000> : vector<8xf32>
    %89 = vector.multi_reduction <maximumf>, %88, %cst_38 [1] : vector<8x8xf32> to vector<8xf32>
    %90 = vector.shape_cast %89 : vector<8xf32> to vector<8x1xf32>
    %91 = vector.broadcast %90 : vector<8x1xf32> to vector<8x8xf32>
    %92 = arith.subf %88, %91 : vector<8x8xf32>
    %93 = math.exp %92 : vector<8x8xf32>
    %cst_39 = arith.constant dense<0.000000e+00> : vector<8xf32>
    %94 = vector.multi_reduction <add>, %93, %cst_39 [1] : vector<8x8xf32> to vector<8xf32>
    %95 = vector.shape_cast %94 : vector<8xf32> to vector<8x1xf32>
    %96 = vector.broadcast %95 : vector<8x1xf32> to vector<8x8xf32>
    %97 = arith.divf %93, %96 : vector<8x8xf32>
    %cst_40 = arith.constant dense<0.000000e+00> : vector<8x16xf32>
    %98 = tpu.matmul %97, %83, %cst_40 {dimension_numbers = #tpu.dot_dimension_numbers<[1], [0], [0], [1], [0, 0, 1, 1], [], []>} : vector<8x8xf32>, vector<8x16xf32>, vector<8x16xf32> -> vector<8x16xf32>
    %99 = vector.extract_strided_slice %44 {offsets = [0, 48], sizes = [8, 16], strides = [1, 1]} : vector<8x192xf32> to vector<8x16xf32>
    %100 = vector.extract_strided_slice %44 {offsets = [0, 112], sizes = [8, 16], strides = [1, 1]} : vector<8x192xf32> to vector<8x16xf32>
    %101 = vector.extract_strided_slice %44 {offsets = [0, 176], sizes = [8, 16], strides = [1, 1]} : vector<8x192xf32> to vector<8x16xf32>
    %cst_41 = arith.constant dense<0.000000e+00> : vector<8x8xf32>
    %102 = tpu.matmul %99, %100, %cst_41 {dimension_numbers = #tpu.dot_dimension_numbers<[1], [1], [0], [0], [0, 0, 1, 0], [], []>} : vector<8x16xf32>, vector<8x16xf32>, vector<8x8xf32> -> vector<8x8xf32>
    %cst_42 = arith.constant -9.99999984E+17 : f32
    %103 = vector.shape_cast %5 : vector<1x8xi1> to vector<1x8xi1>
    %104 = vector.broadcast %103 : vector<1x8xi1> to vector<8x8xi1>
    %105 = vector.broadcast %cst_42 : f32 to vector<8x8xf32>
    %106 = arith.select %104, %105, %102 : vector<8x8xi1>, vector<8x8xf32>
    %cst_43 = arith.constant dense<0xFF800000> : vector<8xf32>
    %107 = vector.multi_reduction <maximumf>, %106, %cst_43 [1] : vector<8x8xf32> to vector<8xf32>
    %108 = vector.shape_cast %107 : vector<8xf32> to vector<8x1xf32>
    %109 = vector.broadcast %108 : vector<8x1xf32> to vector<8x8xf32>
    %110 = arith.subf %106, %109 : vector<8x8xf32>
    %111 = math.exp %110 : vector<8x8xf32>
    %cst_44 = arith.constant dense<0.000000e+00> : vector<8xf32>
    %112 = vector.multi_reduction <add>, %111, %cst_44 [1] : vector<8x8xf32> to vector<8xf32>
    %113 = vector.shape_cast %112 : vector<8xf32> to vector<8x1xf32>
    %114 = vector.broadcast %113 : vector<8x1xf32> to vector<8x8xf32>
    %115 = arith.divf %111, %114 : vector<8x8xf32>
    %cst_45 = arith.constant dense<0.000000e+00> : vector<8x16xf32>
    %116 = tpu.matmul %115, %101, %cst_45 {dimension_numbers = #tpu.dot_dimension_numbers<[1], [0], [0], [1], [0, 0, 1, 1], [], []>} : vector<8x8xf32>, vector<8x16xf32>, vector<8x16xf32> -> vector<8x16xf32>
    %117 = tpu.concatenate %62, %80, %98, %116 in 1 : vector<8x16xf32>, vector<8x16xf32>, vector<8x16xf32>, vector<8x16xf32> -> vector<8x64xf32>
    %cst_46 = arith.constant dense<0.000000e+00> : vector<8x64xf32>
    %118 = tpu.matmul %117, %39, %cst_46 {dimension_numbers = #tpu.dot_dimension_numbers<[1], [0], [0], [1], [0, 0, 1, 1], [], []>} : vector<8x64xf32>, vector<64x64xf32>, vector<8x64xf32> -> vector<8x64xf32>
    %119 = vector.broadcast %41 : vector<1x64xf32> to vector<8x64xf32>
    %120 = arith.addf %118, %119 : vector<8x64xf32>
    %121 = arith.addf %120, %1 : vector<8x64xf32>
    %122 = vector.extract_strided_slice %7 {offsets = [2, 0], sizes = [1, 64], strides = [1, 1]} : vector<6x64xf32> to vector<1x64xf32>
    %123 = vector.shape_cast %122 : vector<1x64xf32> to vector<64xf32>
    %124 = vector.extract_strided_slice %7 {offsets = [3, 0], sizes = [1, 64], strides = [1, 1]} : vector<6x64xf32> to vector<1x64xf32>
    %125 = vector.shape_cast %124 : vector<1x64xf32> to vector<64xf32>
    %cst_47 = arith.constant dense<0.000000e+00> : vector<8xf32>
    %126 = vector.multi_reduction <add>, %121, %cst_47 [1] : vector<8x64xf32> to vector<8xf32>
    %127 = vector.shape_cast %126 : vector<8xf32> to vector<8x1xf32>
    %cst_48 = arith.constant 6.400000e+01 : f32
    %128 = vector.broadcast %cst_48 : f32 to vector<8x1xf32>
    %129 = arith.divf %127, %128 : vector<8x1xf32>
    %130 = vector.broadcast %129 : vector<8x1xf32> to vector<8x64xf32>
    %131 = arith.subf %121, %130 : vector<8x64xf32>
    %132 = arith.mulf %131, %131 : vector<8x64xf32>
    %cst_49 = arith.constant dense<0.000000e+00> : vector<8xf32>
    %133 = vector.multi_reduction <add>, %132, %cst_49 [1] : vector<8x64xf32> to vector<8xf32>
    %134 = vector.shape_cast %133 : vector<8xf32> to vector<8x1xf32>
    %cst_50 = arith.constant 6.400000e+01 : f32
    %135 = vector.broadcast %cst_50 : f32 to vector<8x1xf32>
    %136 = arith.divf %134, %135 : vector<8x1xf32>
    %cst_51 = arith.constant 9.99999997E-7 : f32
    %137 = vector.broadcast %cst_51 : f32 to vector<8x1xf32>
    %138 = arith.addf %136, %137 : vector<8x1xf32>
    %139 = math.rsqrt %138 : vector<8x1xf32>
    %140 = vector.broadcast %139 : vector<8x1xf32> to vector<8x64xf32>
    %141 = arith.mulf %131, %140 : vector<8x64xf32>
    %142 = vector.shape_cast %123 : vector<64xf32> to vector<1x64xf32>
    %143 = vector.broadcast %142 : vector<1x64xf32> to vector<8x64xf32>
    %144 = arith.mulf %141, %143 : vector<8x64xf32>
    %145 = vector.shape_cast %125 : vector<64xf32> to vector<1x64xf32>
    %146 = vector.broadcast %145 : vector<1x64xf32> to vector<8x64xf32>
    %147 = arith.addf %144, %146 : vector<8x64xf32>
    %148 = vector.extract_strided_slice %7 {offsets = [4, 0], sizes = [1, 64], strides = [1, 1]} : vector<6x64xf32> to vector<1x64xf32>
    %149 = vector.shape_cast %148 : vector<1x64xf32> to vector<64xf32>
    %150 = vector.extract_strided_slice %7 {offsets = [5, 0], sizes = [1, 64], strides = [1, 1]} : vector<6x64xf32> to vector<1x64xf32>
    %151 = vector.shape_cast %150 : vector<1x64xf32> to vector<64xf32>
    %cst_52 = arith.constant dense<0.000000e+00> : vector<8xf32>
    %152 = vector.multi_reduction <add>, %147, %cst_52 [1] : vector<8x64xf32> to vector<8xf32>
    %153 = vector.shape_cast %152 : vector<8xf32> to vector<8x1xf32>
    %cst_53 = arith.constant 6.400000e+01 : f32
    %154 = vector.broadcast %cst_53 : f32 to vector<8x1xf32>
    %155 = arith.divf %153, %154 : vector<8x1xf32>
    %156 = vector.broadcast %155 : vector<8x1xf32> to vector<8x64xf32>
    %157 = arith.subf %147, %156 : vector<8x64xf32>
    %158 = arith.mulf %157, %157 : vector<8x64xf32>
    %cst_54 = arith.constant dense<0.000000e+00> : vector<8xf32>
    %159 = vector.multi_reduction <add>, %158, %cst_54 [1] : vector<8x64xf32> to vector<8xf32>
    %160 = vector.shape_cast %159 : vector<8xf32> to vector<8x1xf32>
    %cst_55 = arith.constant 6.400000e+01 : f32
    %161 = vector.broadcast %cst_55 : f32 to vector<8x1xf32>
    %162 = arith.divf %160, %161 : vector<8x1xf32>
    %cst_56 = arith.constant 9.99999997E-7 : f32
    %163 = vector.broadcast %cst_56 : f32 to vector<8x1xf32>
    %164 = arith.addf %162, %163 : vector<8x1xf32>
    %165 = math.rsqrt %164 : vector<8x1xf32>
    %166 = vector.broadcast %165 : vector<8x1xf32> to vector<8x64xf32>
    %167 = arith.mulf %157, %166 : vector<8x64xf32>
    %168 = vector.shape_cast %149 : vector<64xf32> to vector<1x64xf32>
    %169 = vector.broadcast %168 : vector<1x64xf32> to vector<8x64xf32>
    %170 = arith.mulf %167, %169 : vector<8x64xf32>
    %171 = vector.shape_cast %151 : vector<64xf32> to vector<1x64xf32>
    %172 = vector.broadcast %171 : vector<1x64xf32> to vector<8x64xf32>
    %173 = arith.addf %170, %172 : vector<8x64xf32>
    %c0_57 = arith.constant 0 : index
    %c0_58 = arith.constant 0 : index
    %c0_59 = arith.constant 0 : index
    %174 = vector.load %arg7[%c0_57, %c0_58, %c0_59] : memref<2x64x128xf32, #tpu.memory_space<vmem>>, vector<1x64x128xf32>
    %175 = vector.shape_cast %174 : vector<1x64x128xf32> to vector<64x128xf32>
    %cst_60 = arith.constant dense<0.000000e+00> : vector<8x128xf32>
    %176 = tpu.matmul %173, %175, %cst_60 {dimension_numbers = #tpu.dot_dimension_numbers<[1], [0], [0], [1], [0, 0, 1, 1], [], []>} : vector<8x64xf32>, vector<64x128xf32>, vector<8x128xf32> -> vector<8x128xf32>
    %c0_61 = arith.constant 0 : index
    %c0_62 = arith.constant 0 : index
    %c0_63 = arith.constant 0 : index
    %177 = vector.load %arg8[%c0_61, %c0_62, %c0_63] : memref<2x1x128xf32, #tpu.memory_space<vmem>>, vector<1x1x128xf32>
    %178 = vector.shape_cast %177 : vector<1x1x128xf32> to vector<1x128xf32>
    %179 = vector.broadcast %178 : vector<1x128xf32> to vector<8x128xf32>
    %180 = arith.addf %176, %179 : vector<8x128xf32>
    %cst_64 = arith.constant 0.000000e+00 : f32
    %181 = vector.broadcast %cst_64 : f32 to vector<8x128xf32>
    %182 = arith.maximumf %180, %181 : vector<8x128xf32>
    %c0_65 = arith.constant 0 : index
    %c0_66 = arith.constant 0 : index
    %c0_67 = arith.constant 0 : index
    %183 = vector.load %arg9[%c0_65, %c0_66, %c0_67] : memref<2x128x64xf32, #tpu.memory_space<vmem>>, vector<1x128x64xf32>
    %184 = vector.shape_cast %183 : vector<1x128x64xf32> to vector<128x64xf32>
    %cst_68 = arith.constant dense<0.000000e+00> : vector<8x64xf32>
    %185 = tpu.matmul %182, %184, %cst_68 {dimension_numbers = #tpu.dot_dimension_numbers<[1], [0], [0], [1], [0, 0, 1, 1], [], []>} : vector<8x128xf32>, vector<128x64xf32>, vector<8x64xf32> -> vector<8x64xf32>
    %c0_69 = arith.constant 0 : index
    %c0_70 = arith.constant 0 : index
    %c0_71 = arith.constant 0 : index
    %186 = vector.load %arg10[%c0_69, %c0_70, %c0_71] : memref<2x1x64xf32, #tpu.memory_space<vmem>>, vector<1x1x64xf32>
    %187 = vector.shape_cast %186 : vector<1x1x64xf32> to vector<1x64xf32>
    %188 = vector.broadcast %187 : vector<1x64xf32> to vector<8x64xf32>
    %189 = arith.addf %185, %188 : vector<8x64xf32>
    %190 = arith.addf %189, %147 : vector<8x64xf32>
    %191 = arith.addf %190, %121 : vector<8x64xf32>
    %c1 = arith.constant 1 : index
    %c0_72 = arith.constant 0 : index
    %c0_73 = arith.constant 0 : index
    %192 = vector.load %arg11[%c1, %c0_72, %c0_73] : memref<2x6x64xf32, #tpu.memory_space<vmem>>, vector<1x6x64xf32>
    %193 = vector.shape_cast %192 : vector<1x6x64xf32> to vector<6x64xf32>
    %194 = vector.extract_strided_slice %193 {offsets = [0, 0], sizes = [1, 64], strides = [1, 1]} : vector<6x64xf32> to vector<1x64xf32>
    %195 = vector.shape_cast %194 : vector<1x64xf32> to vector<64xf32>
    %196 = vector.extract_strided_slice %193 {offsets = [1, 0], sizes = [1, 64], strides = [1, 1]} : vector<6x64xf32> to vector<1x64xf32>
    %197 = vector.shape_cast %196 : vector<1x64xf32> to vector<64xf32>
    %cst_74 = arith.constant dense<0.000000e+00> : vector<8xf32>
    %198 = vector.multi_reduction <add>, %191, %cst_74 [1] : vector<8x64xf32> to vector<8xf32>
    %199 = vector.shape_cast %198 : vector<8xf32> to vector<8x1xf32>
    %cst_75 = arith.constant 6.400000e+01 : f32
    %200 = vector.broadcast %cst_75 : f32 to vector<8x1xf32>
    %201 = arith.divf %199, %200 : vector<8x1xf32>
    %202 = vector.broadcast %201 : vector<8x1xf32> to vector<8x64xf32>
    %203 = arith.subf %191, %202 : vector<8x64xf32>
    %204 = arith.mulf %203, %203 : vector<8x64xf32>
    %cst_76 = arith.constant dense<0.000000e+00> : vector<8xf32>
    %205 = vector.multi_reduction <add>, %204, %cst_76 [1] : vector<8x64xf32> to vector<8xf32>
    %206 = vector.shape_cast %205 : vector<8xf32> to vector<8x1xf32>
    %cst_77 = arith.constant 6.400000e+01 : f32
    %207 = vector.broadcast %cst_77 : f32 to vector<8x1xf32>
    %208 = arith.divf %206, %207 : vector<8x1xf32>
    %cst_78 = arith.constant 9.99999997E-7 : f32
    %209 = vector.broadcast %cst_78 : f32 to vector<8x1xf32>
    %210 = arith.addf %208, %209 : vector<8x1xf32>
    %211 = math.rsqrt %210 : vector<8x1xf32>
    %212 = vector.broadcast %211 : vector<8x1xf32> to vector<8x64xf32>
    %213 = arith.mulf %203, %212 : vector<8x64xf32>
    %214 = vector.shape_cast %195 : vector<64xf32> to vector<1x64xf32>
    %215 = vector.broadcast %214 : vector<1x64xf32> to vector<8x64xf32>
    %216 = arith.mulf %213, %215 : vector<8x64xf32>
    %217 = vector.shape_cast %197 : vector<64xf32> to vector<1x64xf32>
    %218 = vector.broadcast %217 : vector<1x64xf32> to vector<8x64xf32>
    %219 = arith.addf %216, %218 : vector<8x64xf32>
    %c1_79 = arith.constant 1 : index
    %c0_80 = arith.constant 0 : index
    %c0_81 = arith.constant 0 : index
    %220 = vector.load %arg3[%c1_79, %c0_80, %c0_81] : memref<2x64x192xf32, #tpu.memory_space<vmem>>, vector<1x64x192xf32>
    %221 = vector.shape_cast %220 : vector<1x64x192xf32> to vector<64x192xf32>
    %c1_82 = arith.constant 1 : index
    %c0_83 = arith.constant 0 : index
    %c0_84 = arith.constant 0 : index
    %222 = vector.load %arg4[%c1_82, %c0_83, %c0_84] : memref<2x1x192xf32, #tpu.memory_space<vmem>>, vector<1x1x192xf32>
    %223 = vector.shape_cast %222 : vector<1x1x192xf32> to vector<1x192xf32>
    %c1_85 = arith.constant 1 : index
    %c0_86 = arith.constant 0 : index
    %c0_87 = arith.constant 0 : index
    %224 = vector.load %arg5[%c1_85, %c0_86, %c0_87] : memref<2x64x64xf32, #tpu.memory_space<vmem>>, vector<1x64x64xf32>
    %225 = vector.shape_cast %224 : vector<1x64x64xf32> to vector<64x64xf32>
    %c1_88 = arith.constant 1 : index
    %c0_89 = arith.constant 0 : index
    %c0_90 = arith.constant 0 : index
    %226 = vector.load %arg6[%c1_88, %c0_89, %c0_90] : memref<2x1x64xf32, #tpu.memory_space<vmem>>, vector<1x1x64xf32>
    %227 = vector.shape_cast %226 : vector<1x1x64xf32> to vector<1x64xf32>
    %cst_91 = arith.constant dense<0.000000e+00> : vector<8x192xf32>
    %228 = tpu.matmul %219, %221, %cst_91 {dimension_numbers = #tpu.dot_dimension_numbers<[1], [0], [0], [1], [0, 0, 1, 1], [], []>} : vector<8x64xf32>, vector<64x192xf32>, vector<8x192xf32> -> vector<8x192xf32>
    %229 = vector.broadcast %223 : vector<1x192xf32> to vector<8x192xf32>
    %230 = arith.addf %228, %229 : vector<8x192xf32>
    %231 = vector.extract_strided_slice %230 {offsets = [0, 0], sizes = [8, 16], strides = [1, 1]} : vector<8x192xf32> to vector<8x16xf32>
    %232 = vector.extract_strided_slice %230 {offsets = [0, 64], sizes = [8, 16], strides = [1, 1]} : vector<8x192xf32> to vector<8x16xf32>
    %233 = vector.extract_strided_slice %230 {offsets = [0, 128], sizes = [8, 16], strides = [1, 1]} : vector<8x192xf32> to vector<8x16xf32>
    %cst_92 = arith.constant dense<0.000000e+00> : vector<8x8xf32>
    %234 = tpu.matmul %231, %232, %cst_92 {dimension_numbers = #tpu.dot_dimension_numbers<[1], [1], [0], [0], [0, 0, 1, 0], [], []>} : vector<8x16xf32>, vector<8x16xf32>, vector<8x8xf32> -> vector<8x8xf32>
    %cst_93 = arith.constant -9.99999984E+17 : f32
    %235 = vector.shape_cast %5 : vector<1x8xi1> to vector<1x8xi1>
    %236 = vector.broadcast %235 : vector<1x8xi1> to vector<8x8xi1>
    %237 = vector.broadcast %cst_93 : f32 to vector<8x8xf32>
    %238 = arith.select %236, %237, %234 : vector<8x8xi1>, vector<8x8xf32>
    %cst_94 = arith.constant dense<0xFF800000> : vector<8xf32>
    %239 = vector.multi_reduction <maximumf>, %238, %cst_94 [1] : vector<8x8xf32> to vector<8xf32>
    %240 = vector.shape_cast %239 : vector<8xf32> to vector<8x1xf32>
    %241 = vector.broadcast %240 : vector<8x1xf32> to vector<8x8xf32>
    %242 = arith.subf %238, %241 : vector<8x8xf32>
    %243 = math.exp %242 : vector<8x8xf32>
    %cst_95 = arith.constant dense<0.000000e+00> : vector<8xf32>
    %244 = vector.multi_reduction <add>, %243, %cst_95 [1] : vector<8x8xf32> to vector<8xf32>
    %245 = vector.shape_cast %244 : vector<8xf32> to vector<8x1xf32>
    %246 = vector.broadcast %245 : vector<8x1xf32> to vector<8x8xf32>
    %247 = arith.divf %243, %246 : vector<8x8xf32>
    %cst_96 = arith.constant dense<0.000000e+00> : vector<8x16xf32>
    %248 = tpu.matmul %247, %233, %cst_96 {dimension_numbers = #tpu.dot_dimension_numbers<[1], [0], [0], [1], [0, 0, 1, 1], [], []>} : vector<8x8xf32>, vector<8x16xf32>, vector<8x16xf32> -> vector<8x16xf32>
    %249 = vector.extract_strided_slice %230 {offsets = [0, 16], sizes = [8, 16], strides = [1, 1]} : vector<8x192xf32> to vector<8x16xf32>
    %250 = vector.extract_strided_slice %230 {offsets = [0, 80], sizes = [8, 16], strides = [1, 1]} : vector<8x192xf32> to vector<8x16xf32>
    %251 = vector.extract_strided_slice %230 {offsets = [0, 144], sizes = [8, 16], strides = [1, 1]} : vector<8x192xf32> to vector<8x16xf32>
    %cst_97 = arith.constant dense<0.000000e+00> : vector<8x8xf32>
    %252 = tpu.matmul %249, %250, %cst_97 {dimension_numbers = #tpu.dot_dimension_numbers<[1], [1], [0], [0], [0, 0, 1, 0], [], []>} : vector<8x16xf32>, vector<8x16xf32>, vector<8x8xf32> -> vector<8x8xf32>
    %cst_98 = arith.constant -9.99999984E+17 : f32
    %253 = vector.shape_cast %5 : vector<1x8xi1> to vector<1x8xi1>
    %254 = vector.broadcast %253 : vector<1x8xi1> to vector<8x8xi1>
    %255 = vector.broadcast %cst_98 : f32 to vector<8x8xf32>
    %256 = arith.select %254, %255, %252 : vector<8x8xi1>, vector<8x8xf32>
    %cst_99 = arith.constant dense<0xFF800000> : vector<8xf32>
    %257 = vector.multi_reduction <maximumf>, %256, %cst_99 [1] : vector<8x8xf32> to vector<8xf32>
    %258 = vector.shape_cast %257 : vector<8xf32> to vector<8x1xf32>
    %259 = vector.broadcast %258 : vector<8x1xf32> to vector<8x8xf32>
    %260 = arith.subf %256, %259 : vector<8x8xf32>
    %261 = math.exp %260 : vector<8x8xf32>
    %cst_100 = arith.constant dense<0.000000e+00> : vector<8xf32>
    %262 = vector.multi_reduction <add>, %261, %cst_100 [1] : vector<8x8xf32> to vector<8xf32>
    %263 = vector.shape_cast %262 : vector<8xf32> to vector<8x1xf32>
    %264 = vector.broadcast %263 : vector<8x1xf32> to vector<8x8xf32>
    %265 = arith.divf %261, %264 : vector<8x8xf32>
    %cst_101 = arith.constant dense<0.000000e+00> : vector<8x16xf32>
    %266 = tpu.matmul %265, %251, %cst_101 {dimension_numbers = #tpu.dot_dimension_numbers<[1], [0], [0], [1], [0, 0, 1, 1], [], []>} : vector<8x8xf32>, vector<8x16xf32>, vector<8x16xf32> -> vector<8x16xf32>
    %267 = vector.extract_strided_slice %230 {offsets = [0, 32], sizes = [8, 16], strides = [1, 1]} : vector<8x192xf32> to vector<8x16xf32>
    %268 = vector.extract_strided_slice %230 {offsets = [0, 96], sizes = [8, 16], strides = [1, 1]} : vector<8x192xf32> to vector<8x16xf32>
    %269 = vector.extract_strided_slice %230 {offsets = [0, 160], sizes = [8, 16], strides = [1, 1]} : vector<8x192xf32> to vector<8x16xf32>
    %cst_102 = arith.constant dense<0.000000e+00> : vector<8x8xf32>
    %270 = tpu.matmul %267, %268, %cst_102 {dimension_numbers = #tpu.dot_dimension_numbers<[1], [1], [0], [0], [0, 0, 1, 0], [], []>} : vector<8x16xf32>, vector<8x16xf32>, vector<8x8xf32> -> vector<8x8xf32>
    %cst_103 = arith.constant -9.99999984E+17 : f32
    %271 = vector.shape_cast %5 : vector<1x8xi1> to vector<1x8xi1>
    %272 = vector.broadcast %271 : vector<1x8xi1> to vector<8x8xi1>
    %273 = vector.broadcast %cst_103 : f32 to vector<8x8xf32>
    %274 = arith.select %272, %273, %270 : vector<8x8xi1>, vector<8x8xf32>
    %cst_104 = arith.constant dense<0xFF800000> : vector<8xf32>
    %275 = vector.multi_reduction <maximumf>, %274, %cst_104 [1] : vector<8x8xf32> to vector<8xf32>
    %276 = vector.shape_cast %275 : vector<8xf32> to vector<8x1xf32>
    %277 = vector.broadcast %276 : vector<8x1xf32> to vector<8x8xf32>
    %278 = arith.subf %274, %277 : vector<8x8xf32>
    %279 = math.exp %278 : vector<8x8xf32>
    %cst_105 = arith.constant dense<0.000000e+00> : vector<8xf32>
    %280 = vector.multi_reduction <add>, %279, %cst_105 [1] : vector<8x8xf32> to vector<8xf32>
    %281 = vector.shape_cast %280 : vector<8xf32> to vector<8x1xf32>
    %282 = vector.broadcast %281 : vector<8x1xf32> to vector<8x8xf32>
    %283 = arith.divf %279, %282 : vector<8x8xf32>
    %cst_106 = arith.constant dense<0.000000e+00> : vector<8x16xf32>
    %284 = tpu.matmul %283, %269, %cst_106 {dimension_numbers = #tpu.dot_dimension_numbers<[1], [0], [0], [1], [0, 0, 1, 1], [], []>} : vector<8x8xf32>, vector<8x16xf32>, vector<8x16xf32> -> vector<8x16xf32>
    %285 = vector.extract_strided_slice %230 {offsets = [0, 48], sizes = [8, 16], strides = [1, 1]} : vector<8x192xf32> to vector<8x16xf32>
    %286 = vector.extract_strided_slice %230 {offsets = [0, 112], sizes = [8, 16], strides = [1, 1]} : vector<8x192xf32> to vector<8x16xf32>
    %287 = vector.extract_strided_slice %230 {offsets = [0, 176], sizes = [8, 16], strides = [1, 1]} : vector<8x192xf32> to vector<8x16xf32>
    %cst_107 = arith.constant dense<0.000000e+00> : vector<8x8xf32>
    %288 = tpu.matmul %285, %286, %cst_107 {dimension_numbers = #tpu.dot_dimension_numbers<[1], [1], [0], [0], [0, 0, 1, 0], [], []>} : vector<8x16xf32>, vector<8x16xf32>, vector<8x8xf32> -> vector<8x8xf32>
    %cst_108 = arith.constant -9.99999984E+17 : f32
    %289 = vector.shape_cast %5 : vector<1x8xi1> to vector<1x8xi1>
    %290 = vector.broadcast %289 : vector<1x8xi1> to vector<8x8xi1>
    %291 = vector.broadcast %cst_108 : f32 to vector<8x8xf32>
    %292 = arith.select %290, %291, %288 : vector<8x8xi1>, vector<8x8xf32>
    %cst_109 = arith.constant dense<0xFF800000> : vector<8xf32>
    %293 = vector.multi_reduction <maximumf>, %292, %cst_109 [1] : vector<8x8xf32> to vector<8xf32>
    %294 = vector.shape_cast %293 : vector<8xf32> to vector<8x1xf32>
    %295 = vector.broadcast %294 : vector<8x1xf32> to vector<8x8xf32>
    %296 = arith.subf %292, %295 : vector<8x8xf32>
    %297 = math.exp %296 : vector<8x8xf32>
    %cst_110 = arith.constant dense<0.000000e+00> : vector<8xf32>
    %298 = vector.multi_reduction <add>, %297, %cst_110 [1] : vector<8x8xf32> to vector<8xf32>
    %299 = vector.shape_cast %298 : vector<8xf32> to vector<8x1xf32>
    %300 = vector.broadcast %299 : vector<8x1xf32> to vector<8x8xf32>
    %301 = arith.divf %297, %300 : vector<8x8xf32>
    %cst_111 = arith.constant dense<0.000000e+00> : vector<8x16xf32>
    %302 = tpu.matmul %301, %287, %cst_111 {dimension_numbers = #tpu.dot_dimension_numbers<[1], [0], [0], [1], [0, 0, 1, 1], [], []>} : vector<8x8xf32>, vector<8x16xf32>, vector<8x16xf32> -> vector<8x16xf32>
    %303 = tpu.concatenate %248, %266, %284, %302 in 1 : vector<8x16xf32>, vector<8x16xf32>, vector<8x16xf32>, vector<8x16xf32> -> vector<8x64xf32>
    %cst_112 = arith.constant dense<0.000000e+00> : vector<8x64xf32>
    %304 = tpu.matmul %303, %225, %cst_112 {dimension_numbers = #tpu.dot_dimension_numbers<[1], [0], [0], [1], [0, 0, 1, 1], [], []>} : vector<8x64xf32>, vector<64x64xf32>, vector<8x64xf32> -> vector<8x64xf32>
    %305 = vector.broadcast %227 : vector<1x64xf32> to vector<8x64xf32>
    %306 = arith.addf %304, %305 : vector<8x64xf32>
    %307 = arith.addf %306, %191 : vector<8x64xf32>
    %308 = vector.extract_strided_slice %193 {offsets = [2, 0], sizes = [1, 64], strides = [1, 1]} : vector<6x64xf32> to vector<1x64xf32>
    %309 = vector.shape_cast %308 : vector<1x64xf32> to vector<64xf32>
    %310 = vector.extract_strided_slice %193 {offsets = [3, 0], sizes = [1, 64], strides = [1, 1]} : vector<6x64xf32> to vector<1x64xf32>
    %311 = vector.shape_cast %310 : vector<1x64xf32> to vector<64xf32>
    %cst_113 = arith.constant dense<0.000000e+00> : vector<8xf32>
    %312 = vector.multi_reduction <add>, %307, %cst_113 [1] : vector<8x64xf32> to vector<8xf32>
    %313 = vector.shape_cast %312 : vector<8xf32> to vector<8x1xf32>
    %cst_114 = arith.constant 6.400000e+01 : f32
    %314 = vector.broadcast %cst_114 : f32 to vector<8x1xf32>
    %315 = arith.divf %313, %314 : vector<8x1xf32>
    %316 = vector.broadcast %315 : vector<8x1xf32> to vector<8x64xf32>
    %317 = arith.subf %307, %316 : vector<8x64xf32>
    %318 = arith.mulf %317, %317 : vector<8x64xf32>
    %cst_115 = arith.constant dense<0.000000e+00> : vector<8xf32>
    %319 = vector.multi_reduction <add>, %318, %cst_115 [1] : vector<8x64xf32> to vector<8xf32>
    %320 = vector.shape_cast %319 : vector<8xf32> to vector<8x1xf32>
    %cst_116 = arith.constant 6.400000e+01 : f32
    %321 = vector.broadcast %cst_116 : f32 to vector<8x1xf32>
    %322 = arith.divf %320, %321 : vector<8x1xf32>
    %cst_117 = arith.constant 9.99999997E-7 : f32
    %323 = vector.broadcast %cst_117 : f32 to vector<8x1xf32>
    %324 = arith.addf %322, %323 : vector<8x1xf32>
    %325 = math.rsqrt %324 : vector<8x1xf32>
    %326 = vector.broadcast %325 : vector<8x1xf32> to vector<8x64xf32>
    %327 = arith.mulf %317, %326 : vector<8x64xf32>
    %328 = vector.shape_cast %309 : vector<64xf32> to vector<1x64xf32>
    %329 = vector.broadcast %328 : vector<1x64xf32> to vector<8x64xf32>
    %330 = arith.mulf %327, %329 : vector<8x64xf32>
    %331 = vector.shape_cast %311 : vector<64xf32> to vector<1x64xf32>
    %332 = vector.broadcast %331 : vector<1x64xf32> to vector<8x64xf32>
    %333 = arith.addf %330, %332 : vector<8x64xf32>
    %334 = vector.extract_strided_slice %193 {offsets = [4, 0], sizes = [1, 64], strides = [1, 1]} : vector<6x64xf32> to vector<1x64xf32>
    %335 = vector.shape_cast %334 : vector<1x64xf32> to vector<64xf32>
    %336 = vector.extract_strided_slice %193 {offsets = [5, 0], sizes = [1, 64], strides = [1, 1]} : vector<6x64xf32> to vector<1x64xf32>
    %337 = vector.shape_cast %336 : vector<1x64xf32> to vector<64xf32>
    %cst_118 = arith.constant dense<0.000000e+00> : vector<8xf32>
    %338 = vector.multi_reduction <add>, %333, %cst_118 [1] : vector<8x64xf32> to vector<8xf32>
    %339 = vector.shape_cast %338 : vector<8xf32> to vector<8x1xf32>
    %cst_119 = arith.constant 6.400000e+01 : f32
    %340 = vector.broadcast %cst_119 : f32 to vector<8x1xf32>
    %341 = arith.divf %339, %340 : vector<8x1xf32>
    %342 = vector.broadcast %341 : vector<8x1xf32> to vector<8x64xf32>
    %343 = arith.subf %333, %342 : vector<8x64xf32>
    %344 = arith.mulf %343, %343 : vector<8x64xf32>
    %cst_120 = arith.constant dense<0.000000e+00> : vector<8xf32>
    %345 = vector.multi_reduction <add>, %344, %cst_120 [1] : vector<8x64xf32> to vector<8xf32>
    %346 = vector.shape_cast %345 : vector<8xf32> to vector<8x1xf32>
    %cst_121 = arith.constant 6.400000e+01 : f32
    %347 = vector.broadcast %cst_121 : f32 to vector<8x1xf32>
    %348 = arith.divf %346, %347 : vector<8x1xf32>
    %cst_122 = arith.constant 9.99999997E-7 : f32
    %349 = vector.broadcast %cst_122 : f32 to vector<8x1xf32>
    %350 = arith.addf %348, %349 : vector<8x1xf32>
    %351 = math.rsqrt %350 : vector<8x1xf32>
    %352 = vector.broadcast %351 : vector<8x1xf32> to vector<8x64xf32>
    %353 = arith.mulf %343, %352 : vector<8x64xf32>
    %354 = vector.shape_cast %335 : vector<64xf32> to vector<1x64xf32>
    %355 = vector.broadcast %354 : vector<1x64xf32> to vector<8x64xf32>
    %356 = arith.mulf %353, %355 : vector<8x64xf32>
    %357 = vector.shape_cast %337 : vector<64xf32> to vector<1x64xf32>
    %358 = vector.broadcast %357 : vector<1x64xf32> to vector<8x64xf32>
    %359 = arith.addf %356, %358 : vector<8x64xf32>
    %c1_123 = arith.constant 1 : index
    %c0_124 = arith.constant 0 : index
    %c0_125 = arith.constant 0 : index
    %360 = vector.load %arg7[%c1_123, %c0_124, %c0_125] : memref<2x64x128xf32, #tpu.memory_space<vmem>>, vector<1x64x128xf32>
    %361 = vector.shape_cast %360 : vector<1x64x128xf32> to vector<64x128xf32>
    %cst_126 = arith.constant dense<0.000000e+00> : vector<8x128xf32>
    %362 = tpu.matmul %359, %361, %cst_126 {dimension_numbers = #tpu.dot_dimension_numbers<[1], [0], [0], [1], [0, 0, 1, 1], [], []>} : vector<8x64xf32>, vector<64x128xf32>, vector<8x128xf32> -> vector<8x128xf32>
    %c1_127 = arith.constant 1 : index
    %c0_128 = arith.constant 0 : index
    %c0_129 = arith.constant 0 : index
    %363 = vector.load %arg8[%c1_127, %c0_128, %c0_129] : memref<2x1x128xf32, #tpu.memory_space<vmem>>, vector<1x1x128xf32>
    %364 = vector.shape_cast %363 : vector<1x1x128xf32> to vector<1x128xf32>
    %365 = vector.broadcast %364 : vector<1x128xf32> to vector<8x128xf32>
    %366 = arith.addf %362, %365 : vector<8x128xf32>
    %cst_130 = arith.constant 0.000000e+00 : f32
    %367 = vector.broadcast %cst_130 : f32 to vector<8x128xf32>
    %368 = arith.maximumf %366, %367 : vector<8x128xf32>
    %c1_131 = arith.constant 1 : index
    %c0_132 = arith.constant 0 : index
    %c0_133 = arith.constant 0 : index
    %369 = vector.load %arg9[%c1_131, %c0_132, %c0_133] : memref<2x128x64xf32, #tpu.memory_space<vmem>>, vector<1x128x64xf32>
    %370 = vector.shape_cast %369 : vector<1x128x64xf32> to vector<128x64xf32>
    %cst_134 = arith.constant dense<0.000000e+00> : vector<8x64xf32>
    %371 = tpu.matmul %368, %370, %cst_134 {dimension_numbers = #tpu.dot_dimension_numbers<[1], [0], [0], [1], [0, 0, 1, 1], [], []>} : vector<8x128xf32>, vector<128x64xf32>, vector<8x64xf32> -> vector<8x64xf32>
    %c1_135 = arith.constant 1 : index
    %c0_136 = arith.constant 0 : index
    %c0_137 = arith.constant 0 : index
    %372 = vector.load %arg10[%c1_135, %c0_136, %c0_137] : memref<2x1x64xf32, #tpu.memory_space<vmem>>, vector<1x1x64xf32>
    %373 = vector.shape_cast %372 : vector<1x1x64xf32> to vector<1x64xf32>
    %374 = vector.broadcast %373 : vector<1x64xf32> to vector<8x64xf32>
    %375 = arith.addf %371, %374 : vector<8x64xf32>
    %376 = arith.addf %375, %333 : vector<8x64xf32>
    %377 = arith.addf %376, %307 : vector<8x64xf32>
    %c0_138 = arith.constant 0 : index
    %c0_139 = arith.constant 0 : index
    %378 = vector.load %arg12[%c0_138, %c0_139] : memref<2x64xf32, #tpu.memory_space<vmem>>, vector<1x64xf32>
    %379 = vector.shape_cast %378 : vector<1x64xf32> to vector<64xf32>
    %c1_140 = arith.constant 1 : index
    %c0_141 = arith.constant 0 : index
    %380 = vector.load %arg12[%c1_140, %c0_141] : memref<2x64xf32, #tpu.memory_space<vmem>>, vector<1x64xf32>
    %381 = vector.shape_cast %380 : vector<1x64xf32> to vector<64xf32>
    %cst_142 = arith.constant dense<0.000000e+00> : vector<8xf32>
    %382 = vector.multi_reduction <add>, %377, %cst_142 [1] : vector<8x64xf32> to vector<8xf32>
    %383 = vector.shape_cast %382 : vector<8xf32> to vector<8x1xf32>
    %cst_143 = arith.constant 6.400000e+01 : f32
    %384 = vector.broadcast %cst_143 : f32 to vector<8x1xf32>
    %385 = arith.divf %383, %384 : vector<8x1xf32>
    %386 = vector.broadcast %385 : vector<8x1xf32> to vector<8x64xf32>
    %387 = arith.subf %377, %386 : vector<8x64xf32>
    %388 = arith.mulf %387, %387 : vector<8x64xf32>
    %cst_144 = arith.constant dense<0.000000e+00> : vector<8xf32>
    %389 = vector.multi_reduction <add>, %388, %cst_144 [1] : vector<8x64xf32> to vector<8xf32>
    %390 = vector.shape_cast %389 : vector<8xf32> to vector<8x1xf32>
    %cst_145 = arith.constant 6.400000e+01 : f32
    %391 = vector.broadcast %cst_145 : f32 to vector<8x1xf32>
    %392 = arith.divf %390, %391 : vector<8x1xf32>
    %cst_146 = arith.constant 9.99999997E-7 : f32
    %393 = vector.broadcast %cst_146 : f32 to vector<8x1xf32>
    %394 = arith.addf %392, %393 : vector<8x1xf32>
    %395 = math.rsqrt %394 : vector<8x1xf32>
    %396 = vector.broadcast %395 : vector<8x1xf32> to vector<8x64xf32>
    %397 = arith.mulf %387, %396 : vector<8x64xf32>
    %398 = vector.shape_cast %379 : vector<64xf32> to vector<1x64xf32>
    %399 = vector.broadcast %398 : vector<1x64xf32> to vector<8x64xf32>
    %400 = arith.mulf %397, %399 : vector<8x64xf32>
    %401 = vector.shape_cast %381 : vector<64xf32> to vector<1x64xf32>
    %402 = vector.broadcast %401 : vector<1x64xf32> to vector<8x64xf32>
    %403 = arith.addf %400, %402 : vector<8x64xf32>
    %c0_147 = arith.constant 0 : index
    %c0_148 = arith.constant 0 : index
    %c0_149 = arith.constant 0 : index
    %404 = vector.load %arg13[%c0_147, %c0_148, %c0_149] : memref<1x8x64xf32, #tpu.memory_space<vmem>>, vector<1x8x64xf32>
    %405 = vector.shape_cast %404 : vector<1x8x64xf32> to vector<8x64xf32>
    %406 = vector.shape_cast %403 : vector<8x64xf32> to vector<1x8x64xf32>
    tpu.vector_store %arg13[%c0_147, %c0_148, %c0_149], %406 {strides = array<i32>} : memref<1x8x64xf32, #tpu.memory_space<vmem>>, vector<1x8x64xf32>,
    return
  }
  func.func @transform_0(%arg0: i32) -> (i32, i32, i32) {
    %c0_i32 = arith.constant 0 : i32
    %c0_i32_0 = arith.constant 0 : i32
    %c0_i32_1 = arith.constant 0 : i32
    return %arg0, %c0_i32, %c0_i32_0 : i32, i32, i32
  }
  func.func @transform_1(%arg0: i32) -> (i32, i32, i32) {
    %c0_i32 = arith.constant 0 : i32
    %c0_i32_0 = arith.constant 0 : i32
    %c0_i32_1 = arith.constant 0 : i32
    return %arg0, %c0_i32, %c0_i32_0 : i32, i32, i32
  }
  func.func @transform_2(%arg0: i32) -> (i32, i32, i32) {
    %c0_i32 = arith.constant 0 : i32
    %c0_i32_0 = arith.constant 0 : i32
    %c0_i32_1 = arith.constant 0 : i32
    %c0_i32_2 = arith.constant 0 : i32
    return %c0_i32, %c0_i32_0, %c0_i32_1 : i32, i32, i32
  }
  func.func @transform_3(%arg0: i32) -> (i32, i32, i32) {
    %c0_i32 = arith.constant 0 : i32
    %c0_i32_0 = arith.constant 0 : i32
    %c0_i32_1 = arith.constant 0 : i32
    %c0_i32_2 = arith.constant 0 : i32
    return %c0_i32, %c0_i32_0, %c0_i32_1 : i32, i32, i32
  }
  func.func @transform_4(%arg0: i32) -> (i32, i32, i32) {
    %c0_i32 = arith.constant 0 : i32
    %c0_i32_0 = arith.constant 0 : i32
    %c0_i32_1 = arith.constant 0 : i32
    %c0_i32_2 = arith.constant 0 : i32
    return %c0_i32, %c0_i32_0, %c0_i32_1 : i32, i32, i32
  }
  func.func @transform_5(%arg0: i32) -> (i32, i32, i32) {
    %c0_i32 = arith.constant 0 : i32
    %c0_i32_0 = arith.constant 0 : i32
    %c0_i32_1 = arith.constant 0 : i32
    %c0_i32_2 = arith.constant 0 : i32
    return %c0_i32, %c0_i32_0, %c0_i32_1 : i32, i32, i32
  }
  func.func @transform_6(%arg0: i32) -> (i32, i32, i32) {
    %c0_i32 = arith.constant 0 : i32
    %c0_i32_0 = arith.constant 0 : i32
    %c0_i32_1 = arith.constant 0 : i32
    %c0_i32_2 = arith.constant 0 : i32
    return %c0_i32, %c0_i32_0, %c0_i32_1 : i32, i32, i32
  }
  func.func @transform_7(%arg0: i32) -> (i32, i32, i32) {
    %c0_i32 = arith.constant 0 : i32
    %c0_i32_0 = arith.constant 0 : i32
    %c0_i32_1 = arith.constant 0 : i32
    %c0_i32_2 = arith.constant 0 : i32
    return %c0_i32, %c0_i32_0, %c0_i32_1 : i32, i32, i32
  }
  func.func @transform_8(%arg0: i32) -> (i32, i32, i32) {
    %c0_i32 = arith.constant 0 : i32
    %c0_i32_0 = arith.constant 0 : i32
    %c0_i32_1 = arith.constant 0 : i32
    %c0_i32_2 = arith.constant 0 : i32
    return %c0_i32, %c0_i32_0, %c0_i32_1 : i32, i32, i32
  }
  func.func @transform_9(%arg0: i32) -> (i32, i32, i32) {
    %c0_i32 = arith.constant 0 : i32
    %c0_i32_0 = arith.constant 0 : i32
    %c0_i32_1 = arith.constant 0 : i32
    %c0_i32_2 = arith.constant 0 : i32
    return %c0_i32, %c0_i32_0, %c0_i32_1 : i32, i32, i32
  }
  func.func @transform_10(%arg0: i32) -> (i32, i32, i32) {
    %c0_i32 = arith.constant 0 : i32
    %c0_i32_0 = arith.constant 0 : i32
    %c0_i32_1 = arith.constant 0 : i32
    %c0_i32_2 = arith.constant 0 : i32
    return %c0_i32, %c0_i32_0, %c0_i32_1 : i32, i32, i32
  }
  func.func @transform_11(%arg0: i32) -> (i32, i32) {
    %c0_i32 = arith.constant 0 : i32
    %c0_i32_0 = arith.constant 0 : i32
    %c0_i32_1 = arith.constant 0 : i32
    return %c0_i32, %c0_i32_0 : i32, i32
  }
  func.func @transform_12(%arg0: i32) -> (i32, i32, i32) {
    %c0_i32 = arith.constant 0 : i32
    %c0_i32_0 = arith.constant 0 : i32
    %c0_i32_1 = arith.constant 0 : i32
    return %arg0, %c0_i32, %c0_i32_0 : i32, i32, i32
  }
}

</mosaic_0001>

<llo_original>
// kernel: parser_model_forward.2
$region0: #{parser_model_forward.2}
  #allocation0 [shape = 'u32[]', space=smem, size = 0x4, offset = 0x4, fixed_abs, tag = 'smem constant byte address 0x4 - core index']
  #allocation1 [shape = 'u32[144,128]{1,0:T(1,128)}', space=vmem, size = 0x12000, scoped, tag = 'internal scratch']
  %s0 = inlined_call_operand.vmem [shape: f32[2,8,64], index: 0, kind: input, shape index: {}]
  %s1 = inlined_call_operand.vmem [shape: f32[2,1,8], index: 1, kind: input, shape index: {}]
  %s2 = inlined_call_operand.vmem [shape: f32[2,64,192], index: 2, kind: input, shape index: {}]
  %s3 = inlined_call_operand.vmem [shape: f32[2,1,192], index: 3, kind: input, shape index: {}]
  %s4 = inlined_call_operand.vmem [shape: f32[2,64,64], index: 4, kind: input, shape index: {}]
  %s5 = inlined_call_operand.vmem [shape: f32[2,1,64], index: 5, kind: input, shape index: {}]
  %s6 = inlined_call_operand.vmem [shape: f32[2,64,128], index: 6, kind: input, shape index: {}]
  %s7 = inlined_call_operand.vmem [shape: f32[2,1,128], index: 7, kind: input, shape index: {}]
  %s8 = inlined_call_operand.vmem [shape: f32[2,128,64], index: 8, kind: input, shape index: {}]
  %s9 = inlined_call_operand.vmem [shape: f32[2,1,64], index: 9, kind: input, shape index: {}]
  %s10 = inlined_call_operand.vmem [shape: f32[2,6,64], index: 10, kind: input, shape index: {}]
  %s11 = inlined_call_operand.vmem [shape: f32[2,64], index: 11, kind: input, shape index: {}]
  %s12 = inlined_call_operand.vmem [shape: f32[2,8,64], index: 12, kind: output, shape index: {}]
  %s13 = sld [smem:[#allocation0]]
  $region81: #{parser_model_forward.2} parent=0
    _
  %s15 = ssub.s32 1, %s13
  %s16 = scalar_select 0, %s15, %s13
  loop: start=0, step=1, limit=4
  $region2: #{parser_model_forward.2} parent=0 // loop_pre_header
    _
  $region3: #{parser_model_forward.2} parent=0 // loop_header
    %s18 = sphi 0, %s22
    %p19 = scmp.ge.s32.totalorder %s18, 4
    %s28 = sphi 0, %s30
    %s31 = sphi 0, %s28
    %s32 = sphi 0, %s31
    %s48 = sphi 0, %s32
    %s54 = sphi 0, %s56
    %s57 = sphi 0, %s54
    %s58 = sphi 0, %s57
    %s74 = sphi 0, %s58
    %s78 = sphi 0, %s78
    %s80 = sphi 0, %s78
    %s81 = sphi 0, %s80
    %s95 = sphi 0, %s81
    %s99 = sphi 0, %s99
    %s101 = sphi 0, %s99
    %s102 = sphi 0, %s101
    %s116 = sphi 0, %s102
    %s120 = sphi 0, %s120
    %s122 = sphi 0, %s120
    %s123 = sphi 0, %s122
    %s137 = sphi 0, %s123
    %s141 = sphi 0, %s141
    %s143 = sphi 0, %s141
    %s144 = sphi 0, %s143
    %s158 = sphi 0, %s144
    %s162 = sphi 0, %s162
    %s164 = sphi 0, %s162
    %s165 = sphi 0, %s164
    %s179 = sphi 0, %s165
    %s183 = sphi 0, %s183
    %s185 = sphi 0, %s183
    %s186 = sphi 0, %s185
    %s200 = sphi 0, %s186
    %s204 = sphi 0, %s204
    %s206 = sphi 0, %s204
    %s207 = sphi 0, %s206
    %s221 = sphi 0, %s207
    %s225 = sphi 0, %s225
    %s227 = sphi 0, %s225
    %s228 = sphi 0, %s227
    %s242 = sphi 0, %s228
    %s246 = sphi 0, %s246
    %s248 = sphi 0, %s246
    %s249 = sphi 0, %s248
    %s263 = sphi 0, %s249
    %s267 = sphi 0, %s267
    %s269 = sphi 0, %s267
    %s270 = sphi 0, %s269
    %s284 = sphi 0, %s270
    %s290 = sphi 0, %s292
    %s293 = sphi 0, %s290
    %s294 = sphi 0, %s293
    %s310 = sphi 0, %s294
  $region4: #{parser_model_forward.2} parent=0 // loop_header_branch
    %21 = sbr.rel (%p19) target = $region8
  $region5: #{parser_model_forward.2} parent=0 // loop_body
    %s23 = ssub.s32 %s18, 1
    %s24 = ssub.s32 %s18, 2
    %s25 = sadd.s32 %s18, 1
    %s26 = ssub.s32 %s18, %s25
    %p27 = scmp.eq.s32.totalorder %s26, 0
    %s29 = sadd.s32 %s28, 1
    %s30 = scalar_select %p27, %s28, %s29
    %p33 = pneg %p27
    %p34 = scmp.eq.s32.totalorder %s18, 1
    %p35 = por %p33, %p34
    %p36 = scmp.ne.s32.totalorder %s28, %s31
    %p37 = scmp.eq.s32.totalorder %s18, 0
    %p38 = por %p36, %p37
    %p39 = scmp.ne.s32.totalorder %s28, %s31
    %p40 = scmp.eq.s32.totalorder %s23, 1
    %p41 = por %p39, %p40
    %p42 = scmp.ne.s32.totalorder %s31, %s32
    %p43 = scmp.eq.s32.totalorder %s23, 0
    %p44 = por %p42, %p43
    %p45 = scmp.ne.s32.totalorder %s31, %s32
    %p46 = scmp.eq.s32.totalorder %s24, 1
    %p47 = por %p45, %p46
    %p49 = scmp.ne.s32.totalorder %s32, %s48
    %p50 = scmp.eq.s32.totalorder %s24, 0
    %p51 = por %p49, %p50
    %s52 = ssub.s32 %s18, %s25
    %p53 = scmp.eq.s32.totalorder %s52, 0
    %s55 = sadd.s32 %s54, 1
    %s56 = scalar_select %p53, %s54, %s55
    %p59 = pneg %p53
    %p60 = scmp.eq.s32.totalorder %s18, 1
    %p61 = por %p59, %p60
    %p62 = scmp.ne.s32.totalorder %s54, %s57
    %p63 = scmp.eq.s32.totalorder %s18, 0
    %p64 = por %p62, %p63
    %p65 = scmp.ne.s32.totalorder %s54, %s57
    %p66 = scmp.eq.s32.totalorder %s23, 1
    %p67 = por %p65, %p66
    %p68 = scmp.ne.s32.totalorder %s57, %s58
    %p69 = scmp.eq.s32.totalorder %s23, 0
    %p70 = por %p68, %p69
    %p71 = scmp.ne.s32.totalorder %s57, %s58
    %p72 = scmp.eq.s32.totalorder %s24, 1
    %p73 = por %p71, %p72
    %p75 = scmp.ne.s32.totalorder %s58, %s74
    %p76 = scmp.eq.s32.totalorder %s24, 0
    %p77 = por %p75, %p76
    %s79 = sadd.s32 %s78, 1
    %p82 = scmp.eq.s32.totalorder %s18, 1
    %p83 = scmp.ne.s32.totalorder %s78, %s80
    %p84 = scmp.eq.s32.totalorder %s18, 0
    %p85 = por %p83, %p84
    %p86 = scmp.ne.s32.totalorder %s78, %s80
    %p87 = scmp.eq.s32.totalorder %s23, 1
    %p88 = por %p86, %p87
    %p89 = scmp.ne.s32.totalorder %s80, %s81
    %p90 = scmp.eq.s32.totalorder %s23, 0
    %p91 = por %p89, %p90
    %p92 = scmp.ne.s32.totalorder %s80, %s81
    %p93 = scmp.eq.s32.totalorder %s24, 1
    %p94 = por %p92, %p93
    %p96 = scmp.ne.s32.totalorder %s81, %s95
    %p97 = scmp.eq.s32.totalorder %s24, 0
    %p98 = por %p96, %p97
    %s100 = sadd.s32 %s99, 1
    %p103 = scmp.eq.s32.totalorder %s18, 1
    %p104 = scmp.ne.s32.totalorder %s99, %s101
    %p105 = scmp.eq.s32.totalorder %s18, 0
    %p106 = por %p104, %p105
    %p107 = scmp.ne.s32.totalorder %s99, %s101
    %p108 = scmp.eq.s32.totalorder %s23, 1
    %p109 = por %p107, %p108
    %p110 = scmp.ne.s32.totalorder %s101, %s102
    %p111 = scmp.eq.s32.totalorder %s23, 0
    %p112 = por %p110, %p111
    %p113 = scmp.ne.s32.totalorder %s101, %s102
    %p114 = scmp.eq.s32.totalorder %s24, 1
    %p115 = por %p113, %p114
    %p117 = scmp.ne.s32.totalorder %s102, %s116
    %p118 = scmp.eq.s32.totalorder %s24, 0
    %p119 = por %p117, %p118
    %s121 = sadd.s32 %s120, 1
    %p124 = scmp.eq.s32.totalorder %s18, 1
    %p125 = scmp.ne.s32.totalorder %s120, %s122
    %p126 = scmp.eq.s32.totalorder %s18, 0
    %p127 = por %p125, %p126
    %p128 = scmp.ne.s32.totalorder %s120, %s122
    %p129 = scmp.eq.s32.totalorder %s23, 1
    %p130 = por %p128, %p129
    %p131 = scmp.ne.s32.totalorder %s122, %s123
    %p132 = scmp.eq.s32.totalorder %s23, 0
    %p133 = por %p131, %p132
    %p134 = scmp.ne.s32.totalorder %s122, %s123
    %p135 = scmp.eq.s32.totalorder %s24, 1
    %p136 = por %p134, %p135
    %p138 = scmp.ne.s32.totalorder %s123, %s137
    %p139 = scmp.eq.s32.totalorder %s24, 0
    %p140 = por %p138, %p139
    %s142 = sadd.s32 %s141, 1
    %p145 = scmp.eq.s32.totalorder %s18, 1
    %p146 = scmp.ne.s32.totalorder %s141, %s143
    %p147 = scmp.eq.s32.totalorder %s18, 0
    %p148 = por %p146, %p147
    %p149 = scmp.ne.s32.totalorder %s141, %s143
    %p150 = scmp.eq.s32.totalorder %s23, 1
    %p151 = por %p149, %p150
    %p152 = scmp.ne.s32.totalorder %s143, %s144
    %p153 = scmp.eq.s32.totalorder %s23, 0
    %p154 = por %p152, %p153
    %p155 = scmp.ne.s32.totalorder %s143, %s144
    %p156 = scmp.eq.s32.totalorder %s24, 1
    %p157 = por %p155, %p156
    %p159 = scmp.ne.s32.totalorder %s144, %s158
    %p160 = scmp.eq.s32.totalorder %s24, 0
    %p161 = por %p159, %p160
    %s163 = sadd.s32 %s162, 1
    %p166 = scmp.eq.s32.totalorder %s18, 1
    %p167 = scmp.ne.s32.totalorder %s162, %s164
    %p168 = scmp.eq.s32.totalorder %s18, 0
    %p169 = por %p167, %p168
    %p170 = scmp.ne.s32.totalorder %s162, %s164
    %p171 = scmp.eq.s32.totalorder %s23, 1
    %p172 = por %p170, %p171
    %p173 = scmp.ne.s32.totalorder %s164, %s165
    %p174 = scmp.eq.s32.totalorder %s23, 0
    %p175 = por %p173, %p174
    %p176 = scmp.ne.s32.totalorder %s164, %s165
    %p177 = scmp.eq.s32.totalorder %s24, 1
    %p178 = por %p176, %p177
    %p180 = scmp.ne.s32.totalorder %s165, %s179
    %p181 = scmp.eq.s32.totalorder %s24, 0
    %p182 = por %p180, %p181
    %s184 = sadd.s32 %s183, 1
    %p187 = scmp.eq.s32.totalorder %s18, 1
    %p188 = scmp.ne.s32.totalorder %s183, %s185
    %p189 = scmp.eq.s32.totalorder %s18, 0
    %p190 = por %p188, %p189
    %p191 = scmp.ne.s32.totalorder %s183, %s185
    %p192 = scmp.eq.s32.totalorder %s23, 1
    %p193 = por %p191, %p192
    %p194 = scmp.ne.s32.totalorder %s185, %s186
    %p195 = scmp.eq.s32.totalorder %s23, 0
    %p196 = por %p194, %p195
    %p197 = scmp.ne.s32.totalorder %s185, %s186
    %p198 = scmp.eq.s32.totalorder %s24, 1
    %p199 = por %p197, %p198
    %p201 = scmp.ne.s32.totalorder %s186, %s200
    %p202 = scmp.eq.s32.totalorder %s24, 0
    %p203 = por %p201, %p202
    %s205 = sadd.s32 %s204, 1
    %p208 = scmp.eq.s32.totalorder %s18, 1
    %p209 = scmp.ne.s32.totalorder %s204, %s206
    %p210 = scmp.eq.s32.totalorder %s18, 0
    %p211 = por %p209, %p210
    %p212 = scmp.ne.s32.totalorder %s204, %s206
    %p213 = scmp.eq.s32.totalorder %s23, 1
    %p214 = por %p212, %p213
    %p215 = scmp.ne.s32.totalorder %s206, %s207
    %p216 = scmp.eq.s32.totalorder %s23, 0
    %p217 = por %p215, %p216
    %p218 = scmp.ne.s32.totalorder %s206, %s207
    %p219 = scmp.eq.s32.totalorder %s24, 1
    %p220 = por %p218, %p219
    %p222 = scmp.ne.s32.totalorder %s207, %s221
    %p223 = scmp.eq.s32.totalorder %s24, 0
    %p224 = por %p222, %p223
    %s226 = sadd.s32 %s225, 1
    %p229 = scmp.eq.s32.totalorder %s18, 1
    %p230 = scmp.ne.s32.totalorder %s225, %s227
    %p231 = scmp.eq.s32.totalorder %s18, 0
    %p232 = por %p230, %p231
    %p233 = scmp.ne.s32.totalorder %s225, %s227
    %p234 = scmp.eq.s32.totalorder %s23, 1
    %p235 = por %p233, %p234
    %p236 = scmp.ne.s32.totalorder %s227, %s228
    %p237 = scmp.eq.s32.totalorder %s23, 0
    %p238 = por %p236, %p237
    %p239 = scmp.ne.s32.totalorder %s227, %s228
    %p240 = scmp.eq.s32.totalorder %s24, 1
    %p241 = por %p239, %p240
    %p243 = scmp.ne.s32.totalorder %s228, %s242
    %p244 = scmp.eq.s32.totalorder %s24, 0
    %p245 = por %p243, %p244
    %s247 = sadd.s32 %s246, 1
    %p250 = scmp.eq.s32.totalorder %s18, 1
    %p251 = scmp.ne.s32.totalorder %s246, %s248
    %p252 = scmp.eq.s32.totalorder %s18, 0
    %p253 = por %p251, %p252
    %p254 = scmp.ne.s32.totalorder %s246, %s248
    %p255 = scmp.eq.s32.totalorder %s23, 1
    %p256 = por %p254, %p255
    %p257 = scmp.ne.s32.totalorder %s248, %s249
    %p258 = scmp.eq.s32.totalorder %s23, 0
    %p259 = por %p257, %p258
    %p260 = scmp.ne.s32.totalorder %s248, %s249
    %p261 = scmp.eq.s32.totalorder %s24, 1
    %p262 = por %p260, %p261
    %p264 = scmp.ne.s32.totalorder %s249, %s263
    %p265 = scmp.eq.s32.totalorder %s24, 0
    %p266 = por %p264, %p265
    %s268 = sadd.s32 %s267, 1
    %p271 = scmp.eq.s32.totalorder %s18, 1
    %p272 = scmp.ne.s32.totalorder %s267, %s269
    %p273 = scmp.eq.s32.totalorder %s18, 0
    %p274 = por %p272, %p273
    %p275 = scmp.ne.s32.totalorder %s267, %s269
    %p276 = scmp.eq.s32.totalorder %s23, 1
    %p277 = por %p275, %p276
    %p278 = scmp.ne.s32.totalorder %s269, %s270
    %p279 = scmp.eq.s32.totalorder %s23, 0
    %p280 = por %p278, %p279
    %p281 = scmp.ne.s32.totalorder %s269, %s270
    %p282 = scmp.eq.s32.totalorder %s24, 1
    %p283 = por %p281, %p282
    %p285 = scmp.ne.s32.totalorder %s270, %s284
    %p286 = scmp.eq.s32.totalorder %s24, 0
    %p287 = por %p285, %p286
    %s288 = ssub.s32 %s18, %s25
    %p289 = scmp.eq.s32.totalorder %s288, 0
    %s291 = sadd.s32 %s290, 1
    %s292 = scalar_select %p289, %s290, %s291
    %p295 = pneg %p289
    %p296 = scmp.eq.s32.totalorder %s18, 1
    %p297 = por %p295, %p296
    %p298 = scmp.ne.s32.totalorder %s290, %s293
    %p299 = scmp.eq.s32.totalorder %s18, 0
    %p300 = por %p298, %p299
    %p301 = scmp.ne.s32.totalorder %s290, %s293
    %p302 = scmp.eq.s32.totalorder %s23, 1
    %p303 = por %p301, %p302
    %p304 = scmp.ne.s32.totalorder %s293, %s294
    %p305 = scmp.eq.s32.totalorder %s23, 0
    %p306 = por %p304, %p305
    %p307 = scmp.ne.s32.totalorder %s293, %s294
    %p308 = scmp.eq.s32.totalorder %s24, 1
    %p309 = por %p307, %p308
    %p311 = scmp.ne.s32.totalorder %s294, %s310
    %p312 = scmp.eq.s32.totalorder %s24, 0
    %p313 = por %p311, %p312
    %p314 = scmp.le.s32.totalorder 1, %s18
    %p315 = scmp.lt.s32.totalorder %s18, 3
    %p316 = pnand %p314, %p315
    %p317 = pneg %p316
    // Predicated region
    $region9: #{parser_model_forward.2} parent=5 // pred_check
      _
    $region10: #{parser_model_forward.2} parent=5 // pred_check_branch
      %319 = sbr.rel (%p316) target = $region12
    $region11: #{parser_model_forward.2} parent=5 // pred_region
      %s320 = ssub.s32 %s18, 1
      // Predicated region
      $region13: #{parser_model_forward.2} parent=11 // pred_check
        %p321 = pneg %p91
      $region14: #{parser_model_forward.2} parent=11 // pred_check_branch
        %323 = sbr.rel (%p321) target = $region16
      $region15: #{parser_model_forward.2} parent=11 // pred_region
        _
      $region16: #{parser_model_forward.2} parent=11 // pred_fallthru
        _
      // Predicated region
      $region17: #{parser_model_forward.2} parent=11 // pred_check
        %p324 = pneg %p112
      $region18: #{parser_model_forward.2} parent=11 // pred_check_branch
        %326 = sbr.rel (%p324) target = $region20
      $region19: #{parser_model_forward.2} parent=11 // pred_region
        _
      $region20: #{parser_model_forward.2} parent=11 // pred_fallthru
        _
      // Predicated region
      $region21: #{parser_model_forward.2} parent=11 // pred_check
        %p327 = pneg %p133
      $region22: #{parser_model_forward.2} parent=11 // pred_check_branch
        %329 = sbr.rel (%p327) target = $region24
      $region23: #{parser_model_forward.2} parent=11 // pred_region
        _
      $region24: #{parser_model_forward.2} parent=11 // pred_fallthru
        _
      // Predicated region
      $region25: #{parser_model_forward.2} parent=11 // pred_check
        %p330 = pneg %p154
      $region26: #{parser_model_forward.2} parent=11 // pred_check_branch
        %332 = sbr.rel (%p330) target = $region28
      $region27: #{parser_model_forward.2} parent=11 // pred_region
        _
      $region28: #{parser_model_forward.2} parent=11 // pred_fallthru
        _
      // Predicated region
      $region29: #{parser_model_forward.2} parent=11 // pred_check
        %p333 = pneg %p175
      $region30: #{parser_model_forward.2} parent=11 // pred_check_branch
        %335 = sbr.rel (%p333) target = $region32
      $region31: #{parser_model_forward.2} parent=11 // pred_region
        _
      $region32: #{parser_model_forward.2} parent=11 // pred_fallthru
        _
      // Predicated region
      $region33: #{parser_model_forward.2} parent=11 // pred_check
        %p336 = pneg %p196
      $region34: #{parser_model_forward.2} parent=11 // pred_check_branch
        %338 = sbr.rel (%p336) target = $region36
      $region35: #{parser_model_forward.2} parent=11 // pred_region
        _
      $region36: #{parser_model_forward.2} parent=11 // pred_fallthru
        _
      // Predicated region
      $region37: #{parser_model_forward.2} parent=11 // pred_check
        %p339 = pneg %p217
      $region38: #{parser_model_forward.2} parent=11 // pred_check_branch
        %341 = sbr.rel (%p339) target = $region40
      $region39: #{parser_model_forward.2} parent=11 // pred_region
        _
      $region40: #{parser_model_forward.2} parent=11 // pred_fallthru
        _
      // Predicated region
      $region41: #{parser_model_forward.2} parent=11 // pred_check
        %p342 = pneg %p238
      $region42: #{parser_model_forward.2} parent=11 // pred_check_branch
        %344 = sbr.rel (%p342) target = $region44
      $region43: #{parser_model_forward.2} parent=11 // pred_region
        _
      $region44: #{parser_model_forward.2} parent=11 // pred_fallthru
        _
      // Predicated region
      $region45: #{parser_model_forward.2} parent=11 // pred_check
        %p345 = pneg %p259
      $region46: #{parser_model_forward.2} parent=11 // pred_check_branch
        %347 = sbr.rel (%p345) target = $region48
      $region47: #{parser_model_forward.2} parent=11 // pred_region
        _
      $region48: #{parser_model_forward.2} parent=11 // pred_fallthru
        _
      // Predicated region
      $region49: #{parser_model_forward.2} parent=11 // pred_check
        %p348 = pneg %p280
      $region50: #{parser_model_forward.2} parent=11 // pred_check_branch
        %350 = sbr.rel (%p348) target = $region52
      $region51: #{parser_model_forward.2} parent=11 // pred_region
        _
      $region52: #{parser_model_forward.2} parent=11 // pred_fallthru
        _
    $region12: #{parser_model_forward.2} parent=5 // pred_fallthru
      _
    %p351 = scmp.lt.s32.totalorder %s18, 2
    // Predicated region
    $region53: #{parser_model_forward.2} parent=5 // pred_check
      %p352 = pneg %p351
    $region54: #{parser_model_forward.2} parent=5 // pred_check_branch
      %354 = sbr.rel (%p352) target = $region56
    $region55: #{parser_model_forward.2} parent=5 // pred_region
      // Predicated region
      $region57: #{parser_model_forward.2} parent=55 // pred_check
        %p355 = pneg %p38
      $region58: #{parser_model_forward.2} parent=55 // pred_check_branch
        %357 = sbr.rel (%p355) target = $region60
      $region59: #{parser_model_forward.2} parent=55 // pred_region
        %p358 = scmp.lt.s32.totalorder %s18, 1
        %s359 = scalar_select %p358, %s18, 1
        %s360 = smul.addr %s359, 8
        %s361 = scalar_lea.vmem %s0, %s360
      $region60: #{parser_model_forward.2} parent=55 // pred_fallthru
        _
      // Predicated region
      $region61: #{parser_model_forward.2} parent=55 // pred_check
        %p362 = pneg %p64
      $region62: #{parser_model_forward.2} parent=55 // pred_check_branch
        %364 = sbr.rel (%p362) target = $region64
      $region63: #{parser_model_forward.2} parent=55 // pred_region
        %p365 = scmp.lt.s32.totalorder %s18, 1
        %s366 = scalar_select %p365, %s18, 1
        %s367 = scalar_lea.vmem %s1, %s366
      $region64: #{parser_model_forward.2} parent=55 // pred_fallthru
        _
    $region56: #{parser_model_forward.2} parent=5 // pred_fallthru
      _
    %p368 = scmp.le.s32.totalorder 1, %s18
    %p369 = scmp.lt.s32.totalorder %s18, 3
    %p370 = pnand %p368, %p369
    %p371 = pneg %p370
    // Predicated region
    $region65: #{parser_model_forward.2} parent=5 // pred_check
      _
    $region66: #{parser_model_forward.2} parent=5 // pred_check_branch
      %373 = sbr.rel (%p370) target = $region68
    $region67: #{parser_model_forward.2} parent=5 // pred_region
      %s374 = ssub.s32 %s18, 1
      %p375 = scmp.lt.s32.totalorder %s23, 1
      %s376 = scalar_select %p375, %s23, 1
      %s377 = smul.addr %s376, 8
      %s378 = scalar_lea.vmem %s0, %s377
      %p379 = pneg %p44
      %p380 = pneg %p41
      %p381 = scmp.lt.s32.totalorder %s23, 1
      %s382 = scalar_select %p381, %s23, 1
      %s383 = scalar_lea.vmem %s1, %s382
      %p384 = pneg %p70
      %p385 = pneg %p67
      %p386 = pneg %p91
      %p387 = pneg %p88
      %p388 = pneg %p112
      %p389 = pneg %p109
      %p390 = pneg %p133
      %p391 = pneg %p130
      %p392 = pneg %p154
      %p393 = pneg %p151
      %p394 = pneg %p175
      %p395 = pneg %p172
      %p396 = pneg %p196
      %p397 = pneg %p193
      %p398 = pneg %p217
      %p399 = pneg %p214
      %p400 = pneg %p238
      %p401 = pneg %p235
      %p402 = pneg %p259
      %p403 = pneg %p256
      %p404 = pneg %p280
      %p405 = pneg %p277
      %p406 = pneg %p306
      %p407 = pneg %p303
      %p408 = scmp.lt.s32.totalorder %s23, 1
      %s409 = scalar_select %p408, %s23, 1
      %s410 = smul.addr %s409, 8
      %s411 = scalar_lea.vmem %s12, %s410
      %p412 = scmp.lt.s32.totalorder %s23, 1
      %s413 = scalar_select %p412, %s23, 1
      %s414 = smul.addr %s413, 8
      %s415 = scalar_lea.vmem %s0, %s414
      %p416 = scmp.lt.s32.totalorder %s23, 1
      %s417 = scalar_select %p416, %s23, 1
      %s418 = scalar_lea.vmem %s1, %s417
      %p419 = scmp.lt.s32.totalorder %s23, 1
      %s420 = scalar_select %p419, %s23, 1
      %s421 = smul.addr %s420, 8
      %s422 = scalar_lea.vmem %s12, %s421
      %v423 = vld [vmem:[%s415] sm:$0xff]
      %v424 = vld [vmem:[%s418] sm:$0x1]
      %vm425 = vcmp.gt.f32.partialorder %v424, 0.5
      %v426 = vld [vmem:[%s10] sm:$0x3f]
      %vm427 = vcmask 523264
      %v428 = vsel %vm427, %v423, 0.0
      %429 = vadd.xlane.f32.xlu0 %v428
      %v430 = vpop.xlane.xlu0 %429
      %v431 = vrcp.pop 64.0
      %v432 = vmul.f32 %v430, %v431
      %v433 = vsub.f32 %v423, %v432
      %v434 = vmul.f32 %v433, %v433
      %v435 = vsel %vm427, %v434, 0.0
      %436 = vadd.xlane.f32.xlu0 %v435
      %v437 = vpop.xlane.xlu0 %436
      %v438 = vmul.f32 %v437, %v431
      %v439 = vadd.f32 %v438, 1e-06
      %v440 = vrsqrt.pop %v439
      %v441 = vmul.f32 %v433, %v440
      %v442 = vlaneseq
      %v443 = vshrl.u32 %v442, 7
      %v444 = vsub.s32 0, %v443
      %v445 = vrot.slane %v426, %v444
      %v446 = vmul.f32 %v441, %v445
      %v447 = vlaneseq
      %v448 = vshrl.u32 %v447, 7
      %v449 = vsub.s32 1, %v448
      %v450 = vrot.slane %v426, %v449
      %v451 = vadd.f32 %v446, %v450
      %v452 = vld [vmem:[%s2] sm:$0xff]
      %v453 = vld [vmem:[%s2 + $0x8] sm:$0xff]
      %v454 = vld [vmem:[%s2 + $0x10] sm:$0xff]
      %v455 = vld [vmem:[%s2 + $0x18] sm:$0xff]
      %v456 = vld [vmem:[%s2 + $0x20] sm:$0xff]
      %v457 = vld [vmem:[%s2 + $0x28] sm:$0xff]
      %v458 = vld [vmem:[%s2 + $0x30] sm:$0xff]
      %v459 = vld [vmem:[%s2 + $0x38] sm:$0xff]
      %v460 = vld [vmem:[%s2 + $0x40] sm:$0xff]
      %v461 = vld [vmem:[%s2 + $0x48] sm:$0xff]
      %v462 = vld [vmem:[%s2 + $0x50] sm:$0xff]
      %v463 = vld [vmem:[%s2 + $0x58] sm:$0xff]
      %v464 = vld [vmem:[%s2 + $0x60] sm:$0xff]
      %v465 = vld [vmem:[%s2 + $0x68] sm:$0xff]
      %v466 = vld [vmem:[%s2 + $0x70] sm:$0xff]
      %v467 = vld [vmem:[%s2 + $0x78] sm:$0xff]
      %v468 = vld [vmem:[%s3] sm:$0x3]
      %v469 = vld [vmem:[%s4] sm:$0xff]
      %v470 = vld [vmem:[%s4 + $0x8] sm:$0xff]
      %v471 = vld [vmem:[%s4 + $0x10] sm:$0xff]
      %v472 = vld [vmem:[%s4 + $0x18] sm:$0xff]
      %v473 = vld [vmem:[%s4 + $0x20] sm:$0xff]
      %v474 = vld [vmem:[%s4 + $0x28] sm:$0xff]
      %v475 = vld [vmem:[%s4 + $0x30] sm:$0xff]
      %v476 = vld [vmem:[%s4 + $0x38] sm:$0xff]
      %v477 = vld [vmem:[%s5] sm:$0x1]
      %v479 = vlaneseq
      %v480 = vshrl.u32 %v479, 7
      %v481 = vsub.s32 0, %v480
      %v482 = vrot.slane %v468, %v481
      %v483 = vlaneseq
      %v484 = vshrl.u32 %v483, 7
      %v485 = vsub.s32 1, %v484
      %v486 = vrot.slane %v468, %v485
      %v490 = vsel %vm427, %v451, 0
      %492 = vmatprep.subr.mxu0 %v453
      %493 = vmatpush1.msra.mxu0 %v452
      %494 = vmatprep.subr.mxu0 %v455
      %495 = vmatpush1.msra.mxu0 %v454
      %496 = vmatprep.subr.mxu0 %v457
      %497 = vmatpush1.msra.mxu0 %v456
      %498 = vmatprep.subr.mxu0 %v459
      %499 = vmatpush1.msra.mxu0 %v458
      %500 = vmatprep.subr.mxu0 %v461
      %501 = vmatpush1.msra.mxu0 %v460
      %502 = vmatprep.subr.mxu0 %v463
      %503 = vmatpush1.msra.mxu0 %v462
      %504 = vmatprep.subr.mxu0 %v465
      %505 = vmatpush1.msra.mxu0 %v464
      %506 = vmatprep.subr.mxu0 %v467
      %507 = vmatpush1.msra.mxu0 %v466
      %508 = vmatprep.subr.mxu0 0.0
      %509 = vmatpush1.msra.mxu0 0.0
      %510 = vmatprep.subr.mxu0 0.0
      %511 = vmatpush1.msra.mxu0 0.0
      %512 = vmatprep.subr.mxu0 0.0
      %513 = vmatpush1.msra.mxu0 0.0
      %514 = vmatprep.subr.mxu0 0.0
      %515 = vmatpush1.msra.mxu0 0.0
      %516 = vmatprep.subr.mxu0 0.0
      %517 = vmatpush1.msra.mxu0 0.0
      %518 = vmatprep.subr.mxu0 0.0
      %519 = vmatpush1.msra.mxu0 0.0
      %520 = vmatprep.subr.mxu0 0.0
      %521 = vmatpush1.msra.mxu0 0.0
      %522 = vmatprep.subr.mxu0 0.0
      %523 = vmatpush1.msra.mxu0 0.0
      %524 = vmatprep.subr.mxu0 0.0
      %525 = vmatpush1.msra.mxu0 0.0
      %526 = vmatprep.subr.mxu0 0.0
      %527 = vmatpush1.msra.mxu0 0.0
      %528 = vmatprep.subr.mxu0 0.0
      %529 = vmatpush1.msra.mxu0 0.0
      %530 = vmatprep.subr.mxu0 0.0
      %531 = vmatpush1.msra.mxu0 0.0
      %532 = vmatprep.subr.mxu0 0.0
      %533 = vmatpush1.msra.mxu0 0.0
      %534 = vmatprep.subr.mxu0 0.0
      %535 = vmatpush1.msra.mxu0 0.0
      %536 = vmatprep.subr.mxu0 0.0
      %537 = vmatpush1.msra.mxu0 0.0
      %538 = vmatprep.subr.mxu0 0.0
      %539 = vmatpush1.msra.mxu0 0.0
      %540 = vmatprep.subr.mxu0 0.0
      %541 = vmatpush1.msra.mxu0 0.0
      %542 = vmatprep.subr.mxu0 0.0
      %543 = vmatpush1.msra.mxu0 0.0
      %544 = vmatprep.subr.mxu0 0.0
      %545 = vmatpush1.msra.mxu0 0.0
      %546 = vmatprep.subr.mxu0 0.0
      %547 = vmatpush1.msra.mxu0 0.0
      %548 = vmatprep.subr.mxu0 0.0
      %549 = vmatpush1.msra.mxu0 0.0
      %550 = vmatprep.subr.mxu0 0.0
      %551 = vmatpush1.msra.mxu0 0.0
      %552 = vmatprep.subr.mxu0 0.0
      %553 = vmatpush1.msra.mxu0 0.0
      %554 = vmatprep.subr.mxu0 0.0
      %555 = vmatpush1.msra.mxu0 0.0
      %556 = vmatprep.mubr.f32.mxu0 0.0
      %557 = vmatmul.mubr.f32.gmra.mrb[0].mxu0 %v490
      %v558 = vpop.f32.mrb[0].mxu0
      %v559 = vadd.f32 %v482, %v558
      %v560 = vpop.f32.mrb[0].mxu0
      %v561 = vadd.f32 %v486, %v560
      %562 = vdwg.mxu0
      %564 = vrot.lane.b32.xlu0 %v559, 64
      %v565 = vpop.permute.xlu0 %564
      %vm566 = vcmask 130048
      %v567 = vsel %vm566, %v559, 0
      %v569 = vsel %vm566, %v565, 0
      %571 = vmatprep.subr.mxu0 0.0
      %572 = vmatpush1.xpose.msra.mxu0 %v569
      %573 = vmatprep.subr.mxu0 0.0
      %574 = vmatpush1.xpose.msra.mxu0 0.0
      %575 = vmatprep.subr.mxu0 0.0
      %576 = vmatpush1.xpose.msra.mxu0 0.0
      %577 = vmatprep.subr.mxu0 0.0
      %578 = vmatpush1.xpose.msra.mxu0 0.0
      %579 = vmatprep.subr.mxu0 0.0
      %580 = vmatpush1.xpose.msra.mxu0 0.0
      %581 = vmatprep.subr.mxu0 0.0
      %582 = vmatpush1.xpose.msra.mxu0 0.0
      %583 = vmatprep.subr.mxu0 0.0
      %584 = vmatpush1.xpose.msra.mxu0 0.0
      %585 = vmatprep.subr.mxu0 0.0
      %586 = vmatpush1.xpose.msra.mxu0 0.0
      %587 = vmatprep.subr.mxu0 0.0
      %588 = vmatpush1.xpose.msra.mxu0 0.0
      %589 = vmatprep.subr.mxu0 0.0
      %590 = vmatpush1.xpose.msra.mxu0 0.0
      %591 = vmatprep.subr.mxu0 0.0
      %592 = vmatpush1.xpose.msra.mxu0 0.0
      %593 = vmatprep.subr.mxu0 0.0
      %594 = vmatpush1.xpose.msra.mxu0 0.0
      %595 = vmatprep.subr.mxu0 0.0
      %596 = vmatpush1.xpose.msra.mxu0 0.0
      %597 = vmatprep.subr.mxu0 0.0
      %598 = vmatpush1.xpose.msra.mxu0 0.0
      %599 = vmatprep.subr.mxu0 0.0
      %600 = vmatpush1.xpose.msra.mxu0 0.0
      %601 = vmatprep.subr.mxu0 0.0
      %602 = vmatpush1.xpose.msra.mxu0 0.0
      %603 = vmatprep.subr.mxu0 0.0
      %604 = vmatpush1.xpose.msra.mxu0 0.0
      %605 = vmatprep.subr.mxu0 0.0
      %606 = vmatpush1.xpose.msra.mxu0 0.0
      %607 = vmatprep.subr.mxu0 0.0
      %608 = vmatpush1.xpose.msra.mxu0 0.0
      %609 = vmatprep.subr.mxu0 0.0
      %610 = vmatpush1.xpose.msra.mxu0 0.0
      %611 = vmatprep.subr.mxu0 0.0
      %612 = vmatpush1.xpose.msra.mxu0 0.0
      %613 = vmatprep.subr.mxu0 0.0
      %614 = vmatpush1.xpose.msra.mxu0 0.0
      %615 = vmatprep.subr.mxu0 0.0
      %616 = vmatpush1.xpose.msra.mxu0 0.0
      %617 = vmatprep.subr.mxu0 0.0
      %618 = vmatpush1.xpose.msra.mxu0 0.0
      %619 = vmatprep.subr.mxu0 0.0
      %620 = vmatpush1.xpose.msra.mxu0 0.0
      %621 = vmatprep.subr.mxu0 0.0
      %622 = vmatpush1.xpose.msra.mxu0 0.0
      %623 = vmatprep.subr.mxu0 0.0
      %624 = vmatpush1.xpose.msra.mxu0 0.0
      %625 = vmatprep.subr.mxu0 0.0
      %626 = vmatpush1.xpose.msra.mxu0 0.0
      %627 = vmatprep.subr.mxu0 0.0
      %628 = vmatpush1.xpose.msra.mxu0 0.0
      %629 = vmatprep.subr.mxu0 0.0
      %630 = vmatpush1.xpose.msra.mxu0 0.0
      %631 = vmatprep.subr.mxu0 0.0
      %632 = vmatpush1.xpose.msra.mxu0 0.0
      %633 = vmatprep.subr.mxu0 0.0
      %634 = vmatpush1.xpose.msra.mxu0 0.0
      %635 = vmatprep.mubr.f32.mxu0 0.0
      %636 = vmatmul.mubr.f32.gmra.mrb[0].mxu0 %v567
      %v637 = vpop.f32.mrb[0].mxu0
      %v638 = vadd.f32 0.0, %v637
      %v639 = vpop.f32.mrb[0].mxu0
      %640 = vdwg.mxu0
      %v641 = vsel %vm425, 1, 0
      %v642 = vlaneseq
      %v643 = vshrl.u32 %v642, 7
      %v644 = vsub.s32 0, %v643
      %v645 = vrot.slane %v641, %v644
      %vm646 = vcmp.eq.s32.totalorder %v645, 1
      %v647 = vsel %vm646, -1e+18, %v638
      %vm648 = vcmask 64512
      %v649 = vsel %vm648, %v647, -inf
      %650 = vmax.xlane.f32.xlu0 %v649
      %v651 = vpop.xlane.xlu0 %650
      %v652 = vsub.f32 %v647, %v651
      %v653 = vmul.f32 %v652, 1.442695
      %v654 = vpow.pop %v653
      %v655 = vsel %vm648, %v654, 0.0
      %656 = vadd.xlane.f32.xlu0 %v655
      %v657 = vpop.xlane.xlu0 %656
      %v658 = vrcp.pop %v657
      %v659 = vmul.f32 %v654, %v658
      %v661 = vsel %vm648, %v659, 0
      %663 = vmatprep.subr.mxu0 0.0
      %664 = vmatpush1.msra.mxu0 %v561
      %665 = vmatprep.subr.mxu0 0.0
      %666 = vmatpush1.msra.mxu0 0.0
      %667 = vmatprep.subr.mxu0 0.0
      %668 = vmatpush1.msra.mxu0 0.0
      %669 = vmatprep.subr.mxu0 0.0
      %670 = vmatpush1.msra.mxu0 0.0
      %671 = vmatprep.subr.mxu0 0.0
      %672 = vmatpush1.msra.mxu0 0.0
      %673 = vmatprep.subr.mxu0 0.0
      %674 = vmatpush1.msra.mxu0 0.0
      %675 = vmatprep.subr.mxu0 0.0
      %676 = vmatpush1.msra.mxu0 0.0
      %677 = vmatprep.subr.mxu0 0.0
      %678 = vmatpush1.msra.mxu0 0.0
      %679 = vmatprep.subr.mxu0 0.0
      %680 = vmatpush1.msra.mxu0 0.0
      %681 = vmatprep.subr.mxu0 0.0
      %682 = vmatpush1.msra.mxu0 0.0
      %683 = vmatprep.subr.mxu0 0.0
      %684 = vmatpush1.msra.mxu0 0.0
      %685 = vmatprep.subr.mxu0 0.0
      %686 = vmatpush1.msra.mxu0 0.0
      %687 = vmatprep.subr.mxu0 0.0
      %688 = vmatpush1.msra.mxu0 0.0
      %689 = vmatprep.subr.mxu0 0.0
      %690 = vmatpush1.msra.mxu0 0.0
      %691 = vmatprep.subr.mxu0 0.0
      %692 = vmatpush1.msra.mxu0 0.0
      %693 = vmatprep.subr.mxu0 0.0
      %694 = vmatpush1.msra.mxu0 0.0
      %695 = vmatprep.subr.mxu0 0.0
      %696 = vmatpush1.msra.mxu0 0.0
      %697 = vmatprep.subr.mxu0 0.0
      %698 = vmatpush1.msra.mxu0 0.0
      %699 = vmatprep.subr.mxu0 0.0
      %700 = vmatpush1.msra.mxu0 0.0
      %701 = vmatprep.subr.mxu0 0.0
      %702 = vmatpush1.msra.mxu0 0.0
      %703 = vmatprep.subr.mxu0 0.0
      %704 = vmatpush1.msra.mxu0 0.0
      %705 = vmatprep.subr.mxu0 0.0
      %706 = vmatpush1.msra.mxu0 0.0
      %707 = vmatprep.subr.mxu0 0.0
      %708 = vmatpush1.msra.mxu0 0.0
      %709 = vmatprep.subr.mxu0 0.0
      %710 = vmatpush1.msra.mxu0 0.0
      %711 = vmatprep.subr.mxu0 0.0
      %712 = vmatpush1.msra.mxu0 0.0
      %713 = vmatprep.subr.mxu0 0.0
      %714 = vmatpush1.msra.mxu0 0.0
      %715 = vmatprep.subr.mxu0 0.0
      %716 = vmatpush1.msra.mxu0 0.0
      %717 = vmatprep.subr.mxu0 0.0
      %718 = vmatpush1.msra.mxu0 0.0
      %719 = vmatprep.subr.mxu0 0.0
      %720 = vmatpush1.msra.mxu0 0.0
      %721 = vmatprep.subr.mxu0 0.0
      %722 = vmatpush1.msra.mxu0 0.0
      %723 = vmatprep.subr.mxu0 0.0
      %724 = vmatpush1.msra.mxu0 0.0
      %725 = vmatprep.subr.mxu0 0.0
      %726 = vmatpush1.msra.mxu0 0.0
      %727 = vmatprep.mubr.f32.mxu0 0.0
      %728 = vmatmul.mubr.f32.gmra.mrb[0].mxu0 %v661
      %v729 = vpop.f32.mrb[0].mxu0
      %v730 = vadd.f32 0.0, %v729
      %v731 = vpop.f32.mrb[0].mxu0
      %732 = vdwg.mxu0
      %733 = vrot.lane.b32.xlu0 %v559, 112
      %v734 = vpop.permute.xlu0 %733
      %735 = vrot.lane.b32.xlu0 %v559, 48
      %v736 = vpop.permute.xlu0 %735
      %v737 = vsel %vm566, %v734, 0
      %v739 = vsel %vm566, %v736, 0
      %741 = vmatprep.subr.mxu0 0.0
      %742 = vmatpush1.xpose.msra.mxu0 %v739
      %743 = vmatprep.subr.mxu0 0.0
      %744 = vmatpush1.xpose.msra.mxu0 0.0
      %745 = vmatprep.subr.mxu0 0.0
      %746 = vmatpush1.xpose.msra.mxu0 0.0
      %747 = vmatprep.subr.mxu0 0.0
      %748 = vmatpush1.xpose.msra.mxu0 0.0
      %749 = vmatprep.subr.mxu0 0.0
      %750 = vmatpush1.xpose.msra.mxu0 0.0
      %751 = vmatprep.subr.mxu0 0.0
      %752 = vmatpush1.xpose.msra.mxu0 0.0
      %753 = vmatprep.subr.mxu0 0.0
      %754 = vmatpush1.xpose.msra.mxu0 0.0
      %755 = vmatprep.subr.mxu0 0.0
      %756 = vmatpush1.xpose.msra.mxu0 0.0
      %757 = vmatprep.subr.mxu0 0.0
      %758 = vmatpush1.xpose.msra.mxu0 0.0
      %759 = vmatprep.subr.mxu0 0.0
      %760 = vmatpush1.xpose.msra.mxu0 0.0
      %761 = vmatprep.subr.mxu0 0.0
      %762 = vmatpush1.xpose.msra.mxu0 0.0
      %763 = vmatprep.subr.mxu0 0.0
      %764 = vmatpush1.xpose.msra.mxu0 0.0
      %765 = vmatprep.subr.mxu0 0.0
      %766 = vmatpush1.xpose.msra.mxu0 0.0
      %767 = vmatprep.subr.mxu0 0.0
      %768 = vmatpush1.xpose.msra.mxu0 0.0
      %769 = vmatprep.subr.mxu0 0.0
      %770 = vmatpush1.xpose.msra.mxu0 0.0
      %771 = vmatprep.subr.mxu0 0.0
      %772 = vmatpush1.xpose.msra.mxu0 0.0
      %773 = vmatprep.subr.mxu0 0.0
      %774 = vmatpush1.xpose.msra.mxu0 0.0
      %775 = vmatprep.subr.mxu0 0.0
      %776 = vmatpush1.xpose.msra.mxu0 0.0
      %777 = vmatprep.subr.mxu0 0.0
      %778 = vmatpush1.xpose.msra.mxu0 0.0
      %779 = vmatprep.subr.mxu0 0.0
      %780 = vmatpush1.xpose.msra.mxu0 0.0
      %781 = vmatprep.subr.mxu0 0.0
      %782 = vmatpush1.xpose.msra.mxu0 0.0
      %783 = vmatprep.subr.mxu0 0.0
      %784 = vmatpush1.xpose.msra.mxu0 0.0
      %785 = vmatprep.subr.mxu0 0.0
      %786 = vmatpush1.xpose.msra.mxu0 0.0
      %787 = vmatprep.subr.mxu0 0.0
      %788 = vmatpush1.xpose.msra.mxu0 0.0
      %789 = vmatprep.subr.mxu0 0.0
      %790 = vmatpush1.xpose.msra.mxu0 0.0
      %791 = vmatprep.subr.mxu0 0.0
      %792 = vmatpush1.xpose.msra.mxu0 0.0
      %793 = vmatprep.subr.mxu0 0.0
      %794 = vmatpush1.xpose.msra.mxu0 0.0
      %795 = vmatprep.subr.mxu0 0.0
      %796 = vmatpush1.xpose.msra.mxu0 0.0
      %797 = vmatprep.subr.mxu0 0.0
      %798 = vmatpush1.xpose.msra.mxu0 0.0
      %799 = vmatprep.subr.mxu0 0.0
      %800 = vmatpush1.xpose.msra.mxu0 0.0
      %801 = vmatprep.subr.mxu0 0.0
      %802 = vmatpush1.xpose.msra.mxu0 0.0
      %803 = vmatprep.subr.mxu0 0.0
      %804 = vmatpush1.xpose.msra.mxu0 0.0
      %805 = vmatprep.mubr.f32.mxu0 0.0
      %806 = vmatmul.mubr.f32.gmra.mrb[0].mxu0 %v737
      %v807 = vpop.f32.mrb[0].mxu0
      %v808 = vadd.f32 0.0, %v807
      %v809 = vpop.f32.mrb[0].mxu0
      %810 = vdwg.mxu0
      %v811 = vsel %vm646, -1e+18, %v808
      %v812 = vsel %vm648, %v811, -inf
      %813 = vmax.xlane.f32.xlu0 %v812
      %v814 = vpop.xlane.xlu0 %813
      %v815 = vsub.f32 %v811, %v814
      %v816 = vmul.f32 %v815, 1.442695
      %v817 = vpow.pop %v816
      %v818 = vsel %vm648, %v817, 0.0
      %819 = vadd.xlane.f32.xlu0 %v818
      %v820 = vpop.xlane.xlu0 %819
      %v821 = vrcp.pop %v820
      %v822 = vmul.f32 %v817, %v821
      %824 = vrot.lane.b32.xlu0 %v561, 112
      %v825 = vpop.permute.xlu0 %824
      %v828 = vsel %vm648, %v822, 0
      %830 = vmatprep.subr.mxu0 0.0
      %831 = vmatpush1.msra.mxu0 %v825
      %832 = vmatprep.subr.mxu0 0.0
      %833 = vmatpush1.msra.mxu0 0.0
      %834 = vmatprep.subr.mxu0 0.0
      %835 = vmatpush1.msra.mxu0 0.0
      %836 = vmatprep.subr.mxu0 0.0
      %837 = vmatpush1.msra.mxu0 0.0
      %838 = vmatprep.subr.mxu0 0.0
      %839 = vmatpush1.msra.mxu0 0.0
      %840 = vmatprep.subr.mxu0 0.0
      %841 = vmatpush1.msra.mxu0 0.0
      %842 = vmatprep.subr.mxu0 0.0
      %843 = vmatpush1.msra.mxu0 0.0
      %844 = vmatprep.subr.mxu0 0.0
      %845 = vmatpush1.msra.mxu0 0.0
      %846 = vmatprep.subr.mxu0 0.0
      %847 = vmatpush1.msra.mxu0 0.0
      %848 = vmatprep.subr.mxu0 0.0
      %849 = vmatpush1.msra.mxu0 0.0
      %850 = vmatprep.subr.mxu0 0.0
      %851 = vmatpush1.msra.mxu0 0.0
      %852 = vmatprep.subr.mxu0 0.0
      %853 = vmatpush1.msra.mxu0 0.0
      %854 = vmatprep.subr.mxu0 0.0
      %855 = vmatpush1.msra.mxu0 0.0
      %856 = vmatprep.subr.mxu0 0.0
      %857 = vmatpush1.msra.mxu0 0.0
      %858 = vmatprep.subr.mxu0 0.0
      %859 = vmatpush1.msra.mxu0 0.0
      %860 = vmatprep.subr.mxu0 0.0
      %861 = vmatpush1.msra.mxu0 0.0
      %862 = vmatprep.subr.mxu0 0.0
      %863 = vmatpush1.msra.mxu0 0.0
      %864 = vmatprep.subr.mxu0 0.0
      %865 = vmatpush1.msra.mxu0 0.0
      %866 = vmatprep.subr.mxu0 0.0
      %867 = vmatpush1.msra.mxu0 0.0
      %868 = vmatprep.subr.mxu0 0.0
      %869 = vmatpush1.msra.mxu0 0.0
      %870 = vmatprep.subr.mxu0 0.0
      %871 = vmatpush1.msra.mxu0 0.0
      %872 = vmatprep.subr.mxu0 0.0
      %873 = vmatpush1.msra.mxu0 0.0
      %874 = vmatprep.subr.mxu0 0.0
      %875 = vmatpush1.msra.mxu0 0.0
      %876 = vmatprep.subr.mxu0 0.0
      %877 = vmatpush1.msra.mxu0 0.0
      %878 = vmatprep.subr.mxu0 0.0
      %879 = vmatpush1.msra.mxu0 0.0
      %880 = vmatprep.subr.mxu0 0.0
      %881 = vmatpush1.msra.mxu0 0.0
      %882 = vmatprep.subr.mxu0 0.0
      %883 = vmatpush1.msra.mxu0 0.0
      %884 = vmatprep.subr.mxu0 0.0
      %885 = vmatpush1.msra.mxu0 0.0
      %886 = vmatprep.subr.mxu0 0.0
      %887 = vmatpush1.msra.mxu0 0.0
      %888 = vmatprep.subr.mxu0 0.0
      %889 = vmatpush1.msra.mxu0 0.0
      %890 = vmatprep.subr.mxu0 0.0
      %891 = vmatpush1.msra.mxu0 0.0
      %892 = vmatprep.subr.mxu0 0.0
      %893 = vmatpush1.msra.mxu0 0.0
      %894 = vmatprep.mubr.f32.mxu0 0.0
      %895 = vmatmul.mubr.f32.gmra.mrb[0].mxu0 %v828
      %v896 = vpop.f32.mrb[0].mxu0
      %v897 = vadd.f32 0.0, %v896
      %v898 = vpop.f32.mrb[0].mxu0
      %899 = vdwg.mxu0
      %900 = vrot.lane.b32.xlu0 %v559, 96
      %v901 = vpop.permute.xlu0 %900
      %902 = vrot.lane.b32.xlu0 %v559, 32
      %v903 = vpop.permute.xlu0 %902
      %v904 = vsel %vm566, %v901, 0
      %v906 = vsel %vm566, %v903, 0
      %908 = vmatprep.subr.mxu0 0.0
      %909 = vmatpush1.xpose.msra.mxu0 %v906
      %910 = vmatprep.subr.mxu0 0.0
      %911 = vmatpush1.xpose.msra.mxu0 0.0
      %912 = vmatprep.subr.mxu0 0.0
      %913 = vmatpush1.xpose.msra.mxu0 0.0
      %914 = vmatprep.subr.mxu0 0.0
      %915 = vmatpush1.xpose.msra.mxu0 0.0
      %916 = vmatprep.subr.mxu0 0.0
      %917 = vmatpush1.xpose.msra.mxu0 0.0
      %918 = vmatprep.subr.mxu0 0.0
      %919 = vmatpush1.xpose.msra.mxu0 0.0
      %920 = vmatprep.subr.mxu0 0.0
      %921 = vmatpush1.xpose.msra.mxu0 0.0
      %922 = vmatprep.subr.mxu0 0.0
      %923 = vmatpush1.xpose.msra.mxu0 0.0
      %924 = vmatprep.subr.mxu0 0.0
      %925 = vmatpush1.xpose.msra.mxu0 0.0
      %926 = vmatprep.subr.mxu0 0.0
      %927 = vmatpush1.xpose.msra.mxu0 0.0
      %928 = vmatprep.subr.mxu0 0.0
      %929 = vmatpush1.xpose.msra.mxu0 0.0
      %930 = vmatprep.subr.mxu0 0.0
      %931 = vmatpush1.xpose.msra.mxu0 0.0
      %932 = vmatprep.subr.mxu0 0.0
      %933 = vmatpush1.xpose.msra.mxu0 0.0
      %934 = vmatprep.subr.mxu0 0.0
      %935 = vmatpush1.xpose.msra.mxu0 0.0
      %936 = vmatprep.subr.mxu0 0.0
      %937 = vmatpush1.xpose.msra.mxu0 0.0
      %938 = vmatprep.subr.mxu0 0.0
      %939 = vmatpush1.xpose.msra.mxu0 0.0
      %940 = vmatprep.subr.mxu0 0.0
      %941 = vmatpush1.xpose.msra.mxu0 0.0
      %942 = vmatprep.subr.mxu0 0.0
      %943 = vmatpush1.xpose.msra.mxu0 0.0
      %944 = vmatprep.subr.mxu0 0.0
      %945 = vmatpush1.xpose.msra.mxu0 0.0
      %946 = vmatprep.subr.mxu0 0.0
      %947 = vmatpush1.xpose.msra.mxu0 0.0
      %948 = vmatprep.subr.mxu0 0.0
      %949 = vmatpush1.xpose.msra.mxu0 0.0
      %950 = vmatprep.subr.mxu0 0.0
      %951 = vmatpush1.xpose.msra.mxu0 0.0
      %952 = vmatprep.subr.mxu0 0.0
      %953 = vmatpush1.xpose.msra.mxu0 0.0
      %954 = vmatprep.subr.mxu0 0.0
      %955 = vmatpush1.xpose.msra.mxu0 0.0
      %956 = vmatprep.subr.mxu0 0.0
      %957 = vmatpush1.xpose.msra.mxu0 0.0
      %958 = vmatprep.subr.mxu0 0.0
      %959 = vmatpush1.xpose.msra.mxu0 0.0
      %960 = vmatprep.subr.mxu0 0.0
      %961 = vmatpush1.xpose.msra.mxu0 0.0
      %962 = vmatprep.subr.mxu0 0.0
      %963 = vmatpush1.xpose.msra.mxu0 0.0
      %964 = vmatprep.subr.mxu0 0.0
      %965 = vmatpush1.xpose.msra.mxu0 0.0
      %966 = vmatprep.subr.mxu0 0.0
      %967 = vmatpush1.xpose.msra.mxu0 0.0
      %968 = vmatprep.subr.mxu0 0.0
      %969 = vmatpush1.xpose.msra.mxu0 0.0
      %970 = vmatprep.subr.mxu0 0.0
      %971 = vmatpush1.xpose.msra.mxu0 0.0
      %972 = vmatprep.mubr.f32.mxu0 0.0
      %973 = vmatmul.mubr.f32.gmra.mrb[0].mxu0 %v904
      %v974 = vpop.f32.mrb[0].mxu0
      %v975 = vadd.f32 0.0, %v974
      %v976 = vpop.f32.mrb[0].mxu0
      %977 = vdwg.mxu0
      %v978 = vsel %vm646, -1e+18, %v975
      %v979 = vsel %vm648, %v978, -inf
      %980 = vmax.xlane.f32.xlu0 %v979
      %v981 = vpop.xlane.xlu0 %980
      %v982 = vsub.f32 %v978, %v981
      %v983 = vmul.f32 %v982, 1.442695
      %v984 = vpow.pop %v983
      %v985 = vsel %vm648, %v984, 0.0
      %986 = vadd.xlane.f32.xlu0 %v985
      %v987 = vpop.xlane.xlu0 %986
      %v988 = vrcp.pop %v987
      %v989 = vmul.f32 %v984, %v988
      %990 = vrot.lane.b32.xlu0 %v561, 96
      %v991 = vpop.permute.xlu0 %990
      %v994 = vsel %vm648, %v989, 0
      %996 = vmatprep.subr.mxu0 0.0
      %997 = vmatpush1.msra.mxu0 %v991
      %998 = vmatprep.subr.mxu0 0.0
      %999 = vmatpush1.msra.mxu0 0.0
      %1000 = vmatprep.subr.mxu0 0.0
      %1001 = vmatpush1.msra.mxu0 0.0
      %1002 = vmatprep.subr.mxu0 0.0
      %1003 = vmatpush1.msra.mxu0 0.0
      %1004 = vmatprep.subr.mxu0 0.0
      %1005 = vmatpush1.msra.mxu0 0.0
      %1006 = vmatprep.subr.mxu0 0.0
      %1007 = vmatpush1.msra.mxu0 0.0
      %1008 = vmatprep.subr.mxu0 0.0
      %1009 = vmatpush1.msra.mxu0 0.0
      %1010 = vmatprep.subr.mxu0 0.0
      %1011 = vmatpush1.msra.mxu0 0.0
      %1012 = vmatprep.subr.mxu0 0.0
      %1013 = vmatpush1.msra.mxu0 0.0
      %1014 = vmatprep.subr.mxu0 0.0
      %1015 = vmatpush1.msra.mxu0 0.0
      %1016 = vmatprep.subr.mxu0 0.0
      %1017 = vmatpush1.msra.mxu0 0.0
      %1018 = vmatprep.subr.mxu0 0.0
      %1019 = vmatpush1.msra.mxu0 0.0
      %1020 = vmatprep.subr.mxu0 0.0
      %1021 = vmatpush1.msra.mxu0 0.0
      %1022 = vmatprep.subr.mxu0 0.0
      %1023 = vmatpush1.msra.mxu0 0.0
      %1024 = vmatprep.subr.mxu0 0.0
      %1025 = vmatpush1.msra.mxu0 0.0
      %1026 = vmatprep.subr.mxu0 0.0
      %1027 = vmatpush1.msra.mxu0 0.0
      %1028 = vmatprep.subr.mxu0 0.0
      %1029 = vmatpush1.msra.mxu0 0.0
      %1030 = vmatprep.subr.mxu0 0.0
      %1031 = vmatpush1.msra.mxu0 0.0
      %1032 = vmatprep.subr.mxu0 0.0
      %1033 = vmatpush1.msra.mxu0 0.0
      %1034 = vmatprep.subr.mxu0 0.0
      %1035 = vmatpush1.msra.mxu0 0.0
      %1036 = vmatprep.subr.mxu0 0.0
      %1037 = vmatpush1.msra.mxu0 0.0
      %1038 = vmatprep.subr.mxu0 0.0
      %1039 = vmatpush1.msra.mxu0 0.0
      %1040 = vmatprep.subr.mxu0 0.0
      %1041 = vmatpush1.msra.mxu0 0.0
      %1042 = vmatprep.subr.mxu0 0.0
      %1043 = vmatpush1.msra.mxu0 0.0
      %1044 = vmatprep.subr.mxu0 0.0
      %1045 = vmatpush1.msra.mxu0 0.0
      %1046 = vmatprep.subr.mxu0 0.0
      %1047 = vmatpush1.msra.mxu0 0.0
      %1048 = vmatprep.subr.mxu0 0.0
      %1049 = vmatpush1.msra.mxu0 0.0
      %1050 = vmatprep.subr.mxu0 0.0
      %1051 = vmatpush1.msra.mxu0 0.0
      %1052 = vmatprep.subr.mxu0 0.0
      %1053 = vmatpush1.msra.mxu0 0.0
      %1054 = vmatprep.subr.mxu0 0.0
      %1055 = vmatpush1.msra.mxu0 0.0
      %1056 = vmatprep.subr.mxu0 0.0
      %1057 = vmatpush1.msra.mxu0 0.0
      %1058 = vmatprep.subr.mxu0 0.0
      %1059 = vmatpush1.msra.mxu0 0.0
      %1060 = vmatprep.mubr.f32.mxu0 0.0
      %1061 = vmatmul.mubr.f32.gmra.mrb[0].mxu0 %v994
      %v1062 = vpop.f32.mrb[0].mxu0
      %v1063 = vadd.f32 0.0, %v1062
      %v1064 = vpop.f32.mrb[0].mxu0
      %1065 = vdwg.mxu0
      %1066 = vrot.lane.b32.xlu0 %v559, 80
      %v1067 = vpop.permute.xlu0 %1066
      %1068 = vrot.lane.b32.xlu0 %v559, 16
      %v1069 = vpop.permute.xlu0 %1068
      %v1070 = vsel %vm566, %v1067, 0
      %v1072 = vsel %vm566, %v1069, 0
      %1074 = vmatprep.subr.mxu0 0.0
      %1075 = vmatpush1.xpose.msra.mxu0 %v1072
      %1076 = vmatprep.subr.mxu0 0.0
      %1077 = vmatpush1.xpose.msra.mxu0 0.0
      %1078 = vmatprep.subr.mxu0 0.0
      %1079 = vmatpush1.xpose.msra.mxu0 0.0
      %1080 = vmatprep.subr.mxu0 0.0
      %1081 = vmatpush1.xpose.msra.mxu0 0.0
      %1082 = vmatprep.subr.mxu0 0.0
      %1083 = vmatpush1.xpose.msra.mxu0 0.0
      %1084 = vmatprep.subr.mxu0 0.0
      %1085 = vmatpush1.xpose.msra.mxu0 0.0
      %1086 = vmatprep.subr.mxu0 0.0
      %1087 = vmatpush1.xpose.msra.mxu0 0.0
      %1088 = vmatprep.subr.mxu0 0.0
      %1089 = vmatpush1.xpose.msra.mxu0 0.0
      %1090 = vmatprep.subr.mxu0 0.0
      %1091 = vmatpush1.xpose.msra.mxu0 0.0
      %1092 = vmatprep.subr.mxu0 0.0
      %1093 = vmatpush1.xpose.msra.mxu0 0.0
      %1094 = vmatprep.subr.mxu0 0.0
      %1095 = vmatpush1.xpose.msra.mxu0 0.0
      %1096 = vmatprep.subr.mxu0 0.0
      %1097 = vmatpush1.xpose.msra.mxu0 0.0
      %1098 = vmatprep.subr.mxu0 0.0
      %1099 = vmatpush1.xpose.msra.mxu0 0.0
      %1100 = vmatprep.subr.mxu0 0.0
      %1101 = vmatpush1.xpose.msra.mxu0 0.0
      %1102 = vmatprep.subr.mxu0 0.0
      %1103 = vmatpush1.xpose.msra.mxu0 0.0
      %1104 = vmatprep.subr.mxu0 0.0
      %1105 = vmatpush1.xpose.msra.mxu0 0.0
      %1106 = vmatprep.subr.mxu0 0.0
      %1107 = vmatpush1.xpose.msra.mxu0 0.0
      %1108 = vmatprep.subr.mxu0 0.0
      %1109 = vmatpush1.xpose.msra.mxu0 0.0
      %1110 = vmatprep.subr.mxu0 0.0
      %1111 = vmatpush1.xpose.msra.mxu0 0.0
      %1112 = vmatprep.subr.mxu0 0.0
      %1113 = vmatpush1.xpose.msra.mxu0 0.0
      %1114 = vmatprep.subr.mxu0 0.0
      %1115 = vmatpush1.xpose.msra.mxu0 0.0
      %1116 = vmatprep.subr.mxu0 0.0
      %1117 = vmatpush1.xpose.msra.mxu0 0.0
      %1118 = vmatprep.subr.mxu0 0.0
      %1119 = vmatpush1.xpose.msra.mxu0 0.0
      %1120 = vmatprep.subr.mxu0 0.0
      %1121 = vmatpush1.xpose.msra.mxu0 0.0
      %1122 = vmatprep.subr.mxu0 0.0
      %1123 = vmatpush1.xpose.msra.mxu0 0.0
      %1124 = vmatprep.subr.mxu0 0.0
      %1125 = vmatpush1.xpose.msra.mxu0 0.0
      %1126 = vmatprep.subr.mxu0 0.0
      %1127 = vmatpush1.xpose.msra.mxu0 0.0
      %1128 = vmatprep.subr.mxu0 0.0
      %1129 = vmatpush1.xpose.msra.mxu0 0.0
      %1130 = vmatprep.subr.mxu0 0.0
      %1131 = vmatpush1.xpose.msra.mxu0 0.0
      %1132 = vmatprep.subr.mxu0 0.0
      %1133 = vmatpush1.xpose.msra.mxu0 0.0
      %1134 = vmatprep.subr.mxu0 0.0
      %1135 = vmatpush1.xpose.msra.mxu0 0.0
      %1136 = vmatprep.subr.mxu0 0.0
      %1137 = vmatpush1.xpose.msra.mxu0 0.0
      %1138 = vmatprep.mubr.f32.mxu0 0.0
      %1139 = vmatmul.mubr.f32.gmra.mrb[0].mxu0 %v1070
      %v1140 = vpop.f32.mrb[0].mxu0
      %v1141 = vadd.f32 0.0, %v1140
      %v1142 = vpop.f32.mrb[0].mxu0
      %1143 = vdwg.mxu0
      %v1144 = vsel %vm646, -1e+18, %v1141
      %v1145 = vsel %vm648, %v1144, -inf
      %1146 = vmax.xlane.f32.xlu0 %v1145
      %v1147 = vpop.xlane.xlu0 %1146
      %v1148 = vsub.f32 %v1144, %v1147
      %v1149 = vmul.f32 %v1148, 1.442695
      %v1150 = vpow.pop %v1149
      %v1151 = vsel %vm648, %v1150, 0.0
      %1152 = vadd.xlane.f32.xlu0 %v1151
      %v1153 = vpop.xlane.xlu0 %1152
      %v1154 = vrcp.pop %v1153
      %v1155 = vmul.f32 %v1150, %v1154
      %1156 = vrot.lane.b32.xlu0 %v561, 80
      %v1157 = vpop.permute.xlu0 %1156
      %v1160 = vsel %vm648, %v1155, 0
      %1162 = vmatprep.subr.mxu0 0.0
      %1163 = vmatpush1.msra.mxu0 %v1157
      %1164 = vmatprep.subr.mxu0 0.0
      %1165 = vmatpush1.msra.mxu0 0.0
      %1166 = vmatprep.subr.mxu0 0.0
      %1167 = vmatpush1.msra.mxu0 0.0
      %1168 = vmatprep.subr.mxu0 0.0
      %1169 = vmatpush1.msra.mxu0 0.0
      %1170 = vmatprep.subr.mxu0 0.0
      %1171 = vmatpush1.msra.mxu0 0.0
      %1172 = vmatprep.subr.mxu0 0.0
      %1173 = vmatpush1.msra.mxu0 0.0
      %1174 = vmatprep.subr.mxu0 0.0
      %1175 = vmatpush1.msra.mxu0 0.0
      %1176 = vmatprep.subr.mxu0 0.0
      %1177 = vmatpush1.msra.mxu0 0.0
      %1178 = vmatprep.subr.mxu0 0.0
      %1179 = vmatpush1.msra.mxu0 0.0
      %1180 = vmatprep.subr.mxu0 0.0
      %1181 = vmatpush1.msra.mxu0 0.0
      %1182 = vmatprep.subr.mxu0 0.0
      %1183 = vmatpush1.msra.mxu0 0.0
      %1184 = vmatprep.subr.mxu0 0.0
      %1185 = vmatpush1.msra.mxu0 0.0
      %1186 = vmatprep.subr.mxu0 0.0
      %1187 = vmatpush1.msra.mxu0 0.0
      %1188 = vmatprep.subr.mxu0 0.0
      %1189 = vmatpush1.msra.mxu0 0.0
      %1190 = vmatprep.subr.mxu0 0.0
      %1191 = vmatpush1.msra.mxu0 0.0
      %1192 = vmatprep.subr.mxu0 0.0
      %1193 = vmatpush1.msra.mxu0 0.0
      %1194 = vmatprep.subr.mxu0 0.0
      %1195 = vmatpush1.msra.mxu0 0.0
      %1196 = vmatprep.subr.mxu0 0.0
      %1197 = vmatpush1.msra.mxu0 0.0
      %1198 = vmatprep.subr.mxu0 0.0
      %1199 = vmatpush1.msra.mxu0 0.0
      %1200 = vmatprep.subr.mxu0 0.0
      %1201 = vmatpush1.msra.mxu0 0.0
      %1202 = vmatprep.subr.mxu0 0.0
      %1203 = vmatpush1.msra.mxu0 0.0
      %1204 = vmatprep.subr.mxu0 0.0
      %1205 = vmatpush1.msra.mxu0 0.0
      %1206 = vmatprep.subr.mxu0 0.0
      %1207 = vmatpush1.msra.mxu0 0.0
      %1208 = vmatprep.subr.mxu0 0.0
      %1209 = vmatpush1.msra.mxu0 0.0
      %1210 = vmatprep.subr.mxu0 0.0
      %1211 = vmatpush1.msra.mxu0 0.0
      %1212 = vmatprep.subr.mxu0 0.0
      %1213 = vmatpush1.msra.mxu0 0.0
      %1214 = vmatprep.subr.mxu0 0.0
      %1215 = vmatpush1.msra.mxu0 0.0
      %1216 = vmatprep.subr.mxu0 0.0
      %1217 = vmatpush1.msra.mxu0 0.0
      %1218 = vmatprep.subr.mxu0 0.0
      %1219 = vmatpush1.msra.mxu0 0.0
      %1220 = vmatprep.subr.mxu0 0.0
      %1221 = vmatpush1.msra.mxu0 0.0
      %1222 = vmatprep.subr.mxu0 0.0
      %1223 = vmatpush1.msra.mxu0 0.0
      %1224 = vmatprep.subr.mxu0 0.0
      %1225 = vmatpush1.msra.mxu0 0.0
      %1226 = vmatprep.mubr.f32.mxu0 0.0
      %1227 = vmatmul.mubr.f32.gmra.mrb[0].mxu0 %v1160
      %v1228 = vpop.f32.mrb[0].mxu0
      %v1229 = vadd.f32 0.0, %v1228
      %v1230 = vpop.f32.mrb[0].mxu0
      %1231 = vdwg.mxu0
      %1233 = vrot.lane.b32.xlu0 %v897, 16
      %v1234 = vpop.permute.xlu0 %1233
      %1237 = vrot.lane.b32.xlu0 %v1063, 32
      %v1238 = vpop.permute.xlu0 %1237
      %1241 = vrot.lane.b32.xlu0 %v1229, 48
      %v1242 = vpop.permute.xlu0 %1241
      %v1244 = vsel %vm566, %v730, %v1234
      %vm1245 = vcmask 261120
      %v1246 = vsel %vm1245, %v1244, %v1238
      %vm1247 = vcmask 392192
      %v1248 = vsel %vm1247, %v1246, %v1242
      %v1250 = vlaneseq
      %v1251 = vshrl.u32 %v1250, 7
      %v1252 = vsub.s32 0, %v1251
      %v1253 = vrot.slane %v477, %v1252
      %v1256 = vsel %vm427, %v1248, 0
      %1258 = vmatprep.subr.mxu0 0.0
      %1259 = vmatpush1.msra.mxu0 %v469
      %1260 = vmatprep.subr.mxu0 0.0
      %1261 = vmatpush1.msra.mxu0 %v470
      %1262 = vmatprep.subr.mxu0 0.0
      %1263 = vmatpush1.msra.mxu0 %v471
      %1264 = vmatprep.subr.mxu0 0.0
      %1265 = vmatpush1.msra.mxu0 %v472
      %1266 = vmatprep.subr.mxu0 0.0
      %1267 = vmatpush1.msra.mxu0 %v473
      %1268 = vmatprep.subr.mxu0 0.0
      %1269 = vmatpush1.msra.mxu0 %v474
      %1270 = vmatprep.subr.mxu0 0.0
      %1271 = vmatpush1.msra.mxu0 %v475
      %1272 = vmatprep.subr.mxu0 0.0
      %1273 = vmatpush1.msra.mxu0 %v476
      %1274 = vmatprep.subr.mxu0 0.0
      %1275 = vmatpush1.msra.mxu0 0.0
      %1276 = vmatprep.subr.mxu0 0.0
      %1277 = vmatpush1.msra.mxu0 0.0
      %1278 = vmatprep.subr.mxu0 0.0
      %1279 = vmatpush1.msra.mxu0 0.0
      %1280 = vmatprep.subr.mxu0 0.0
      %1281 = vmatpush1.msra.mxu0 0.0
      %1282 = vmatprep.subr.mxu0 0.0
      %1283 = vmatpush1.msra.mxu0 0.0
      %1284 = vmatprep.subr.mxu0 0.0
      %1285 = vmatpush1.msra.mxu0 0.0
      %1286 = vmatprep.subr.mxu0 0.0
      %1287 = vmatpush1.msra.mxu0 0.0
      %1288 = vmatprep.subr.mxu0 0.0
      %1289 = vmatpush1.msra.mxu0 0.0
      %1290 = vmatprep.subr.mxu0 0.0
      %1291 = vmatpush1.msra.mxu0 0.0
      %1292 = vmatprep.subr.mxu0 0.0
      %1293 = vmatpush1.msra.mxu0 0.0
      %1294 = vmatprep.subr.mxu0 0.0
      %1295 = vmatpush1.msra.mxu0 0.0
      %1296 = vmatprep.subr.mxu0 0.0
      %1297 = vmatpush1.msra.mxu0 0.0
      %1298 = vmatprep.subr.mxu0 0.0
      %1299 = vmatpush1.msra.mxu0 0.0
      %1300 = vmatprep.subr.mxu0 0.0
      %1301 = vmatpush1.msra.mxu0 0.0
      %1302 = vmatprep.subr.mxu0 0.0
      %1303 = vmatpush1.msra.mxu0 0.0
      %1304 = vmatprep.subr.mxu0 0.0
      %1305 = vmatpush1.msra.mxu0 0.0
      %1306 = vmatprep.subr.mxu0 0.0
      %1307 = vmatpush1.msra.mxu0 0.0
      %1308 = vmatprep.subr.mxu0 0.0
      %1309 = vmatpush1.msra.mxu0 0.0
      %1310 = vmatprep.subr.mxu0 0.0
      %1311 = vmatpush1.msra.mxu0 0.0
      %1312 = vmatprep.subr.mxu0 0.0
      %1313 = vmatpush1.msra.mxu0 0.0
      %1314 = vmatprep.subr.mxu0 0.0
      %1315 = vmatpush1.msra.mxu0 0.0
      %1316 = vmatprep.subr.mxu0 0.0
      %1317 = vmatpush1.msra.mxu0 0.0
      %1318 = vmatprep.subr.mxu0 0.0
      %1319 = vmatpush1.msra.mxu0 0.0
      %1320 = vmatprep.subr.mxu0 0.0
      %1321 = vmatpush1.msra.mxu0 0.0
      %1322 = vmatprep.mubr.f32.mxu0 0.0
      %1323 = vmatmul.mubr.f32.gmra.mrb[0].mxu0 %v1256
      %v1324 = vpop.f32.mrb[0].mxu0
      %v1325 = vadd.f32 %v1253, %v1324
      %v1326 = vpop.f32.mrb[0].mxu0
      %1327 = vdwg.mxu0
      %v1328 = vadd.f32 %v1325, %v423
      %v1329 = vsel %vm427, %v1328, 0.0
      %1330 = vadd.xlane.f32.xlu0 %v1329
      %v1331 = vpop.xlane.xlu0 %1330
      %v1332 = vmul.f32 %v1331, %v431
      %v1333 = vsub.f32 %v1328, %v1332
      %v1334 = vmul.f32 %v1333, %v1333
      %v1335 = vsel %vm427, %v1334, 0.0
      %1336 = vadd.xlane.f32.xlu0 %v1335
      %v1337 = vpop.xlane.xlu0 %1336
      %v1338 = vmul.f32 %v1337, %v431
      %v1339 = vadd.f32 %v1338, 1e-06
      %v1340 = vrsqrt.pop %v1339
      %v1341 = vmul.f32 %v1333, %v1340
      %v1342 = vlaneseq
      %v1343 = vshrl.u32 %v1342, 7
      %v1344 = vsub.s32 2, %v1343
      %v1345 = vrot.slane %v426, %v1344
      %v1346 = vmul.f32 %v1341, %v1345
      %v1347 = vlaneseq
      %v1348 = vshrl.u32 %v1347, 7
      %v1349 = vsub.s32 3, %v1348
      %v1350 = vrot.slane %v426, %v1349
      %v1351 = vadd.f32 %v1346, %v1350
      %v1352 = vsel %vm427, %v1351, 0.0
      %1353 = vadd.xlane.f32.xlu0 %v1352
      %v1354 = vpop.xlane.xlu0 %1353
      %v1355 = vmul.f32 %v1354, %v431
      %v1356 = vsub.f32 %v1351, %v1355
      %v1357 = vmul.f32 %v1356, %v1356
      %v1358 = vsel %vm427, %v1357, 0.0
      %1359 = vadd.xlane.f32.xlu0 %v1358
      %v1360 = vpop.xlane.xlu0 %1359
      %v1361 = vmul.f32 %v1360, %v431
      %v1362 = vadd.f32 %v1361, 1e-06
      %v1363 = vrsqrt.pop %v1362
      %v1364 = vmul.f32 %v1356, %v1363
      %v1365 = vlaneseq
      %v1366 = vshrl.u32 %v1365, 7
      %v1367 = vsub.s32 4, %v1366
      %v1368 = vrot.slane %v426, %v1367
      %v1369 = vmul.f32 %v1364, %v1368
      %v1370 = vlaneseq
      %v1371 = vshrl.u32 %v1370, 7
      %v1372 = vsub.s32 5, %v1371
      %v1373 = vrot.slane %v426, %v1372
      %v1374 = vadd.f32 %v1369, %v1373
      %v1375 = vld [vmem:[%s6] sm:$0xff]
      %v1376 = vld [vmem:[%s6 + $0x8] sm:$0xff]
      %v1377 = vld [vmem:[%s6 + $0x10] sm:$0xff]
      %v1378 = vld [vmem:[%s6 + $0x18] sm:$0xff]
      %v1379 = vld [vmem:[%s6 + $0x20] sm:$0xff]
      %v1380 = vld [vmem:[%s6 + $0x28] sm:$0xff]
      %v1381 = vld [vmem:[%s6 + $0x30] sm:$0xff]
      %v1382 = vld [vmem:[%s6 + $0x38] sm:$0xff]
      %v1383 = vld [vmem:[%s7] sm:$0x1]
      %v1385 = vlaneseq
      %v1386 = vshrl.u32 %v1385, 7
      %v1387 = vsub.s32 0, %v1386
      %v1388 = vrot.slane %v1383, %v1387
      %v1391 = vsel %vm427, %v1374, 0
      %1393 = vmatprep.subr.mxu0 0.0
      %1394 = vmatpush1.msra.mxu0 %v1375
      %1395 = vmatprep.subr.mxu0 0.0
      %1396 = vmatpush1.msra.mxu0 %v1376
      %1397 = vmatprep.subr.mxu0 0.0
      %1398 = vmatpush1.msra.mxu0 %v1377
      %1399 = vmatprep.subr.mxu0 0.0
      %1400 = vmatpush1.msra.mxu0 %v1378
      %1401 = vmatprep.subr.mxu0 0.0
      %1402 = vmatpush1.msra.mxu0 %v1379
      %1403 = vmatprep.subr.mxu0 0.0
      %1404 = vmatpush1.msra.mxu0 %v1380
      %1405 = vmatprep.subr.mxu0 0.0
      %1406 = vmatpush1.msra.mxu0 %v1381
      %1407 = vmatprep.subr.mxu0 0.0
      %1408 = vmatpush1.msra.mxu0 %v1382
      %1409 = vmatprep.subr.mxu0 0.0
      %1410 = vmatpush1.msra.mxu0 0.0
      %1411 = vmatprep.subr.mxu0 0.0
      %1412 = vmatpush1.msra.mxu0 0.0
      %1413 = vmatprep.subr.mxu0 0.0
      %1414 = vmatpush1.msra.mxu0 0.0
      %1415 = vmatprep.subr.mxu0 0.0
      %1416 = vmatpush1.msra.mxu0 0.0
      %1417 = vmatprep.subr.mxu0 0.0
      %1418 = vmatpush1.msra.mxu0 0.0
      %1419 = vmatprep.subr.mxu0 0.0
      %1420 = vmatpush1.msra.mxu0 0.0
      %1421 = vmatprep.subr.mxu0 0.0
      %1422 = vmatpush1.msra.mxu0 0.0
      %1423 = vmatprep.subr.mxu0 0.0
      %1424 = vmatpush1.msra.mxu0 0.0
      %1425 = vmatprep.subr.mxu0 0.0
      %1426 = vmatpush1.msra.mxu0 0.0
      %1427 = vmatprep.subr.mxu0 0.0
      %1428 = vmatpush1.msra.mxu0 0.0
      %1429 = vmatprep.subr.mxu0 0.0
      %1430 = vmatpush1.msra.mxu0 0.0
      %1431 = vmatprep.subr.mxu0 0.0
      %1432 = vmatpush1.msra.mxu0 0.0
      %1433 = vmatprep.subr.mxu0 0.0
      %1434 = vmatpush1.msra.mxu0 0.0
      %1435 = vmatprep.subr.mxu0 0.0
      %1436 = vmatpush1.msra.mxu0 0.0
      %1437 = vmatprep.subr.mxu0 0.0
      %1438 = vmatpush1.msra.mxu0 0.0
      %1439 = vmatprep.subr.mxu0 0.0
      %1440 = vmatpush1.msra.mxu0 0.0
      %1441 = vmatprep.subr.mxu0 0.0
      %1442 = vmatpush1.msra.mxu0 0.0
      %1443 = vmatprep.subr.mxu0 0.0
      %1444 = vmatpush1.msra.mxu0 0.0
      %1445 = vmatprep.subr.mxu0 0.0
      %1446 = vmatpush1.msra.mxu0 0.0
      %1447 = vmatprep.subr.mxu0 0.0
      %1448 = vmatpush1.msra.mxu0 0.0
      %1449 = vmatprep.subr.mxu0 0.0
      %1450 = vmatpush1.msra.mxu0 0.0
      %1451 = vmatprep.subr.mxu0 0.0
      %1452 = vmatpush1.msra.mxu0 0.0
      %1453 = vmatprep.subr.mxu0 0.0
      %1454 = vmatpush1.msra.mxu0 0.0
      %1455 = vmatprep.subr.mxu0 0.0
      %1456 = vmatpush1.msra.mxu0 0.0
      %1457 = vmatprep.mubr.f32.mxu0 0.0
      %1458 = vmatmul.mubr.f32.gmra.mrb[0].mxu0 %v1391
      %v1459 = vpop.f32.mrb[0].mxu0
      %v1460 = vadd.f32 %v1388, %v1459
      %v1461 = vpop.f32.mrb[0].mxu0
      %1462 = vdwg.mxu0
      %v1463 = vmax.f32 %v1460, 0.0
      %v1464 = vld [vmem:[%s8] sm:$0xff]
      %v1465 = vld [vmem:[%s8 + $0x8] sm:$0xff]
      %v1466 = vld [vmem:[%s8 + $0x10] sm:$0xff]
      %v1467 = vld [vmem:[%s8 + $0x18] sm:$0xff]
      %v1468 = vld [vmem:[%s8 + $0x20] sm:$0xff]
      %v1469 = vld [vmem:[%s8 + $0x28] sm:$0xff]
      %v1470 = vld [vmem:[%s8 + $0x30] sm:$0xff]
      %v1471 = vld [vmem:[%s8 + $0x38] sm:$0xff]
      %v1472 = vld [vmem:[%s8 + $0x40] sm:$0xff]
      %v1473 = vld [vmem:[%s8 + $0x48] sm:$0xff]
      %v1474 = vld [vmem:[%s8 + $0x50] sm:$0xff]
      %v1475 = vld [vmem:[%s8 + $0x58] sm:$0xff]
      %v1476 = vld [vmem:[%s8 + $0x60] sm:$0xff]
      %v1477 = vld [vmem:[%s8 + $0x68] sm:$0xff]
      %v1478 = vld [vmem:[%s8 + $0x70] sm:$0xff]
      %v1479 = vld [vmem:[%s8 + $0x78] sm:$0xff]
      %v1480 = vld [vmem:[%s9] sm:$0x1]
      %v1482 = vlaneseq
      %v1483 = vshrl.u32 %v1482, 7
      %v1484 = vsub.s32 0, %v1483
      %v1485 = vrot.slane %v1480, %v1484
      %1487 = vmatprep.subr.mxu0 0.0
      %1488 = vmatpush1.msra.mxu0 %v1464
      %1489 = vmatprep.subr.mxu0 0.0
      %1490 = vmatpush1.msra.mxu0 %v1465
      %1491 = vmatprep.subr.mxu0 0.0
      %1492 = vmatpush1.msra.mxu0 %v1466
      %1493 = vmatprep.subr.mxu0 0.0
      %1494 = vmatpush1.msra.mxu0 %v1467
      %1495 = vmatprep.subr.mxu0 0.0
      %1496 = vmatpush1.msra.mxu0 %v1468
      %1497 = vmatprep.subr.mxu0 0.0
      %1498 = vmatpush1.msra.mxu0 %v1469
      %1499 = vmatprep.subr.mxu0 0.0
      %1500 = vmatpush1.msra.mxu0 %v1470
      %1501 = vmatprep.subr.mxu0 0.0
      %1502 = vmatpush1.msra.mxu0 %v1471
      %1503 = vmatprep.subr.mxu0 0.0
      %1504 = vmatpush1.msra.mxu0 %v1472
      %1505 = vmatprep.subr.mxu0 0.0
      %1506 = vmatpush1.msra.mxu0 %v1473
      %1507 = vmatprep.subr.mxu0 0.0
      %1508 = vmatpush1.msra.mxu0 %v1474
      %1509 = vmatprep.subr.mxu0 0.0
      %1510 = vmatpush1.msra.mxu0 %v1475
      %1511 = vmatprep.subr.mxu0 0.0
      %1512 = vmatpush1.msra.mxu0 %v1476
      %1513 = vmatprep.subr.mxu0 0.0
      %1514 = vmatpush1.msra.mxu0 %v1477
      %1515 = vmatprep.subr.mxu0 0.0
      %1516 = vmatpush1.msra.mxu0 %v1478
      %1517 = vmatprep.subr.mxu0 0.0
      %1518 = vmatpush1.msra.mxu0 %v1479
      %1519 = vmatprep.subr.mxu0 0.0
      %1520 = vmatpush1.msra.mxu0 0.0
      %1521 = vmatprep.subr.mxu0 0.0
      %1522 = vmatpush1.msra.mxu0 0.0
      %1523 = vmatprep.subr.mxu0 0.0
      %1524 = vmatpush1.msra.mxu0 0.0
      %1525 = vmatprep.subr.mxu0 0.0
      %1526 = vmatpush1.msra.mxu0 0.0
      %1527 = vmatprep.subr.mxu0 0.0
      %1528 = vmatpush1.msra.mxu0 0.0
      %1529 = vmatprep.subr.mxu0 0.0
      %1530 = vmatpush1.msra.mxu0 0.0
      %1531 = vmatprep.subr.mxu0 0.0
      %1532 = vmatpush1.msra.mxu0 0.0
      %1533 = vmatprep.subr.mxu0 0.0
      %1534 = vmatpush1.msra.mxu0 0.0
      %1535 = vmatprep.subr.mxu0 0.0
      %1536 = vmatpush1.msra.mxu0 0.0
      %1537 = vmatprep.subr.mxu0 0.0
      %1538 = vmatpush1.msra.mxu0 0.0
      %1539 = vmatprep.subr.mxu0 0.0
      %1540 = vmatpush1.msra.mxu0 0.0
      %1541 = vmatprep.subr.mxu0 0.0
      %1542 = vmatpush1.msra.mxu0 0.0
      %1543 = vmatprep.subr.mxu0 0.0
      %1544 = vmatpush1.msra.mxu0 0.0
      %1545 = vmatprep.subr.mxu0 0.0
      %1546 = vmatpush1.msra.mxu0 0.0
      %1547 = vmatprep.subr.mxu0 0.0
      %1548 = vmatpush1.msra.mxu0 0.0
      %1549 = vmatprep.subr.mxu0 0.0
      %1550 = vmatpush1.msra.mxu0 0.0
      %1551 = vmatprep.mubr.f32.mxu0 0.0
      %1552 = vmatmul.mubr.f32.gmra.mrb[0].mxu0 %v1463
      %v1553 = vpop.f32.mrb[0].mxu0
      %v1554 = vadd.f32 %v1485, %v1553
      %v1555 = vpop.f32.mrb[0].mxu0
      %1556 = vdwg.mxu0
      %v1557 = vadd.f32 %v1554, %v1351
      %v1558 = vadd.f32 %v1557, %v1328
      %s1559 = scalar_lea.vmem %s10, 8
      %v1560 = vld [vmem:[%s1559] sm:$0x3f]
      %v1561 = vsel %vm427, %v1558, 0.0
      %1562 = vadd.xlane.f32.xlu0 %v1561
      %v1563 = vpop.xlane.xlu0 %1562
      %v1564 = vmul.f32 %v1563, %v431
      %v1565 = vsub.f32 %v1558, %v1564
      %v1566 = vmul.f32 %v1565, %v1565
      %v1567 = vsel %vm427, %v1566, 0.0
      %1568 = vadd.xlane.f32.xlu0 %v1567
      %v1569 = vpop.xlane.xlu0 %1568
      %v1570 = vmul.f32 %v1569, %v431
      %v1571 = vadd.f32 %v1570, 1e-06
      %v1572 = vrsqrt.pop %v1571
      %v1573 = vmul.f32 %v1565, %v1572
      %v1574 = vlaneseq
      %v1575 = vshrl.u32 %v1574, 7
      %v1576 = vsub.s32 0, %v1575
      %v1577 = vrot.slane %v1560, %v1576
      %v1578 = vmul.f32 %v1573, %v1577
      %v1579 = vlaneseq
      %v1580 = vshrl.u32 %v1579, 7
      %v1581 = vsub.s32 1, %v1580
      %v1582 = vrot.slane %v1560, %v1581
      %v1583 = vadd.f32 %v1578, %v1582
      %s1584 = scalar_lea.vmem %s2, 128
      %v1585 = vld [vmem:[%s1584] sm:$0xff]
      %v1586 = vld [vmem:[%s1584 + $0x8] sm:$0xff]
      %v1587 = vld [vmem:[%s1584 + $0x10] sm:$0xff]
      %v1588 = vld [vmem:[%s1584 + $0x18] sm:$0xff]
      %v1589 = vld [vmem:[%s1584 + $0x20] sm:$0xff]
      %v1590 = vld [vmem:[%s1584 + $0x28] sm:$0xff]
      %v1591 = vld [vmem:[%s1584 + $0x30] sm:$0xff]
      %v1592 = vld [vmem:[%s1584 + $0x38] sm:$0xff]
      %v1593 = vld [vmem:[%s1584 + $0x40] sm:$0xff]
      %v1594 = vld [vmem:[%s1584 + $0x48] sm:$0xff]
      %v1595 = vld [vmem:[%s1584 + $0x50] sm:$0xff]
      %v1596 = vld [vmem:[%s1584 + $0x58] sm:$0xff]
      %v1597 = vld [vmem:[%s1584 + $0x60] sm:$0xff]
      %v1598 = vld [vmem:[%s1584 + $0x68] sm:$0xff]
      %v1599 = vld [vmem:[%s1584 + $0x70] sm:$0xff]
      %v1600 = vld [vmem:[%s1584 + $0x78] sm:$0xff]
      %s1601 = scalar_lea.vmem %s3, 2
      %v1602 = vld [vmem:[%s1601] sm:$0x3]
      %s1603 = scalar_lea.vmem %s4, 64
      %v1604 = vld [vmem:[%s1603] sm:$0xff]
      %v1605 = vld [vmem:[%s1603 + $0x8] sm:$0xff]
      %v1606 = vld [vmem:[%s1603 + $0x10] sm:$0xff]
      %v1607 = vld [vmem:[%s1603 + $0x18] sm:$0xff]
      %v1608 = vld [vmem:[%s1603 + $0x20] sm:$0xff]
      %v1609 = vld [vmem:[%s1603 + $0x28] sm:$0xff]
      %v1610 = vld [vmem:[%s1603 + $0x30] sm:$0xff]
      %v1611 = vld [vmem:[%s1603 + $0x38] sm:$0xff]
      %s1612 = scalar_lea.vmem %s5, 1
      %v1613 = vld [vmem:[%s1612] sm:$0x1]
      %v1615 = vlaneseq
      %v1616 = vshrl.u32 %v1615, 7
      %v1617 = vsub.s32 0, %v1616
      %v1618 = vrot.slane %v1602, %v1617
      %v1619 = vlaneseq
      %v1620 = vshrl.u32 %v1619, 7
      %v1621 = vsub.s32 1, %v1620
      %v1622 = vrot.slane %v1602, %v1621
      %v1626 = vsel %vm427, %v1583, 0
      %1628 = vmatprep.subr.mxu0 %v1586
      %1629 = vmatpush1.msra.mxu0 %v1585
      %1630 = vmatprep.subr.mxu0 %v1588
      %1631 = vmatpush1.msra.mxu0 %v1587
      %1632 = vmatprep.subr.mxu0 %v1590
      %1633 = vmatpush1.msra.mxu0 %v1589
      %1634 = vmatprep.subr.mxu0 %v1592
      %1635 = vmatpush1.msra.mxu0 %v1591
      %1636 = vmatprep.subr.mxu0 %v1594
      %1637 = vmatpush1.msra.mxu0 %v1593
      %1638 = vmatprep.subr.mxu0 %v1596
      %1639 = vmatpush1.msra.mxu0 %v1595
      %1640 = vmatprep.subr.mxu0 %v1598
      %1641 = vmatpush1.msra.mxu0 %v1597
      %1642 = vmatprep.subr.mxu0 %v1600
      %1643 = vmatpush1.msra.mxu0 %v1599
      %1644 = vmatprep.subr.mxu0 0.0
      %1645 = vmatpush1.msra.mxu0 0.0
      %1646 = vmatprep.subr.mxu0 0.0
      %1647 = vmatpush1.msra.mxu0 0.0
      %1648 = vmatprep.subr.mxu0 0.0
      %1649 = vmatpush1.msra.mxu0 0.0
      %1650 = vmatprep.subr.mxu0 0.0
      %1651 = vmatpush1.msra.mxu0 0.0
      %1652 = vmatprep.subr.mxu0 0.0
      %1653 = vmatpush1.msra.mxu0 0.0
      %1654 = vmatprep.subr.mxu0 0.0
      %1655 = vmatpush1.msra.mxu0 0.0
      %1656 = vmatprep.subr.mxu0 0.0
      %1657 = vmatpush1.msra.mxu0 0.0
      %1658 = vmatprep.subr.mxu0 0.0
      %1659 = vmatpush1.msra.mxu0 0.0
      %1660 = vmatprep.subr.mxu0 0.0
      %1661 = vmatpush1.msra.mxu0 0.0
      %1662 = vmatprep.subr.mxu0 0.0
      %1663 = vmatpush1.msra.mxu0 0.0
      %1664 = vmatprep.subr.mxu0 0.0
      %1665 = vmatpush1.msra.mxu0 0.0
      %1666 = vmatprep.subr.mxu0 0.0
      %1667 = vmatpush1.msra.mxu0 0.0
      %1668 = vmatprep.subr.mxu0 0.0
      %1669 = vmatpush1.msra.mxu0 0.0
      %1670 = vmatprep.subr.mxu0 0.0
      %1671 = vmatpush1.msra.mxu0 0.0
      %1672 = vmatprep.subr.mxu0 0.0
      %1673 = vmatpush1.msra.mxu0 0.0
      %1674 = vmatprep.subr.mxu0 0.0
      %1675 = vmatpush1.msra.mxu0 0.0
      %1676 = vmatprep.subr.mxu0 0.0
      %1677 = vmatpush1.msra.mxu0 0.0
      %1678 = vmatprep.subr.mxu0 0.0
      %1679 = vmatpush1.msra.mxu0 0.0
      %1680 = vmatprep.subr.mxu0 0.0
      %1681 = vmatpush1.msra.mxu0 0.0
      %1682 = vmatprep.subr.mxu0 0.0
      %1683 = vmatpush1.msra.mxu0 0.0
      %1684 = vmatprep.subr.mxu0 0.0
      %1685 = vmatpush1.msra.mxu0 0.0
      %1686 = vmatprep.subr.mxu0 0.0
      %1687 = vmatpush1.msra.mxu0 0.0
      %1688 = vmatprep.subr.mxu0 0.0
      %1689 = vmatpush1.msra.mxu0 0.0
      %1690 = vmatprep.subr.mxu0 0.0
      %1691 = vmatpush1.msra.mxu0 0.0
      %1692 = vmatprep.mubr.f32.mxu0 0.0
      %1693 = vmatmul.mubr.f32.gmra.mrb[0].mxu0 %v1626
      %v1694 = vpop.f32.mrb[0].mxu0
      %v1695 = vadd.f32 %v1618, %v1694
      %v1696 = vpop.f32.mrb[0].mxu0
      %v1697 = vadd.f32 %v1622, %v1696
      %1698 = vdwg.mxu0
      %1700 = vrot.lane.b32.xlu0 %v1695, 64
      %v1701 = vpop.permute.xlu0 %1700
      %v1702 = vsel %vm566, %v1695, 0
      %v1704 = vsel %vm566, %v1701, 0
      %1706 = vmatprep.subr.mxu0 0.0
      %1707 = vmatpush1.xpose.msra.mxu0 %v1704
      %1708 = vmatprep.subr.mxu0 0.0
      %1709 = vmatpush1.xpose.msra.mxu0 0.0
      %1710 = vmatprep.subr.mxu0 0.0
      %1711 = vmatpush1.xpose.msra.mxu0 0.0
      %1712 = vmatprep.subr.mxu0 0.0
      %1713 = vmatpush1.xpose.msra.mxu0 0.0
      %1714 = vmatprep.subr.mxu0 0.0
      %1715 = vmatpush1.xpose.msra.mxu0 0.0
      %1716 = vmatprep.subr.mxu0 0.0
      %1717 = vmatpush1.xpose.msra.mxu0 0.0
      %1718 = vmatprep.subr.mxu0 0.0
      %1719 = vmatpush1.xpose.msra.mxu0 0.0
      %1720 = vmatprep.subr.mxu0 0.0
      %1721 = vmatpush1.xpose.msra.mxu0 0.0
      %1722 = vmatprep.subr.mxu0 0.0
      %1723 = vmatpush1.xpose.msra.mxu0 0.0
      %1724 = vmatprep.subr.mxu0 0.0
      %1725 = vmatpush1.xpose.msra.mxu0 0.0
      %1726 = vmatprep.subr.mxu0 0.0
      %1727 = vmatpush1.xpose.msra.mxu0 0.0
      %1728 = vmatprep.subr.mxu0 0.0
      %1729 = vmatpush1.xpose.msra.mxu0 0.0
      %1730 = vmatprep.subr.mxu0 0.0
      %1731 = vmatpush1.xpose.msra.mxu0 0.0
      %1732 = vmatprep.subr.mxu0 0.0
      %1733 = vmatpush1.xpose.msra.mxu0 0.0
      %1734 = vmatprep.subr.mxu0 0.0
      %1735 = vmatpush1.xpose.msra.mxu0 0.0
      %1736 = vmatprep.subr.mxu0 0.0
      %1737 = vmatpush1.xpose.msra.mxu0 0.0
      %1738 = vmatprep.subr.mxu0 0.0
      %1739 = vmatpush1.xpose.msra.mxu0 0.0
      %1740 = vmatprep.subr.mxu0 0.0
      %1741 = vmatpush1.xpose.msra.mxu0 0.0
      %1742 = vmatprep.subr.mxu0 0.0
      %1743 = vmatpush1.xpose.msra.mxu0 0.0
      %1744 = vmatprep.subr.mxu0 0.0
      %1745 = vmatpush1.xpose.msra.mxu0 0.0
      %1746 = vmatprep.subr.mxu0 0.0
      %1747 = vmatpush1.xpose.msra.mxu0 0.0
      %1748 = vmatprep.subr.mxu0 0.0
      %1749 = vmatpush1.xpose.msra.mxu0 0.0
      %1750 = vmatprep.subr.mxu0 0.0
      %1751 = vmatpush1.xpose.msra.mxu0 0.0
      %1752 = vmatprep.subr.mxu0 0.0
      %1753 = vmatpush1.xpose.msra.mxu0 0.0
      %1754 = vmatprep.subr.mxu0 0.0
      %1755 = vmatpush1.xpose.msra.mxu0 0.0
      %1756 = vmatprep.subr.mxu0 0.0
      %1757 = vmatpush1.xpose.msra.mxu0 0.0
      %1758 = vmatprep.subr.mxu0 0.0
      %1759 = vmatpush1.xpose.msra.mxu0 0.0
      %1760 = vmatprep.subr.mxu0 0.0
      %1761 = vmatpush1.xpose.msra.mxu0 0.0
      %1762 = vmatprep.subr.mxu0 0.0
      %1763 = vmatpush1.xpose.msra.mxu0 0.0
      %1764 = vmatprep.subr.mxu0 0.0
      %1765 = vmatpush1.xpose.msra.mxu0 0.0
      %1766 = vmatprep.subr.mxu0 0.0
      %1767 = vmatpush1.xpose.msra.mxu0 0.0
      %1768 = vmatprep.subr.mxu0 0.0
      %1769 = vmatpush1.xpose.msra.mxu0 0.0
      %1770 = vmatprep.mubr.f32.mxu0 0.0
      %1771 = vmatmul.mubr.f32.gmra.mrb[0].mxu0 %v1702
      %v1772 = vpop.f32.mrb[0].mxu0
      %v1773 = vadd.f32 0.0, %v1772
      %v1774 = vpop.f32.mrb[0].mxu0
      %1775 = vdwg.mxu0
      %v1776 = vsel %vm646, -1e+18, %v1773
      %v1777 = vsel %vm648, %v1776, -inf
      %1778 = vmax.xlane.f32.xlu0 %v1777
      %v1779 = vpop.xlane.xlu0 %1778
      %v1780 = vsub.f32 %v1776, %v1779
      %v1781 = vmul.f32 %v1780, 1.442695
      %v1782 = vpow.pop %v1781
      %v1783 = vsel %vm648, %v1782, 0.0
      %1784 = vadd.xlane.f32.xlu0 %v1783
      %v1785 = vpop.xlane.xlu0 %1784
      %v1786 = vrcp.pop %v1785
      %v1787 = vmul.f32 %v1782, %v1786
      %v1789 = vsel %vm648, %v1787, 0
      %1791 = vmatprep.subr.mxu0 0.0
      %1792 = vmatpush1.msra.mxu0 %v1697
      %1793 = vmatprep.subr.mxu0 0.0
      %1794 = vmatpush1.msra.mxu0 0.0
      %1795 = vmatprep.subr.mxu0 0.0
      %1796 = vmatpush1.msra.mxu0 0.0
      %1797 = vmatprep.subr.mxu0 0.0
      %1798 = vmatpush1.msra.mxu0 0.0
      %1799 = vmatprep.subr.mxu0 0.0
      %1800 = vmatpush1.msra.mxu0 0.0
      %1801 = vmatprep.subr.mxu0 0.0
      %1802 = vmatpush1.msra.mxu0 0.0
      %1803 = vmatprep.subr.mxu0 0.0
      %1804 = vmatpush1.msra.mxu0 0.0
      %1805 = vmatprep.subr.mxu0 0.0
      %1806 = vmatpush1.msra.mxu0 0.0
      %1807 = vmatprep.subr.mxu0 0.0
      %1808 = vmatpush1.msra.mxu0 0.0
      %1809 = vmatprep.subr.mxu0 0.0
      %1810 = vmatpush1.msra.mxu0 0.0
      %1811 = vmatprep.subr.mxu0 0.0
      %1812 = vmatpush1.msra.mxu0 0.0
      %1813 = vmatprep.subr.mxu0 0.0
      %1814 = vmatpush1.msra.mxu0 0.0
      %1815 = vmatprep.subr.mxu0 0.0
      %1816 = vmatpush1.msra.mxu0 0.0
      %1817 = vmatprep.subr.mxu0 0.0
      %1818 = vmatpush1.msra.mxu0 0.0
      %1819 = vmatprep.subr.mxu0 0.0
      %1820 = vmatpush1.msra.mxu0 0.0
      %1821 = vmatprep.subr.mxu0 0.0
      %1822 = vmatpush1.msra.mxu0 0.0
      %1823 = vmatprep.subr.mxu0 0.0
      %1824 = vmatpush1.msra.mxu0 0.0
      %1825 = vmatprep.subr.mxu0 0.0
      %1826 = vmatpush1.msra.mxu0 0.0
      %1827 = vmatprep.subr.mxu0 0.0
      %1828 = vmatpush1.msra.mxu0 0.0
      %1829 = vmatprep.subr.mxu0 0.0
      %1830 = vmatpush1.msra.mxu0 0.0
      %1831 = vmatprep.subr.mxu0 0.0
      %1832 = vmatpush1.msra.mxu0 0.0
      %1833 = vmatprep.subr.mxu0 0.0
      %1834 = vmatpush1.msra.mxu0 0.0
      %1835 = vmatprep.subr.mxu0 0.0
      %1836 = vmatpush1.msra.mxu0 0.0
      %1837 = vmatprep.subr.mxu0 0.0
      %1838 = vmatpush1.msra.mxu0 0.0
      %1839 = vmatprep.subr.mxu0 0.0
      %1840 = vmatpush1.msra.mxu0 0.0
      %1841 = vmatprep.subr.mxu0 0.0
      %1842 = vmatpush1.msra.mxu0 0.0
      %1843 = vmatprep.subr.mxu0 0.0
      %1844 = vmatpush1.msra.mxu0 0.0
      %1845 = vmatprep.subr.mxu0 0.0
      %1846 = vmatpush1.msra.mxu0 0.0
      %1847 = vmatprep.subr.mxu0 0.0
      %1848 = vmatpush1.msra.mxu0 0.0
      %1849 = vmatprep.subr.mxu0 0.0
      %1850 = vmatpush1.msra.mxu0 0.0
      %1851 = vmatprep.subr.mxu0 0.0
      %1852 = vmatpush1.msra.mxu0 0.0
      %1853 = vmatprep.subr.mxu0 0.0
      %1854 = vmatpush1.msra.mxu0 0.0
      %1855 = vmatprep.mubr.f32.mxu0 0.0
      %1856 = vmatmul.mubr.f32.gmra.mrb[0].mxu0 %v1789
      %v1857 = vpop.f32.mrb[0].mxu0
      %v1858 = vadd.f32 0.0, %v1857
      %v1859 = vpop.f32.mrb[0].mxu0
      %1860 = vdwg.mxu0
      %1861 = vrot.lane.b32.xlu0 %v1695, 112
      %v1862 = vpop.permute.xlu0 %1861
      %1863 = vrot.lane.b32.xlu0 %v1695, 48
      %v1864 = vpop.permute.xlu0 %1863
      %v1865 = vsel %vm566, %v1862, 0
      %v1867 = vsel %vm566, %v1864, 0
      %1869 = vmatprep.subr.mxu0 0.0
      %1870 = vmatpush1.xpose.msra.mxu0 %v1867
      %1871 = vmatprep.subr.mxu0 0.0
      %1872 = vmatpush1.xpose.msra.mxu0 0.0
      %1873 = vmatprep.subr.mxu0 0.0
      %1874 = vmatpush1.xpose.msra.mxu0 0.0
      %1875 = vmatprep.subr.mxu0 0.0
      %1876 = vmatpush1.xpose.msra.mxu0 0.0
      %1877 = vmatprep.subr.mxu0 0.0
      %1878 = vmatpush1.xpose.msra.mxu0 0.0
      %1879 = vmatprep.subr.mxu0 0.0
      %1880 = vmatpush1.xpose.msra.mxu0 0.0
      %1881 = vmatprep.subr.mxu0 0.0
      %1882 = vmatpush1.xpose.msra.mxu0 0.0
      %1883 = vmatprep.subr.mxu0 0.0
      %1884 = vmatpush1.xpose.msra.mxu0 0.0
      %1885 = vmatprep.subr.mxu0 0.0
      %1886 = vmatpush1.xpose.msra.mxu0 0.0
      %1887 = vmatprep.subr.mxu0 0.0
      %1888 = vmatpush1.xpose.msra.mxu0 0.0
      %1889 = vmatprep.subr.mxu0 0.0
      %1890 = vmatpush1.xpose.msra.mxu0 0.0
      %1891 = vmatprep.subr.mxu0 0.0
      %1892 = vmatpush1.xpose.msra.mxu0 0.0
      %1893 = vmatprep.subr.mxu0 0.0
      %1894 = vmatpush1.xpose.msra.mxu0 0.0
      %1895 = vmatprep.subr.mxu0 0.0
      %1896 = vmatpush1.xpose.msra.mxu0 0.0
      %1897 = vmatprep.subr.mxu0 0.0
      %1898 = vmatpush1.xpose.msra.mxu0 0.0
      %1899 = vmatprep.subr.mxu0 0.0
      %1900 = vmatpush1.xpose.msra.mxu0 0.0
      %1901 = vmatprep.subr.mxu0 0.0
      %1902 = vmatpush1.xpose.msra.mxu0 0.0
      %1903 = vmatprep.subr.mxu0 0.0
      %1904 = vmatpush1.xpose.msra.mxu0 0.0
      %1905 = vmatprep.subr.mxu0 0.0
      %1906 = vmatpush1.xpose.msra.mxu0 0.0
      %1907 = vmatprep.subr.mxu0 0.0
      %1908 = vmatpush1.xpose.msra.mxu0 0.0
      %1909 = vmatprep.subr.mxu0 0.0
      %1910 = vmatpush1.xpose.msra.mxu0 0.0
      %1911 = vmatprep.subr.mxu0 0.0
      %1912 = vmatpush1.xpose.msra.mxu0 0.0
      %1913 = vmatprep.subr.mxu0 0.0
      %1914 = vmatpush1.xpose.msra.mxu0 0.0
      %1915 = vmatprep.subr.mxu0 0.0
      %1916 = vmatpush1.xpose.msra.mxu0 0.0
      %1917 = vmatprep.subr.mxu0 0.0
      %1918 = vmatpush1.xpose.msra.mxu0 0.0
      %1919 = vmatprep.subr.mxu0 0.0
      %1920 = vmatpush1.xpose.msra.mxu0 0.0
      %1921 = vmatprep.subr.mxu0 0.0
      %1922 = vmatpush1.xpose.msra.mxu0 0.0
      %1923 = vmatprep.subr.mxu0 0.0
      %1924 = vmatpush1.xpose.msra.mxu0 0.0
      %1925 = vmatprep.subr.mxu0 0.0
      %1926 = vmatpush1.xpose.msra.mxu0 0.0
      %1927 = vmatprep.subr.mxu0 0.0
      %1928 = vmatpush1.xpose.msra.mxu0 0.0
      %1929 = vmatprep.subr.mxu0 0.0
      %1930 = vmatpush1.xpose.msra.mxu0 0.0
      %1931 = vmatprep.subr.mxu0 0.0
      %1932 = vmatpush1.xpose.msra.mxu0 0.0
      %1933 = vmatprep.mubr.f32.mxu0 0.0
      %1934 = vmatmul.mubr.f32.gmra.mrb[0].mxu0 %v1865
      %v1935 = vpop.f32.mrb[0].mxu0
      %v1936 = vadd.f32 0.0, %v1935
      %v1937 = vpop.f32.mrb[0].mxu0
      %1938 = vdwg.mxu0
      %v1939 = vsel %vm646, -1e+18, %v1936
      %v1940 = vsel %vm648, %v1939, -inf
      %1941 = vmax.xlane.f32.xlu0 %v1940
      %v1942 = vpop.xlane.xlu0 %1941
      %v1943 = vsub.f32 %v1939, %v1942
      %v1944 = vmul.f32 %v1943, 1.442695
      %v1945 = vpow.pop %v1944
      %v1946 = vsel %vm648, %v1945, 0.0
      %1947 = vadd.xlane.f32.xlu0 %v1946
      %v1948 = vpop.xlane.xlu0 %1947
      %v1949 = vrcp.pop %v1948
      %v1950 = vmul.f32 %v1945, %v1949
      %1952 = vrot.lane.b32.xlu0 %v1697, 112
      %v1953 = vpop.permute.xlu0 %1952
      %v1956 = vsel %vm648, %v1950, 0
      %1958 = vmatprep.subr.mxu0 0.0
      %1959 = vmatpush1.msra.mxu0 %v1953
      %1960 = vmatprep.subr.mxu0 0.0
      %1961 = vmatpush1.msra.mxu0 0.0
      %1962 = vmatprep.subr.mxu0 0.0
      %1963 = vmatpush1.msra.mxu0 0.0
      %1964 = vmatprep.subr.mxu0 0.0
      %1965 = vmatpush1.msra.mxu0 0.0
      %1966 = vmatprep.subr.mxu0 0.0
      %1967 = vmatpush1.msra.mxu0 0.0
      %1968 = vmatprep.subr.mxu0 0.0
      %1969 = vmatpush1.msra.mxu0 0.0
      %1970 = vmatprep.subr.mxu0 0.0
      %1971 = vmatpush1.msra.mxu0 0.0
      %1972 = vmatprep.subr.mxu0 0.0
      %1973 = vmatpush1.msra.mxu0 0.0
      %1974 = vmatprep.subr.mxu0 0.0
      %1975 = vmatpush1.msra.mxu0 0.0
      %1976 = vmatprep.subr.mxu0 0.0
      %1977 = vmatpush1.msra.mxu0 0.0
      %1978 = vmatprep.subr.mxu0 0.0
      %1979 = vmatpush1.msra.mxu0 0.0
      %1980 = vmatprep.subr.mxu0 0.0
      %1981 = vmatpush1.msra.mxu0 0.0
      %1982 = vmatprep.subr.mxu0 0.0
      %1983 = vmatpush1.msra.mxu0 0.0
      %1984 = vmatprep.subr.mxu0 0.0
      %1985 = vmatpush1.msra.mxu0 0.0
      %1986 = vmatprep.subr.mxu0 0.0
      %1987 = vmatpush1.msra.mxu0 0.0
      %1988 = vmatprep.subr.mxu0 0.0
      %1989 = vmatpush1.msra.mxu0 0.0
      %1990 = vmatprep.subr.mxu0 0.0
      %1991 = vmatpush1.msra.mxu0 0.0
      %1992 = vmatprep.subr.mxu0 0.0
      %1993 = vmatpush1.msra.mxu0 0.0
      %1994 = vmatprep.subr.mxu0 0.0
      %1995 = vmatpush1.msra.mxu0 0.0
      %1996 = vmatprep.subr.mxu0 0.0
      %1997 = vmatpush1.msra.mxu0 0.0
      %1998 = vmatprep.subr.mxu0 0.0
      %1999 = vmatpush1.msra.mxu0 0.0
      %2000 = vmatprep.subr.mxu0 0.0
      %2001 = vmatpush1.msra.mxu0 0.0
      %2002 = vmatprep.subr.mxu0 0.0
      %2003 = vmatpush1.msra.mxu0 0.0
      %2004 = vmatprep.subr.mxu0 0.0
      %2005 = vmatpush1.msra.mxu0 0.0
      %2006 = vmatprep.subr.mxu0 0.0
      %2007 = vmatpush1.msra.mxu0 0.0
      %2008 = vmatprep.subr.mxu0 0.0
      %2009 = vmatpush1.msra.mxu0 0.0
      %2010 = vmatprep.subr.mxu0 0.0
      %2011 = vmatpush1.msra.mxu0 0.0
      %2012 = vmatprep.subr.mxu0 0.0
      %2013 = vmatpush1.msra.mxu0 0.0
      %2014 = vmatprep.subr.mxu0 0.0
      %2015 = vmatpush1.msra.mxu0 0.0
      %2016 = vmatprep.subr.mxu0 0.0
      %2017 = vmatpush1.msra.mxu0 0.0
      %2018 = vmatprep.subr.mxu0 0.0
      %2019 = vmatpush1.msra.mxu0 0.0
      %2020 = vmatprep.subr.mxu0 0.0
      %2021 = vmatpush1.msra.mxu0 0.0
      %2022 = vmatprep.mubr.f32.mxu0 0.0
      %2023 = vmatmul.mubr.f32.gmra.mrb[0].mxu0 %v1956
      %v2024 = vpop.f32.mrb[0].mxu0
      %v2025 = vadd.f32 0.0, %v2024
      %v2026 = vpop.f32.mrb[0].mxu0
      %2027 = vdwg.mxu0
      %2028 = vrot.lane.b32.xlu0 %v1695, 96
      %v2029 = vpop.permute.xlu0 %2028
      %2030 = vrot.lane.b32.xlu0 %v1695, 32
      %v2031 = vpop.permute.xlu0 %2030
      %v2032 = vsel %vm566, %v2029, 0
      %v2034 = vsel %vm566, %v2031, 0
      %2036 = vmatprep.subr.mxu0 0.0
      %2037 = vmatpush1.xpose.msra.mxu0 %v2034
      %2038 = vmatprep.subr.mxu0 0.0
      %2039 = vmatpush1.xpose.msra.mxu0 0.0
      %2040 = vmatprep.subr.mxu0 0.0
      %2041 = vmatpush1.xpose.msra.mxu0 0.0
      %2042 = vmatprep.subr.mxu0 0.0
      %2043 = vmatpush1.xpose.msra.mxu0 0.0
      %2044 = vmatprep.subr.mxu0 0.0
      %2045 = vmatpush1.xpose.msra.mxu0 0.0
      %2046 = vmatprep.subr.mxu0 0.0
      %2047 = vmatpush1.xpose.msra.mxu0 0.0
      %2048 = vmatprep.subr.mxu0 0.0
      %2049 = vmatpush1.xpose.msra.mxu0 0.0
      %2050 = vmatprep.subr.mxu0 0.0
      %2051 = vmatpush1.xpose.msra.mxu0 0.0
      %2052 = vmatprep.subr.mxu0 0.0
      %2053 = vmatpush1.xpose.msra.mxu0 0.0
      %2054 = vmatprep.subr.mxu0 0.0
      %2055 = vmatpush1.xpose.msra.mxu0 0.0
      %2056 = vmatprep.subr.mxu0 0.0
      %2057 = vmatpush1.xpose.msra.mxu0 0.0
      %2058 = vmatprep.subr.mxu0 0.0
      %2059 = vmatpush1.xpose.msra.mxu0 0.0
      %2060 = vmatprep.subr.mxu0 0.0
      %2061 = vmatpush1.xpose.msra.mxu0 0.0
      %2062 = vmatprep.subr.mxu0 0.0
      %2063 = vmatpush1.xpose.msra.mxu0 0.0
      %2064 = vmatprep.subr.mxu0 0.0
      %2065 = vmatpush1.xpose.msra.mxu0 0.0
      %2066 = vmatprep.subr.mxu0 0.0
      %2067 = vmatpush1.xpose.msra.mxu0 0.0
      %2068 = vmatprep.subr.mxu0 0.0
      %2069 = vmatpush1.xpose.msra.mxu0 0.0
      %2070 = vmatprep.subr.mxu0 0.0
      %2071 = vmatpush1.xpose.msra.mxu0 0.0
      %2072 = vmatprep.subr.mxu0 0.0
      %2073 = vmatpush1.xpose.msra.mxu0 0.0
      %2074 = vmatprep.subr.mxu0 0.0
      %2075 = vmatpush1.xpose.msra.mxu0 0.0
      %2076 = vmatprep.subr.mxu0 0.0
      %2077 = vmatpush1.xpose.msra.mxu0 0.0
      %2078 = vmatprep.subr.mxu0 0.0
      %2079 = vmatpush1.xpose.msra.mxu0 0.0
      %2080 = vmatprep.subr.mxu0 0.0
      %2081 = vmatpush1.xpose.msra.mxu0 0.0
      %2082 = vmatprep.subr.mxu0 0.0
      %2083 = vmatpush1.xpose.msra.mxu0 0.0
      %2084 = vmatprep.subr.mxu0 0.0
      %2085 = vmatpush1.xpose.msra.mxu0 0.0
      %2086 = vmatprep.subr.mxu0 0.0
      %2087 = vmatpush1.xpose.msra.mxu0 0.0
      %2088 = vmatprep.subr.mxu0 0.0
      %2089 = vmatpush1.xpose.msra.mxu0 0.0
      %2090 = vmatprep.subr.mxu0 0.0
      %2091 = vmatpush1.xpose.msra.mxu0 0.0
      %2092 = vmatprep.subr.mxu0 0.0
      %2093 = vmatpush1.xpose.msra.mxu0 0.0
      %2094 = vmatprep.subr.mxu0 0.0
      %2095 = vmatpush1.xpose.msra.mxu0 0.0
      %2096 = vmatprep.subr.mxu0 0.0
      %2097 = vmatpush1.xpose.msra.mxu0 0.0
      %2098 = vmatprep.subr.mxu0 0.0
      %2099 = vmatpush1.xpose.msra.mxu0 0.0
      %2100 = vmatprep.mubr.f32.mxu0 0.0
      %2101 = vmatmul.mubr.f32.gmra.mrb[0].mxu0 %v2032
      %v2102 = vpop.f32.mrb[0].mxu0
      %v2103 = vadd.f32 0.0, %v2102
      %v2104 = vpop.f32.mrb[0].mxu0
      %2105 = vdwg.mxu0
      %v2106 = vsel %vm646, -1e+18, %v2103
      %v2107 = vsel %vm648, %v2106, -inf
      %2108 = vmax.xlane.f32.xlu0 %v2107
      %v2109 = vpop.xlane.xlu0 %2108
      %v2110 = vsub.f32 %v2106, %v2109
      %v2111 = vmul.f32 %v2110, 1.442695
      %v2112 = vpow.pop %v2111
      %v2113 = vsel %vm648, %v2112, 0.0
      %2114 = vadd.xlane.f32.xlu0 %v2113
      %v2115 = vpop.xlane.xlu0 %2114
      %v2116 = vrcp.pop %v2115
      %v2117 = vmul.f32 %v2112, %v2116
      %2118 = vrot.lane.b32.xlu0 %v1697, 96
      %v2119 = vpop.permute.xlu0 %2118
      %v2122 = vsel %vm648, %v2117, 0
      %2124 = vmatprep.subr.mxu0 0.0
      %2125 = vmatpush1.msra.mxu0 %v2119
      %2126 = vmatprep.subr.mxu0 0.0
      %2127 = vmatpush1.msra.mxu0 0.0
      %2128 = vmatprep.subr.mxu0 0.0
      %2129 = vmatpush1.msra.mxu0 0.0
      %2130 = vmatprep.subr.mxu0 0.0
      %2131 = vmatpush1.msra.mxu0 0.0
      %2132 = vmatprep.subr.mxu0 0.0
      %2133 = vmatpush1.msra.mxu0 0.0
      %2134 = vmatprep.subr.mxu0 0.0
      %2135 = vmatpush1.msra.mxu0 0.0
      %2136 = vmatprep.subr.mxu0 0.0
      %2137 = vmatpush1.msra.mxu0 0.0
      %2138 = vmatprep.subr.mxu0 0.0
      %2139 = vmatpush1.msra.mxu0 0.0
      %2140 = vmatprep.subr.mxu0 0.0
      %2141 = vmatpush1.msra.mxu0 0.0
      %2142 = vmatprep.subr.mxu0 0.0
      %2143 = vmatpush1.msra.mxu0 0.0
      %2144 = vmatprep.subr.mxu0 0.0
      %2145 = vmatpush1.msra.mxu0 0.0
      %2146 = vmatprep.subr.mxu0 0.0
      %2147 = vmatpush1.msra.mxu0 0.0
      %2148 = vmatprep.subr.mxu0 0.0
      %2149 = vmatpush1.msra.mxu0 0.0
      %2150 = vmatprep.subr.mxu0 0.0
      %2151 = vmatpush1.msra.mxu0 0.0
      %2152 = vmatprep.subr.mxu0 0.0
      %2153 = vmatpush1.msra.mxu0 0.0
      %2154 = vmatprep.subr.mxu0 0.0
      %2155 = vmatpush1.msra.mxu0 0.0
      %2156 = vmatprep.subr.mxu0 0.0
      %2157 = vmatpush1.msra.mxu0 0.0
      %2158 = vmatprep.subr.mxu0 0.0
      %2159 = vmatpush1.msra.mxu0 0.0
      %2160 = vmatprep.subr.mxu0 0.0
      %2161 = vmatpush1.msra.mxu0 0.0
      %2162 = vmatprep.subr.mxu0 0.0
      %2163 = vmatpush1.msra.mxu0 0.0
      %2164 = vmatprep.subr.mxu0 0.0
      %2165 = vmatpush1.msra.mxu0 0.0
      %2166 = vmatprep.subr.mxu0 0.0
      %2167 = vmatpush1.msra.mxu0 0.0
      %2168 = vmatprep.subr.mxu0 0.0
      %2169 = vmatpush1.msra.mxu0 0.0
      %2170 = vmatprep.subr.mxu0 0.0
      %2171 = vmatpush1.msra.mxu0 0.0
      %2172 = vmatprep.subr.mxu0 0.0
      %2173 = vmatpush1.msra.mxu0 0.0
      %2174 = vmatprep.subr.mxu0 0.0
      %2175 = vmatpush1.msra.mxu0 0.0
      %2176 = vmatprep.subr.mxu0 0.0
      %2177 = vmatpush1.msra.mxu0 0.0
      %2178 = vmatprep.subr.mxu0 0.0
      %2179 = vmatpush1.msra.mxu0 0.0
      %2180 = vmatprep.subr.mxu0 0.0
      %2181 = vmatpush1.msra.mxu0 0.0
      %2182 = vmatprep.subr.mxu0 0.0
      %2183 = vmatpush1.msra.mxu0 0.0
      %2184 = vmatprep.subr.mxu0 0.0
      %2185 = vmatpush1.msra.mxu0 0.0
      %2186 = vmatprep.subr.mxu0 0.0
      %2187 = vmatpush1.msra.mxu0 0.0
      %2188 = vmatprep.mubr.f32.mxu0 0.0
      %2189 = vmatmul.mubr.f32.gmra.mrb[0].mxu0 %v2122
      %v2190 = vpop.f32.mrb[0].mxu0
      %v2191 = vadd.f32 0.0, %v2190
      %v2192 = vpop.f32.mrb[0].mxu0
      %2193 = vdwg.mxu0
      %2194 = vrot.lane.b32.xlu0 %v1695, 80
      %v2195 = vpop.permute.xlu0 %2194
      %2196 = vrot.lane.b32.xlu0 %v1695, 16
      %v2197 = vpop.permute.xlu0 %2196
      %v2198 = vsel %vm566, %v2195, 0
      %v2200 = vsel %vm566, %v2197, 0
      %2202 = vmatprep.subr.mxu0 0.0
      %2203 = vmatpush1.xpose.msra.mxu0 %v2200
      %2204 = vmatprep.subr.mxu0 0.0
      %2205 = vmatpush1.xpose.msra.mxu0 0.0
      %2206 = vmatprep.subr.mxu0 0.0
      %2207 = vmatpush1.xpose.msra.mxu0 0.0
      %2208 = vmatprep.subr.mxu0 0.0
      %2209 = vmatpush1.xpose.msra.mxu0 0.0
      %2210 = vmatprep.subr.mxu0 0.0
      %2211 = vmatpush1.xpose.msra.mxu0 0.0
      %2212 = vmatprep.subr.mxu0 0.0
      %2213 = vmatpush1.xpose.msra.mxu0 0.0
      %2214 = vmatprep.subr.mxu0 0.0
      %2215 = vmatpush1.xpose.msra.mxu0 0.0
      %2216 = vmatprep.subr.mxu0 0.0
      %2217 = vmatpush1.xpose.msra.mxu0 0.0
      %2218 = vmatprep.subr.mxu0 0.0
      %2219 = vmatpush1.xpose.msra.mxu0 0.0
      %2220 = vmatprep.subr.mxu0 0.0
      %2221 = vmatpush1.xpose.msra.mxu0 0.0
      %2222 = vmatprep.subr.mxu0 0.0
      %2223 = vmatpush1.xpose.msra.mxu0 0.0
      %2224 = vmatprep.subr.mxu0 0.0
      %2225 = vmatpush1.xpose.msra.mxu0 0.0
      %2226 = vmatprep.subr.mxu0 0.0
      %2227 = vmatpush1.xpose.msra.mxu0 0.0
      %2228 = vmatprep.subr.mxu0 0.0
      %2229 = vmatpush1.xpose.msra.mxu0 0.0
      %2230 = vmatprep.subr.mxu0 0.0
      %2231 = vmatpush1.xpose.msra.mxu0 0.0
      %2232 = vmatprep.subr.mxu0 0.0
      %2233 = vmatpush1.xpose.msra.mxu0 0.0
      %2234 = vmatprep.subr.mxu0 0.0
      %2235 = vmatpush1.xpose.msra.mxu0 0.0
      %2236 = vmatprep.subr.mxu0 0.0
      %2237 = vmatpush1.xpose.msra.mxu0 0.0
      %2238 = vmatprep.subr.mxu0 0.0
      %2239 = vmatpush1.xpose.msra.mxu0 0.0
      %2240 = vmatprep.subr.mxu0 0.0
      %2241 = vmatpush1.xpose.msra.mxu0 0.0
      %2242 = vmatprep.subr.mxu0 0.0
      %2243 = vmatpush1.xpose.msra.mxu0 0.0
      %2244 = vmatprep.subr.mxu0 0.0
      %2245 = vmatpush1.xpose.msra.mxu0 0.0
      %2246 = vmatprep.subr.mxu0 0.0
      %2247 = vmatpush1.xpose.msra.mxu0 0.0
      %2248 = vmatprep.subr.mxu0 0.0
      %2249 = vmatpush1.xpose.msra.mxu0 0.0
      %2250 = vmatprep.subr.mxu0 0.0
      %2251 = vmatpush1.xpose.msra.mxu0 0.0
      %2252 = vmatprep.subr.mxu0 0.0
      %2253 = vmatpush1.xpose.msra.mxu0 0.0
      %2254 = vmatprep.subr.mxu0 0.0
      %2255 = vmatpush1.xpose.msra.mxu0 0.0
      %2256 = vmatprep.subr.mxu0 0.0
      %2257 = vmatpush1.xpose.msra.mxu0 0.0
      %2258 = vmatprep.subr.mxu0 0.0
      %2259 = vmatpush1.xpose.msra.mxu0 0.0
      %2260 = vmatprep.subr.mxu0 0.0
      %2261 = vmatpush1.xpose.msra.mxu0 0.0
      %2262 = vmatprep.subr.mxu0 0.0
      %2263 = vmatpush1.xpose.msra.mxu0 0.0
      %2264 = vmatprep.subr.mxu0 0.0
      %2265 = vmatpush1.xpose.msra.mxu0 0.0
      %2266 = vmatprep.mubr.f32.mxu0 0.0
      %2267 = vmatmul.mubr.f32.gmra.mrb[0].mxu0 %v2198
      %v2268 = vpop.f32.mrb[0].mxu0
      %v2269 = vadd.f32 0.0, %v2268
      %v2270 = vpop.f32.mrb[0].mxu0
      %2271 = vdwg.mxu0
      %v2272 = vsel %vm646, -1e+18, %v2269
      %v2273 = vsel %vm648, %v2272, -inf
      %2274 = vmax.xlane.f32.xlu0 %v2273
      %v2275 = vpop.xlane.xlu0 %2274
      %v2276 = vsub.f32 %v2272, %v2275
      %v2277 = vmul.f32 %v2276, 1.442695
      %v2278 = vpow.pop %v2277
      %v2279 = vsel %vm648, %v2278, 0.0
      %2280 = vadd.xlane.f32.xlu0 %v2279
      %v2281 = vpop.xlane.xlu0 %2280
      %v2282 = vrcp.pop %v2281
      %v2283 = vmul.f32 %v2278, %v2282
      %2284 = vrot.lane.b32.xlu0 %v1697, 80
      %v2285 = vpop.permute.xlu0 %2284
      %v2288 = vsel %vm648, %v2283, 0
      %2290 = vmatprep.subr.mxu0 0.0
      %2291 = vmatpush1.msra.mxu0 %v2285
      %2292 = vmatprep.subr.mxu0 0.0
      %2293 = vmatpush1.msra.mxu0 0.0
      %2294 = vmatprep.subr.mxu0 0.0
      %2295 = vmatpush1.msra.mxu0 0.0
      %2296 = vmatprep.subr.mxu0 0.0
      %2297 = vmatpush1.msra.mxu0 0.0
      %2298 = vmatprep.subr.mxu0 0.0
      %2299 = vmatpush1.msra.mxu0 0.0
      %2300 = vmatprep.subr.mxu0 0.0
      %2301 = vmatpush1.msra.mxu0 0.0
      %2302 = vmatprep.subr.mxu0 0.0
      %2303 = vmatpush1.msra.mxu0 0.0
      %2304 = vmatprep.subr.mxu0 0.0
      %2305 = vmatpush1.msra.mxu0 0.0
      %2306 = vmatprep.subr.mxu0 0.0
      %2307 = vmatpush1.msra.mxu0 0.0
      %2308 = vmatprep.subr.mxu0 0.0
      %2309 = vmatpush1.msra.mxu0 0.0
      %2310 = vmatprep.subr.mxu0 0.0
      %2311 = vmatpush1.msra.mxu0 0.0
      %2312 = vmatprep.subr.mxu0 0.0
      %2313 = vmatpush1.msra.mxu0 0.0
      %2314 = vmatprep.subr.mxu0 0.0
      %2315 = vmatpush1.msra.mxu0 0.0
      %2316 = vmatprep.subr.mxu0 0.0
      %2317 = vmatpush1.msra.mxu0 0.0
      %2318 = vmatprep.subr.mxu0 0.0
      %2319 = vmatpush1.msra.mxu0 0.0
      %2320 = vmatprep.subr.mxu0 0.0
      %2321 = vmatpush1.msra.mxu0 0.0
      %2322 = vmatprep.subr.mxu0 0.0
      %2323 = vmatpush1.msra.mxu0 0.0
      %2324 = vmatprep.subr.mxu0 0.0
      %2325 = vmatpush1.msra.mxu0 0.0
      %2326 = vmatprep.subr.mxu0 0.0
      %2327 = vmatpush1.msra.mxu0 0.0
      %2328 = vmatprep.subr.mxu0 0.0
      %2329 = vmatpush1.msra.mxu0 0.0
      %2330 = vmatprep.subr.mxu0 0.0
      %2331 = vmatpush1.msra.mxu0 0.0
      %2332 = vmatprep.subr.mxu0 0.0
      %2333 = vmatpush1.msra.mxu0 0.0
      %2334 = vmatprep.subr.mxu0 0.0
      %2335 = vmatpush1.msra.mxu0 0.0
      %2336 = vmatprep.subr.mxu0 0.0
      %2337 = vmatpush1.msra.mxu0 0.0
      %2338 = vmatprep.subr.mxu0 0.0
      %2339 = vmatpush1.msra.mxu0 0.0
      %2340 = vmatprep.subr.mxu0 0.0
      %2341 = vmatpush1.msra.mxu0 0.0
      %2342 = vmatprep.subr.mxu0 0.0
      %2343 = vmatpush1.msra.mxu0 0.0
      %2344 = vmatprep.subr.mxu0 0.0
      %2345 = vmatpush1.msra.mxu0 0.0
      %2346 = vmatprep.subr.mxu0 0.0
      %2347 = vmatpush1.msra.mxu0 0.0
      %2348 = vmatprep.subr.mxu0 0.0
      %2349 = vmatpush1.msra.mxu0 0.0
      %2350 = vmatprep.subr.mxu0 0.0
      %2351 = vmatpush1.msra.mxu0 0.0
      %2352 = vmatprep.subr.mxu0 0.0
      %2353 = vmatpush1.msra.mxu0 0.0
      %2354 = vmatprep.mubr.f32.mxu0 0.0
      %2355 = vmatmul.mubr.f32.gmra.mrb[0].mxu0 %v2288
      %v2356 = vpop.f32.mrb[0].mxu0
      %v2357 = vadd.f32 0.0, %v2356
      %v2358 = vpop.f32.mrb[0].mxu0
      %2359 = vdwg.mxu0
      %2361 = vrot.lane.b32.xlu0 %v2025, 16
      %v2362 = vpop.permute.xlu0 %2361
      %2365 = vrot.lane.b32.xlu0 %v2191, 32
      %v2366 = vpop.permute.xlu0 %2365
      %2369 = vrot.lane.b32.xlu0 %v2357, 48
      %v2370 = vpop.permute.xlu0 %2369
      %v2372 = vsel %vm566, %v1858, %v2362
      %v2373 = vsel %vm1245, %v2372, %v2366
      %v2374 = vsel %vm1247, %v2373, %v2370
      %v2376 = vlaneseq
      %v2377 = vshrl.u32 %v2376, 7
      %v2378 = vsub.s32 0, %v2377
      %v2379 = vrot.slane %v1613, %v2378
      %v2382 = vsel %vm427, %v2374, 0
      %2384 = vmatprep.subr.mxu0 0.0
      %2385 = vmatpush1.msra.mxu0 %v1604
      %2386 = vmatprep.subr.mxu0 0.0
      %2387 = vmatpush1.msra.mxu0 %v1605
      %2388 = vmatprep.subr.mxu0 0.0
      %2389 = vmatpush1.msra.mxu0 %v1606
      %2390 = vmatprep.subr.mxu0 0.0
      %2391 = vmatpush1.msra.mxu0 %v1607
      %2392 = vmatprep.subr.mxu0 0.0
      %2393 = vmatpush1.msra.mxu0 %v1608
      %2394 = vmatprep.subr.mxu0 0.0
      %2395 = vmatpush1.msra.mxu0 %v1609
      %2396 = vmatprep.subr.mxu0 0.0
      %2397 = vmatpush1.msra.mxu0 %v1610
      %2398 = vmatprep.subr.mxu0 0.0
      %2399 = vmatpush1.msra.mxu0 %v1611
      %2400 = vmatprep.subr.mxu0 0.0
      %2401 = vmatpush1.msra.mxu0 0.0
      %2402 = vmatprep.subr.mxu0 0.0
      %2403 = vmatpush1.msra.mxu0 0.0
      %2404 = vmatprep.subr.mxu0 0.0
      %2405 = vmatpush1.msra.mxu0 0.0
      %2406 = vmatprep.subr.mxu0 0.0
      %2407 = vmatpush1.msra.mxu0 0.0
      %2408 = vmatprep.subr.mxu0 0.0
      %2409 = vmatpush1.msra.mxu0 0.0
      %2410 = vmatprep.subr.mxu0 0.0
      %2411 = vmatpush1.msra.mxu0 0.0
      %2412 = vmatprep.subr.mxu0 0.0
      %2413 = vmatpush1.msra.mxu0 0.0
      %2414 = vmatprep.subr.mxu0 0.0
      %2415 = vmatpush1.msra.mxu0 0.0
      %2416 = vmatprep.subr.mxu0 0.0
      %2417 = vmatpush1.msra.mxu0 0.0
      %2418 = vmatprep.subr.mxu0 0.0
      %2419 = vmatpush1.msra.mxu0 0.0
      %2420 = vmatprep.subr.mxu0 0.0
      %2421 = vmatpush1.msra.mxu0 0.0
      %2422 = vmatprep.subr.mxu0 0.0
      %2423 = vmatpush1.msra.mxu0 0.0
      %2424 = vmatprep.subr.mxu0 0.0
      %2425 = vmatpush1.msra.mxu0 0.0
      %2426 = vmatprep.subr.mxu0 0.0
      %2427 = vmatpush1.msra.mxu0 0.0
      %2428 = vmatprep.subr.mxu0 0.0
      %2429 = vmatpush1.msra.mxu0 0.0
      %2430 = vmatprep.subr.mxu0 0.0
      %2431 = vmatpush1.msra.mxu0 0.0
      %2432 = vmatprep.subr.mxu0 0.0
      %2433 = vmatpush1.msra.mxu0 0.0
      %2434 = vmatprep.subr.mxu0 0.0
      %2435 = vmatpush1.msra.mxu0 0.0
      %2436 = vmatprep.subr.mxu0 0.0
      %2437 = vmatpush1.msra.mxu0 0.0
      %2438 = vmatprep.subr.mxu0 0.0
      %2439 = vmatpush1.msra.mxu0 0.0
      %2440 = vmatprep.subr.mxu0 0.0
      %2441 = vmatpush1.msra.mxu0 0.0
      %2442 = vmatprep.subr.mxu0 0.0
      %2443 = vmatpush1.msra.mxu0 0.0
      %2444 = vmatprep.subr.mxu0 0.0
      %2445 = vmatpush1.msra.mxu0 0.0
      %2446 = vmatprep.subr.mxu0 0.0
      %2447 = vmatpush1.msra.mxu0 0.0
      %2448 = vmatprep.mubr.f32.mxu0 0.0
      %2449 = vmatmul.mubr.f32.gmra.mrb[0].mxu0 %v2382
      %v2450 = vpop.f32.mrb[0].mxu0
      %v2451 = vadd.f32 %v2379, %v2450
      %v2452 = vpop.f32.mrb[0].mxu0
      %2453 = vdwg.mxu0
      %v2454 = vadd.f32 %v2451, %v1558
      %v2455 = vsel %vm427, %v2454, 0.0
      %2456 = vadd.xlane.f32.xlu0 %v2455
      %v2457 = vpop.xlane.xlu0 %2456
      %v2458 = vmul.f32 %v2457, %v431
      %v2459 = vsub.f32 %v2454, %v2458
      %v2460 = vmul.f32 %v2459, %v2459
      %v2461 = vsel %vm427, %v2460, 0.0
      %2462 = vadd.xlane.f32.xlu0 %v2461
      %v2463 = vpop.xlane.xlu0 %2462
      %v2464 = vmul.f32 %v2463, %v431
      %v2465 = vadd.f32 %v2464, 1e-06
      %v2466 = vrsqrt.pop %v2465
      %v2467 = vmul.f32 %v2459, %v2466
      %v2468 = vlaneseq
      %v2469 = vshrl.u32 %v2468, 7
      %v2470 = vsub.s32 2, %v2469
      %v2471 = vrot.slane %v1560, %v2470
      %v2472 = vmul.f32 %v2467, %v2471
      %v2473 = vlaneseq
      %v2474 = vshrl.u32 %v2473, 7
      %v2475 = vsub.s32 3, %v2474
      %v2476 = vrot.slane %v1560, %v2475
      %v2477 = vadd.f32 %v2472, %v2476
      %v2478 = vsel %vm427, %v2477, 0.0
      %2479 = vadd.xlane.f32.xlu0 %v2478
      %v2480 = vpop.xlane.xlu0 %2479
      %v2481 = vmul.f32 %v2480, %v431
      %v2482 = vsub.f32 %v2477, %v2481
      %v2483 = vmul.f32 %v2482, %v2482
      %v2484 = vsel %vm427, %v2483, 0.0
      %2485 = vadd.xlane.f32.xlu0 %v2484
      %v2486 = vpop.xlane.xlu0 %2485
      %v2487 = vmul.f32 %v2486, %v431
      %v2488 = vadd.f32 %v2487, 1e-06
      %v2489 = vrsqrt.pop %v2488
      %v2490 = vmul.f32 %v2482, %v2489
      %v2491 = vlaneseq
      %v2492 = vshrl.u32 %v2491, 7
      %v2493 = vsub.s32 4, %v2492
      %v2494 = vrot.slane %v1560, %v2493
      %v2495 = vmul.f32 %v2490, %v2494
      %v2496 = vlaneseq
      %v2497 = vshrl.u32 %v2496, 7
      %v2498 = vsub.s32 5, %v2497
      %v2499 = vrot.slane %v1560, %v2498
      %v2500 = vadd.f32 %v2495, %v2499
      %s2501 = scalar_lea.vmem %s6, 64
      %v2502 = vld [vmem:[%s2501] sm:$0xff]
      %v2503 = vld [vmem:[%s2501 + $0x8] sm:$0xff]
      %v2504 = vld [vmem:[%s2501 + $0x10] sm:$0xff]
      %v2505 = vld [vmem:[%s2501 + $0x18] sm:$0xff]
      %v2506 = vld [vmem:[%s2501 + $0x20] sm:$0xff]
      %v2507 = vld [vmem:[%s2501 + $0x28] sm:$0xff]
      %v2508 = vld [vmem:[%s2501 + $0x30] sm:$0xff]
      %v2509 = vld [vmem:[%s2501 + $0x38] sm:$0xff]
      %s2510 = scalar_lea.vmem %s7, 1
      %v2511 = vld [vmem:[%s2510] sm:$0x1]
      %v2513 = vlaneseq
      %v2514 = vshrl.u32 %v2513, 7
      %v2515 = vsub.s32 0, %v2514
      %v2516 = vrot.slane %v2511, %v2515
      %v2519 = vsel %vm427, %v2500, 0
      %2521 = vmatprep.subr.mxu0 0.0
      %2522 = vmatpush1.msra.mxu0 %v2502
      %2523 = vmatprep.subr.mxu0 0.0
      %2524 = vmatpush1.msra.mxu0 %v2503
      %2525 = vmatprep.subr.mxu0 0.0
      %2526 = vmatpush1.msra.mxu0 %v2504
      %2527 = vmatprep.subr.mxu0 0.0
      %2528 = vmatpush1.msra.mxu0 %v2505
      %2529 = vmatprep.subr.mxu0 0.0
      %2530 = vmatpush1.msra.mxu0 %v2506
      %2531 = vmatprep.subr.mxu0 0.0
      %2532 = vmatpush1.msra.mxu0 %v2507
      %2533 = vmatprep.subr.mxu0 0.0
      %2534 = vmatpush1.msra.mxu0 %v2508
      %2535 = vmatprep.subr.mxu0 0.0
      %2536 = vmatpush1.msra.mxu0 %v2509
      %2537 = vmatprep.subr.mxu0 0.0
      %2538 = vmatpush1.msra.mxu0 0.0
      %2539 = vmatprep.subr.mxu0 0.0
      %2540 = vmatpush1.msra.mxu0 0.0
      %2541 = vmatprep.subr.mxu0 0.0
      %2542 = vmatpush1.msra.mxu0 0.0
      %2543 = vmatprep.subr.mxu0 0.0
      %2544 = vmatpush1.msra.mxu0 0.0
      %2545 = vmatprep.subr.mxu0 0.0
      %2546 = vmatpush1.msra.mxu0 0.0
      %2547 = vmatprep.subr.mxu0 0.0
      %2548 = vmatpush1.msra.mxu0 0.0
      %2549 = vmatprep.subr.mxu0 0.0
      %2550 = vmatpush1.msra.mxu0 0.0
      %2551 = vmatprep.subr.mxu0 0.0
      %2552 = vmatpush1.msra.mxu0 0.0
      %2553 = vmatprep.subr.mxu0 0.0
      %2554 = vmatpush1.msra.mxu0 0.0
      %2555 = vmatprep.subr.mxu0 0.0
      %2556 = vmatpush1.msra.mxu0 0.0
      %2557 = vmatprep.subr.mxu0 0.0
      %2558 = vmatpush1.msra.mxu0 0.0
      %2559 = vmatprep.subr.mxu0 0.0
      %2560 = vmatpush1.msra.mxu0 0.0
      %2561 = vmatprep.subr.mxu0 0.0
      %2562 = vmatpush1.msra.mxu0 0.0
      %2563 = vmatprep.subr.mxu0 0.0
      %2564 = vmatpush1.msra.mxu0 0.0
      %2565 = vmatprep.subr.mxu0 0.0
      %2566 = vmatpush1.msra.mxu0 0.0
      %2567 = vmatprep.subr.mxu0 0.0
      %2568 = vmatpush1.msra.mxu0 0.0
      %2569 = vmatprep.subr.mxu0 0.0
      %2570 = vmatpush1.msra.mxu0 0.0
      %2571 = vmatprep.subr.mxu0 0.0
      %2572 = vmatpush1.msra.mxu0 0.0
      %2573 = vmatprep.subr.mxu0 0.0
      %2574 = vmatpush1.msra.mxu0 0.0
      %2575 = vmatprep.subr.mxu0 0.0
      %2576 = vmatpush1.msra.mxu0 0.0
      %2577 = vmatprep.subr.mxu0 0.0
      %2578 = vmatpush1.msra.mxu0 0.0
      %2579 = vmatprep.subr.mxu0 0.0
      %2580 = vmatpush1.msra.mxu0 0.0
      %2581 = vmatprep.subr.mxu0 0.0
      %2582 = vmatpush1.msra.mxu0 0.0
      %2583 = vmatprep.subr.mxu0 0.0
      %2584 = vmatpush1.msra.mxu0 0.0
      %2585 = vmatprep.mubr.f32.mxu0 0.0
      %2586 = vmatmul.mubr.f32.gmra.mrb[0].mxu0 %v2519
      %v2587 = vpop.f32.mrb[0].mxu0
      %v2588 = vadd.f32 %v2516, %v2587
      %v2589 = vpop.f32.mrb[0].mxu0
      %2590 = vdwg.mxu0
      %v2591 = vmax.f32 %v2588, 0.0
      %s2592 = scalar_lea.vmem %s8, 128
      %v2593 = vld [vmem:[%s2592] sm:$0xff]
      %v2594 = vld [vmem:[%s2592 + $0x8] sm:$0xff]
      %v2595 = vld [vmem:[%s2592 + $0x10] sm:$0xff]
      %v2596 = vld [vmem:[%s2592 + $0x18] sm:$0xff]
      %v2597 = vld [vmem:[%s2592 + $0x20] sm:$0xff]
      %v2598 = vld [vmem:[%s2592 + $0x28] sm:$0xff]
      %v2599 = vld [vmem:[%s2592 + $0x30] sm:$0xff]
      %v2600 = vld [vmem:[%s2592 + $0x38] sm:$0xff]
      %v2601 = vld [vmem:[%s2592 + $0x40] sm:$0xff]
      %v2602 = vld [vmem:[%s2592 + $0x48] sm:$0xff]
      %v2603 = vld [vmem:[%s2592 + $0x50] sm:$0xff]
      %v2604 = vld [vmem:[%s2592 + $0x58] sm:$0xff]
      %v2605 = vld [vmem:[%s2592 + $0x60] sm:$0xff]
      %v2606 = vld [vmem:[%s2592 + $0x68] sm:$0xff]
      %v2607 = vld [vmem:[%s2592 + $0x70] sm:$0xff]
      %v2608 = vld [vmem:[%s2592 + $0x78] sm:$0xff]
      %s2609 = scalar_lea.vmem %s9, 1
      %v2610 = vld [vmem:[%s2609] sm:$0x1]
      %v2612 = vlaneseq
      %v2613 = vshrl.u32 %v2612, 7
      %v2614 = vsub.s32 0, %v2613
      %v2615 = vrot.slane %v2610, %v2614
      %2617 = vmatprep.subr.mxu0 0.0
      %2618 = vmatpush1.msra.mxu0 %v2593
      %2619 = vmatprep.subr.mxu0 0.0
      %2620 = vmatpush1.msra.mxu0 %v2594
      %2621 = vmatprep.subr.mxu0 0.0
      %2622 = vmatpush1.msra.mxu0 %v2595
      %2623 = vmatprep.subr.mxu0 0.0
      %2624 = vmatpush1.msra.mxu0 %v2596
      %2625 = vmatprep.subr.mxu0 0.0
      %2626 = vmatpush1.msra.mxu0 %v2597
      %2627 = vmatprep.subr.mxu0 0.0
      %2628 = vmatpush1.msra.mxu0 %v2598
      %2629 = vmatprep.subr.mxu0 0.0
      %2630 = vmatpush1.msra.mxu0 %v2599
      %2631 = vmatprep.subr.mxu0 0.0
      %2632 = vmatpush1.msra.mxu0 %v2600
      %2633 = vmatprep.subr.mxu0 0.0
      %2634 = vmatpush1.msra.mxu0 %v2601
      %2635 = vmatprep.subr.mxu0 0.0
      %2636 = vmatpush1.msra.mxu0 %v2602
      %2637 = vmatprep.subr.mxu0 0.0
      %2638 = vmatpush1.msra.mxu0 %v2603
      %2639 = vmatprep.subr.mxu0 0.0
      %2640 = vmatpush1.msra.mxu0 %v2604
      %2641 = vmatprep.subr.mxu0 0.0
      %2642 = vmatpush1.msra.mxu0 %v2605
      %2643 = vmatprep.subr.mxu0 0.0
      %2644 = vmatpush1.msra.mxu0 %v2606
      %2645 = vmatprep.subr.mxu0 0.0
      %2646 = vmatpush1.msra.mxu0 %v2607
      %2647 = vmatprep.subr.mxu0 0.0
      %2648 = vmatpush1.msra.mxu0 %v2608
      %2649 = vmatprep.subr.mxu0 0.0
      %2650 = vmatpush1.msra.mxu0 0.0
      %2651 = vmatprep.subr.mxu0 0.0
      %2652 = vmatpush1.msra.mxu0 0.0
      %2653 = vmatprep.subr.mxu0 0.0
      %2654 = vmatpush1.msra.mxu0 0.0
      %2655 = vmatprep.subr.mxu0 0.0
      %2656 = vmatpush1.msra.mxu0 0.0
      %2657 = vmatprep.subr.mxu0 0.0
      %2658 = vmatpush1.msra.mxu0 0.0
      %2659 = vmatprep.subr.mxu0 0.0
      %2660 = vmatpush1.msra.mxu0 0.0
      %2661 = vmatprep.subr.mxu0 0.0
      %2662 = vmatpush1.msra.mxu0 0.0
      %2663 = vmatprep.subr.mxu0 0.0
      %2664 = vmatpush1.msra.mxu0 0.0
      %2665 = vmatprep.subr.mxu0 0.0
      %2666 = vmatpush1.msra.mxu0 0.0
      %2667 = vmatprep.subr.mxu0 0.0
      %2668 = vmatpush1.msra.mxu0 0.0
      %2669 = vmatprep.subr.mxu0 0.0
      %2670 = vmatpush1.msra.mxu0 0.0
      %2671 = vmatprep.subr.mxu0 0.0
      %2672 = vmatpush1.msra.mxu0 0.0
      %2673 = vmatprep.subr.mxu0 0.0
      %2674 = vmatpush1.msra.mxu0 0.0
      %2675 = vmatprep.subr.mxu0 0.0
      %2676 = vmatpush1.msra.mxu0 0.0
      %2677 = vmatprep.subr.mxu0 0.0
      %2678 = vmatpush1.msra.mxu0 0.0
      %2679 = vmatprep.subr.mxu0 0.0
      %2680 = vmatpush1.msra.mxu0 0.0
      %2681 = vmatprep.mubr.f32.mxu0 0.0
      %2682 = vmatmul.mubr.f32.gmra.mrb[0].mxu0 %v2591
      %v2683 = vpop.f32.mrb[0].mxu0
      %v2684 = vadd.f32 %v2615, %v2683
      %v2685 = vpop.f32.mrb[0].mxu0
      %2686 = vdwg.mxu0
      %v2687 = vadd.f32 %v2684, %v2477
      %v2688 = vadd.f32 %v2687, %v2454
      %v2689 = vld [vmem:[%s11] sm:$0x1]
      %v2690 = vld [vmem:[%s11 + $0x1] sm:$0x1]
      %v2691 = vsel %vm427, %v2688, 0.0
      %2692 = vadd.xlane.f32.xlu0 %v2691
      %v2693 = vpop.xlane.xlu0 %2692
      %v2694 = vmul.f32 %v2693, %v431
      %v2695 = vsub.f32 %v2688, %v2694
      %v2696 = vmul.f32 %v2695, %v2695
      %v2697 = vsel %vm427, %v2696, 0.0
      %2698 = vadd.xlane.f32.xlu0 %v2697
      %v2699 = vpop.xlane.xlu0 %2698
      %v2700 = vmul.f32 %v2699, %v431
      %v2701 = vadd.f32 %v2700, 1e-06
      %v2702 = vrsqrt.pop %v2701
      %v2703 = vmul.f32 %v2695, %v2702
      %v2704 = vlaneseq
      %v2705 = vshrl.u32 %v2704, 7
      %v2706 = vsub.s32 0, %v2705
      %v2707 = vrot.slane %v2689, %v2706
      %v2708 = vmul.f32 %v2703, %v2707
      %v2709 = vlaneseq
      %v2710 = vshrl.u32 %v2709, 7
      %v2711 = vsub.s32 0, %v2710
      %v2712 = vrot.slane %v2690, %v2711
      %v2713 = vadd.f32 %v2708, %v2712
      %2714 = vst.msk [vmem:[%s422] sm:$0xff] %vm427, %v2713
      %p2715 = scmp.lt.s32.totalorder %s23, 1
      %s2716 = scalar_select %p2715, %s23, 1
      %s2717 = smul.addr %s2716, 8
      %s2718 = scalar_lea.vmem %s12, %s2717
      // Predicated region
      $region69: #{parser_model_forward.2} parent=67 // pred_check
        %p2719 = pneg %p303
      $region70: #{parser_model_forward.2} parent=67 // pred_check_branch
        %2721 = sbr.rel (%p2719) target = $region72
      $region71: #{parser_model_forward.2} parent=67 // pred_region
        _
      $region72: #{parser_model_forward.2} parent=67 // pred_fallthru
        _
    $region68: #{parser_model_forward.2} parent=5 // pred_fallthru
      _
    %p2722 = scmp.le.s32.totalorder 2, %s18
    // Predicated region
    $region73: #{parser_model_forward.2} parent=5 // pred_check
      %p2723 = pneg %p2722
    $region74: #{parser_model_forward.2} parent=5 // pred_check_branch
      %2725 = sbr.rel (%p2723) target = $region76
    $region75: #{parser_model_forward.2} parent=5 // pred_region
      %s2726 = ssub.s32 %s18, 2
      // Predicated region
      $region77: #{parser_model_forward.2} parent=75 // pred_check
        %p2727 = pneg %p309
      $region78: #{parser_model_forward.2} parent=75 // pred_check_branch
        %2729 = sbr.rel (%p2727) target = $region80
      $region79: #{parser_model_forward.2} parent=75 // pred_region
        %p2730 = scmp.lt.s32.totalorder %s24, 1
        %s2731 = scalar_select %p2730, %s24, 1
        %s2732 = smul.addr %s2731, 8
        %s2733 = scalar_lea.vmem %s12, %s2732
      $region80: #{parser_model_forward.2} parent=75 // pred_fallthru
        _
    $region76: #{parser_model_forward.2} parent=5 // pred_fallthru
      _
  $region6: #{parser_model_forward.2} parent=0 // loop_footer
    %s22 = sadd.s32 1, %s18
  $region7: #{parser_model_forward.2} parent=0 // loop_footer_branch
    %17 = sbr.rel target = $region3
  $region8: #{parser_model_forward.2} parent=0 // loop_exit
    _

// kernel: parser_model_forward.3
$region0: #{parser_model_forward.3}
  #allocation0 [shape = 'u32[]', space=smem, size = 0x4, offset = 0x4, fixed_abs, tag = 'smem constant byte address 0x4 - core index']
  #allocation1 [shape = 'u32[144,128]{1,0:T(1,128)}', space=vmem, size = 0x12000, scoped, tag = 'internal scratch']
  %s0 = inlined_call_operand.vmem [shape: f32[4,8,64], index: 0, kind: input, shape index: {}]
  %s1 = inlined_call_operand.vmem [shape: f32[4,1,8], index: 1, kind: input, shape index: {}]
  %s2 = inlined_call_operand.vmem [shape: f32[2,64,192], index: 2, kind: input, shape index: {}]
  %s3 = inlined_call_operand.vmem [shape: f32[2,1,192], index: 3, kind: input, shape index: {}]
  %s4 = inlined_call_operand.vmem [shape: f32[2,64,64], index: 4, kind: input, shape index: {}]
  %s5 = inlined_call_operand.vmem [shape: f32[2,1,64], index: 5, kind: input, shape index: {}]
  %s6 = inlined_call_operand.vmem [shape: f32[2,64,128], index: 6, kind: input, shape index: {}]
  %s7 = inlined_call_operand.vmem [shape: f32[2,1,128], index: 7, kind: input, shape index: {}]
  %s8 = inlined_call_operand.vmem [shape: f32[2,128,64], index: 8, kind: input, shape index: {}]
  %s9 = inlined_call_operand.vmem [shape: f32[2,1,64], index: 9, kind: input, shape index: {}]
  %s10 = inlined_call_operand.vmem [shape: f32[2,4,64], index: 10, kind: input, shape index: {}]
  %s11 = inlined_call_operand.vmem [shape: f32[2,64], index: 11, kind: input, shape index: {}]
  %s12 = inlined_call_operand.vmem [shape: f32[64,32], index: 12, kind: input, shape index: {}]
  %s13 = inlined_call_operand.vmem [shape: f32[4,8,32], index: 13, kind: output, shape index: {0}]
  %s14 = inlined_call_operand.hbm [shape: f32[4,8,8], index: 14, kind: output, shape index: {1}]
  %15 = xla_tuple %s13, %s14
  %s16 = sld [smem:[#allocation0]]
  $region93: #{parser_model_forward.3} parent=0
    _
  %s18 = ssub.s32 1, %s16
  %s19 = scalar_select 0, %s18, %s16
  $region1: #{parser_model_forward.3} parent=0
    #allocation2 [shape = 'u8[8192]{0}', space=vmem, size = 0x2000, scoped, tag = 'output window, operand 1']
    #allocation3 [shape = 's32[2]{0}', space=sflag, size = 0x8, scoped, tag = 'scoped memory for parser_model_forward.3']
    %20 = vsyncpa [#allocation3], 0
    %s21 = scalar_lea.sflag [#allocation3], 1
    %22 = vsyncpa %s21, 0
    loop: start=0, step=1, limit=6
    $region2: #{parser_model_forward.3} parent=1 // loop_pre_header
      _
    $region3: #{parser_model_forward.3} parent=1 // loop_header
      %s24 = sphi 0, %s28
      %p25 = scmp.ge.s32.totalorder %s24, 6
      %s34 = sphi 0, %s36
      %s37 = sphi 0, %s34
      %s38 = sphi 0, %s37
      %s54 = sphi 0, %s38
      %s60 = sphi 0, %s62
      %s63 = sphi 0, %s60
      %s64 = sphi 0, %s63
      %s80 = sphi 0, %s64
      %s84 = sphi 0, %s84
      %s86 = sphi 0, %s84
      %s87 = sphi 0, %s86
      %s101 = sphi 0, %s87
      %s105 = sphi 0, %s105
      %s107 = sphi 0, %s105
      %s108 = sphi 0, %s107
      %s122 = sphi 0, %s108
      %s126 = sphi 0, %s126
      %s128 = sphi 0, %s126
      %s129 = sphi 0, %s128
      %s143 = sphi 0, %s129
      %s147 = sphi 0, %s147
      %s149 = sphi 0, %s147
      %s150 = sphi 0, %s149
      %s164 = sphi 0, %s150
      %s168 = sphi 0, %s168
      %s170 = sphi 0, %s168
      %s171 = sphi 0, %s170
      %s185 = sphi 0, %s171
      %s189 = sphi 0, %s189
      %s191 = sphi 0, %s189
      %s192 = sphi 0, %s191
      %s206 = sphi 0, %s192
      %s210 = sphi 0, %s210
      %s212 = sphi 0, %s210
      %s213 = sphi 0, %s212
      %s227 = sphi 0, %s213
      %s231 = sphi 0, %s231
      %s233 = sphi 0, %s231
      %s234 = sphi 0, %s233
      %s248 = sphi 0, %s234
      %s252 = sphi 0, %s252
      %s254 = sphi 0, %s252
      %s255 = sphi 0, %s254
      %s269 = sphi 0, %s255
      %s273 = sphi 0, %s273
      %s275 = sphi 0, %s273
      %s276 = sphi 0, %s275
      %s290 = sphi 0, %s276
      %s294 = sphi 0, %s294
      %s296 = sphi 0, %s294
      %s297 = sphi 0, %s296
      %s311 = sphi 0, %s297
      %s317 = sphi 0, %s319
      %s320 = sphi 0, %s317
      %s321 = sphi 0, %s320
      %s337 = sphi 0, %s321
      %s343 = sphi 0, %s345
      %s346 = sphi 0, %s343
      %s347 = sphi 0, %s346
      %s363 = sphi 0, %s347
    $region4: #{parser_model_forward.3} parent=1 // loop_header_branch
      %27 = sbr.rel (%p25) target = $region8
    $region5: #{parser_model_forward.3} parent=1 // loop_body
      %s29 = ssub.s32 %s24, 1
      %s30 = ssub.s32 %s24, 2
      %s31 = sadd.s32 %s24, 1
      %s32 = ssub.s32 %s24, %s31
      %p33 = scmp.eq.s32.totalorder %s32, 0
      %s35 = sadd.s32 %s34, 1
      %s36 = scalar_select %p33, %s34, %s35
      %p39 = pneg %p33
      %p40 = scmp.eq.s32.totalorder %s24, 3
      %p41 = por %p39, %p40
      %p42 = scmp.ne.s32.totalorder %s34, %s37
      %p43 = scmp.eq.s32.totalorder %s24, 0
      %p44 = por %p42, %p43
      %p45 = scmp.ne.s32.totalorder %s34, %s37
      %p46 = scmp.eq.s32.totalorder %s29, 3
      %p47 = por %p45, %p46
      %p48 = scmp.ne.s32.totalorder %s37, %s38
      %p49 = scmp.eq.s32.totalorder %s29, 0
      %p50 = por %p48, %p49
      %p51 = scmp.ne.s32.totalorder %s37, %s38
      %p52 = scmp.eq.s32.totalorder %s30, 3
      %p53 = por %p51, %p52
      %p55 = scmp.ne.s32.totalorder %s38, %s54
      %p56 = scmp.eq.s32.totalorder %s30, 0
      %p57 = por %p55, %p56
      %s58 = ssub.s32 %s24, %s31
      %p59 = scmp.eq.s32.totalorder %s58, 0
      %s61 = sadd.s32 %s60, 1
      %s62 = scalar_select %p59, %s60, %s61
      %p65 = pneg %p59
      %p66 = scmp.eq.s32.totalorder %s24, 3
      %p67 = por %p65, %p66
      %p68 = scmp.ne.s32.totalorder %s60, %s63
      %p69 = scmp.eq.s32.totalorder %s24, 0
      %p70 = por %p68, %p69
      %p71 = scmp.ne.s32.totalorder %s60, %s63
      %p72 = scmp.eq.s32.totalorder %s29, 3
      %p73 = por %p71, %p72
      %p74 = scmp.ne.s32.totalorder %s63, %s64
      %p75 = scmp.eq.s32.totalorder %s29, 0
      %p76 = por %p74, %p75
      %p77 = scmp.ne.s32.totalorder %s63, %s64
      %p78 = scmp.eq.s32.totalorder %s30, 3
      %p79 = por %p77, %p78
      %p81 = scmp.ne.s32.totalorder %s64, %s80
      %p82 = scmp.eq.s32.totalorder %s30, 0
      %p83 = por %p81, %p82
      %s85 = sadd.s32 %s84, 1
      %p88 = scmp.eq.s32.totalorder %s24, 3
      %p89 = scmp.ne.s32.totalorder %s84, %s86
      %p90 = scmp.eq.s32.totalorder %s24, 0
      %p91 = por %p89, %p90
      %p92 = scmp.ne.s32.totalorder %s84, %s86
      %p93 = scmp.eq.s32.totalorder %s29, 3
      %p94 = por %p92, %p93
      %p95 = scmp.ne.s32.totalorder %s86, %s87
      %p96 = scmp.eq.s32.totalorder %s29, 0
      %p97 = por %p95, %p96
      %p98 = scmp.ne.s32.totalorder %s86, %s87
      %p99 = scmp.eq.s32.totalorder %s30, 3
      %p100 = por %p98, %p99
      %p102 = scmp.ne.s32.totalorder %s87, %s101
      %p103 = scmp.eq.s32.totalorder %s30, 0
      %p104 = por %p102, %p103
      %s106 = sadd.s32 %s105, 1
      %p109 = scmp.eq.s32.totalorder %s24, 3
      %p110 = scmp.ne.s32.totalorder %s105, %s107
      %p111 = scmp.eq.s32.totalorder %s24, 0
      %p112 = por %p110, %p111
      %p113 = scmp.ne.s32.totalorder %s105, %s107
      %p114 = scmp.eq.s32.totalorder %s29, 3
      %p115 = por %p113, %p114
      %p116 = scmp.ne.s32.totalorder %s107, %s108
      %p117 = scmp.eq.s32.totalorder %s29, 0
      %p118 = por %p116, %p117
      %p119 = scmp.ne.s32.totalorder %s107, %s108
      %p120 = scmp.eq.s32.totalorder %s30, 3
      %p121 = por %p119, %p120
      %p123 = scmp.ne.s32.totalorder %s108, %s122
      %p124 = scmp.eq.s32.totalorder %s30, 0
      %p125 = por %p123, %p124
      %s127 = sadd.s32 %s126, 1
      %p130 = scmp.eq.s32.totalorder %s24, 3
      %p131 = scmp.ne.s32.totalorder %s126, %s128
      %p132 = scmp.eq.s32.totalorder %s24, 0
      %p133 = por %p131, %p132
      %p134 = scmp.ne.s32.totalorder %s126, %s128
      %p135 = scmp.eq.s32.totalorder %s29, 3
      %p136 = por %p134, %p135
      %p137 = scmp.ne.s32.totalorder %s128, %s129
      %p138 = scmp.eq.s32.totalorder %s29, 0
      %p139 = por %p137, %p138
      %p140 = scmp.ne.s32.totalorder %s128, %s129
      %p141 = scmp.eq.s32.totalorder %s30, 3
      %p142 = por %p140, %p141
      %p144 = scmp.ne.s32.totalorder %s129, %s143
      %p145 = scmp.eq.s32.totalorder %s30, 0
      %p146 = por %p144, %p145
      %s148 = sadd.s32 %s147, 1
      %p151 = scmp.eq.s32.totalorder %s24, 3
      %p152 = scmp.ne.s32.totalorder %s147, %s149
      %p153 = scmp.eq.s32.totalorder %s24, 0
      %p154 = por %p152, %p153
      %p155 = scmp.ne.s32.totalorder %s147, %s149
      %p156 = scmp.eq.s32.totalorder %s29, 3
      %p157 = por %p155, %p156
      %p158 = scmp.ne.s32.totalorder %s149, %s150
      %p159 = scmp.eq.s32.totalorder %s29, 0
      %p160 = por %p158, %p159
      %p161 = scmp.ne.s32.totalorder %s149, %s150
      %p162 = scmp.eq.s32.totalorder %s30, 3
      %p163 = por %p161, %p162
      %p165 = scmp.ne.s32.totalorder %s150, %s164
      %p166 = scmp.eq.s32.totalorder %s30, 0
      %p167 = por %p165, %p166
      %s169 = sadd.s32 %s168, 1
      %p172 = scmp.eq.s32.totalorder %s24, 3
      %p173 = scmp.ne.s32.totalorder %s168, %s170
      %p174 = scmp.eq.s32.totalorder %s24, 0
      %p175 = por %p173, %p174
      %p176 = scmp.ne.s32.totalorder %s168, %s170
      %p177 = scmp.eq.s32.totalorder %s29, 3
      %p178 = por %p176, %p177
      %p179 = scmp.ne.s32.totalorder %s170, %s171
      %p180 = scmp.eq.s32.totalorder %s29, 0
      %p181 = por %p179, %p180
      %p182 = scmp.ne.s32.totalorder %s170, %s171
      %p183 = scmp.eq.s32.totalorder %s30, 3
      %p184 = por %p182, %p183
      %p186 = scmp.ne.s32.totalorder %s171, %s185
      %p187 = scmp.eq.s32.totalorder %s30, 0
      %p188 = por %p186, %p187
      %s190 = sadd.s32 %s189, 1
      %p193 = scmp.eq.s32.totalorder %s24, 3
      %p194 = scmp.ne.s32.totalorder %s189, %s191
      %p195 = scmp.eq.s32.totalorder %s24, 0
      %p196 = por %p194, %p195
      %p197 = scmp.ne.s32.totalorder %s189, %s191
      %p198 = scmp.eq.s32.totalorder %s29, 3
      %p199 = por %p197, %p198
      %p200 = scmp.ne.s32.totalorder %s191, %s192
      %p201 = scmp.eq.s32.totalorder %s29, 0
      %p202 = por %p200, %p201
      %p203 = scmp.ne.s32.totalorder %s191, %s192
      %p204 = scmp.eq.s32.totalorder %s30, 3
      %p205 = por %p203, %p204
      %p207 = scmp.ne.s32.totalorder %s192, %s206
      %p208 = scmp.eq.s32.totalorder %s30, 0
      %p209 = por %p207, %p208
      %s211 = sadd.s32 %s210, 1
      %p214 = scmp.eq.s32.totalorder %s24, 3
      %p215 = scmp.ne.s32.totalorder %s210, %s212
      %p216 = scmp.eq.s32.totalorder %s24, 0
      %p217 = por %p215, %p216
      %p218 = scmp.ne.s32.totalorder %s210, %s212
      %p219 = scmp.eq.s32.totalorder %s29, 3
      %p220 = por %p218, %p219
      %p221 = scmp.ne.s32.totalorder %s212, %s213
      %p222 = scmp.eq.s32.totalorder %s29, 0
      %p223 = por %p221, %p222
      %p224 = scmp.ne.s32.totalorder %s212, %s213
      %p225 = scmp.eq.s32.totalorder %s30, 3
      %p226 = por %p224, %p225
      %p228 = scmp.ne.s32.totalorder %s213, %s227
      %p229 = scmp.eq.s32.totalorder %s30, 0
      %p230 = por %p228, %p229
      %s232 = sadd.s32 %s231, 1
      %p235 = scmp.eq.s32.totalorder %s24, 3
      %p236 = scmp.ne.s32.totalorder %s231, %s233
      %p237 = scmp.eq.s32.totalorder %s24, 0
      %p238 = por %p236, %p237
      %p239 = scmp.ne.s32.totalorder %s231, %s233
      %p240 = scmp.eq.s32.totalorder %s29, 3
      %p241 = por %p239, %p240
      %p242 = scmp.ne.s32.totalorder %s233, %s234
      %p243 = scmp.eq.s32.totalorder %s29, 0
      %p244 = por %p242, %p243
      %p245 = scmp.ne.s32.totalorder %s233, %s234
      %p246 = scmp.eq.s32.totalorder %s30, 3
      %p247 = por %p245, %p246
      %p249 = scmp.ne.s32.totalorder %s234, %s248
      %p250 = scmp.eq.s32.totalorder %s30, 0
      %p251 = por %p249, %p250
      %s253 = sadd.s32 %s252, 1
      %p256 = scmp.eq.s32.totalorder %s24, 3
      %p257 = scmp.ne.s32.totalorder %s252, %s254
      %p258 = scmp.eq.s32.totalorder %s24, 0
      %p259 = por %p257, %p258
      %p260 = scmp.ne.s32.totalorder %s252, %s254
      %p261 = scmp.eq.s32.totalorder %s29, 3
      %p262 = por %p260, %p261
      %p263 = scmp.ne.s32.totalorder %s254, %s255
      %p264 = scmp.eq.s32.totalorder %s29, 0
      %p265 = por %p263, %p264
      %p266 = scmp.ne.s32.totalorder %s254, %s255
      %p267 = scmp.eq.s32.totalorder %s30, 3
      %p268 = por %p266, %p267
      %p270 = scmp.ne.s32.totalorder %s255, %s269
      %p271 = scmp.eq.s32.totalorder %s30, 0
      %p272 = por %p270, %p271
      %s274 = sadd.s32 %s273, 1
      %p277 = scmp.eq.s32.totalorder %s24, 3
      %p278 = scmp.ne.s32.totalorder %s273, %s275
      %p279 = scmp.eq.s32.totalorder %s24, 0
      %p280 = por %p278, %p279
      %p281 = scmp.ne.s32.totalorder %s273, %s275
      %p282 = scmp.eq.s32.totalorder %s29, 3
      %p283 = por %p281, %p282
      %p284 = scmp.ne.s32.totalorder %s275, %s276
      %p285 = scmp.eq.s32.totalorder %s29, 0
      %p286 = por %p284, %p285
      %p287 = scmp.ne.s32.totalorder %s275, %s276
      %p288 = scmp.eq.s32.totalorder %s30, 3
      %p289 = por %p287, %p288
      %p291 = scmp.ne.s32.totalorder %s276, %s290
      %p292 = scmp.eq.s32.totalorder %s30, 0
      %p293 = por %p291, %p292
      %s295 = sadd.s32 %s294, 1
      %p298 = scmp.eq.s32.totalorder %s24, 3
      %p299 = scmp.ne.s32.totalorder %s294, %s296
      %p300 = scmp.eq.s32.totalorder %s24, 0
      %p301 = por %p299, %p300
      %p302 = scmp.ne.s32.totalorder %s294, %s296
      %p303 = scmp.eq.s32.totalorder %s29, 3
      %p304 = por %p302, %p303
      %p305 = scmp.ne.s32.totalorder %s296, %s297
      %p306 = scmp.eq.s32.totalorder %s29, 0
      %p307 = por %p305, %p306
      %p308 = scmp.ne.s32.totalorder %s296, %s297
      %p309 = scmp.eq.s32.totalorder %s30, 3
      %p310 = por %p308, %p309
      %p312 = scmp.ne.s32.totalorder %s297, %s311
      %p313 = scmp.eq.s32.totalorder %s30, 0
      %p314 = por %p312, %p313
      %s315 = ssub.s32 %s24, %s31
      %p316 = scmp.eq.s32.totalorder %s315, 0
      %s318 = sadd.s32 %s317, 1
      %s319 = scalar_select %p316, %s317, %s318
      %p322 = pneg %p316
      %p323 = scmp.eq.s32.totalorder %s24, 3
      %p324 = por %p322, %p323
      %p325 = scmp.ne.s32.totalorder %s317, %s320
      %p326 = scmp.eq.s32.totalorder %s24, 0
      %p327 = por %p325, %p326
      %p328 = scmp.ne.s32.totalorder %s317, %s320
      %p329 = scmp.eq.s32.totalorder %s29, 3
      %p330 = por %p328, %p329
      %p331 = scmp.ne.s32.totalorder %s320, %s321
      %p332 = scmp.eq.s32.totalorder %s29, 0
      %p333 = por %p331, %p332
      %p334 = scmp.ne.s32.totalorder %s320, %s321
      %p335 = scmp.eq.s32.totalorder %s30, 3
      %p336 = por %p334, %p335
      %p338 = scmp.ne.s32.totalorder %s321, %s337
      %p339 = scmp.eq.s32.totalorder %s30, 0
      %p340 = por %p338, %p339
      %s341 = ssub.s32 %s24, %s31
      %p342 = scmp.eq.s32.totalorder %s341, 0
      %s344 = sadd.s32 %s343, 1
      %s345 = scalar_select %p342, %s343, %s344
      %p348 = pneg %p342
      %p349 = scmp.eq.s32.totalorder %s24, 3
      %p350 = por %p348, %p349
      %p351 = scmp.ne.s32.totalorder %s343, %s346
      %p352 = scmp.eq.s32.totalorder %s24, 0
      %p353 = por %p351, %p352
      %p354 = scmp.ne.s32.totalorder %s343, %s346
      %p355 = scmp.eq.s32.totalorder %s29, 3
      %p356 = por %p354, %p355
      %p357 = scmp.ne.s32.totalorder %s346, %s347
      %p358 = scmp.eq.s32.totalorder %s29, 0
      %p359 = por %p357, %p358
      %p360 = scmp.ne.s32.totalorder %s346, %s347
      %p361 = scmp.eq.s32.totalorder %s30, 3
      %p362 = por %p360, %p361
      %p364 = scmp.ne.s32.totalorder %s347, %s363
      %p365 = scmp.eq.s32.totalorder %s30, 0
      %p366 = por %p364, %p365
      %p367 = scmp.le.s32.totalorder 1, %s24
      %p368 = scmp.lt.s32.totalorder %s24, 5
      %p369 = pnand %p367, %p368
      %p370 = pneg %p369
      // Predicated region
      $region9: #{parser_model_forward.3} parent=5 // pred_check
        _
      $region10: #{parser_model_forward.3} parent=5 // pred_check_branch
        %372 = sbr.rel (%p369) target = $region12
      $region11: #{parser_model_forward.3} parent=5 // pred_region
        %s373 = ssub.s32 %s24, 1
        // Predicated region
        $region13: #{parser_model_forward.3} parent=11 // pred_check
          %p374 = pneg %p97
        $region14: #{parser_model_forward.3} parent=11 // pred_check_branch
          %376 = sbr.rel (%p374) target = $region16
        $region15: #{parser_model_forward.3} parent=11 // pred_region
          _
        $region16: #{parser_model_forward.3} parent=11 // pred_fallthru
          _
        // Predicated region
        $region17: #{parser_model_forward.3} parent=11 // pred_check
          %p377 = pneg %p118
        $region18: #{parser_model_forward.3} parent=11 // pred_check_branch
          %379 = sbr.rel (%p377) target = $region20
        $region19: #{parser_model_forward.3} parent=11 // pred_region
          _
        $region20: #{parser_model_forward.3} parent=11 // pred_fallthru
          _
        // Predicated region
        $region21: #{parser_model_forward.3} parent=11 // pred_check
          %p380 = pneg %p139
        $region22: #{parser_model_forward.3} parent=11 // pred_check_branch
          %382 = sbr.rel (%p380) target = $region24
        $region23: #{parser_model_forward.3} parent=11 // pred_region
          _
        $region24: #{parser_model_forward.3} parent=11 // pred_fallthru
          _
        // Predicated region
        $region25: #{parser_model_forward.3} parent=11 // pred_check
          %p383 = pneg %p160
        $region26: #{parser_model_forward.3} parent=11 // pred_check_branch
          %385 = sbr.rel (%p383) target = $region28
        $region27: #{parser_model_forward.3} parent=11 // pred_region
          _
        $region28: #{parser_model_forward.3} parent=11 // pred_fallthru
          _
        // Predicated region
        $region29: #{parser_model_forward.3} parent=11 // pred_check
          %p386 = pneg %p181
        $region30: #{parser_model_forward.3} parent=11 // pred_check_branch
          %388 = sbr.rel (%p386) target = $region32
        $region31: #{parser_model_forward.3} parent=11 // pred_region
          _
        $region32: #{parser_model_forward.3} parent=11 // pred_fallthru
          _
        // Predicated region
        $region33: #{parser_model_forward.3} parent=11 // pred_check
          %p389 = pneg %p202
        $region34: #{parser_model_forward.3} parent=11 // pred_check_branch
          %391 = sbr.rel (%p389) target = $region36
        $region35: #{parser_model_forward.3} parent=11 // pred_region
          _
        $region36: #{parser_model_forward.3} parent=11 // pred_fallthru
          _
        // Predicated region
        $region37: #{parser_model_forward.3} parent=11 // pred_check
          %p392 = pneg %p223
        $region38: #{parser_model_forward.3} parent=11 // pred_check_branch
          %394 = sbr.rel (%p392) target = $region40
        $region39: #{parser_model_forward.3} parent=11 // pred_region
          _
        $region40: #{parser_model_forward.3} parent=11 // pred_fallthru
          _
        // Predicated region
        $region41: #{parser_model_forward.3} parent=11 // pred_check
          %p395 = pneg %p244
        $region42: #{parser_model_forward.3} parent=11 // pred_check_branch
          %397 = sbr.rel (%p395) target = $region44
        $region43: #{parser_model_forward.3} parent=11 // pred_region
          _
        $region44: #{parser_model_forward.3} parent=11 // pred_fallthru
          _
        // Predicated region
        $region45: #{parser_model_forward.3} parent=11 // pred_check
          %p398 = pneg %p265
        $region46: #{parser_model_forward.3} parent=11 // pred_check_branch
          %400 = sbr.rel (%p398) target = $region48
        $region47: #{parser_model_forward.3} parent=11 // pred_region
          _
        $region48: #{parser_model_forward.3} parent=11 // pred_fallthru
          _
        // Predicated region
        $region49: #{parser_model_forward.3} parent=11 // pred_check
          %p401 = pneg %p286
        $region50: #{parser_model_forward.3} parent=11 // pred_check_branch
          %403 = sbr.rel (%p401) target = $region52
        $region51: #{parser_model_forward.3} parent=11 // pred_region
          _
        $region52: #{parser_model_forward.3} parent=11 // pred_fallthru
          _
        // Predicated region
        $region53: #{parser_model_forward.3} parent=11 // pred_check
          %p404 = pneg %p307
        $region54: #{parser_model_forward.3} parent=11 // pred_check_branch
          %406 = sbr.rel (%p404) target = $region56
        $region55: #{parser_model_forward.3} parent=11 // pred_region
          _
        $region56: #{parser_model_forward.3} parent=11 // pred_fallthru
          _
      $region12: #{parser_model_forward.3} parent=5 // pred_fallthru
        _
      %p407 = scmp.lt.s32.totalorder %s24, 4
      // Predicated region
      $region57: #{parser_model_forward.3} parent=5 // pred_check
        %p408 = pneg %p407
      $region58: #{parser_model_forward.3} parent=5 // pred_check_branch
        %410 = sbr.rel (%p408) target = $region60
      $region59: #{parser_model_forward.3} parent=5 // pred_region
        // Predicated region
        $region61: #{parser_model_forward.3} parent=59 // pred_check
          %p411 = pneg %p44
        $region62: #{parser_model_forward.3} parent=59 // pred_check_branch
          %413 = sbr.rel (%p411) target = $region64
        $region63: #{parser_model_forward.3} parent=59 // pred_region
          %p414 = scmp.lt.s32.totalorder %s24, 3
          %s415 = scalar_select %p414, %s24, 3
          %s416 = smul.addr %s415, 8
          %s417 = scalar_lea.vmem %s0, %s416
        $region64: #{parser_model_forward.3} parent=59 // pred_fallthru
          _
        // Predicated region
        $region65: #{parser_model_forward.3} parent=59 // pred_check
          %p418 = pneg %p70
        $region66: #{parser_model_forward.3} parent=59 // pred_check_branch
          %420 = sbr.rel (%p418) target = $region68
        $region67: #{parser_model_forward.3} parent=59 // pred_region
          %p421 = scmp.lt.s32.totalorder %s24, 3
          %s422 = scalar_select %p421, %s24, 3
          %s423 = scalar_lea.vmem %s1, %s422
        $region68: #{parser_model_forward.3} parent=59 // pred_fallthru
          _
      $region60: #{parser_model_forward.3} parent=5 // pred_fallthru
        _
      %p424 = scmp.le.s32.totalorder 1, %s24
      %p425 = scmp.lt.s32.totalorder %s24, 5
      %p426 = pnand %p424, %p425
      %p427 = pneg %p426
      // Predicated region
      $region69: #{parser_model_forward.3} parent=5 // pred_check
        _
      $region70: #{parser_model_forward.3} parent=5 // pred_check_branch
        %429 = sbr.rel (%p426) target = $region72
      $region71: #{parser_model_forward.3} parent=5 // pred_region
        %s430 = ssub.s32 %s24, 1
        %p431 = scmp.lt.s32.totalorder %s29, 3
        %s432 = scalar_select %p431, %s29, 3
        %s433 = smul.addr %s432, 8
        %s434 = scalar_lea.vmem %s0, %s433
        %p435 = pneg %p50
        %p436 = pneg %p47
        %p437 = scmp.lt.s32.totalorder %s29, 3
        %s438 = scalar_select %p437, %s29, 3
        %s439 = scalar_lea.vmem %s1, %s438
        %p440 = pneg %p76
        %p441 = pneg %p73
        %p442 = pneg %p97
        %p443 = pneg %p94
        %p444 = pneg %p118
        %p445 = pneg %p115
        %p446 = pneg %p139
        %p447 = pneg %p136
        %p448 = pneg %p160
        %p449 = pneg %p157
        %p450 = pneg %p181
        %p451 = pneg %p178
        %p452 = pneg %p202
        %p453 = pneg %p199
        %p454 = pneg %p223
        %p455 = pneg %p220
        %p456 = pneg %p244
        %p457 = pneg %p241
        %p458 = pneg %p265
        %p459 = pneg %p262
        %p460 = pneg %p286
        %p461 = pneg %p283
        %p462 = pneg %p307
        %p463 = pneg %p304
        %p464 = pneg %p333
        %p465 = pneg %p330
        %p466 = scmp.lt.s32.totalorder %s29, 3
        %s467 = scalar_select %p466, %s29, 3
        %s468 = smul.addr %s467, 8
        %s469 = scalar_lea.vmem %s13, %s468
        %p470 = pneg %p359
        %p471 = pneg %p356
        %s472 = sand.u32 %s346, 1
        %s473 = scalar_lea.sflag [#allocation3], %s472
        %s474 = sand.u32 %s346, 1
        %s475 = smul.addr %s474, 8
        %s476 = scalar_lea.vmem [#allocation2], %s475
        %p477 = scmp.lt.s32.totalorder %s29, 3
        %s478 = scalar_select %p477, %s29, 3
        %s479 = smul.addr %s478, 8
        %s480 = scalar_lea.vmem %s0, %s479
        %p481 = scmp.lt.s32.totalorder %s29, 3
        %s482 = scalar_select %p481, %s29, 3
        %s483 = scalar_lea.vmem %s1, %s482
        %p484 = scmp.lt.s32.totalorder %s29, 3
        %s485 = scalar_select %p484, %s29, 3
        %s486 = smul.addr %s485, 8
        %s487 = scalar_lea.vmem %s13, %s486
        %v488 = vld [vmem:[%s480] sm:$0xff]
        %v489 = vld [vmem:[%s483] sm:$0x1]
        %vm490 = vcmp.gt.f32.partialorder %v489, 0.5
        %v491 = vlaneseq
        %v492 = vshrl.u32 %v491, 7
        %v493 = vlaneseq
        %v494 = vand.u32 %v493, 127
        %vm495 = vcmp.gt.s32.totalorder %v494, %v492
        %v496 = vsel %vm490, 1, 0
        %v497 = vlaneseq
        %v498 = vshrl.u32 %v497, 7
        %v499 = vsub.s32 0, %v498
        %v500 = vrot.slane %v496, %v499
        %vm501 = vcmp.eq.s32.totalorder %v500, 1
        %vm502 = vmor %vm495, %vm501
        %v503 = vld [vmem:[%s10] sm:$0xf]
        %vm504 = vcmask 523264
        %v505 = vsel %vm504, %v488, 0.0
        %506 = vadd.xlane.f32.xlu0 %v505
        %v507 = vpop.xlane.xlu0 %506
        %v508 = vrcp.pop 64.0
        %v509 = vmul.f32 %v507, %v508
        %v510 = vsub.f32 %v488, %v509
        %v511 = vmul.f32 %v510, %v510
        %v512 = vsel %vm504, %v511, 0.0
        %513 = vadd.xlane.f32.xlu0 %v512
        %v514 = vpop.xlane.xlu0 %513
        %v515 = vmul.f32 %v514, %v508
        %v516 = vadd.f32 %v515, 1e-06
        %v517 = vrsqrt.pop %v516
        %v518 = vmul.f32 %v510, %v517
        %v519 = vlaneseq
        %v520 = vshrl.u32 %v519, 7
        %v521 = vsub.s32 0, %v520
        %v522 = vrot.slane %v503, %v521
        %v523 = vmul.f32 %v518, %v522
        %v524 = vlaneseq
        %v525 = vshrl.u32 %v524, 7
        %v526 = vsub.s32 1, %v525
        %v527 = vrot.slane %v503, %v526
        %v528 = vadd.f32 %v523, %v527
        %v529 = vld [vmem:[%s2] sm:$0xff]
        %v530 = vld [vmem:[%s2 + $0x8] sm:$0xff]
        %v531 = vld [vmem:[%s2 + $0x10] sm:$0xff]
        %v532 = vld [vmem:[%s2 + $0x18] sm:$0xff]
        %v533 = vld [vmem:[%s2 + $0x20] sm:$0xff]
        %v534 = vld [vmem:[%s2 + $0x28] sm:$0xff]
        %v535 = vld [vmem:[%s2 + $0x30] sm:$0xff]
        %v536 = vld [vmem:[%s2 + $0x38] sm:$0xff]
        %v537 = vld [vmem:[%s2 + $0x40] sm:$0xff]
        %v538 = vld [vmem:[%s2 + $0x48] sm:$0xff]
        %v539 = vld [vmem:[%s2 + $0x50] sm:$0xff]
        %v540 = vld [vmem:[%s2 + $0x58] sm:$0xff]
        %v541 = vld [vmem:[%s2 + $0x60] sm:$0xff]
        %v542 = vld [vmem:[%s2 + $0x68] sm:$0xff]
        %v543 = vld [vmem:[%s2 + $0x70] sm:$0xff]
        %v544 = vld [vmem:[%s2 + $0x78] sm:$0xff]
        %v545 = vld [vmem:[%s3] sm:$0x3]
        %v546 = vld [vmem:[%s4] sm:$0xff]
        %v547 = vld [vmem:[%s4 + $0x8] sm:$0xff]
        %v548 = vld [vmem:[%s4 + $0x10] sm:$0xff]
        %v549 = vld [vmem:[%s4 + $0x18] sm:$0xff]
        %v550 = vld [vmem:[%s4 + $0x20] sm:$0xff]
        %v551 = vld [vmem:[%s4 + $0x28] sm:$0xff]
        %v552 = vld [vmem:[%s4 + $0x30] sm:$0xff]
        %v553 = vld [vmem:[%s4 + $0x38] sm:$0xff]
        %v554 = vld [vmem:[%s5] sm:$0x1]
        %v556 = vlaneseq
        %v557 = vshrl.u32 %v556, 7
        %v558 = vsub.s32 0, %v557
        %v559 = vrot.slane %v545, %v558
        %v560 = vlaneseq
        %v561 = vshrl.u32 %v560, 7
        %v562 = vsub.s32 1, %v561
        %v563 = vrot.slane %v545, %v562
        %v567 = vsel %vm504, %v528, 0
        %569 = vmatprep.subr.mxu0 %v530
        %570 = vmatpush1.msra.mxu0 %v529
        %571 = vmatprep.subr.mxu0 %v532
        %572 = vmatpush1.msra.mxu0 %v531
        %573 = vmatprep.subr.mxu0 %v534
        %574 = vmatpush1.msra.mxu0 %v533
        %575 = vmatprep.subr.mxu0 %v536
        %576 = vmatpush1.msra.mxu0 %v535
        %577 = vmatprep.subr.mxu0 %v538
        %578 = vmatpush1.msra.mxu0 %v537
        %579 = vmatprep.subr.mxu0 %v540
        %580 = vmatpush1.msra.mxu0 %v539
        %581 = vmatprep.subr.mxu0 %v542
        %582 = vmatpush1.msra.mxu0 %v541
        %583 = vmatprep.subr.mxu0 %v544
        %584 = vmatpush1.msra.mxu0 %v543
        %585 = vmatprep.subr.mxu0 0.0
        %586 = vmatpush1.msra.mxu0 0.0
        %587 = vmatprep.subr.mxu0 0.0
        %588 = vmatpush1.msra.mxu0 0.0
        %589 = vmatprep.subr.mxu0 0.0
        %590 = vmatpush1.msra.mxu0 0.0
        %591 = vmatprep.subr.mxu0 0.0
        %592 = vmatpush1.msra.mxu0 0.0
        %593 = vmatprep.subr.mxu0 0.0
        %594 = vmatpush1.msra.mxu0 0.0
        %595 = vmatprep.subr.mxu0 0.0
        %596 = vmatpush1.msra.mxu0 0.0
        %597 = vmatprep.subr.mxu0 0.0
        %598 = vmatpush1.msra.mxu0 0.0
        %599 = vmatprep.subr.mxu0 0.0
        %600 = vmatpush1.msra.mxu0 0.0
        %601 = vmatprep.subr.mxu0 0.0
        %602 = vmatpush1.msra.mxu0 0.0
        %603 = vmatprep.subr.mxu0 0.0
        %604 = vmatpush1.msra.mxu0 0.0
        %605 = vmatprep.subr.mxu0 0.0
        %606 = vmatpush1.msra.mxu0 0.0
        %607 = vmatprep.subr.mxu0 0.0
        %608 = vmatpush1.msra.mxu0 0.0
        %609 = vmatprep.subr.mxu0 0.0
        %610 = vmatpush1.msra.mxu0 0.0
        %611 = vmatprep.subr.mxu0 0.0
        %612 = vmatpush1.msra.mxu0 0.0
        %613 = vmatprep.subr.mxu0 0.0
        %614 = vmatpush1.msra.mxu0 0.0
        %615 = vmatprep.subr.mxu0 0.0
        %616 = vmatpush1.msra.mxu0 0.0
        %617 = vmatprep.subr.mxu0 0.0
        %618 = vmatpush1.msra.mxu0 0.0
        %619 = vmatprep.subr.mxu0 0.0
        %620 = vmatpush1.msra.mxu0 0.0
        %621 = vmatprep.subr.mxu0 0.0
        %622 = vmatpush1.msra.mxu0 0.0
        %623 = vmatprep.subr.mxu0 0.0
        %624 = vmatpush1.msra.mxu0 0.0
        %625 = vmatprep.subr.mxu0 0.0
        %626 = vmatpush1.msra.mxu0 0.0
        %627 = vmatprep.subr.mxu0 0.0
        %628 = vmatpush1.msra.mxu0 0.0
        %629 = vmatprep.subr.mxu0 0.0
        %630 = vmatpush1.msra.mxu0 0.0
        %631 = vmatprep.subr.mxu0 0.0
        %632 = vmatpush1.msra.mxu0 0.0
        %633 = vmatprep.mubr.f32.mxu0 0.0
        %634 = vmatmul.mubr.f32.gmra.mrb[0].mxu0 %v567
        %v635 = vpop.f32.mrb[0].mxu0
        %v636 = vadd.f32 %v559, %v635
        %v637 = vpop.f32.mrb[0].mxu0
        %v638 = vadd.f32 %v563, %v637
        %639 = vdwg.mxu0
        %641 = vrot.lane.b32.xlu0 %v636, 64
        %v642 = vpop.permute.xlu0 %641
        %vm643 = vcmask 130048
        %v644 = vsel %vm643, %v636, 0
        %v646 = vsel %vm643, %v642, 0
        %648 = vmatprep.subr.mxu0 0.0
        %649 = vmatpush1.xpose.msra.mxu0 %v646
        %650 = vmatprep.subr.mxu0 0.0
        %651 = vmatpush1.xpose.msra.mxu0 0.0
        %652 = vmatprep.subr.mxu0 0.0
        %653 = vmatpush1.xpose.msra.mxu0 0.0
        %654 = vmatprep.subr.mxu0 0.0
        %655 = vmatpush1.xpose.msra.mxu0 0.0
        %656 = vmatprep.subr.mxu0 0.0
        %657 = vmatpush1.xpose.msra.mxu0 0.0
        %658 = vmatprep.subr.mxu0 0.0
        %659 = vmatpush1.xpose.msra.mxu0 0.0
        %660 = vmatprep.subr.mxu0 0.0
        %661 = vmatpush1.xpose.msra.mxu0 0.0
        %662 = vmatprep.subr.mxu0 0.0
        %663 = vmatpush1.xpose.msra.mxu0 0.0
        %664 = vmatprep.subr.mxu0 0.0
        %665 = vmatpush1.xpose.msra.mxu0 0.0
        %666 = vmatprep.subr.mxu0 0.0
        %667 = vmatpush1.xpose.msra.mxu0 0.0
        %668 = vmatprep.subr.mxu0 0.0
        %669 = vmatpush1.xpose.msra.mxu0 0.0
        %670 = vmatprep.subr.mxu0 0.0
        %671 = vmatpush1.xpose.msra.mxu0 0.0
        %672 = vmatprep.subr.mxu0 0.0
        %673 = vmatpush1.xpose.msra.mxu0 0.0
        %674 = vmatprep.subr.mxu0 0.0
        %675 = vmatpush1.xpose.msra.mxu0 0.0
        %676 = vmatprep.subr.mxu0 0.0
        %677 = vmatpush1.xpose.msra.mxu0 0.0
        %678 = vmatprep.subr.mxu0 0.0
        %679 = vmatpush1.xpose.msra.mxu0 0.0
        %680 = vmatprep.subr.mxu0 0.0
        %681 = vmatpush1.xpose.msra.mxu0 0.0
        %682 = vmatprep.subr.mxu0 0.0
        %683 = vmatpush1.xpose.msra.mxu0 0.0
        %684 = vmatprep.subr.mxu0 0.0
        %685 = vmatpush1.xpose.msra.mxu0 0.0
        %686 = vmatprep.subr.mxu0 0.0
        %687 = vmatpush1.xpose.msra.mxu0 0.0
        %688 = vmatprep.subr.mxu0 0.0
        %689 = vmatpush1.xpose.msra.mxu0 0.0
        %690 = vmatprep.subr.mxu0 0.0
        %691 = vmatpush1.xpose.msra.mxu0 0.0
        %692 = vmatprep.subr.mxu0 0.0
        %693 = vmatpush1.xpose.msra.mxu0 0.0
        %694 = vmatprep.subr.mxu0 0.0
        %695 = vmatpush1.xpose.msra.mxu0 0.0
        %696 = vmatprep.subr.mxu0 0.0
        %697 = vmatpush1.xpose.msra.mxu0 0.0
        %698 = vmatprep.subr.mxu0 0.0
        %699 = vmatpush1.xpose.msra.mxu0 0.0
        %700 = vmatprep.subr.mxu0 0.0
        %701 = vmatpush1.xpose.msra.mxu0 0.0
        %702 = vmatprep.subr.mxu0 0.0
        %703 = vmatpush1.xpose.msra.mxu0 0.0
        %704 = vmatprep.subr.mxu0 0.0
        %705 = vmatpush1.xpose.msra.mxu0 0.0
        %706 = vmatprep.subr.mxu0 0.0
        %707 = vmatpush1.xpose.msra.mxu0 0.0
        %708 = vmatprep.subr.mxu0 0.0
        %709 = vmatpush1.xpose.msra.mxu0 0.0
        %710 = vmatprep.subr.mxu0 0.0
        %711 = vmatpush1.xpose.msra.mxu0 0.0
        %712 = vmatprep.mubr.f32.mxu0 0.0
        %713 = vmatmul.mubr.f32.gmra.mrb[0].mxu0 %v644
        %v714 = vpop.f32.mrb[0].mxu0
        %v715 = vadd.f32 0.0, %v714
        %v716 = vpop.f32.mrb[0].mxu0
        %717 = vdwg.mxu0
        %v718 = vsel %vm502, -1e+18, %v715
        %vm719 = vcmask 64512
        %v720 = vsel %vm719, %v718, -inf
        %721 = vmax.xlane.f32.xlu0 %v720
        %v722 = vpop.xlane.xlu0 %721
        %v723 = vsub.f32 %v718, %v722
        %v724 = vmul.f32 %v723, 1.442695
        %v725 = vpow.pop %v724
        %v726 = vsel %vm719, %v725, 0.0
        %727 = vadd.xlane.f32.xlu0 %v726
        %v728 = vpop.xlane.xlu0 %727
        %v729 = vrcp.pop %v728
        %v730 = vmul.f32 %v725, %v729
        %v732 = vsel %vm719, %v730, 0
        %734 = vmatprep.subr.mxu0 0.0
        %735 = vmatpush1.msra.mxu0 %v638
        %736 = vmatprep.subr.mxu0 0.0
        %737 = vmatpush1.msra.mxu0 0.0
        %738 = vmatprep.subr.mxu0 0.0
        %739 = vmatpush1.msra.mxu0 0.0
        %740 = vmatprep.subr.mxu0 0.0
        %741 = vmatpush1.msra.mxu0 0.0
        %742 = vmatprep.subr.mxu0 0.0
        %743 = vmatpush1.msra.mxu0 0.0
        %744 = vmatprep.subr.mxu0 0.0
        %745 = vmatpush1.msra.mxu0 0.0
        %746 = vmatprep.subr.mxu0 0.0
        %747 = vmatpush1.msra.mxu0 0.0
        %748 = vmatprep.subr.mxu0 0.0
        %749 = vmatpush1.msra.mxu0 0.0
        %750 = vmatprep.subr.mxu0 0.0
        %751 = vmatpush1.msra.mxu0 0.0
        %752 = vmatprep.subr.mxu0 0.0
        %753 = vmatpush1.msra.mxu0 0.0
        %754 = vmatprep.subr.mxu0 0.0
        %755 = vmatpush1.msra.mxu0 0.0
        %756 = vmatprep.subr.mxu0 0.0
        %757 = vmatpush1.msra.mxu0 0.0
        %758 = vmatprep.subr.mxu0 0.0
        %759 = vmatpush1.msra.mxu0 0.0
        %760 = vmatprep.subr.mxu0 0.0
        %761 = vmatpush1.msra.mxu0 0.0
        %762 = vmatprep.subr.mxu0 0.0
        %763 = vmatpush1.msra.mxu0 0.0
        %764 = vmatprep.subr.mxu0 0.0
        %765 = vmatpush1.msra.mxu0 0.0
        %766 = vmatprep.subr.mxu0 0.0
        %767 = vmatpush1.msra.mxu0 0.0
        %768 = vmatprep.subr.mxu0 0.0
        %769 = vmatpush1.msra.mxu0 0.0
        %770 = vmatprep.subr.mxu0 0.0
        %771 = vmatpush1.msra.mxu0 0.0
        %772 = vmatprep.subr.mxu0 0.0
        %773 = vmatpush1.msra.mxu0 0.0
        %774 = vmatprep.subr.mxu0 0.0
        %775 = vmatpush1.msra.mxu0 0.0
        %776 = vmatprep.subr.mxu0 0.0
        %777 = vmatpush1.msra.mxu0 0.0
        %778 = vmatprep.subr.mxu0 0.0
        %779 = vmatpush1.msra.mxu0 0.0
        %780 = vmatprep.subr.mxu0 0.0
        %781 = vmatpush1.msra.mxu0 0.0
        %782 = vmatprep.subr.mxu0 0.0
        %783 = vmatpush1.msra.mxu0 0.0
        %784 = vmatprep.subr.mxu0 0.0
        %785 = vmatpush1.msra.mxu0 0.0
        %786 = vmatprep.subr.mxu0 0.0
        %787 = vmatpush1.msra.mxu0 0.0
        %788 = vmatprep.subr.mxu0 0.0
        %789 = vmatpush1.msra.mxu0 0.0
        %790 = vmatprep.subr.mxu0 0.0
        %791 = vmatpush1.msra.mxu0 0.0
        %792 = vmatprep.subr.mxu0 0.0
        %793 = vmatpush1.msra.mxu0 0.0
        %794 = vmatprep.subr.mxu0 0.0
        %795 = vmatpush1.msra.mxu0 0.0
        %796 = vmatprep.subr.mxu0 0.0
        %797 = vmatpush1.msra.mxu0 0.0
        %798 = vmatprep.mubr.f32.mxu0 0.0
        %799 = vmatmul.mubr.f32.gmra.mrb[0].mxu0 %v732
        %v800 = vpop.f32.mrb[0].mxu0
        %v801 = vadd.f32 0.0, %v800
        %v802 = vpop.f32.mrb[0].mxu0
        %803 = vdwg.mxu0
        %804 = vrot.lane.b32.xlu0 %v636, 112
        %v805 = vpop.permute.xlu0 %804
        %806 = vrot.lane.b32.xlu0 %v636, 48
        %v807 = vpop.permute.xlu0 %806
        %v808 = vsel %vm643, %v805, 0
        %v810 = vsel %vm643, %v807, 0
        %812 = vmatprep.subr.mxu0 0.0
        %813 = vmatpush1.xpose.msra.mxu0 %v810
        %814 = vmatprep.subr.mxu0 0.0
        %815 = vmatpush1.xpose.msra.mxu0 0.0
        %816 = vmatprep.subr.mxu0 0.0
        %817 = vmatpush1.xpose.msra.mxu0 0.0
        %818 = vmatprep.subr.mxu0 0.0
        %819 = vmatpush1.xpose.msra.mxu0 0.0
        %820 = vmatprep.subr.mxu0 0.0
        %821 = vmatpush1.xpose.msra.mxu0 0.0
        %822 = vmatprep.subr.mxu0 0.0
        %823 = vmatpush1.xpose.msra.mxu0 0.0
        %824 = vmatprep.subr.mxu0 0.0
        %825 = vmatpush1.xpose.msra.mxu0 0.0
        %826 = vmatprep.subr.mxu0 0.0
        %827 = vmatpush1.xpose.msra.mxu0 0.0
        %828 = vmatprep.subr.mxu0 0.0
        %829 = vmatpush1.xpose.msra.mxu0 0.0
        %830 = vmatprep.subr.mxu0 0.0
        %831 = vmatpush1.xpose.msra.mxu0 0.0
        %832 = vmatprep.subr.mxu0 0.0
        %833 = vmatpush1.xpose.msra.mxu0 0.0
        %834 = vmatprep.subr.mxu0 0.0
        %835 = vmatpush1.xpose.msra.mxu0 0.0
        %836 = vmatprep.subr.mxu0 0.0
        %837 = vmatpush1.xpose.msra.mxu0 0.0
        %838 = vmatprep.subr.mxu0 0.0
        %839 = vmatpush1.xpose.msra.mxu0 0.0
        %840 = vmatprep.subr.mxu0 0.0
        %841 = vmatpush1.xpose.msra.mxu0 0.0
        %842 = vmatprep.subr.mxu0 0.0
        %843 = vmatpush1.xpose.msra.mxu0 0.0
        %844 = vmatprep.subr.mxu0 0.0
        %845 = vmatpush1.xpose.msra.mxu0 0.0
        %846 = vmatprep.subr.mxu0 0.0
        %847 = vmatpush1.xpose.msra.mxu0 0.0
        %848 = vmatprep.subr.mxu0 0.0
        %849 = vmatpush1.xpose.msra.mxu0 0.0
        %850 = vmatprep.subr.mxu0 0.0
        %851 = vmatpush1.xpose.msra.mxu0 0.0
        %852 = vmatprep.subr.mxu0 0.0
        %853 = vmatpush1.xpose.msra.mxu0 0.0
        %854 = vmatprep.subr.mxu0 0.0
        %855 = vmatpush1.xpose.msra.mxu0 0.0
        %856 = vmatprep.subr.mxu0 0.0
        %857 = vmatpush1.xpose.msra.mxu0 0.0
        %858 = vmatprep.subr.mxu0 0.0
        %859 = vmatpush1.xpose.msra.mxu0 0.0
        %860 = vmatprep.subr.mxu0 0.0
        %861 = vmatpush1.xpose.msra.mxu0 0.0
        %862 = vmatprep.subr.mxu0 0.0
        %863 = vmatpush1.xpose.msra.mxu0 0.0
        %864 = vmatprep.subr.mxu0 0.0
        %865 = vmatpush1.xpose.msra.mxu0 0.0
        %866 = vmatprep.subr.mxu0 0.0
        %867 = vmatpush1.xpose.msra.mxu0 0.0
        %868 = vmatprep.subr.mxu0 0.0
        %869 = vmatpush1.xpose.msra.mxu0 0.0
        %870 = vmatprep.subr.mxu0 0.0
        %871 = vmatpush1.xpose.msra.mxu0 0.0
        %872 = vmatprep.subr.mxu0 0.0
        %873 = vmatpush1.xpose.msra.mxu0 0.0
        %874 = vmatprep.subr.mxu0 0.0
        %875 = vmatpush1.xpose.msra.mxu0 0.0
        %876 = vmatprep.mubr.f32.mxu0 0.0
        %877 = vmatmul.mubr.f32.gmra.mrb[0].mxu0 %v808
        %v878 = vpop.f32.mrb[0].mxu0
        %v879 = vadd.f32 0.0, %v878
        %v880 = vpop.f32.mrb[0].mxu0
        %881 = vdwg.mxu0
        %v882 = vsel %vm502, -1e+18, %v879
        %v883 = vsel %vm719, %v882, -inf
        %884 = vmax.xlane.f32.xlu0 %v883
        %v885 = vpop.xlane.xlu0 %884
        %v886 = vsub.f32 %v882, %v885
        %v887 = vmul.f32 %v886, 1.442695
        %v888 = vpow.pop %v887
        %v889 = vsel %vm719, %v888, 0.0
        %890 = vadd.xlane.f32.xlu0 %v889
        %v891 = vpop.xlane.xlu0 %890
        %v892 = vrcp.pop %v891
        %v893 = vmul.f32 %v888, %v892
        %895 = vrot.lane.b32.xlu0 %v638, 112
        %v896 = vpop.permute.xlu0 %895
        %v899 = vsel %vm719, %v893, 0
        %901 = vmatprep.subr.mxu0 0.0
        %902 = vmatpush1.msra.mxu0 %v896
        %903 = vmatprep.subr.mxu0 0.0
        %904 = vmatpush1.msra.mxu0 0.0
        %905 = vmatprep.subr.mxu0 0.0
        %906 = vmatpush1.msra.mxu0 0.0
        %907 = vmatprep.subr.mxu0 0.0
        %908 = vmatpush1.msra.mxu0 0.0
        %909 = vmatprep.subr.mxu0 0.0
        %910 = vmatpush1.msra.mxu0 0.0
        %911 = vmatprep.subr.mxu0 0.0
        %912 = vmatpush1.msra.mxu0 0.0
        %913 = vmatprep.subr.mxu0 0.0
        %914 = vmatpush1.msra.mxu0 0.0
        %915 = vmatprep.subr.mxu0 0.0
        %916 = vmatpush1.msra.mxu0 0.0
        %917 = vmatprep.subr.mxu0 0.0
        %918 = vmatpush1.msra.mxu0 0.0
        %919 = vmatprep.subr.mxu0 0.0
        %920 = vmatpush1.msra.mxu0 0.0
        %921 = vmatprep.subr.mxu0 0.0
        %922 = vmatpush1.msra.mxu0 0.0
        %923 = vmatprep.subr.mxu0 0.0
        %924 = vmatpush1.msra.mxu0 0.0
        %925 = vmatprep.subr.mxu0 0.0
        %926 = vmatpush1.msra.mxu0 0.0
        %927 = vmatprep.subr.mxu0 0.0
        %928 = vmatpush1.msra.mxu0 0.0
        %929 = vmatprep.subr.mxu0 0.0
        %930 = vmatpush1.msra.mxu0 0.0
        %931 = vmatprep.subr.mxu0 0.0
        %932 = vmatpush1.msra.mxu0 0.0
        %933 = vmatprep.subr.mxu0 0.0
        %934 = vmatpush1.msra.mxu0 0.0
        %935 = vmatprep.subr.mxu0 0.0
        %936 = vmatpush1.msra.mxu0 0.0
        %937 = vmatprep.subr.mxu0 0.0
        %938 = vmatpush1.msra.mxu0 0.0
        %939 = vmatprep.subr.mxu0 0.0
        %940 = vmatpush1.msra.mxu0 0.0
        %941 = vmatprep.subr.mxu0 0.0
        %942 = vmatpush1.msra.mxu0 0.0
        %943 = vmatprep.subr.mxu0 0.0
        %944 = vmatpush1.msra.mxu0 0.0
        %945 = vmatprep.subr.mxu0 0.0
        %946 = vmatpush1.msra.mxu0 0.0
        %947 = vmatprep.subr.mxu0 0.0
        %948 = vmatpush1.msra.mxu0 0.0
        %949 = vmatprep.subr.mxu0 0.0
        %950 = vmatpush1.msra.mxu0 0.0
        %951 = vmatprep.subr.mxu0 0.0
        %952 = vmatpush1.msra.mxu0 0.0
        %953 = vmatprep.subr.mxu0 0.0
        %954 = vmatpush1.msra.mxu0 0.0
        %955 = vmatprep.subr.mxu0 0.0
        %956 = vmatpush1.msra.mxu0 0.0
        %957 = vmatprep.subr.mxu0 0.0
        %958 = vmatpush1.msra.mxu0 0.0
        %959 = vmatprep.subr.mxu0 0.0
        %960 = vmatpush1.msra.mxu0 0.0
        %961 = vmatprep.subr.mxu0 0.0
        %962 = vmatpush1.msra.mxu0 0.0
        %963 = vmatprep.subr.mxu0 0.0
        %964 = vmatpush1.msra.mxu0 0.0
        %965 = vmatprep.mubr.f32.mxu0 0.0
        %966 = vmatmul.mubr.f32.gmra.mrb[0].mxu0 %v899
        %v967 = vpop.f32.mrb[0].mxu0
        %v968 = vadd.f32 0.0, %v967
        %v969 = vpop.f32.mrb[0].mxu0
        %970 = vdwg.mxu0
        %971 = vrot.lane.b32.xlu0 %v636, 96
        %v972 = vpop.permute.xlu0 %971
        %973 = vrot.lane.b32.xlu0 %v636, 32
        %v974 = vpop.permute.xlu0 %973
        %v975 = vsel %vm643, %v972, 0
        %v977 = vsel %vm643, %v974, 0
        %979 = vmatprep.subr.mxu0 0.0
        %980 = vmatpush1.xpose.msra.mxu0 %v977
        %981 = vmatprep.subr.mxu0 0.0
        %982 = vmatpush1.xpose.msra.mxu0 0.0
        %983 = vmatprep.subr.mxu0 0.0
        %984 = vmatpush1.xpose.msra.mxu0 0.0
        %985 = vmatprep.subr.mxu0 0.0
        %986 = vmatpush1.xpose.msra.mxu0 0.0
        %987 = vmatprep.subr.mxu0 0.0
        %988 = vmatpush1.xpose.msra.mxu0 0.0
        %989 = vmatprep.subr.mxu0 0.0
        %990 = vmatpush1.xpose.msra.mxu0 0.0
        %991 = vmatprep.subr.mxu0 0.0
        %992 = vmatpush1.xpose.msra.mxu0 0.0
        %993 = vmatprep.subr.mxu0 0.0
        %994 = vmatpush1.xpose.msra.mxu0 0.0
        %995 = vmatprep.subr.mxu0 0.0
        %996 = vmatpush1.xpose.msra.mxu0 0.0
        %997 = vmatprep.subr.mxu0 0.0
        %998 = vmatpush1.xpose.msra.mxu0 0.0
        %999 = vmatprep.subr.mxu0 0.0
        %1000 = vmatpush1.xpose.msra.mxu0 0.0
        %1001 = vmatprep.subr.mxu0 0.0
        %1002 = vmatpush1.xpose.msra.mxu0 0.0
        %1003 = vmatprep.subr.mxu0 0.0
        %1004 = vmatpush1.xpose.msra.mxu0 0.0
        %1005 = vmatprep.subr.mxu0 0.0
        %1006 = vmatpush1.xpose.msra.mxu0 0.0
        %1007 = vmatprep.subr.mxu0 0.0
        %1008 = vmatpush1.xpose.msra.mxu0 0.0
        %1009 = vmatprep.subr.mxu0 0.0
        %1010 = vmatpush1.xpose.msra.mxu0 0.0
        %1011 = vmatprep.subr.mxu0 0.0
        %1012 = vmatpush1.xpose.msra.mxu0 0.0
        %1013 = vmatprep.subr.mxu0 0.0
        %1014 = vmatpush1.xpose.msra.mxu0 0.0
        %1015 = vmatprep.subr.mxu0 0.0
        %1016 = vmatpush1.xpose.msra.mxu0 0.0
        %1017 = vmatprep.subr.mxu0 0.0
        %1018 = vmatpush1.xpose.msra.mxu0 0.0
        %1019 = vmatprep.subr.mxu0 0.0
        %1020 = vmatpush1.xpose.msra.mxu0 0.0
        %1021 = vmatprep.subr.mxu0 0.0
        %1022 = vmatpush1.xpose.msra.mxu0 0.0
        %1023 = vmatprep.subr.mxu0 0.0
        %1024 = vmatpush1.xpose.msra.mxu0 0.0
        %1025 = vmatprep.subr.mxu0 0.0
        %1026 = vmatpush1.xpose.msra.mxu0 0.0
        %1027 = vmatprep.subr.mxu0 0.0
        %1028 = vmatpush1.xpose.msra.mxu0 0.0
        %1029 = vmatprep.subr.mxu0 0.0
        %1030 = vmatpush1.xpose.msra.mxu0 0.0
        %1031 = vmatprep.subr.mxu0 0.0
        %1032 = vmatpush1.xpose.msra.mxu0 0.0
        %1033 = vmatprep.subr.mxu0 0.0
        %1034 = vmatpush1.xpose.msra.mxu0 0.0
        %1035 = vmatprep.subr.mxu0 0.0
        %1036 = vmatpush1.xpose.msra.mxu0 0.0
        %1037 = vmatprep.subr.mxu0 0.0
        %1038 = vmatpush1.xpose.msra.mxu0 0.0
        %1039 = vmatprep.subr.mxu0 0.0
        %1040 = vmatpush1.xpose.msra.mxu0 0.0
        %1041 = vmatprep.subr.mxu0 0.0
        %1042 = vmatpush1.xpose.msra.mxu0 0.0
        %1043 = vmatprep.mubr.f32.mxu0 0.0
        %1044 = vmatmul.mubr.f32.gmra.mrb[0].mxu0 %v975
        %v1045 = vpop.f32.mrb[0].mxu0
        %v1046 = vadd.f32 0.0, %v1045
        %v1047 = vpop.f32.mrb[0].mxu0
        %1048 = vdwg.mxu0
        %v1049 = vsel %vm502, -1e+18, %v1046
        %v1050 = vsel %vm719, %v1049, -inf
        %1051 = vmax.xlane.f32.xlu0 %v1050
        %v1052 = vpop.xlane.xlu0 %1051
        %v1053 = vsub.f32 %v1049, %v1052
        %v1054 = vmul.f32 %v1053, 1.442695
        %v1055 = vpow.pop %v1054
        %v1056 = vsel %vm719, %v1055, 0.0
        %1057 = vadd.xlane.f32.xlu0 %v1056
        %v1058 = vpop.xlane.xlu0 %1057
        %v1059 = vrcp.pop %v1058
        %v1060 = vmul.f32 %v1055, %v1059
        %1061 = vrot.lane.b32.xlu0 %v638, 96
        %v1062 = vpop.permute.xlu0 %1061
        %v1065 = vsel %vm719, %v1060, 0
        %1067 = vmatprep.subr.mxu0 0.0
        %1068 = vmatpush1.msra.mxu0 %v1062
        %1069 = vmatprep.subr.mxu0 0.0
        %1070 = vmatpush1.msra.mxu0 0.0
        %1071 = vmatprep.subr.mxu0 0.0
        %1072 = vmatpush1.msra.mxu0 0.0
        %1073 = vmatprep.subr.mxu0 0.0
        %1074 = vmatpush1.msra.mxu0 0.0
        %1075 = vmatprep.subr.mxu0 0.0
        %1076 = vmatpush1.msra.mxu0 0.0
        %1077 = vmatprep.subr.mxu0 0.0
        %1078 = vmatpush1.msra.mxu0 0.0
        %1079 = vmatprep.subr.mxu0 0.0
        %1080 = vmatpush1.msra.mxu0 0.0
        %1081 = vmatprep.subr.mxu0 0.0
        %1082 = vmatpush1.msra.mxu0 0.0
        %1083 = vmatprep.subr.mxu0 0.0
        %1084 = vmatpush1.msra.mxu0 0.0
        %1085 = vmatprep.subr.mxu0 0.0
        %1086 = vmatpush1.msra.mxu0 0.0
        %1087 = vmatprep.subr.mxu0 0.0
        %1088 = vmatpush1.msra.mxu0 0.0
        %1089 = vmatprep.subr.mxu0 0.0
        %1090 = vmatpush1.msra.mxu0 0.0
        %1091 = vmatprep.subr.mxu0 0.0
        %1092 = vmatpush1.msra.mxu0 0.0
        %1093 = vmatprep.subr.mxu0 0.0
        %1094 = vmatpush1.msra.mxu0 0.0
        %1095 = vmatprep.subr.mxu0 0.0
        %1096 = vmatpush1.msra.mxu0 0.0
        %1097 = vmatprep.subr.mxu0 0.0
        %1098 = vmatpush1.msra.mxu0 0.0
        %1099 = vmatprep.subr.mxu0 0.0
        %1100 = vmatpush1.msra.mxu0 0.0
        %1101 = vmatprep.subr.mxu0 0.0
        %1102 = vmatpush1.msra.mxu0 0.0
        %1103 = vmatprep.subr.mxu0 0.0
        %1104 = vmatpush1.msra.mxu0 0.0
        %1105 = vmatprep.subr.mxu0 0.0
        %1106 = vmatpush1.msra.mxu0 0.0
        %1107 = vmatprep.subr.mxu0 0.0
        %1108 = vmatpush1.msra.mxu0 0.0
        %1109 = vmatprep.subr.mxu0 0.0
        %1110 = vmatpush1.msra.mxu0 0.0
        %1111 = vmatprep.subr.mxu0 0.0
        %1112 = vmatpush1.msra.mxu0 0.0
        %1113 = vmatprep.subr.mxu0 0.0
        %1114 = vmatpush1.msra.mxu0 0.0
        %1115 = vmatprep.subr.mxu0 0.0
        %1116 = vmatpush1.msra.mxu0 0.0
        %1117 = vmatprep.subr.mxu0 0.0
        %1118 = vmatpush1.msra.mxu0 0.0
        %1119 = vmatprep.subr.mxu0 0.0
        %1120 = vmatpush1.msra.mxu0 0.0
        %1121 = vmatprep.subr.mxu0 0.0
        %1122 = vmatpush1.msra.mxu0 0.0
        %1123 = vmatprep.subr.mxu0 0.0
        %1124 = vmatpush1.msra.mxu0 0.0
        %1125 = vmatprep.subr.mxu0 0.0
        %1126 = vmatpush1.msra.mxu0 0.0
        %1127 = vmatprep.subr.mxu0 0.0
        %1128 = vmatpush1.msra.mxu0 0.0
        %1129 = vmatprep.subr.mxu0 0.0
        %1130 = vmatpush1.msra.mxu0 0.0
        %1131 = vmatprep.mubr.f32.mxu0 0.0
        %1132 = vmatmul.mubr.f32.gmra.mrb[0].mxu0 %v1065
        %v1133 = vpop.f32.mrb[0].mxu0
        %v1134 = vadd.f32 0.0, %v1133
        %v1135 = vpop.f32.mrb[0].mxu0
        %1136 = vdwg.mxu0
        %1137 = vrot.lane.b32.xlu0 %v636, 80
        %v1138 = vpop.permute.xlu0 %1137
        %1139 = vrot.lane.b32.xlu0 %v636, 16
        %v1140 = vpop.permute.xlu0 %1139
        %v1141 = vsel %vm643, %v1138, 0
        %v1143 = vsel %vm643, %v1140, 0
        %1145 = vmatprep.subr.mxu0 0.0
        %1146 = vmatpush1.xpose.msra.mxu0 %v1143
        %1147 = vmatprep.subr.mxu0 0.0
        %1148 = vmatpush1.xpose.msra.mxu0 0.0
        %1149 = vmatprep.subr.mxu0 0.0
        %1150 = vmatpush1.xpose.msra.mxu0 0.0
        %1151 = vmatprep.subr.mxu0 0.0
        %1152 = vmatpush1.xpose.msra.mxu0 0.0
        %1153 = vmatprep.subr.mxu0 0.0
        %1154 = vmatpush1.xpose.msra.mxu0 0.0
        %1155 = vmatprep.subr.mxu0 0.0
        %1156 = vmatpush1.xpose.msra.mxu0 0.0
        %1157 = vmatprep.subr.mxu0 0.0
        %1158 = vmatpush1.xpose.msra.mxu0 0.0
        %1159 = vmatprep.subr.mxu0 0.0
        %1160 = vmatpush1.xpose.msra.mxu0 0.0
        %1161 = vmatprep.subr.mxu0 0.0
        %1162 = vmatpush1.xpose.msra.mxu0 0.0
        %1163 = vmatprep.subr.mxu0 0.0
        %1164 = vmatpush1.xpose.msra.mxu0 0.0
        %1165 = vmatprep.subr.mxu0 0.0
        %1166 = vmatpush1.xpose.msra.mxu0 0.0
        %1167 = vmatprep.subr.mxu0 0.0
        %1168 = vmatpush1.xpose.msra.mxu0 0.0
        %1169 = vmatprep.subr.mxu0 0.0
        %1170 = vmatpush1.xpose.msra.mxu0 0.0
        %1171 = vmatprep.subr.mxu0 0.0
        %1172 = vmatpush1.xpose.msra.mxu0 0.0
        %1173 = vmatprep.subr.mxu0 0.0
        %1174 = vmatpush1.xpose.msra.mxu0 0.0
        %1175 = vmatprep.subr.mxu0 0.0
        %1176 = vmatpush1.xpose.msra.mxu0 0.0
        %1177 = vmatprep.subr.mxu0 0.0
        %1178 = vmatpush1.xpose.msra.mxu0 0.0
        %1179 = vmatprep.subr.mxu0 0.0
        %1180 = vmatpush1.xpose.msra.mxu0 0.0
        %1181 = vmatprep.subr.mxu0 0.0
        %1182 = vmatpush1.xpose.msra.mxu0 0.0
        %1183 = vmatprep.subr.mxu0 0.0
        %1184 = vmatpush1.xpose.msra.mxu0 0.0
        %1185 = vmatprep.subr.mxu0 0.0
        %1186 = vmatpush1.xpose.msra.mxu0 0.0
        %1187 = vmatprep.subr.mxu0 0.0
        %1188 = vmatpush1.xpose.msra.mxu0 0.0
        %1189 = vmatprep.subr.mxu0 0.0
        %1190 = vmatpush1.xpose.msra.mxu0 0.0
        %1191 = vmatprep.subr.mxu0 0.0
        %1192 = vmatpush1.xpose.msra.mxu0 0.0
        %1193 = vmatprep.subr.mxu0 0.0
        %1194 = vmatpush1.xpose.msra.mxu0 0.0
        %1195 = vmatprep.subr.mxu0 0.0
        %1196 = vmatpush1.xpose.msra.mxu0 0.0
        %1197 = vmatprep.subr.mxu0 0.0
        %1198 = vmatpush1.xpose.msra.mxu0 0.0
        %1199 = vmatprep.subr.mxu0 0.0
        %1200 = vmatpush1.xpose.msra.mxu0 0.0
        %1201 = vmatprep.subr.mxu0 0.0
        %1202 = vmatpush1.xpose.msra.mxu0 0.0
        %1203 = vmatprep.subr.mxu0 0.0
        %1204 = vmatpush1.xpose.msra.mxu0 0.0
        %1205 = vmatprep.subr.mxu0 0.0
        %1206 = vmatpush1.xpose.msra.mxu0 0.0
        %1207 = vmatprep.subr.mxu0 0.0
        %1208 = vmatpush1.xpose.msra.mxu0 0.0
        %1209 = vmatprep.mubr.f32.mxu0 0.0
        %1210 = vmatmul.mubr.f32.gmra.mrb[0].mxu0 %v1141
        %v1211 = vpop.f32.mrb[0].mxu0
        %v1212 = vadd.f32 0.0, %v1211
        %v1213 = vpop.f32.mrb[0].mxu0
        %1214 = vdwg.mxu0
        %v1215 = vsel %vm502, -1e+18, %v1212
        %v1216 = vsel %vm719, %v1215, -inf
        %1217 = vmax.xlane.f32.xlu0 %v1216
        %v1218 = vpop.xlane.xlu0 %1217
        %v1219 = vsub.f32 %v1215, %v1218
        %v1220 = vmul.f32 %v1219, 1.442695
        %v1221 = vpow.pop %v1220
        %v1222 = vsel %vm719, %v1221, 0.0
        %1223 = vadd.xlane.f32.xlu0 %v1222
        %v1224 = vpop.xlane.xlu0 %1223
        %v1225 = vrcp.pop %v1224
        %v1226 = vmul.f32 %v1221, %v1225
        %1227 = vrot.lane.b32.xlu0 %v638, 80
        %v1228 = vpop.permute.xlu0 %1227
        %v1231 = vsel %vm719, %v1226, 0
        %1233 = vmatprep.subr.mxu0 0.0
        %1234 = vmatpush1.msra.mxu0 %v1228
        %1235 = vmatprep.subr.mxu0 0.0
        %1236 = vmatpush1.msra.mxu0 0.0
        %1237 = vmatprep.subr.mxu0 0.0
        %1238 = vmatpush1.msra.mxu0 0.0
        %1239 = vmatprep.subr.mxu0 0.0
        %1240 = vmatpush1.msra.mxu0 0.0
        %1241 = vmatprep.subr.mxu0 0.0
        %1242 = vmatpush1.msra.mxu0 0.0
        %1243 = vmatprep.subr.mxu0 0.0
        %1244 = vmatpush1.msra.mxu0 0.0
        %1245 = vmatprep.subr.mxu0 0.0
        %1246 = vmatpush1.msra.mxu0 0.0
        %1247 = vmatprep.subr.mxu0 0.0
        %1248 = vmatpush1.msra.mxu0 0.0
        %1249 = vmatprep.subr.mxu0 0.0
        %1250 = vmatpush1.msra.mxu0 0.0
        %1251 = vmatprep.subr.mxu0 0.0
        %1252 = vmatpush1.msra.mxu0 0.0
        %1253 = vmatprep.subr.mxu0 0.0
        %1254 = vmatpush1.msra.mxu0 0.0
        %1255 = vmatprep.subr.mxu0 0.0
        %1256 = vmatpush1.msra.mxu0 0.0
        %1257 = vmatprep.subr.mxu0 0.0
        %1258 = vmatpush1.msra.mxu0 0.0
        %1259 = vmatprep.subr.mxu0 0.0
        %1260 = vmatpush1.msra.mxu0 0.0
        %1261 = vmatprep.subr.mxu0 0.0
        %1262 = vmatpush1.msra.mxu0 0.0
        %1263 = vmatprep.subr.mxu0 0.0
        %1264 = vmatpush1.msra.mxu0 0.0
        %1265 = vmatprep.subr.mxu0 0.0
        %1266 = vmatpush1.msra.mxu0 0.0
        %1267 = vmatprep.subr.mxu0 0.0
        %1268 = vmatpush1.msra.mxu0 0.0
        %1269 = vmatprep.subr.mxu0 0.0
        %1270 = vmatpush1.msra.mxu0 0.0
        %1271 = vmatprep.subr.mxu0 0.0
        %1272 = vmatpush1.msra.mxu0 0.0
        %1273 = vmatprep.subr.mxu0 0.0
        %1274 = vmatpush1.msra.mxu0 0.0
        %1275 = vmatprep.subr.mxu0 0.0
        %1276 = vmatpush1.msra.mxu0 0.0
        %1277 = vmatprep.subr.mxu0 0.0
        %1278 = vmatpush1.msra.mxu0 0.0
        %1279 = vmatprep.subr.mxu0 0.0
        %1280 = vmatpush1.msra.mxu0 0.0
        %1281 = vmatprep.subr.mxu0 0.0
        %1282 = vmatpush1.msra.mxu0 0.0
        %1283 = vmatprep.subr.mxu0 0.0
        %1284 = vmatpush1.msra.mxu0 0.0
        %1285 = vmatprep.subr.mxu0 0.0
        %1286 = vmatpush1.msra.mxu0 0.0
        %1287 = vmatprep.subr.mxu0 0.0
        %1288 = vmatpush1.msra.mxu0 0.0
        %1289 = vmatprep.subr.mxu0 0.0
        %1290 = vmatpush1.msra.mxu0 0.0
        %1291 = vmatprep.subr.mxu0 0.0
        %1292 = vmatpush1.msra.mxu0 0.0
        %1293 = vmatprep.subr.mxu0 0.0
        %1294 = vmatpush1.msra.mxu0 0.0
        %1295 = vmatprep.subr.mxu0 0.0
        %1296 = vmatpush1.msra.mxu0 0.0
        %1297 = vmatprep.mubr.f32.mxu0 0.0
        %1298 = vmatmul.mubr.f32.gmra.mrb[0].mxu0 %v1231
        %v1299 = vpop.f32.mrb[0].mxu0
        %v1300 = vadd.f32 0.0, %v1299
        %v1301 = vpop.f32.mrb[0].mxu0
        %1302 = vdwg.mxu0
        %1304 = vrot.lane.b32.xlu0 %v968, 16
        %v1305 = vpop.permute.xlu0 %1304
        %1308 = vrot.lane.b32.xlu0 %v1134, 32
        %v1309 = vpop.permute.xlu0 %1308
        %1312 = vrot.lane.b32.xlu0 %v1300, 48
        %v1313 = vpop.permute.xlu0 %1312
        %v1315 = vsel %vm643, %v801, %v1305
        %vm1316 = vcmask 261120
        %v1317 = vsel %vm1316, %v1315, %v1309
        %vm1318 = vcmask 392192
        %v1319 = vsel %vm1318, %v1317, %v1313
        %v1321 = vlaneseq
        %v1322 = vshrl.u32 %v1321, 7
        %v1323 = vsub.s32 0, %v1322
        %v1324 = vrot.slane %v554, %v1323
        %v1327 = vsel %vm504, %v1319, 0
        %1329 = vmatprep.subr.mxu0 0.0
        %1330 = vmatpush1.msra.mxu0 %v546
        %1331 = vmatprep.subr.mxu0 0.0
        %1332 = vmatpush1.msra.mxu0 %v547
        %1333 = vmatprep.subr.mxu0 0.0
        %1334 = vmatpush1.msra.mxu0 %v548
        %1335 = vmatprep.subr.mxu0 0.0
        %1336 = vmatpush1.msra.mxu0 %v549
        %1337 = vmatprep.subr.mxu0 0.0
        %1338 = vmatpush1.msra.mxu0 %v550
        %1339 = vmatprep.subr.mxu0 0.0
        %1340 = vmatpush1.msra.mxu0 %v551
        %1341 = vmatprep.subr.mxu0 0.0
        %1342 = vmatpush1.msra.mxu0 %v552
        %1343 = vmatprep.subr.mxu0 0.0
        %1344 = vmatpush1.msra.mxu0 %v553
        %1345 = vmatprep.subr.mxu0 0.0
        %1346 = vmatpush1.msra.mxu0 0.0
        %1347 = vmatprep.subr.mxu0 0.0
        %1348 = vmatpush1.msra.mxu0 0.0
        %1349 = vmatprep.subr.mxu0 0.0
        %1350 = vmatpush1.msra.mxu0 0.0
        %1351 = vmatprep.subr.mxu0 0.0
        %1352 = vmatpush1.msra.mxu0 0.0
        %1353 = vmatprep.subr.mxu0 0.0
        %1354 = vmatpush1.msra.mxu0 0.0
        %1355 = vmatprep.subr.mxu0 0.0
        %1356 = vmatpush1.msra.mxu0 0.0
        %1357 = vmatprep.subr.mxu0 0.0
        %1358 = vmatpush1.msra.mxu0 0.0
        %1359 = vmatprep.subr.mxu0 0.0
        %1360 = vmatpush1.msra.mxu0 0.0
        %1361 = vmatprep.subr.mxu0 0.0
        %1362 = vmatpush1.msra.mxu0 0.0
        %1363 = vmatprep.subr.mxu0 0.0
        %1364 = vmatpush1.msra.mxu0 0.0
        %1365 = vmatprep.subr.mxu0 0.0
        %1366 = vmatpush1.msra.mxu0 0.0
        %1367 = vmatprep.subr.mxu0 0.0
        %1368 = vmatpush1.msra.mxu0 0.0
        %1369 = vmatprep.subr.mxu0 0.0
        %1370 = vmatpush1.msra.mxu0 0.0
        %1371 = vmatprep.subr.mxu0 0.0
        %1372 = vmatpush1.msra.mxu0 0.0
        %1373 = vmatprep.subr.mxu0 0.0
        %1374 = vmatpush1.msra.mxu0 0.0
        %1375 = vmatprep.subr.mxu0 0.0
        %1376 = vmatpush1.msra.mxu0 0.0
        %1377 = vmatprep.subr.mxu0 0.0
        %1378 = vmatpush1.msra.mxu0 0.0
        %1379 = vmatprep.subr.mxu0 0.0
        %1380 = vmatpush1.msra.mxu0 0.0
        %1381 = vmatprep.subr.mxu0 0.0
        %1382 = vmatpush1.msra.mxu0 0.0
        %1383 = vmatprep.subr.mxu0 0.0
        %1384 = vmatpush1.msra.mxu0 0.0
        %1385 = vmatprep.subr.mxu0 0.0
        %1386 = vmatpush1.msra.mxu0 0.0
        %1387 = vmatprep.subr.mxu0 0.0
        %1388 = vmatpush1.msra.mxu0 0.0
        %1389 = vmatprep.subr.mxu0 0.0
        %1390 = vmatpush1.msra.mxu0 0.0
        %1391 = vmatprep.subr.mxu0 0.0
        %1392 = vmatpush1.msra.mxu0 0.0
        %1393 = vmatprep.mubr.f32.mxu0 0.0
        %1394 = vmatmul.mubr.f32.gmra.mrb[0].mxu0 %v1327
        %v1395 = vpop.f32.mrb[0].mxu0
        %v1396 = vadd.f32 %v1324, %v1395
        %v1397 = vpop.f32.mrb[0].mxu0
        %1398 = vdwg.mxu0
        %v1399 = vadd.f32 %v1396, %v488
        %v1400 = vsel %vm504, %v1399, 0.0
        %1401 = vadd.xlane.f32.xlu0 %v1400
        %v1402 = vpop.xlane.xlu0 %1401
        %v1403 = vmul.f32 %v1402, %v508
        %v1404 = vsub.f32 %v1399, %v1403
        %v1405 = vmul.f32 %v1404, %v1404
        %v1406 = vsel %vm504, %v1405, 0.0
        %1407 = vadd.xlane.f32.xlu0 %v1406
        %v1408 = vpop.xlane.xlu0 %1407
        %v1409 = vmul.f32 %v1408, %v508
        %v1410 = vadd.f32 %v1409, 1e-06
        %v1411 = vrsqrt.pop %v1410
        %v1412 = vmul.f32 %v1404, %v1411
        %v1413 = vlaneseq
        %v1414 = vshrl.u32 %v1413, 7
        %v1415 = vsub.s32 2, %v1414
        %v1416 = vrot.slane %v503, %v1415
        %v1417 = vmul.f32 %v1412, %v1416
        %v1418 = vlaneseq
        %v1419 = vshrl.u32 %v1418, 7
        %v1420 = vsub.s32 3, %v1419
        %v1421 = vrot.slane %v503, %v1420
        %v1422 = vadd.f32 %v1417, %v1421
        %v1423 = vld [vmem:[%s6] sm:$0xff]
        %v1424 = vld [vmem:[%s6 + $0x8] sm:$0xff]
        %v1425 = vld [vmem:[%s6 + $0x10] sm:$0xff]
        %v1426 = vld [vmem:[%s6 + $0x18] sm:$0xff]
        %v1427 = vld [vmem:[%s6 + $0x20] sm:$0xff]
        %v1428 = vld [vmem:[%s6 + $0x28] sm:$0xff]
        %v1429 = vld [vmem:[%s6 + $0x30] sm:$0xff]
        %v1430 = vld [vmem:[%s6 + $0x38] sm:$0xff]
        %v1431 = vld [vmem:[%s7] sm:$0x1]
        %v1433 = vlaneseq
        %v1434 = vshrl.u32 %v1433, 7
        %v1435 = vsub.s32 0, %v1434
        %v1436 = vrot.slane %v1431, %v1435
        %v1439 = vsel %vm504, %v1422, 0
        %1441 = vmatprep.subr.mxu0 0.0
        %1442 = vmatpush1.msra.mxu0 %v1423
        %1443 = vmatprep.subr.mxu0 0.0
        %1444 = vmatpush1.msra.mxu0 %v1424
        %1445 = vmatprep.subr.mxu0 0.0
        %1446 = vmatpush1.msra.mxu0 %v1425
        %1447 = vmatprep.subr.mxu0 0.0
        %1448 = vmatpush1.msra.mxu0 %v1426
        %1449 = vmatprep.subr.mxu0 0.0
        %1450 = vmatpush1.msra.mxu0 %v1427
        %1451 = vmatprep.subr.mxu0 0.0
        %1452 = vmatpush1.msra.mxu0 %v1428
        %1453 = vmatprep.subr.mxu0 0.0
        %1454 = vmatpush1.msra.mxu0 %v1429
        %1455 = vmatprep.subr.mxu0 0.0
        %1456 = vmatpush1.msra.mxu0 %v1430
        %1457 = vmatprep.subr.mxu0 0.0
        %1458 = vmatpush1.msra.mxu0 0.0
        %1459 = vmatprep.subr.mxu0 0.0
        %1460 = vmatpush1.msra.mxu0 0.0
        %1461 = vmatprep.subr.mxu0 0.0
        %1462 = vmatpush1.msra.mxu0 0.0
        %1463 = vmatprep.subr.mxu0 0.0
        %1464 = vmatpush1.msra.mxu0 0.0
        %1465 = vmatprep.subr.mxu0 0.0
        %1466 = vmatpush1.msra.mxu0 0.0
        %1467 = vmatprep.subr.mxu0 0.0
        %1468 = vmatpush1.msra.mxu0 0.0
        %1469 = vmatprep.subr.mxu0 0.0
        %1470 = vmatpush1.msra.mxu0 0.0
        %1471 = vmatprep.subr.mxu0 0.0
        %1472 = vmatpush1.msra.mxu0 0.0
        %1473 = vmatprep.subr.mxu0 0.0
        %1474 = vmatpush1.msra.mxu0 0.0
        %1475 = vmatprep.subr.mxu0 0.0
        %1476 = vmatpush1.msra.mxu0 0.0
        %1477 = vmatprep.subr.mxu0 0.0
        %1478 = vmatpush1.msra.mxu0 0.0
        %1479 = vmatprep.subr.mxu0 0.0
        %1480 = vmatpush1.msra.mxu0 0.0
        %1481 = vmatprep.subr.mxu0 0.0
        %1482 = vmatpush1.msra.mxu0 0.0
        %1483 = vmatprep.subr.mxu0 0.0
        %1484 = vmatpush1.msra.mxu0 0.0
        %1485 = vmatprep.subr.mxu0 0.0
        %1486 = vmatpush1.msra.mxu0 0.0
        %1487 = vmatprep.subr.mxu0 0.0
        %1488 = vmatpush1.msra.mxu0 0.0
        %1489 = vmatprep.subr.mxu0 0.0
        %1490 = vmatpush1.msra.mxu0 0.0
        %1491 = vmatprep.subr.mxu0 0.0
        %1492 = vmatpush1.msra.mxu0 0.0
        %1493 = vmatprep.subr.mxu0 0.0
        %1494 = vmatpush1.msra.mxu0 0.0
        %1495 = vmatprep.subr.mxu0 0.0
        %1496 = vmatpush1.msra.mxu0 0.0
        %1497 = vmatprep.subr.mxu0 0.0
        %1498 = vmatpush1.msra.mxu0 0.0
        %1499 = vmatprep.subr.mxu0 0.0
        %1500 = vmatpush1.msra.mxu0 0.0
        %1501 = vmatprep.subr.mxu0 0.0
        %1502 = vmatpush1.msra.mxu0 0.0
        %1503 = vmatprep.subr.mxu0 0.0
        %1504 = vmatpush1.msra.mxu0 0.0
        %1505 = vmatprep.mubr.f32.mxu0 0.0
        %1506 = vmatmul.mubr.f32.gmra.mrb[0].mxu0 %v1439
        %v1507 = vpop.f32.mrb[0].mxu0
        %v1508 = vadd.f32 %v1436, %v1507
        %v1509 = vpop.f32.mrb[0].mxu0
        %1510 = vdwg.mxu0
        %v1511 = vmax.f32 %v1508, 0.0
        %v1512 = vld [vmem:[%s8] sm:$0xff]
        %v1513 = vld [vmem:[%s8 + $0x8] sm:$0xff]
        %v1514 = vld [vmem:[%s8 + $0x10] sm:$0xff]
        %v1515 = vld [vmem:[%s8 + $0x18] sm:$0xff]
        %v1516 = vld [vmem:[%s8 + $0x20] sm:$0xff]
        %v1517 = vld [vmem:[%s8 + $0x28] sm:$0xff]
        %v1518 = vld [vmem:[%s8 + $0x30] sm:$0xff]
        %v1519 = vld [vmem:[%s8 + $0x38] sm:$0xff]
        %v1520 = vld [vmem:[%s8 + $0x40] sm:$0xff]
        %v1521 = vld [vmem:[%s8 + $0x48] sm:$0xff]
        %v1522 = vld [vmem:[%s8 + $0x50] sm:$0xff]
        %v1523 = vld [vmem:[%s8 + $0x58] sm:$0xff]
        %v1524 = vld [vmem:[%s8 + $0x60] sm:$0xff]
        %v1525 = vld [vmem:[%s8 + $0x68] sm:$0xff]
        %v1526 = vld [vmem:[%s8 + $0x70] sm:$0xff]
        %v1527 = vld [vmem:[%s8 + $0x78] sm:$0xff]
        %v1528 = vld [vmem:[%s9] sm:$0x1]
        %v1530 = vlaneseq
        %v1531 = vshrl.u32 %v1530, 7
        %v1532 = vsub.s32 0, %v1531
        %v1533 = vrot.slane %v1528, %v1532
        %1535 = vmatprep.subr.mxu0 0.0
        %1536 = vmatpush1.msra.mxu0 %v1512
        %1537 = vmatprep.subr.mxu0 0.0
        %1538 = vmatpush1.msra.mxu0 %v1513
        %1539 = vmatprep.subr.mxu0 0.0
        %1540 = vmatpush1.msra.mxu0 %v1514
        %1541 = vmatprep.subr.mxu0 0.0
        %1542 = vmatpush1.msra.mxu0 %v1515
        %1543 = vmatprep.subr.mxu0 0.0
        %1544 = vmatpush1.msra.mxu0 %v1516
        %1545 = vmatprep.subr.mxu0 0.0
        %1546 = vmatpush1.msra.mxu0 %v1517
        %1547 = vmatprep.subr.mxu0 0.0
        %1548 = vmatpush1.msra.mxu0 %v1518
        %1549 = vmatprep.subr.mxu0 0.0
        %1550 = vmatpush1.msra.mxu0 %v1519
        %1551 = vmatprep.subr.mxu0 0.0
        %1552 = vmatpush1.msra.mxu0 %v1520
        %1553 = vmatprep.subr.mxu0 0.0
        %1554 = vmatpush1.msra.mxu0 %v1521
        %1555 = vmatprep.subr.mxu0 0.0
        %1556 = vmatpush1.msra.mxu0 %v1522
        %1557 = vmatprep.subr.mxu0 0.0
        %1558 = vmatpush1.msra.mxu0 %v1523
        %1559 = vmatprep.subr.mxu0 0.0
        %1560 = vmatpush1.msra.mxu0 %v1524
        %1561 = vmatprep.subr.mxu0 0.0
        %1562 = vmatpush1.msra.mxu0 %v1525
        %1563 = vmatprep.subr.mxu0 0.0
        %1564 = vmatpush1.msra.mxu0 %v1526
        %1565 = vmatprep.subr.mxu0 0.0
        %1566 = vmatpush1.msra.mxu0 %v1527
        %1567 = vmatprep.subr.mxu0 0.0
        %1568 = vmatpush1.msra.mxu0 0.0
        %1569 = vmatprep.subr.mxu0 0.0
        %1570 = vmatpush1.msra.mxu0 0.0
        %1571 = vmatprep.subr.mxu0 0.0
        %1572 = vmatpush1.msra.mxu0 0.0
        %1573 = vmatprep.subr.mxu0 0.0
        %1574 = vmatpush1.msra.mxu0 0.0
        %1575 = vmatprep.subr.mxu0 0.0
        %1576 = vmatpush1.msra.mxu0 0.0
        %1577 = vmatprep.subr.mxu0 0.0
        %1578 = vmatpush1.msra.mxu0 0.0
        %1579 = vmatprep.subr.mxu0 0.0
        %1580 = vmatpush1.msra.mxu0 0.0
        %1581 = vmatprep.subr.mxu0 0.0
        %1582 = vmatpush1.msra.mxu0 0.0
        %1583 = vmatprep.subr.mxu0 0.0
        %1584 = vmatpush1.msra.mxu0 0.0
        %1585 = vmatprep.subr.mxu0 0.0
        %1586 = vmatpush1.msra.mxu0 0.0
        %1587 = vmatprep.subr.mxu0 0.0
        %1588 = vmatpush1.msra.mxu0 0.0
        %1589 = vmatprep.subr.mxu0 0.0
        %1590 = vmatpush1.msra.mxu0 0.0
        %1591 = vmatprep.subr.mxu0 0.0
        %1592 = vmatpush1.msra.mxu0 0.0
        %1593 = vmatprep.subr.mxu0 0.0
        %1594 = vmatpush1.msra.mxu0 0.0
        %1595 = vmatprep.subr.mxu0 0.0
        %1596 = vmatpush1.msra.mxu0 0.0
        %1597 = vmatprep.subr.mxu0 0.0
        %1598 = vmatpush1.msra.mxu0 0.0
        %1599 = vmatprep.mubr.f32.mxu0 0.0
        %1600 = vmatmul.mubr.f32.gmra.mrb[0].mxu0 %v1511
        %v1601 = vpop.f32.mrb[0].mxu0
        %v1602 = vadd.f32 %v1533, %v1601
        %v1603 = vpop.f32.mrb[0].mxu0
        %1604 = vdwg.mxu0
        %v1605 = vadd.f32 %v1602, %v1399
        %s1606 = scalar_lea.vmem %s10, 4
        %v1607 = vld [vmem:[%s1606] sm:$0xf]
        %v1608 = vsel %vm504, %v1605, 0.0
        %1609 = vadd.xlane.f32.xlu0 %v1608
        %v1610 = vpop.xlane.xlu0 %1609
        %v1611 = vmul.f32 %v1610, %v508
        %v1612 = vsub.f32 %v1605, %v1611
        %v1613 = vmul.f32 %v1612, %v1612
        %v1614 = vsel %vm504, %v1613, 0.0
        %1615 = vadd.xlane.f32.xlu0 %v1614
        %v1616 = vpop.xlane.xlu0 %1615
        %v1617 = vmul.f32 %v1616, %v508
        %v1618 = vadd.f32 %v1617, 1e-06
        %v1619 = vrsqrt.pop %v1618
        %v1620 = vmul.f32 %v1612, %v1619
        %v1621 = vlaneseq
        %v1622 = vshrl.u32 %v1621, 7
        %v1623 = vsub.s32 0, %v1622
        %v1624 = vrot.slane %v1607, %v1623
        %v1625 = vmul.f32 %v1620, %v1624
        %v1626 = vlaneseq
        %v1627 = vshrl.u32 %v1626, 7
        %v1628 = vsub.s32 1, %v1627
        %v1629 = vrot.slane %v1607, %v1628
        %v1630 = vadd.f32 %v1625, %v1629
        %s1631 = scalar_lea.vmem %s2, 128
        %v1632 = vld [vmem:[%s1631] sm:$0xff]
        %v1633 = vld [vmem:[%s1631 + $0x8] sm:$0xff]
        %v1634 = vld [vmem:[%s1631 + $0x10] sm:$0xff]
        %v1635 = vld [vmem:[%s1631 + $0x18] sm:$0xff]
        %v1636 = vld [vmem:[%s1631 + $0x20] sm:$0xff]
        %v1637 = vld [vmem:[%s1631 + $0x28] sm:$0xff]
        %v1638 = vld [vmem:[%s1631 + $0x30] sm:$0xff]
        %v1639 = vld [vmem:[%s1631 + $0x38] sm:$0xff]
        %v1640 = vld [vmem:[%s1631 + $0x40] sm:$0xff]
        %v1641 = vld [vmem:[%s1631 + $0x48] sm:$0xff]
        %v1642 = vld [vmem:[%s1631 + $0x50] sm:$0xff]
        %v1643 = vld [vmem:[%s1631 + $0x58] sm:$0xff]
        %v1644 = vld [vmem:[%s1631 + $0x60] sm:$0xff]
        %v1645 = vld [vmem:[%s1631 + $0x68] sm:$0xff]
        %v1646 = vld [vmem:[%s1631 + $0x70] sm:$0xff]
        %v1647 = vld [vmem:[%s1631 + $0x78] sm:$0xff]
        %s1648 = scalar_lea.vmem %s3, 2
        %v1649 = vld [vmem:[%s1648] sm:$0x3]
        %s1650 = scalar_lea.vmem %s4, 64
        %v1651 = vld [vmem:[%s1650] sm:$0xff]
        %v1652 = vld [vmem:[%s1650 + $0x8] sm:$0xff]
        %v1653 = vld [vmem:[%s1650 + $0x10] sm:$0xff]
        %v1654 = vld [vmem:[%s1650 + $0x18] sm:$0xff]
        %v1655 = vld [vmem:[%s1650 + $0x20] sm:$0xff]
        %v1656 = vld [vmem:[%s1650 + $0x28] sm:$0xff]
        %v1657 = vld [vmem:[%s1650 + $0x30] sm:$0xff]
        %v1658 = vld [vmem:[%s1650 + $0x38] sm:$0xff]
        %s1659 = scalar_lea.vmem %s5, 1
        %v1660 = vld [vmem:[%s1659] sm:$0x1]
        %v1662 = vlaneseq
        %v1663 = vshrl.u32 %v1662, 7
        %v1664 = vsub.s32 0, %v1663
        %v1665 = vrot.slane %v1649, %v1664
        %v1666 = vlaneseq
        %v1667 = vshrl.u32 %v1666, 7
        %v1668 = vsub.s32 1, %v1667
        %v1669 = vrot.slane %v1649, %v1668
        %v1673 = vsel %vm504, %v1630, 0
        %1675 = vmatprep.subr.mxu0 %v1633
        %1676 = vmatpush1.msra.mxu0 %v1632
        %1677 = vmatprep.subr.mxu0 %v1635
        %1678 = vmatpush1.msra.mxu0 %v1634
        %1679 = vmatprep.subr.mxu0 %v1637
        %1680 = vmatpush1.msra.mxu0 %v1636
        %1681 = vmatprep.subr.mxu0 %v1639
        %1682 = vmatpush1.msra.mxu0 %v1638
        %1683 = vmatprep.subr.mxu0 %v1641
        %1684 = vmatpush1.msra.mxu0 %v1640
        %1685 = vmatprep.subr.mxu0 %v1643
        %1686 = vmatpush1.msra.mxu0 %v1642
        %1687 = vmatprep.subr.mxu0 %v1645
        %1688 = vmatpush1.msra.mxu0 %v1644
        %1689 = vmatprep.subr.mxu0 %v1647
        %1690 = vmatpush1.msra.mxu0 %v1646
        %1691 = vmatprep.subr.mxu0 0.0
        %1692 = vmatpush1.msra.mxu0 0.0
        %1693 = vmatprep.subr.mxu0 0.0
        %1694 = vmatpush1.msra.mxu0 0.0
        %1695 = vmatprep.subr.mxu0 0.0
        %1696 = vmatpush1.msra.mxu0 0.0
        %1697 = vmatprep.subr.mxu0 0.0
        %1698 = vmatpush1.msra.mxu0 0.0
        %1699 = vmatprep.subr.mxu0 0.0
        %1700 = vmatpush1.msra.mxu0 0.0
        %1701 = vmatprep.subr.mxu0 0.0
        %1702 = vmatpush1.msra.mxu0 0.0
        %1703 = vmatprep.subr.mxu0 0.0
        %1704 = vmatpush1.msra.mxu0 0.0
        %1705 = vmatprep.subr.mxu0 0.0
        %1706 = vmatpush1.msra.mxu0 0.0
        %1707 = vmatprep.subr.mxu0 0.0
        %1708 = vmatpush1.msra.mxu0 0.0
        %1709 = vmatprep.subr.mxu0 0.0
        %1710 = vmatpush1.msra.mxu0 0.0
        %1711 = vmatprep.subr.mxu0 0.0
        %1712 = vmatpush1.msra.mxu0 0.0
        %1713 = vmatprep.subr.mxu0 0.0
        %1714 = vmatpush1.msra.mxu0 0.0
        %1715 = vmatprep.subr.mxu0 0.0
        %1716 = vmatpush1.msra.mxu0 0.0
        %1717 = vmatprep.subr.mxu0 0.0
        %1718 = vmatpush1.msra.mxu0 0.0
        %1719 = vmatprep.subr.mxu0 0.0
        %1720 = vmatpush1.msra.mxu0 0.0
        %1721 = vmatprep.subr.mxu0 0.0
        %1722 = vmatpush1.msra.mxu0 0.0
        %1723 = vmatprep.subr.mxu0 0.0
        %1724 = vmatpush1.msra.mxu0 0.0
        %1725 = vmatprep.subr.mxu0 0.0
        %1726 = vmatpush1.msra.mxu0 0.0
        %1727 = vmatprep.subr.mxu0 0.0
        %1728 = vmatpush1.msra.mxu0 0.0
        %1729 = vmatprep.subr.mxu0 0.0
        %1730 = vmatpush1.msra.mxu0 0.0
        %1731 = vmatprep.subr.mxu0 0.0
        %1732 = vmatpush1.msra.mxu0 0.0
        %1733 = vmatprep.subr.mxu0 0.0
        %1734 = vmatpush1.msra.mxu0 0.0
        %1735 = vmatprep.subr.mxu0 0.0
        %1736 = vmatpush1.msra.mxu0 0.0
        %1737 = vmatprep.subr.mxu0 0.0
        %1738 = vmatpush1.msra.mxu0 0.0
        %1739 = vmatprep.mubr.f32.mxu0 0.0
        %1740 = vmatmul.mubr.f32.gmra.mrb[0].mxu0 %v1673
        %v1741 = vpop.f32.mrb[0].mxu0
        %v1742 = vadd.f32 %v1665, %v1741
        %v1743 = vpop.f32.mrb[0].mxu0
        %v1744 = vadd.f32 %v1669, %v1743
        %1745 = vdwg.mxu0
        %1747 = vrot.lane.b32.xlu0 %v1742, 64
        %v1748 = vpop.permute.xlu0 %1747
        %v1749 = vsel %vm643, %v1742, 0
        %v1751 = vsel %vm643, %v1748, 0
        %1753 = vmatprep.subr.mxu0 0.0
        %1754 = vmatpush1.xpose.msra.mxu0 %v1751
        %1755 = vmatprep.subr.mxu0 0.0
        %1756 = vmatpush1.xpose.msra.mxu0 0.0
        %1757 = vmatprep.subr.mxu0 0.0
        %1758 = vmatpush1.xpose.msra.mxu0 0.0
        %1759 = vmatprep.subr.mxu0 0.0
        %1760 = vmatpush1.xpose.msra.mxu0 0.0
        %1761 = vmatprep.subr.mxu0 0.0
        %1762 = vmatpush1.xpose.msra.mxu0 0.0
        %1763 = vmatprep.subr.mxu0 0.0
        %1764 = vmatpush1.xpose.msra.mxu0 0.0
        %1765 = vmatprep.subr.mxu0 0.0
        %1766 = vmatpush1.xpose.msra.mxu0 0.0
        %1767 = vmatprep.subr.mxu0 0.0
        %1768 = vmatpush1.xpose.msra.mxu0 0.0
        %1769 = vmatprep.subr.mxu0 0.0
        %1770 = vmatpush1.xpose.msra.mxu0 0.0
        %1771 = vmatprep.subr.mxu0 0.0
        %1772 = vmatpush1.xpose.msra.mxu0 0.0
        %1773 = vmatprep.subr.mxu0 0.0
        %1774 = vmatpush1.xpose.msra.mxu0 0.0
        %1775 = vmatprep.subr.mxu0 0.0
        %1776 = vmatpush1.xpose.msra.mxu0 0.0
        %1777 = vmatprep.subr.mxu0 0.0
        %1778 = vmatpush1.xpose.msra.mxu0 0.0
        %1779 = vmatprep.subr.mxu0 0.0
        %1780 = vmatpush1.xpose.msra.mxu0 0.0
        %1781 = vmatprep.subr.mxu0 0.0
        %1782 = vmatpush1.xpose.msra.mxu0 0.0
        %1783 = vmatprep.subr.mxu0 0.0
        %1784 = vmatpush1.xpose.msra.mxu0 0.0
        %1785 = vmatprep.subr.mxu0 0.0
        %1786 = vmatpush1.xpose.msra.mxu0 0.0
        %1787 = vmatprep.subr.mxu0 0.0
        %1788 = vmatpush1.xpose.msra.mxu0 0.0
        %1789 = vmatprep.subr.mxu0 0.0
        %1790 = vmatpush1.xpose.msra.mxu0 0.0
        %1791 = vmatprep.subr.mxu0 0.0
        %1792 = vmatpush1.xpose.msra.mxu0 0.0
        %1793 = vmatprep.subr.mxu0 0.0
        %1794 = vmatpush1.xpose.msra.mxu0 0.0
        %1795 = vmatprep.subr.mxu0 0.0
        %1796 = vmatpush1.xpose.msra.mxu0 0.0
        %1797 = vmatprep.subr.mxu0 0.0
        %1798 = vmatpush1.xpose.msra.mxu0 0.0
        %1799 = vmatprep.subr.mxu0 0.0
        %1800 = vmatpush1.xpose.msra.mxu0 0.0
        %1801 = vmatprep.subr.mxu0 0.0
        %1802 = vmatpush1.xpose.msra.mxu0 0.0
        %1803 = vmatprep.subr.mxu0 0.0
        %1804 = vmatpush1.xpose.msra.mxu0 0.0
        %1805 = vmatprep.subr.mxu0 0.0
        %1806 = vmatpush1.xpose.msra.mxu0 0.0
        %1807 = vmatprep.subr.mxu0 0.0
        %1808 = vmatpush1.xpose.msra.mxu0 0.0
        %1809 = vmatprep.subr.mxu0 0.0
        %1810 = vmatpush1.xpose.msra.mxu0 0.0
        %1811 = vmatprep.subr.mxu0 0.0
        %1812 = vmatpush1.xpose.msra.mxu0 0.0
        %1813 = vmatprep.subr.mxu0 0.0
        %1814 = vmatpush1.xpose.msra.mxu0 0.0
        %1815 = vmatprep.subr.mxu0 0.0
        %1816 = vmatpush1.xpose.msra.mxu0 0.0
        %1817 = vmatprep.mubr.f32.mxu0 0.0
        %1818 = vmatmul.mubr.f32.gmra.mrb[0].mxu0 %v1749
        %v1819 = vpop.f32.mrb[0].mxu0
        %v1820 = vadd.f32 0.0, %v1819
        %v1821 = vpop.f32.mrb[0].mxu0
        %1822 = vdwg.mxu0
        %v1823 = vsel %vm502, -1e+18, %v1820
        %v1824 = vsel %vm719, %v1823, -inf
        %1825 = vmax.xlane.f32.xlu0 %v1824
        %v1826 = vpop.xlane.xlu0 %1825
        %v1827 = vsub.f32 %v1823, %v1826
        %v1828 = vmul.f32 %v1827, 1.442695
        %v1829 = vpow.pop %v1828
        %v1830 = vsel %vm719, %v1829, 0.0
        %1831 = vadd.xlane.f32.xlu0 %v1830
        %v1832 = vpop.xlane.xlu0 %1831
        %v1833 = vrcp.pop %v1832
        %v1834 = vmul.f32 %v1829, %v1833
        %v1836 = vsel %vm719, %v1834, 0
        %1838 = vmatprep.subr.mxu0 0.0
        %1839 = vmatpush1.msra.mxu0 %v1744
        %1840 = vmatprep.subr.mxu0 0.0
        %1841 = vmatpush1.msra.mxu0 0.0
        %1842 = vmatprep.subr.mxu0 0.0
        %1843 = vmatpush1.msra.mxu0 0.0
        %1844 = vmatprep.subr.mxu0 0.0
        %1845 = vmatpush1.msra.mxu0 0.0
        %1846 = vmatprep.subr.mxu0 0.0
        %1847 = vmatpush1.msra.mxu0 0.0
        %1848 = vmatprep.subr.mxu0 0.0
        %1849 = vmatpush1.msra.mxu0 0.0
        %1850 = vmatprep.subr.mxu0 0.0
        %1851 = vmatpush1.msra.mxu0 0.0
        %1852 = vmatprep.subr.mxu0 0.0
        %1853 = vmatpush1.msra.mxu0 0.0
        %1854 = vmatprep.subr.mxu0 0.0
        %1855 = vmatpush1.msra.mxu0 0.0
        %1856 = vmatprep.subr.mxu0 0.0
        %1857 = vmatpush1.msra.mxu0 0.0
        %1858 = vmatprep.subr.mxu0 0.0
        %1859 = vmatpush1.msra.mxu0 0.0
        %1860 = vmatprep.subr.mxu0 0.0
        %1861 = vmatpush1.msra.mxu0 0.0
        %1862 = vmatprep.subr.mxu0 0.0
        %1863 = vmatpush1.msra.mxu0 0.0
        %1864 = vmatprep.subr.mxu0 0.0
        %1865 = vmatpush1.msra.mxu0 0.0
        %1866 = vmatprep.subr.mxu0 0.0
        %1867 = vmatpush1.msra.mxu0 0.0
        %1868 = vmatprep.subr.mxu0 0.0
        %1869 = vmatpush1.msra.mxu0 0.0
        %1870 = vmatprep.subr.mxu0 0.0
        %1871 = vmatpush1.msra.mxu0 0.0
        %1872 = vmatprep.subr.mxu0 0.0
        %1873 = vmatpush1.msra.mxu0 0.0
        %1874 = vmatprep.subr.mxu0 0.0
        %1875 = vmatpush1.msra.mxu0 0.0
        %1876 = vmatprep.subr.mxu0 0.0
        %1877 = vmatpush1.msra.mxu0 0.0
        %1878 = vmatprep.subr.mxu0 0.0
        %1879 = vmatpush1.msra.mxu0 0.0
        %1880 = vmatprep.subr.mxu0 0.0
        %1881 = vmatpush1.msra.mxu0 0.0
        %1882 = vmatprep.subr.mxu0 0.0
        %1883 = vmatpush1.msra.mxu0 0.0
        %1884 = vmatprep.subr.mxu0 0.0
        %1885 = vmatpush1.msra.mxu0 0.0
        %1886 = vmatprep.subr.mxu0 0.0
        %1887 = vmatpush1.msra.mxu0 0.0
        %1888 = vmatprep.subr.mxu0 0.0
        %1889 = vmatpush1.msra.mxu0 0.0
        %1890 = vmatprep.subr.mxu0 0.0
        %1891 = vmatpush1.msra.mxu0 0.0
        %1892 = vmatprep.subr.mxu0 0.0
        %1893 = vmatpush1.msra.mxu0 0.0
        %1894 = vmatprep.subr.mxu0 0.0
        %1895 = vmatpush1.msra.mxu0 0.0
        %1896 = vmatprep.subr.mxu0 0.0
        %1897 = vmatpush1.msra.mxu0 0.0
        %1898 = vmatprep.subr.mxu0 0.0
        %1899 = vmatpush1.msra.mxu0 0.0
        %1900 = vmatprep.subr.mxu0 0.0
        %1901 = vmatpush1.msra.mxu0 0.0
        %1902 = vmatprep.mubr.f32.mxu0 0.0
        %1903 = vmatmul.mubr.f32.gmra.mrb[0].mxu0 %v1836
        %v1904 = vpop.f32.mrb[0].mxu0
        %v1905 = vadd.f32 0.0, %v1904
        %v1906 = vpop.f32.mrb[0].mxu0
        %1907 = vdwg.mxu0
        %1908 = vrot.lane.b32.xlu0 %v1742, 112
        %v1909 = vpop.permute.xlu0 %1908
        %1910 = vrot.lane.b32.xlu0 %v1742, 48
        %v1911 = vpop.permute.xlu0 %1910
        %v1912 = vsel %vm643, %v1909, 0
        %v1914 = vsel %vm643, %v1911, 0
        %1916 = vmatprep.subr.mxu0 0.0
        %1917 = vmatpush1.xpose.msra.mxu0 %v1914
        %1918 = vmatprep.subr.mxu0 0.0
        %1919 = vmatpush1.xpose.msra.mxu0 0.0
        %1920 = vmatprep.subr.mxu0 0.0
        %1921 = vmatpush1.xpose.msra.mxu0 0.0
        %1922 = vmatprep.subr.mxu0 0.0
        %1923 = vmatpush1.xpose.msra.mxu0 0.0
        %1924 = vmatprep.subr.mxu0 0.0
        %1925 = vmatpush1.xpose.msra.mxu0 0.0
        %1926 = vmatprep.subr.mxu0 0.0
        %1927 = vmatpush1.xpose.msra.mxu0 0.0
        %1928 = vmatprep.subr.mxu0 0.0
        %1929 = vmatpush1.xpose.msra.mxu0 0.0
        %1930 = vmatprep.subr.mxu0 0.0
        %1931 = vmatpush1.xpose.msra.mxu0 0.0
        %1932 = vmatprep.subr.mxu0 0.0
        %1933 = vmatpush1.xpose.msra.mxu0 0.0
        %1934 = vmatprep.subr.mxu0 0.0
        %1935 = vmatpush1.xpose.msra.mxu0 0.0
        %1936 = vmatprep.subr.mxu0 0.0
        %1937 = vmatpush1.xpose.msra.mxu0 0.0
        %1938 = vmatprep.subr.mxu0 0.0
        %1939 = vmatpush1.xpose.msra.mxu0 0.0
        %1940 = vmatprep.subr.mxu0 0.0
        %1941 = vmatpush1.xpose.msra.mxu0 0.0
        %1942 = vmatprep.subr.mxu0 0.0
        %1943 = vmatpush1.xpose.msra.mxu0 0.0
        %1944 = vmatprep.subr.mxu0 0.0
        %1945 = vmatpush1.xpose.msra.mxu0 0.0
        %1946 = vmatprep.subr.mxu0 0.0
        %1947 = vmatpush1.xpose.msra.mxu0 0.0
        %1948 = vmatprep.subr.mxu0 0.0
        %1949 = vmatpush1.xpose.msra.mxu0 0.0
        %1950 = vmatprep.subr.mxu0 0.0
        %1951 = vmatpush1.xpose.msra.mxu0 0.0
        %1952 = vmatprep.subr.mxu0 0.0
        %1953 = vmatpush1.xpose.msra.mxu0 0.0
        %1954 = vmatprep.subr.mxu0 0.0
        %1955 = vmatpush1.xpose.msra.mxu0 0.0
        %1956 = vmatprep.subr.mxu0 0.0
        %1957 = vmatpush1.xpose.msra.mxu0 0.0
        %1958 = vmatprep.subr.mxu0 0.0
        %1959 = vmatpush1.xpose.msra.mxu0 0.0
        %1960 = vmatprep.subr.mxu0 0.0
        %1961 = vmatpush1.xpose.msra.mxu0 0.0
        %1962 = vmatprep.subr.mxu0 0.0
        %1963 = vmatpush1.xpose.msra.mxu0 0.0
        %1964 = vmatprep.subr.mxu0 0.0
        %1965 = vmatpush1.xpose.msra.mxu0 0.0
        %1966 = vmatprep.subr.mxu0 0.0
        %1967 = vmatpush1.xpose.msra.mxu0 0.0
        %1968 = vmatprep.subr.mxu0 0.0
        %1969 = vmatpush1.xpose.msra.mxu0 0.0
        %1970 = vmatprep.subr.mxu0 0.0
        %1971 = vmatpush1.xpose.msra.mxu0 0.0
        %1972 = vmatprep.subr.mxu0 0.0
        %1973 = vmatpush1.xpose.msra.mxu0 0.0
        %1974 = vmatprep.subr.mxu0 0.0
        %1975 = vmatpush1.xpose.msra.mxu0 0.0
        %1976 = vmatprep.subr.mxu0 0.0
        %1977 = vmatpush1.xpose.msra.mxu0 0.0
        %1978 = vmatprep.subr.mxu0 0.0
        %1979 = vmatpush1.xpose.msra.mxu0 0.0
        %1980 = vmatprep.mubr.f32.mxu0 0.0
        %1981 = vmatmul.mubr.f32.gmra.mrb[0].mxu0 %v1912
        %v1982 = vpop.f32.mrb[0].mxu0
        %v1983 = vadd.f32 0.0, %v1982
        %v1984 = vpop.f32.mrb[0].mxu0
        %1985 = vdwg.mxu0
        %v1986 = vsel %vm502, -1e+18, %v1983
        %v1987 = vsel %vm719, %v1986, -inf
        %1988 = vmax.xlane.f32.xlu0 %v1987
        %v1989 = vpop.xlane.xlu0 %1988
        %v1990 = vsub.f32 %v1986, %v1989
        %v1991 = vmul.f32 %v1990, 1.442695
        %v1992 = vpow.pop %v1991
        %v1993 = vsel %vm719, %v1992, 0.0
        %1994 = vadd.xlane.f32.xlu0 %v1993
        %v1995 = vpop.xlane.xlu0 %1994
        %v1996 = vrcp.pop %v1995
        %v1997 = vmul.f32 %v1992, %v1996
        %1999 = vrot.lane.b32.xlu0 %v1744, 112
        %v2000 = vpop.permute.xlu0 %1999
        %v2003 = vsel %vm719, %v1997, 0
        %2005 = vmatprep.subr.mxu0 0.0
        %2006 = vmatpush1.msra.mxu0 %v2000
        %2007 = vmatprep.subr.mxu0 0.0
        %2008 = vmatpush1.msra.mxu0 0.0
        %2009 = vmatprep.subr.mxu0 0.0
        %2010 = vmatpush1.msra.mxu0 0.0
        %2011 = vmatprep.subr.mxu0 0.0
        %2012 = vmatpush1.msra.mxu0 0.0
        %2013 = vmatprep.subr.mxu0 0.0
        %2014 = vmatpush1.msra.mxu0 0.0
        %2015 = vmatprep.subr.mxu0 0.0
        %2016 = vmatpush1.msra.mxu0 0.0
        %2017 = vmatprep.subr.mxu0 0.0
        %2018 = vmatpush1.msra.mxu0 0.0
        %2019 = vmatprep.subr.mxu0 0.0
        %2020 = vmatpush1.msra.mxu0 0.0
        %2021 = vmatprep.subr.mxu0 0.0
        %2022 = vmatpush1.msra.mxu0 0.0
        %2023 = vmatprep.subr.mxu0 0.0
        %2024 = vmatpush1.msra.mxu0 0.0
        %2025 = vmatprep.subr.mxu0 0.0
        %2026 = vmatpush1.msra.mxu0 0.0
        %2027 = vmatprep.subr.mxu0 0.0
        %2028 = vmatpush1.msra.mxu0 0.0
        %2029 = vmatprep.subr.mxu0 0.0
        %2030 = vmatpush1.msra.mxu0 0.0
        %2031 = vmatprep.subr.mxu0 0.0
        %2032 = vmatpush1.msra.mxu0 0.0
        %2033 = vmatprep.subr.mxu0 0.0
        %2034 = vmatpush1.msra.mxu0 0.0
        %2035 = vmatprep.subr.mxu0 0.0
        %2036 = vmatpush1.msra.mxu0 0.0
        %2037 = vmatprep.subr.mxu0 0.0
        %2038 = vmatpush1.msra.mxu0 0.0
        %2039 = vmatprep.subr.mxu0 0.0
        %2040 = vmatpush1.msra.mxu0 0.0
        %2041 = vmatprep.subr.mxu0 0.0
        %2042 = vmatpush1.msra.mxu0 0.0
        %2043 = vmatprep.subr.mxu0 0.0
        %2044 = vmatpush1.msra.mxu0 0.0
        %2045 = vmatprep.subr.mxu0 0.0
        %2046 = vmatpush1.msra.mxu0 0.0
        %2047 = vmatprep.subr.mxu0 0.0
        %2048 = vmatpush1.msra.mxu0 0.0
        %2049 = vmatprep.subr.mxu0 0.0
        %2050 = vmatpush1.msra.mxu0 0.0
        %2051 = vmatprep.subr.mxu0 0.0
        %2052 = vmatpush1.msra.mxu0 0.0
        %2053 = vmatprep.subr.mxu0 0.0
        %2054 = vmatpush1.msra.mxu0 0.0
        %2055 = vmatprep.subr.mxu0 0.0
        %2056 = vmatpush1.msra.mxu0 0.0
        %2057 = vmatprep.subr.mxu0 0.0
        %2058 = vmatpush1.msra.mxu0 0.0
        %2059 = vmatprep.subr.mxu0 0.0
        %2060 = vmatpush1.msra.mxu0 0.0
        %2061 = vmatprep.subr.mxu0 0.0
        %2062 = vmatpush1.msra.mxu0 0.0
        %2063 = vmatprep.subr.mxu0 0.0
        %2064 = vmatpush1.msra.mxu0 0.0
        %2065 = vmatprep.subr.mxu0 0.0
        %2066 = vmatpush1.msra.mxu0 0.0
        %2067 = vmatprep.subr.mxu0 0.0
        %2068 = vmatpush1.msra.mxu0 0.0
        %2069 = vmatprep.mubr.f32.mxu0 0.0
        %2070 = vmatmul.mubr.f32.gmra.mrb[0].mxu0 %v2003
        %v2071 = vpop.f32.mrb[0].mxu0
        %v2072 = vadd.f32 0.0, %v2071
        %v2073 = vpop.f32.mrb[0].mxu0
        %2074 = vdwg.mxu0
        %2075 = vrot.lane.b32.xlu0 %v1742, 96
        %v2076 = vpop.permute.xlu0 %2075
        %2077 = vrot.lane.b32.xlu0 %v1742, 32
        %v2078 = vpop.permute.xlu0 %2077
        %v2079 = vsel %vm643, %v2076, 0
        %v2081 = vsel %vm643, %v2078, 0
        %2083 = vmatprep.subr.mxu0 0.0
        %2084 = vmatpush1.xpose.msra.mxu0 %v2081
        %2085 = vmatprep.subr.mxu0 0.0
        %2086 = vmatpush1.xpose.msra.mxu0 0.0
        %2087 = vmatprep.subr.mxu0 0.0
        %2088 = vmatpush1.xpose.msra.mxu0 0.0
        %2089 = vmatprep.subr.mxu0 0.0
        %2090 = vmatpush1.xpose.msra.mxu0 0.0
        %2091 = vmatprep.subr.mxu0 0.0
        %2092 = vmatpush1.xpose.msra.mxu0 0.0
        %2093 = vmatprep.subr.mxu0 0.0
        %2094 = vmatpush1.xpose.msra.mxu0 0.0
        %2095 = vmatprep.subr.mxu0 0.0
        %2096 = vmatpush1.xpose.msra.mxu0 0.0
        %2097 = vmatprep.subr.mxu0 0.0
        %2098 = vmatpush1.xpose.msra.mxu0 0.0
        %2099 = vmatprep.subr.mxu0 0.0
        %2100 = vmatpush1.xpose.msra.mxu0 0.0
        %2101 = vmatprep.subr.mxu0 0.0
        %2102 = vmatpush1.xpose.msra.mxu0 0.0
        %2103 = vmatprep.subr.mxu0 0.0
        %2104 = vmatpush1.xpose.msra.mxu0 0.0
        %2105 = vmatprep.subr.mxu0 0.0
        %2106 = vmatpush1.xpose.msra.mxu0 0.0
        %2107 = vmatprep.subr.mxu0 0.0
        %2108 = vmatpush1.xpose.msra.mxu0 0.0
        %2109 = vmatprep.subr.mxu0 0.0
        %2110 = vmatpush1.xpose.msra.mxu0 0.0
        %2111 = vmatprep.subr.mxu0 0.0
        %2112 = vmatpush1.xpose.msra.mxu0 0.0
        %2113 = vmatprep.subr.mxu0 0.0
        %2114 = vmatpush1.xpose.msra.mxu0 0.0
        %2115 = vmatprep.subr.mxu0 0.0
        %2116 = vmatpush1.xpose.msra.mxu0 0.0
        %2117 = vmatprep.subr.mxu0 0.0
        %2118 = vmatpush1.xpose.msra.mxu0 0.0
        %2119 = vmatprep.subr.mxu0 0.0
        %2120 = vmatpush1.xpose.msra.mxu0 0.0
        %2121 = vmatprep.subr.mxu0 0.0
        %2122 = vmatpush1.xpose.msra.mxu0 0.0
        %2123 = vmatprep.subr.mxu0 0.0
        %2124 = vmatpush1.xpose.msra.mxu0 0.0
        %2125 = vmatprep.subr.mxu0 0.0
        %2126 = vmatpush1.xpose.msra.mxu0 0.0
        %2127 = vmatprep.subr.mxu0 0.0
        %2128 = vmatpush1.xpose.msra.mxu0 0.0
        %2129 = vmatprep.subr.mxu0 0.0
        %2130 = vmatpush1.xpose.msra.mxu0 0.0
        %2131 = vmatprep.subr.mxu0 0.0
        %2132 = vmatpush1.xpose.msra.mxu0 0.0
        %2133 = vmatprep.subr.mxu0 0.0
        %2134 = vmatpush1.xpose.msra.mxu0 0.0
        %2135 = vmatprep.subr.mxu0 0.0
        %2136 = vmatpush1.xpose.msra.mxu0 0.0
        %2137 = vmatprep.subr.mxu0 0.0
        %2138 = vmatpush1.xpose.msra.mxu0 0.0
        %2139 = vmatprep.subr.mxu0 0.0
        %2140 = vmatpush1.xpose.msra.mxu0 0.0
        %2141 = vmatprep.subr.mxu0 0.0
        %2142 = vmatpush1.xpose.msra.mxu0 0.0
        %2143 = vmatprep.subr.mxu0 0.0
        %2144 = vmatpush1.xpose.msra.mxu0 0.0
        %2145 = vmatprep.subr.mxu0 0.0
        %2146 = vmatpush1.xpose.msra.mxu0 0.0
        %2147 = vmatprep.mubr.f32.mxu0 0.0
        %2148 = vmatmul.mubr.f32.gmra.mrb[0].mxu0 %v2079
        %v2149 = vpop.f32.mrb[0].mxu0
        %v2150 = vadd.f32 0.0, %v2149
        %v2151 = vpop.f32.mrb[0].mxu0
        %2152 = vdwg.mxu0
        %v2153 = vsel %vm502, -1e+18, %v2150
        %v2154 = vsel %vm719, %v2153, -inf
        %2155 = vmax.xlane.f32.xlu0 %v2154
        %v2156 = vpop.xlane.xlu0 %2155
        %v2157 = vsub.f32 %v2153, %v2156
        %v2158 = vmul.f32 %v2157, 1.442695
        %v2159 = vpow.pop %v2158
        %v2160 = vsel %vm719, %v2159, 0.0
        %2161 = vadd.xlane.f32.xlu0 %v2160
        %v2162 = vpop.xlane.xlu0 %2161
        %v2163 = vrcp.pop %v2162
        %v2164 = vmul.f32 %v2159, %v2163
        %2165 = vrot.lane.b32.xlu0 %v1744, 96
        %v2166 = vpop.permute.xlu0 %2165
        %v2169 = vsel %vm719, %v2164, 0
        %2171 = vmatprep.subr.mxu0 0.0
        %2172 = vmatpush1.msra.mxu0 %v2166
        %2173 = vmatprep.subr.mxu0 0.0
        %2174 = vmatpush1.msra.mxu0 0.0
        %2175 = vmatprep.subr.mxu0 0.0
        %2176 = vmatpush1.msra.mxu0 0.0
        %2177 = vmatprep.subr.mxu0 0.0
        %2178 = vmatpush1.msra.mxu0 0.0
        %2179 = vmatprep.subr.mxu0 0.0
        %2180 = vmatpush1.msra.mxu0 0.0
        %2181 = vmatprep.subr.mxu0 0.0
        %2182 = vmatpush1.msra.mxu0 0.0
        %2183 = vmatprep.subr.mxu0 0.0
        %2184 = vmatpush1.msra.mxu0 0.0
        %2185 = vmatprep.subr.mxu0 0.0
        %2186 = vmatpush1.msra.mxu0 0.0
        %2187 = vmatprep.subr.mxu0 0.0
        %2188 = vmatpush1.msra.mxu0 0.0
        %2189 = vmatprep.subr.mxu0 0.0
        %2190 = vmatpush1.msra.mxu0 0.0
        %2191 = vmatprep.subr.mxu0 0.0
        %2192 = vmatpush1.msra.mxu0 0.0
        %2193 = vmatprep.subr.mxu0 0.0
        %2194 = vmatpush1.msra.mxu0 0.0
        %2195 = vmatprep.subr.mxu0 0.0
        %2196 = vmatpush1.msra.mxu0 0.0
        %2197 = vmatprep.subr.mxu0 0.0
        %2198 = vmatpush1.msra.mxu0 0.0
        %2199 = vmatprep.subr.mxu0 0.0
        %2200 = vmatpush1.msra.mxu0 0.0
        %2201 = vmatprep.subr.mxu0 0.0
        %2202 = vmatpush1.msra.mxu0 0.0
        %2203 = vmatprep.subr.mxu0 0.0
        %2204 = vmatpush1.msra.mxu0 0.0
        %2205 = vmatprep.subr.mxu0 0.0
        %2206 = vmatpush1.msra.mxu0 0.0
        %2207 = vmatprep.subr.mxu0 0.0
        %2208 = vmatpush1.msra.mxu0 0.0
        %2209 = vmatprep.subr.mxu0 0.0
        %2210 = vmatpush1.msra.mxu0 0.0
        %2211 = vmatprep.subr.mxu0 0.0
        %2212 = vmatpush1.msra.mxu0 0.0
        %2213 = vmatprep.subr.mxu0 0.0
        %2214 = vmatpush1.msra.mxu0 0.0
        %2215 = vmatprep.subr.mxu0 0.0
        %2216 = vmatpush1.msra.mxu0 0.0
        %2217 = vmatprep.subr.mxu0 0.0
        %2218 = vmatpush1.msra.mxu0 0.0
        %2219 = vmatprep.subr.mxu0 0.0
        %2220 = vmatpush1.msra.mxu0 0.0
        %2221 = vmatprep.subr.mxu0 0.0
        %2222 = vmatpush1.msra.mxu0 0.0
        %2223 = vmatprep.subr.mxu0 0.0
        %2224 = vmatpush1.msra.mxu0 0.0
        %2225 = vmatprep.subr.mxu0 0.0
        %2226 = vmatpush1.msra.mxu0 0.0
        %2227 = vmatprep.subr.mxu0 0.0
        %2228 = vmatpush1.msra.mxu0 0.0
        %2229 = vmatprep.subr.mxu0 0.0
        %2230 = vmatpush1.msra.mxu0 0.0
        %2231 = vmatprep.subr.mxu0 0.0
        %2232 = vmatpush1.msra.mxu0 0.0
        %2233 = vmatprep.subr.mxu0 0.0
        %2234 = vmatpush1.msra.mxu0 0.0
        %2235 = vmatprep.mubr.f32.mxu0 0.0
        %2236 = vmatmul.mubr.f32.gmra.mrb[0].mxu0 %v2169
        %v2237 = vpop.f32.mrb[0].mxu0
        %v2238 = vadd.f32 0.0, %v2237
        %v2239 = vpop.f32.mrb[0].mxu0
        %2240 = vdwg.mxu0
        %2241 = vrot.lane.b32.xlu0 %v1742, 80
        %v2242 = vpop.permute.xlu0 %2241
        %2243 = vrot.lane.b32.xlu0 %v1742, 16
        %v2244 = vpop.permute.xlu0 %2243
        %v2245 = vsel %vm643, %v2242, 0
        %v2247 = vsel %vm643, %v2244, 0
        %2249 = vmatprep.subr.mxu0 0.0
        %2250 = vmatpush1.xpose.msra.mxu0 %v2247
        %2251 = vmatprep.subr.mxu0 0.0
        %2252 = vmatpush1.xpose.msra.mxu0 0.0
        %2253 = vmatprep.subr.mxu0 0.0
        %2254 = vmatpush1.xpose.msra.mxu0 0.0
        %2255 = vmatprep.subr.mxu0 0.0
        %2256 = vmatpush1.xpose.msra.mxu0 0.0
        %2257 = vmatprep.subr.mxu0 0.0
        %2258 = vmatpush1.xpose.msra.mxu0 0.0
        %2259 = vmatprep.subr.mxu0 0.0
        %2260 = vmatpush1.xpose.msra.mxu0 0.0
        %2261 = vmatprep.subr.mxu0 0.0
        %2262 = vmatpush1.xpose.msra.mxu0 0.0
        %2263 = vmatprep.subr.mxu0 0.0
        %2264 = vmatpush1.xpose.msra.mxu0 0.0
        %2265 = vmatprep.subr.mxu0 0.0
        %2266 = vmatpush1.xpose.msra.mxu0 0.0
        %2267 = vmatprep.subr.mxu0 0.0
        %2268 = vmatpush1.xpose.msra.mxu0 0.0
        %2269 = vmatprep.subr.mxu0 0.0
        %2270 = vmatpush1.xpose.msra.mxu0 0.0
        %2271 = vmatprep.subr.mxu0 0.0
        %2272 = vmatpush1.xpose.msra.mxu0 0.0
        %2273 = vmatprep.subr.mxu0 0.0
        %2274 = vmatpush1.xpose.msra.mxu0 0.0
        %2275 = vmatprep.subr.mxu0 0.0
        %2276 = vmatpush1.xpose.msra.mxu0 0.0
        %2277 = vmatprep.subr.mxu0 0.0
        %2278 = vmatpush1.xpose.msra.mxu0 0.0
        %2279 = vmatprep.subr.mxu0 0.0
        %2280 = vmatpush1.xpose.msra.mxu0 0.0
        %2281 = vmatprep.subr.mxu0 0.0
        %2282 = vmatpush1.xpose.msra.mxu0 0.0
        %2283 = vmatprep.subr.mxu0 0.0
        %2284 = vmatpush1.xpose.msra.mxu0 0.0
        %2285 = vmatprep.subr.mxu0 0.0
        %2286 = vmatpush1.xpose.msra.mxu0 0.0
        %2287 = vmatprep.subr.mxu0 0.0
        %2288 = vmatpush1.xpose.msra.mxu0 0.0
        %2289 = vmatprep.subr.mxu0 0.0
        %2290 = vmatpush1.xpose.msra.mxu0 0.0
        %2291 = vmatprep.subr.mxu0 0.0
        %2292 = vmatpush1.xpose.msra.mxu0 0.0
        %2293 = vmatprep.subr.mxu0 0.0
        %2294 = vmatpush1.xpose.msra.mxu0 0.0
        %2295 = vmatprep.subr.mxu0 0.0
        %2296 = vmatpush1.xpose.msra.mxu0 0.0
        %2297 = vmatprep.subr.mxu0 0.0
        %2298 = vmatpush1.xpose.msra.mxu0 0.0
        %2299 = vmatprep.subr.mxu0 0.0
        %2300 = vmatpush1.xpose.msra.mxu0 0.0
        %2301 = vmatprep.subr.mxu0 0.0
        %2302 = vmatpush1.xpose.msra.mxu0 0.0
        %2303 = vmatprep.subr.mxu0 0.0
        %2304 = vmatpush1.xpose.msra.mxu0 0.0
        %2305 = vmatprep.subr.mxu0 0.0
        %2306 = vmatpush1.xpose.msra.mxu0 0.0
        %2307 = vmatprep.subr.mxu0 0.0
        %2308 = vmatpush1.xpose.msra.mxu0 0.0
        %2309 = vmatprep.subr.mxu0 0.0
        %2310 = vmatpush1.xpose.msra.mxu0 0.0
        %2311 = vmatprep.subr.mxu0 0.0
        %2312 = vmatpush1.xpose.msra.mxu0 0.0
        %2313 = vmatprep.mubr.f32.mxu0 0.0
        %2314 = vmatmul.mubr.f32.gmra.mrb[0].mxu0 %v2245
        %v2315 = vpop.f32.mrb[0].mxu0
        %v2316 = vadd.f32 0.0, %v2315
        %v2317 = vpop.f32.mrb[0].mxu0
        %2318 = vdwg.mxu0
        %v2319 = vsel %vm502, -1e+18, %v2316
        %v2320 = vsel %vm719, %v2319, -inf
        %2321 = vmax.xlane.f32.xlu0 %v2320
        %v2322 = vpop.xlane.xlu0 %2321
        %v2323 = vsub.f32 %v2319, %v2322
        %v2324 = vmul.f32 %v2323, 1.442695
        %v2325 = vpow.pop %v2324
        %v2326 = vsel %vm719, %v2325, 0.0
        %2327 = vadd.xlane.f32.xlu0 %v2326
        %v2328 = vpop.xlane.xlu0 %2327
        %v2329 = vrcp.pop %v2328
        %v2330 = vmul.f32 %v2325, %v2329
        %2331 = vrot.lane.b32.xlu0 %v1744, 80
        %v2332 = vpop.permute.xlu0 %2331
        %v2335 = vsel %vm719, %v2330, 0
        %2337 = vmatprep.subr.mxu0 0.0
        %2338 = vmatpush1.msra.mxu0 %v2332
        %2339 = vmatprep.subr.mxu0 0.0
        %2340 = vmatpush1.msra.mxu0 0.0
        %2341 = vmatprep.subr.mxu0 0.0
        %2342 = vmatpush1.msra.mxu0 0.0
        %2343 = vmatprep.subr.mxu0 0.0
        %2344 = vmatpush1.msra.mxu0 0.0
        %2345 = vmatprep.subr.mxu0 0.0
        %2346 = vmatpush1.msra.mxu0 0.0
        %2347 = vmatprep.subr.mxu0 0.0
        %2348 = vmatpush1.msra.mxu0 0.0
        %2349 = vmatprep.subr.mxu0 0.0
        %2350 = vmatpush1.msra.mxu0 0.0
        %2351 = vmatprep.subr.mxu0 0.0
        %2352 = vmatpush1.msra.mxu0 0.0
        %2353 = vmatprep.subr.mxu0 0.0
        %2354 = vmatpush1.msra.mxu0 0.0
        %2355 = vmatprep.subr.mxu0 0.0
        %2356 = vmatpush1.msra.mxu0 0.0
        %2357 = vmatprep.subr.mxu0 0.0
        %2358 = vmatpush1.msra.mxu0 0.0
        %2359 = vmatprep.subr.mxu0 0.0
        %2360 = vmatpush1.msra.mxu0 0.0
        %2361 = vmatprep.subr.mxu0 0.0
        %2362 = vmatpush1.msra.mxu0 0.0
        %2363 = vmatprep.subr.mxu0 0.0
        %2364 = vmatpush1.msra.mxu0 0.0
        %2365 = vmatprep.subr.mxu0 0.0
        %2366 = vmatpush1.msra.mxu0 0.0
        %2367 = vmatprep.subr.mxu0 0.0
        %2368 = vmatpush1.msra.mxu0 0.0
        %2369 = vmatprep.subr.mxu0 0.0
        %2370 = vmatpush1.msra.mxu0 0.0
        %2371 = vmatprep.subr.mxu0 0.0
        %2372 = vmatpush1.msra.mxu0 0.0
        %2373 = vmatprep.subr.mxu0 0.0
        %2374 = vmatpush1.msra.mxu0 0.0
        %2375 = vmatprep.subr.mxu0 0.0
        %2376 = vmatpush1.msra.mxu0 0.0
        %2377 = vmatprep.subr.mxu0 0.0
        %2378 = vmatpush1.msra.mxu0 0.0
        %2379 = vmatprep.subr.mxu0 0.0
        %2380 = vmatpush1.msra.mxu0 0.0
        %2381 = vmatprep.subr.mxu0 0.0
        %2382 = vmatpush1.msra.mxu0 0.0
        %2383 = vmatprep.subr.mxu0 0.0
        %2384 = vmatpush1.msra.mxu0 0.0
        %2385 = vmatprep.subr.mxu0 0.0
        %2386 = vmatpush1.msra.mxu0 0.0
        %2387 = vmatprep.subr.mxu0 0.0
        %2388 = vmatpush1.msra.mxu0 0.0
        %2389 = vmatprep.subr.mxu0 0.0
        %2390 = vmatpush1.msra.mxu0 0.0
        %2391 = vmatprep.subr.mxu0 0.0
        %2392 = vmatpush1.msra.mxu0 0.0
        %2393 = vmatprep.subr.mxu0 0.0
        %2394 = vmatpush1.msra.mxu0 0.0
        %2395 = vmatprep.subr.mxu0 0.0
        %2396 = vmatpush1.msra.mxu0 0.0
        %2397 = vmatprep.subr.mxu0 0.0
        %2398 = vmatpush1.msra.mxu0 0.0
        %2399 = vmatprep.subr.mxu0 0.0
        %2400 = vmatpush1.msra.mxu0 0.0
        %2401 = vmatprep.mubr.f32.mxu0 0.0
        %2402 = vmatmul.mubr.f32.gmra.mrb[0].mxu0 %v2335
        %v2403 = vpop.f32.mrb[0].mxu0
        %v2404 = vadd.f32 0.0, %v2403
        %v2405 = vpop.f32.mrb[0].mxu0
        %2406 = vdwg.mxu0
        %2408 = vrot.lane.b32.xlu0 %v2072, 16
        %v2409 = vpop.permute.xlu0 %2408
        %2412 = vrot.lane.b32.xlu0 %v2238, 32
        %v2413 = vpop.permute.xlu0 %2412
        %2416 = vrot.lane.b32.xlu0 %v2404, 48
        %v2417 = vpop.permute.xlu0 %2416
        %v2419 = vsel %vm643, %v1905, %v2409
        %v2420 = vsel %vm1316, %v2419, %v2413
        %v2421 = vsel %vm1318, %v2420, %v2417
        %v2423 = vlaneseq
        %v2424 = vshrl.u32 %v2423, 7
        %v2425 = vsub.s32 0, %v2424
        %v2426 = vrot.slane %v1660, %v2425
        %v2429 = vsel %vm504, %v2421, 0
        %2431 = vmatprep.subr.mxu0 0.0
        %2432 = vmatpush1.msra.mxu0 %v1651
        %2433 = vmatprep.subr.mxu0 0.0
        %2434 = vmatpush1.msra.mxu0 %v1652
        %2435 = vmatprep.subr.mxu0 0.0
        %2436 = vmatpush1.msra.mxu0 %v1653
        %2437 = vmatprep.subr.mxu0 0.0
        %2438 = vmatpush1.msra.mxu0 %v1654
        %2439 = vmatprep.subr.mxu0 0.0
        %2440 = vmatpush1.msra.mxu0 %v1655
        %2441 = vmatprep.subr.mxu0 0.0
        %2442 = vmatpush1.msra.mxu0 %v1656
        %2443 = vmatprep.subr.mxu0 0.0
        %2444 = vmatpush1.msra.mxu0 %v1657
        %2445 = vmatprep.subr.mxu0 0.0
        %2446 = vmatpush1.msra.mxu0 %v1658
        %2447 = vmatprep.subr.mxu0 0.0
        %2448 = vmatpush1.msra.mxu0 0.0
        %2449 = vmatprep.subr.mxu0 0.0
        %2450 = vmatpush1.msra.mxu0 0.0
        %2451 = vmatprep.subr.mxu0 0.0
        %2452 = vmatpush1.msra.mxu0 0.0
        %2453 = vmatprep.subr.mxu0 0.0
        %2454 = vmatpush1.msra.mxu0 0.0
        %2455 = vmatprep.subr.mxu0 0.0
        %2456 = vmatpush1.msra.mxu0 0.0
        %2457 = vmatprep.subr.mxu0 0.0
        %2458 = vmatpush1.msra.mxu0 0.0
        %2459 = vmatprep.subr.mxu0 0.0
        %2460 = vmatpush1.msra.mxu0 0.0
        %2461 = vmatprep.subr.mxu0 0.0
        %2462 = vmatpush1.msra.mxu0 0.0
        %2463 = vmatprep.subr.mxu0 0.0
        %2464 = vmatpush1.msra.mxu0 0.0
        %2465 = vmatprep.subr.mxu0 0.0
        %2466 = vmatpush1.msra.mxu0 0.0
        %2467 = vmatprep.subr.mxu0 0.0
        %2468 = vmatpush1.msra.mxu0 0.0
        %2469 = vmatprep.subr.mxu0 0.0
        %2470 = vmatpush1.msra.mxu0 0.0
        %2471 = vmatprep.subr.mxu0 0.0
        %2472 = vmatpush1.msra.mxu0 0.0
        %2473 = vmatprep.subr.mxu0 0.0
        %2474 = vmatpush1.msra.mxu0 0.0
        %2475 = vmatprep.subr.mxu0 0.0
        %2476 = vmatpush1.msra.mxu0 0.0
        %2477 = vmatprep.subr.mxu0 0.0
        %2478 = vmatpush1.msra.mxu0 0.0
        %2479 = vmatprep.subr.mxu0 0.0
        %2480 = vmatpush1.msra.mxu0 0.0
        %2481 = vmatprep.subr.mxu0 0.0
        %2482 = vmatpush1.msra.mxu0 0.0
        %2483 = vmatprep.subr.mxu0 0.0
        %2484 = vmatpush1.msra.mxu0 0.0
        %2485 = vmatprep.subr.mxu0 0.0
        %2486 = vmatpush1.msra.mxu0 0.0
        %2487 = vmatprep.subr.mxu0 0.0
        %2488 = vmatpush1.msra.mxu0 0.0
        %2489 = vmatprep.subr.mxu0 0.0
        %2490 = vmatpush1.msra.mxu0 0.0
        %2491 = vmatprep.subr.mxu0 0.0
        %2492 = vmatpush1.msra.mxu0 0.0
        %2493 = vmatprep.subr.mxu0 0.0
        %2494 = vmatpush1.msra.mxu0 0.0
        %2495 = vmatprep.mubr.f32.mxu0 0.0
        %2496 = vmatmul.mubr.f32.gmra.mrb[0].mxu0 %v2429
        %v2497 = vpop.f32.mrb[0].mxu0
        %v2498 = vadd.f32 %v2426, %v2497
        %v2499 = vpop.f32.mrb[0].mxu0
        %2500 = vdwg.mxu0
        %v2501 = vadd.f32 %v2498, %v1605
        %v2502 = vsel %vm504, %v2501, 0.0
        %2503 = vadd.xlane.f32.xlu0 %v2502
        %v2504 = vpop.xlane.xlu0 %2503
        %v2505 = vmul.f32 %v2504, %v508
        %v2506 = vsub.f32 %v2501, %v2505
        %v2507 = vmul.f32 %v2506, %v2506
        %v2508 = vsel %vm504, %v2507, 0.0
        %2509 = vadd.xlane.f32.xlu0 %v2508
        %v2510 = vpop.xlane.xlu0 %2509
        %v2511 = vmul.f32 %v2510, %v508
        %v2512 = vadd.f32 %v2511, 1e-06
        %v2513 = vrsqrt.pop %v2512
        %v2514 = vmul.f32 %v2506, %v2513
        %v2515 = vlaneseq
        %v2516 = vshrl.u32 %v2515, 7
        %v2517 = vsub.s32 2, %v2516
        %v2518 = vrot.slane %v1607, %v2517
        %v2519 = vmul.f32 %v2514, %v2518
        %v2520 = vlaneseq
        %v2521 = vshrl.u32 %v2520, 7
        %v2522 = vsub.s32 3, %v2521
        %v2523 = vrot.slane %v1607, %v2522
        %v2524 = vadd.f32 %v2519, %v2523
        %s2525 = scalar_lea.vmem %s6, 64
        %v2526 = vld [vmem:[%s2525] sm:$0xff]
        %v2527 = vld [vmem:[%s2525 + $0x8] sm:$0xff]
        %v2528 = vld [vmem:[%s2525 + $0x10] sm:$0xff]
        %v2529 = vld [vmem:[%s2525 + $0x18] sm:$0xff]
        %v2530 = vld [vmem:[%s2525 + $0x20] sm:$0xff]
        %v2531 = vld [vmem:[%s2525 + $0x28] sm:$0xff]
        %v2532 = vld [vmem:[%s2525 + $0x30] sm:$0xff]
        %v2533 = vld [vmem:[%s2525 + $0x38] sm:$0xff]
        %s2534 = scalar_lea.vmem %s7, 1
        %v2535 = vld [vmem:[%s2534] sm:$0x1]
        %v2537 = vlaneseq
        %v2538 = vshrl.u32 %v2537, 7
        %v2539 = vsub.s32 0, %v2538
        %v2540 = vrot.slane %v2535, %v2539
        %v2543 = vsel %vm504, %v2524, 0
        %2545 = vmatprep.subr.mxu0 0.0
        %2546 = vmatpush1.msra.mxu0 %v2526
        %2547 = vmatprep.subr.mxu0 0.0
        %2548 = vmatpush1.msra.mxu0 %v2527
        %2549 = vmatprep.subr.mxu0 0.0
        %2550 = vmatpush1.msra.mxu0 %v2528
        %2551 = vmatprep.subr.mxu0 0.0
        %2552 = vmatpush1.msra.mxu0 %v2529
        %2553 = vmatprep.subr.mxu0 0.0
        %2554 = vmatpush1.msra.mxu0 %v2530
        %2555 = vmatprep.subr.mxu0 0.0
        %2556 = vmatpush1.msra.mxu0 %v2531
        %2557 = vmatprep.subr.mxu0 0.0
        %2558 = vmatpush1.msra.mxu0 %v2532
        %2559 = vmatprep.subr.mxu0 0.0
        %2560 = vmatpush1.msra.mxu0 %v2533
        %2561 = vmatprep.subr.mxu0 0.0
        %2562 = vmatpush1.msra.mxu0 0.0
        %2563 = vmatprep.subr.mxu0 0.0
        %2564 = vmatpush1.msra.mxu0 0.0
        %2565 = vmatprep.subr.mxu0 0.0
        %2566 = vmatpush1.msra.mxu0 0.0
        %2567 = vmatprep.subr.mxu0 0.0
        %2568 = vmatpush1.msra.mxu0 0.0
        %2569 = vmatprep.subr.mxu0 0.0
        %2570 = vmatpush1.msra.mxu0 0.0
        %2571 = vmatprep.subr.mxu0 0.0
        %2572 = vmatpush1.msra.mxu0 0.0
        %2573 = vmatprep.subr.mxu0 0.0
        %2574 = vmatpush1.msra.mxu0 0.0
        %2575 = vmatprep.subr.mxu0 0.0
        %2576 = vmatpush1.msra.mxu0 0.0
        %2577 = vmatprep.subr.mxu0 0.0
        %2578 = vmatpush1.msra.mxu0 0.0
        %2579 = vmatprep.subr.mxu0 0.0
        %2580 = vmatpush1.msra.mxu0 0.0
        %2581 = vmatprep.subr.mxu0 0.0
        %2582 = vmatpush1.msra.mxu0 0.0
        %2583 = vmatprep.subr.mxu0 0.0
        %2584 = vmatpush1.msra.mxu0 0.0
        %2585 = vmatprep.subr.mxu0 0.0
        %2586 = vmatpush1.msra.mxu0 0.0
        %2587 = vmatprep.subr.mxu0 0.0
        %2588 = vmatpush1.msra.mxu0 0.0
        %2589 = vmatprep.subr.mxu0 0.0
        %2590 = vmatpush1.msra.mxu0 0.0
        %2591 = vmatprep.subr.mxu0 0.0
        %2592 = vmatpush1.msra.mxu0 0.0
        %2593 = vmatprep.subr.mxu0 0.0
        %2594 = vmatpush1.msra.mxu0 0.0
        %2595 = vmatprep.subr.mxu0 0.0
        %2596 = vmatpush1.msra.mxu0 0.0
        %2597 = vmatprep.subr.mxu0 0.0
        %2598 = vmatpush1.msra.mxu0 0.0
        %2599 = vmatprep.subr.mxu0 0.0
        %2600 = vmatpush1.msra.mxu0 0.0
        %2601 = vmatprep.subr.mxu0 0.0
        %2602 = vmatpush1.msra.mxu0 0.0
        %2603 = vmatprep.subr.mxu0 0.0
        %2604 = vmatpush1.msra.mxu0 0.0
        %2605 = vmatprep.subr.mxu0 0.0
        %2606 = vmatpush1.msra.mxu0 0.0
        %2607 = vmatprep.subr.mxu0 0.0
        %2608 = vmatpush1.msra.mxu0 0.0
        %2609 = vmatprep.mubr.f32.mxu0 0.0
        %2610 = vmatmul.mubr.f32.gmra.mrb[0].mxu0 %v2543
        %v2611 = vpop.f32.mrb[0].mxu0
        %v2612 = vadd.f32 %v2540, %v2611
        %v2613 = vpop.f32.mrb[0].mxu0
        %2614 = vdwg.mxu0
        %v2615 = vmax.f32 %v2612, 0.0
        %s2616 = scalar_lea.vmem %s8, 128
        %v2617 = vld [vmem:[%s2616] sm:$0xff]
        %v2618 = vld [vmem:[%s2616 + $0x8] sm:$0xff]
        %v2619 = vld [vmem:[%s2616 + $0x10] sm:$0xff]
        %v2620 = vld [vmem:[%s2616 + $0x18] sm:$0xff]
        %v2621 = vld [vmem:[%s2616 + $0x20] sm:$0xff]
        %v2622 = vld [vmem:[%s2616 + $0x28] sm:$0xff]
        %v2623 = vld [vmem:[%s2616 + $0x30] sm:$0xff]
        %v2624 = vld [vmem:[%s2616 + $0x38] sm:$0xff]
        %v2625 = vld [vmem:[%s2616 + $0x40] sm:$0xff]
        %v2626 = vld [vmem:[%s2616 + $0x48] sm:$0xff]
        %v2627 = vld [vmem:[%s2616 + $0x50] sm:$0xff]
        %v2628 = vld [vmem:[%s2616 + $0x58] sm:$0xff]
        %v2629 = vld [vmem:[%s2616 + $0x60] sm:$0xff]
        %v2630 = vld [vmem:[%s2616 + $0x68] sm:$0xff]
        %v2631 = vld [vmem:[%s2616 + $0x70] sm:$0xff]
        %v2632 = vld [vmem:[%s2616 + $0x78] sm:$0xff]
        %s2633 = scalar_lea.vmem %s9, 1
        %v2634 = vld [vmem:[%s2633] sm:$0x1]
        %v2636 = vlaneseq
        %v2637 = vshrl.u32 %v2636, 7
        %v2638 = vsub.s32 0, %v2637
        %v2639 = vrot.slane %v2634, %v2638
        %2641 = vmatprep.subr.mxu0 0.0
        %2642 = vmatpush1.msra.mxu0 %v2617
        %2643 = vmatprep.subr.mxu0 0.0
        %2644 = vmatpush1.msra.mxu0 %v2618
        %2645 = vmatprep.subr.mxu0 0.0
        %2646 = vmatpush1.msra.mxu0 %v2619
        %2647 = vmatprep.subr.mxu0 0.0
        %2648 = vmatpush1.msra.mxu0 %v2620
        %2649 = vmatprep.subr.mxu0 0.0
        %2650 = vmatpush1.msra.mxu0 %v2621
        %2651 = vmatprep.subr.mxu0 0.0
        %2652 = vmatpush1.msra.mxu0 %v2622
        %2653 = vmatprep.subr.mxu0 0.0
        %2654 = vmatpush1.msra.mxu0 %v2623
        %2655 = vmatprep.subr.mxu0 0.0
        %2656 = vmatpush1.msra.mxu0 %v2624
        %2657 = vmatprep.subr.mxu0 0.0
        %2658 = vmatpush1.msra.mxu0 %v2625
        %2659 = vmatprep.subr.mxu0 0.0
        %2660 = vmatpush1.msra.mxu0 %v2626
        %2661 = vmatprep.subr.mxu0 0.0
        %2662 = vmatpush1.msra.mxu0 %v2627
        %2663 = vmatprep.subr.mxu0 0.0
        %2664 = vmatpush1.msra.mxu0 %v2628
        %2665 = vmatprep.subr.mxu0 0.0
        %2666 = vmatpush1.msra.mxu0 %v2629
        %2667 = vmatprep.subr.mxu0 0.0
        %2668 = vmatpush1.msra.mxu0 %v2630
        %2669 = vmatprep.subr.mxu0 0.0
        %2670 = vmatpush1.msra.mxu0 %v2631
        %2671 = vmatprep.subr.mxu0 0.0
        %2672 = vmatpush1.msra.mxu0 %v2632
        %2673 = vmatprep.subr.mxu0 0.0
        %2674 = vmatpush1.msra.mxu0 0.0
        %2675 = vmatprep.subr.mxu0 0.0
        %2676 = vmatpush1.msra.mxu0 0.0
        %2677 = vmatprep.subr.mxu0 0.0
        %2678 = vmatpush1.msra.mxu0 0.0
        %2679 = vmatprep.subr.mxu0 0.0
        %2680 = vmatpush1.msra.mxu0 0.0
        %2681 = vmatprep.subr.mxu0 0.0
        %2682 = vmatpush1.msra.mxu0 0.0
        %2683 = vmatprep.subr.mxu0 0.0
        %2684 = vmatpush1.msra.mxu0 0.0
        %2685 = vmatprep.subr.mxu0 0.0
        %2686 = vmatpush1.msra.mxu0 0.0
        %2687 = vmatprep.subr.mxu0 0.0
        %2688 = vmatpush1.msra.mxu0 0.0
        %2689 = vmatprep.subr.mxu0 0.0
        %2690 = vmatpush1.msra.mxu0 0.0
        %2691 = vmatprep.subr.mxu0 0.0
        %2692 = vmatpush1.msra.mxu0 0.0
        %2693 = vmatprep.subr.mxu0 0.0
        %2694 = vmatpush1.msra.mxu0 0.0
        %2695 = vmatprep.subr.mxu0 0.0
        %2696 = vmatpush1.msra.mxu0 0.0
        %2697 = vmatprep.subr.mxu0 0.0
        %2698 = vmatpush1.msra.mxu0 0.0
        %2699 = vmatprep.subr.mxu0 0.0
        %2700 = vmatpush1.msra.mxu0 0.0
        %2701 = vmatprep.subr.mxu0 0.0
        %2702 = vmatpush1.msra.mxu0 0.0
        %2703 = vmatprep.subr.mxu0 0.0
        %2704 = vmatpush1.msra.mxu0 0.0
        %2705 = vmatprep.mubr.f32.mxu0 0.0
        %2706 = vmatmul.mubr.f32.gmra.mrb[0].mxu0 %v2615
        %v2707 = vpop.f32.mrb[0].mxu0
        %v2708 = vadd.f32 %v2639, %v2707
        %v2709 = vpop.f32.mrb[0].mxu0
        %2710 = vdwg.mxu0
        %v2711 = vadd.f32 %v2708, %v2501
        %v2712 = vld [vmem:[%s11] sm:$0x1]
        %v2713 = vld [vmem:[%s11 + $0x1] sm:$0x1]
        %v2714 = vsel %vm504, %v2711, 0.0
        %2715 = vadd.xlane.f32.xlu0 %v2714
        %v2716 = vpop.xlane.xlu0 %2715
        %v2717 = vmul.f32 %v2716, %v508
        %v2718 = vsub.f32 %v2711, %v2717
        %v2719 = vmul.f32 %v2718, %v2718
        %v2720 = vsel %vm504, %v2719, 0.0
        %2721 = vadd.xlane.f32.xlu0 %v2720
        %v2722 = vpop.xlane.xlu0 %2721
        %v2723 = vmul.f32 %v2722, %v508
        %v2724 = vadd.f32 %v2723, 1e-06
        %v2725 = vrsqrt.pop %v2724
        %v2726 = vmul.f32 %v2718, %v2725
        %v2727 = vlaneseq
        %v2728 = vshrl.u32 %v2727, 7
        %v2729 = vsub.s32 0, %v2728
        %v2730 = vrot.slane %v2712, %v2729
        %v2731 = vmul.f32 %v2726, %v2730
        %v2732 = vlaneseq
        %v2733 = vshrl.u32 %v2732, 7
        %v2734 = vsub.s32 0, %v2733
        %v2735 = vrot.slane %v2713, %v2734
        %v2736 = vadd.f32 %v2731, %v2735
        %v2737 = vld [vmem:[%s12] sm:$0xff]
        %v2738 = vld [vmem:[%s12 + $0x8] sm:$0xff]
        %v2739 = vld [vmem:[%s12 + $0x10] sm:$0xff]
        %v2740 = vld [vmem:[%s12 + $0x18] sm:$0xff]
        %v2741 = vld [vmem:[%s12 + $0x20] sm:$0xff]
        %v2742 = vld [vmem:[%s12 + $0x28] sm:$0xff]
        %v2743 = vld [vmem:[%s12 + $0x30] sm:$0xff]
        %v2744 = vld [vmem:[%s12 + $0x38] sm:$0xff]
        %v2746 = vsel %vm504, %v2736, 0
        %2748 = vmatprep.subr.mxu0 0.0
        %2749 = vmatpush1.msra.mxu0 %v2737
        %2750 = vmatprep.subr.mxu0 0.0
        %2751 = vmatpush1.msra.mxu0 %v2738
        %2752 = vmatprep.subr.mxu0 0.0
        %2753 = vmatpush1.msra.mxu0 %v2739
        %2754 = vmatprep.subr.mxu0 0.0
        %2755 = vmatpush1.msra.mxu0 %v2740
        %2756 = vmatprep.subr.mxu0 0.0
        %2757 = vmatpush1.msra.mxu0 %v2741
        %2758 = vmatprep.subr.mxu0 0.0
        %2759 = vmatpush1.msra.mxu0 %v2742
        %2760 = vmatprep.subr.mxu0 0.0
        %2761 = vmatpush1.msra.mxu0 %v2743
        %2762 = vmatprep.subr.mxu0 0.0
        %2763 = vmatpush1.msra.mxu0 %v2744
        %2764 = vmatprep.subr.mxu0 0.0
        %2765 = vmatpush1.msra.mxu0 0.0
        %2766 = vmatprep.subr.mxu0 0.0
        %2767 = vmatpush1.msra.mxu0 0.0
        %2768 = vmatprep.subr.mxu0 0.0
        %2769 = vmatpush1.msra.mxu0 0.0
        %2770 = vmatprep.subr.mxu0 0.0
        %2771 = vmatpush1.msra.mxu0 0.0
        %2772 = vmatprep.subr.mxu0 0.0
        %2773 = vmatpush1.msra.mxu0 0.0
        %2774 = vmatprep.subr.mxu0 0.0
        %2775 = vmatpush1.msra.mxu0 0.0
        %2776 = vmatprep.subr.mxu0 0.0
        %2777 = vmatpush1.msra.mxu0 0.0
        %2778 = vmatprep.subr.mxu0 0.0
        %2779 = vmatpush1.msra.mxu0 0.0
        %2780 = vmatprep.subr.mxu0 0.0
        %2781 = vmatpush1.msra.mxu0 0.0
        %2782 = vmatprep.subr.mxu0 0.0
        %2783 = vmatpush1.msra.mxu0 0.0
        %2784 = vmatprep.subr.mxu0 0.0
        %2785 = vmatpush1.msra.mxu0 0.0
        %2786 = vmatprep.subr.mxu0 0.0
        %2787 = vmatpush1.msra.mxu0 0.0
        %2788 = vmatprep.subr.mxu0 0.0
        %2789 = vmatpush1.msra.mxu0 0.0
        %2790 = vmatprep.subr.mxu0 0.0
        %2791 = vmatpush1.msra.mxu0 0.0
        %2792 = vmatprep.subr.mxu0 0.0
        %2793 = vmatpush1.msra.mxu0 0.0
        %2794 = vmatprep.subr.mxu0 0.0
        %2795 = vmatpush1.msra.mxu0 0.0
        %2796 = vmatprep.subr.mxu0 0.0
        %2797 = vmatpush1.msra.mxu0 0.0
        %2798 = vmatprep.subr.mxu0 0.0
        %2799 = vmatpush1.msra.mxu0 0.0
        %2800 = vmatprep.subr.mxu0 0.0
        %2801 = vmatpush1.msra.mxu0 0.0
        %2802 = vmatprep.subr.mxu0 0.0
        %2803 = vmatpush1.msra.mxu0 0.0
        %2804 = vmatprep.subr.mxu0 0.0
        %2805 = vmatpush1.msra.mxu0 0.0
        %2806 = vmatprep.subr.mxu0 0.0
        %2807 = vmatpush1.msra.mxu0 0.0
        %2808 = vmatprep.subr.mxu0 0.0
        %2809 = vmatpush1.msra.mxu0 0.0
        %2810 = vmatprep.subr.mxu0 0.0
        %2811 = vmatpush1.msra.mxu0 0.0
        %2812 = vmatprep.mubr.f32.mxu0 0.0
        %2813 = vmatmul.mubr.f32.gmra.mrb[0].mxu0 %v2746
        %v2814 = vpop.f32.mrb[0].mxu0
        %v2815 = vadd.f32 0.0, %v2814
        %v2816 = vpop.f32.mrb[0].mxu0
        %2817 = vdwg.mxu0
        %2818 = vst.msk [vmem:[%s487] sm:$0xff] %vm1316, %v2815
        %2819 = vst.msk [vmem:[%s476] sm:$0xff] %vm719, %v1834
        %p2820 = scmp.lt.s32.totalorder %s29, 3
        %s2821 = scalar_select %p2820, %s29, 3
        %s2822 = smul.addr %s2821, 8
        %s2823 = scalar_lea.vmem %s13, %s2822
        %s2824 = sand.u32 %s346, 1
        %s2825 = scalar_lea.sflag [#allocation3], %s2824
        %s2826 = sand.u32 %s346, 1
        %s2827 = smul.addr %s2826, 8
        %s2828 = scalar_lea.vmem [#allocation2], %s2827
        // Predicated region
        $region73: #{parser_model_forward.3} parent=71 // pred_check
          %p2829 = pneg %p330
        $region74: #{parser_model_forward.3} parent=71 // pred_check_branch
          %2831 = sbr.rel (%p2829) target = $region76
        $region75: #{parser_model_forward.3} parent=71 // pred_region
          _
        $region76: #{parser_model_forward.3} parent=71 // pred_fallthru
          _
        // Predicated region
        $region77: #{parser_model_forward.3} parent=71 // pred_check
          %p2832 = pneg %p356
        $region78: #{parser_model_forward.3} parent=71 // pred_check_branch
          %2834 = sbr.rel (%p2832) target = $region80
        $region79: #{parser_model_forward.3} parent=71 // pred_region
          %s2836 = ssub.s32 128, 128
          %2837 = vsyncadd %s2825, %s2836
          %s2838 = smul.addr %s29, 128
          %s2839 = scalar_lea.hbm %s14, %s2838
          %s2841 = sshll.u32 %s2828, 4
          %s2842 = int_to_ptr.vmem [resolvable:$true] %s2841
          %2844 = dma.vmem_to_hbm [thread:$0]  %s2842, 128, %s2839, %s2825
        $region80: #{parser_model_forward.3} parent=71 // pred_fallthru
          _
      $region72: #{parser_model_forward.3} parent=5 // pred_fallthru
        _
      %p2845 = scmp.le.s32.totalorder 2, %s24
      // Predicated region
      $region81: #{parser_model_forward.3} parent=5 // pred_check
        %p2846 = pneg %p2845
      $region82: #{parser_model_forward.3} parent=5 // pred_check_branch
        %2848 = sbr.rel (%p2846) target = $region84
      $region83: #{parser_model_forward.3} parent=5 // pred_region
        %s2849 = ssub.s32 %s24, 2
        // Predicated region
        $region85: #{parser_model_forward.3} parent=83 // pred_check
          %p2850 = pneg %p336
        $region86: #{parser_model_forward.3} parent=83 // pred_check_branch
          %2852 = sbr.rel (%p2850) target = $region88
        $region87: #{parser_model_forward.3} parent=83 // pred_region
          %p2853 = scmp.lt.s32.totalorder %s30, 3
          %s2854 = scalar_select %p2853, %s30, 3
          %s2855 = smul.addr %s2854, 8
          %s2856 = scalar_lea.vmem %s13, %s2855
        $region88: #{parser_model_forward.3} parent=83 // pred_fallthru
          _
        // Predicated region
        $region89: #{parser_model_forward.3} parent=83 // pred_check
          %p2857 = pneg %p362
        $region90: #{parser_model_forward.3} parent=83 // pred_check_branch
          %2859 = sbr.rel (%p2857) target = $region92
        $region91: #{parser_model_forward.3} parent=83 // pred_region
          %s2860 = sand.u32 %s347, 1
          %s2861 = scalar_lea.sflag [#allocation3], %s2860
          %s2862 = sand.u32 %s347, 1
          %s2863 = smul.addr %s2862, 8
          %s2864 = scalar_lea.vmem [#allocation2], %s2863
          %2865 = dma.done %s2861, 128
        $region92: #{parser_model_forward.3} parent=83 // pred_fallthru
          _
      $region84: #{parser_model_forward.3} parent=5 // pred_fallthru
        _
    $region6: #{parser_model_forward.3} parent=1 // loop_footer
      %s28 = sadd.s32 1, %s24
    $region7: #{parser_model_forward.3} parent=1 // loop_footer_branch
      %23 = sbr.rel target = $region3
    $region8: #{parser_model_forward.3} parent=1 // loop_exit
      _
    %2866 = vsyncpa [#allocation3], 1
    %s2867 = scalar_lea.sflag [#allocation3], 1
    %2868 = vsyncpa %s2867, 1

</llo_original>
